<compile_context>
chip_gen: v6e
topology: v6e:2x2x1
jax: 0.10.0
libtpu: 0.0.40
codegen_flags: <defaults>
</compile_context>

<pallas_src>
import functools
import math

import jax
import jax.numpy as jnp
from jax.experimental import pallas as pl
from jax.experimental.pallas import tpu as pltpu

N_FC = 5  # number of Linear layers in each of c_fc / u_fc (num_layers == 5)


def _round_up(x, m):
    return ((x + m - 1) // m) * m


def _elu(x):
    # nn.ELU(alpha=1): x if x > 0 else exp(x) - 1   (clamp arg of exp for safety)
    return jnp.where(x > 0, x, jnp.exp(jnp.minimum(x, 0.0)) - 1.0)


# ---------------------------------------------------------------------------
# Pure-JAX reference (faithful to the PyTorch module, un-fused parameters)
# ---------------------------------------------------------------------------
def _softmax_last_ref(x):
    m = jnp.max(x, axis=-1, keepdims=True)
    e = jnp.exp(x - m)
    return e / jnp.sum(e, axis=-1, keepdims=True)


def _efin_reference(feat, params):
    it = iter(params)
    emb = next(it)                                           # (F, HU)  x_rep.weight
    qw, qb, kw, kb, vw, vb = (next(it) for _ in range(6))    # self-attn Q/K/V
    a1w, a2w, a2b, a3w = (next(it) for _ in range(4))        # att_embed_1/2/3
    trw, trb = next(it), next(it)                            # t_rep: (1, HU) each
    c_lin = [(next(it), next(it)) for _ in range(N_FC)]      # control MLP
    clw, clb, ctw, ctb = (next(it) for _ in range(4))        # c_logit / c_tau
    u_lin = [(next(it), next(it)) for _ in range(N_FC)]      # uplift MLP
    tlw, tlb, utw, utb = (next(it) for _ in range(4))        # t_logit / u_tau

    TB, F = feat.shape
    HU = emb.shape[1]

    x_rep = feat[:, :, None] * emb[None, :, :]                       # (TB, F, HU)
    nrm = jnp.sqrt(jnp.sum(x_rep * x_rep, axis=1, keepdims=True))    # (TB, 1, HU)
    xn = x_rep / nrm

    def lin3(x, w, b=None):
        y = jnp.einsum('bfh,ho->bfo', x, w, preferred_element_type=jnp.float32)
        if b is not None:
            y = y + b[None, :, :]
        return y

    Q = lin3(xn, qw, qb)
    K = lin3(xn, kw, kb)
    V = lin3(xn, vw, vb)
    att = jnp.einsum('bqh,bkh->bqk', Q, K,
                     preferred_element_type=jnp.float32) / (HU ** 0.5)
    att = _softmax_last_ref(jax.nn.sigmoid(att))
    xx = jnp.einsum('bqk,bkh->bqh', att, V, preferred_element_type=jnp.float32)

    h = xx.reshape(TB, F * HU)
    w0, b0 = c_lin[0]
    h = jnp.dot(h, w0, preferred_element_type=jnp.float32) + b0
    for w, b in c_lin[1:]:
        h = jnp.dot(_elu(h), w, preferred_element_type=jnp.float32) + b
    c_last = _elu(h)
    c_logit = jnp.dot(c_last, clw, preferred_element_type=jnp.float32) + clb
    c_tau = jnp.dot(c_last, ctw, preferred_element_type=jnp.float32) + ctb
    c_prob = jax.nn.sigmoid(c_logit)

    t_rep = jnp.broadcast_to(trw + trb, (TB, HU))
    s1 = jax.nn.sigmoid(jnp.dot(t_rep, a1w, preferred_element_type=jnp.float32))
    s2 = jax.nn.sigmoid(lin3(x_rep, a2w, a2b))
    hh = jnp.maximum(s1[:, None, :] + s2, 0.0)
    att_logits = jnp.sum(hh * a3w[None, :, :], axis=-1)
    iatt = _softmax_last_ref(att_logits)
    xt = jnp.sum(iatt[:, :, None] * x_rep, axis=1)

    w0, b0 = u_lin[0]
    h = jnp.dot(xt, w0, preferred_element_type=jnp.float32) + b0
    for w, b in u_lin[1:]:
        h = jnp.dot(_elu(h), w, preferred_element_type=jnp.float32) + b
    u_last = _elu(h)
    t_logit = jnp.dot(u_last, tlw, preferred_element_type=jnp.float32) + tlb
    u_tau = jnp.dot(u_last, utw, preferred_element_type=jnp.float32) + utb
    t_prob = jax.nn.sigmoid(t_logit)

    return c_logit, c_prob, c_tau, t_logit, t_prob, u_tau


# ---------------------------------------------------------------------------
# Optimized in-kernel math (pre-processed / fused parameters)
# ---------------------------------------------------------------------------
def _recip(x):
    # EUP approximate reciprocal + 2 Newton steps -> full f32 accuracy,
    # keeps the divide off the VALU critical path.
    r = pl.reciprocal(x, approx=True)
    r = r * (2.0 - x * r)
    r = r * (2.0 - x * r)
    return r


def _softmax_last_fast(x):
    m = jnp.max(x, axis=-1, keepdims=True)
    e = jnp.exp(x - m)
    s = jnp.sum(e, axis=-1, keepdims=True)
    return e * _recip(s)


def _efin_fused_math(feat, kp):
    """Optimized forward on one batch tile; returns a packed (TB, 8) block."""
    it = iter(kp)
    emb = next(it)                                           # (F, HU)
    qw, qb, kw, kb, vw, vb = (next(it) for _ in range(6))
    a2w, a2b, s1, a3w = (next(it) for _ in range(4))         # s1: (1,HU) precomputed
    c_lin = [(next(it), next(it)) for _ in range(N_FC)]
    chw, chb = next(it), next(it)                            # fused c_logit||c_tau
    u_lin = [(next(it), next(it)) for _ in range(N_FC)]
    uhw, uhb = next(it), next(it)                            # fused t_logit||u_tau

    TB = feat.shape[0]
    F, HU = emb.shape
    mxu_dt = qw.dtype                                        # f32 or bf16 (MXU operands)

    def dot2(x, w):  # 2-D matmul, f32 accumulation
        return jnp.dot(x.astype(mxu_dt), w, preferred_element_type=jnp.float32)

    # x_rep and L2-normalized xn (rsqrt + eps: EUP path, no div-by-zero)
    x_rep = feat[:, :, None] * emb[None, :, :]                      # (TB, F, HU)
    ssq = jnp.sum(x_rep * x_rep, axis=1, keepdims=True)             # (TB, 1, HU)
    xn = x_rep * jax.lax.rsqrt(ssq + 1e-12)

    # ------------- self attention (control branch) -------------
    # flatten (TB,F,HU)->(TB*F,HU): layout preserving (HU stays on lanes),
    # turns TB tiny matmuls into ONE MXU matmul with M = TB*F.
    xn2 = xn.reshape(TB * F, HU)
    Q = (dot2(xn2, qw) + qb).reshape(TB, F, HU)
    K = (dot2(xn2, kw) + kb).reshape(TB, F, HU)
    V = (dot2(xn2, vw) + vb).reshape(TB, F, HU)

    att = jnp.einsum('bqh,bkh->bqk', Q.astype(mxu_dt), K.astype(mxu_dt),
                     preferred_element_type=jnp.float32) * (1.0 / math.sqrt(HU))
    att = _softmax_last_fast(jax.nn.sigmoid(att))                   # softmax(sigmoid(.))
    xx = jnp.einsum('bqk,bkh->bqh', att.astype(mxu_dt), V.astype(mxu_dt),
                    preferred_element_type=jnp.float32)             # (TB, F, HU)

    # first control-MLP layer without the (TB, F*HU) lane-relayout:
    # h = reshape(xx) @ W0  ==  sum_f xx[:, f, :] @ W0[f*HU:(f+1)*HU, :]
    w0, b0 = c_lin[0]
    h = dot2(xx[:, 0, :], w0[0:HU, :]) + b0
    for f in range(1, F):
        h = h + dot2(xx[:, f, :], w0[f * HU:(f + 1) * HU, :])
    for w, b in c_lin[1:]:
        h = dot2(_elu(h), w) + b
    c_last = _elu(h)
    c_head = dot2(c_last, chw) + chb                                # (TB, 2)
    c_logit = c_head[:, 0:1]
    c_tau = c_head[:, 1:2]
    c_prob = jax.nn.sigmoid(c_logit)

    # ------------- interaction attention (uplift branch) -------------
    # s1 (batch invariant) is precomputed in the wrapper as a (1, HU) row.
    x2 = x_rep.reshape(TB * F, HU)
    s2 = jax.nn.sigmoid(dot2(x2, a2w) + a2b)                        # (TB*F, HU)
    hh = jnp.maximum(s1 + s2, 0.0).reshape(TB, F, HU)
    att_logits = jnp.sum(hh * a3w[None, :, :], axis=-1)             # (TB, F)
    iatt = _softmax_last_fast(att_logits)
    xt = jnp.sum(iatt[:, :, None] * x_rep, axis=1)                  # (TB, HU)

    w0u, b0u = u_lin[0]
    h = dot2(xt, w0u) + b0u
    for w, b in u_lin[1:]:
        h = dot2(_elu(h), w) + b
    u_last = _elu(h)
    u_head = dot2(u_last, uhw) + uhb                                # (TB, 2)
    t_logit = u_head[:, 0:1]
    u_tau = u_head[:, 1:2]
    t_prob = jax.nn.sigmoid(t_logit)

    # single lane-packed output block: one store / writeback DMA per tile
    packed = jnp.concatenate(
        [c_logit, c_prob, c_tau, t_logit, t_prob, u_tau,
         jnp.zeros((TB, 2), jnp.float32)], axis=-1)                 # (TB, 8)
    return packed


def _efin_kernel(n_params, feat_ref, *refs):
    params = [r[...] for r in refs[:n_params]]
    out_ref = refs[n_params]
    out_ref[...] = _efin_fused_math(feat_ref[...], params).astype(out_ref.dtype)


# ---------------------------------------------------------------------------
# Wrapper: parameter pre-processing + pallas_call
# ---------------------------------------------------------------------------
def _preprocess_params(params, mxu_dtype):
    it = iter(params)
    emb = next(it)
    qw, qb, kw, kb, vw, vb = (next(it) for _ in range(6))
    a1w, a2w, a2b, a3w = (next(it) for _ in range(4))
    trw, trb = next(it), next(it)
    c_lin = [(next(it), next(it)) for _ in range(N_FC)]
    clw, clb, ctw, ctb = (next(it) for _ in range(4))
    u_lin = [(next(it), next(it)) for _ in range(N_FC)]
    tlw, tlb, utw, utb = (next(it) for _ in range(4))

    # batch-invariant uplift-attention row: sigmoid(att_embed_1(t_rep(1.0)))
    s1 = jax.nn.sigmoid(jnp.dot(trw + trb, a1w,
                                preferred_element_type=jnp.float32))    # (1, HU)

    # fuse the two width-1 heads of each branch into a single 2-column matmul
    chw = jnp.concatenate([clw, ctw], axis=1)    # (hc/4, 2)
    chb = jnp.concatenate([clb, ctb], axis=1)    # (1, 2)
    uhw = jnp.concatenate([tlw, utw], axis=1)    # (hu/4, 2)
    uhb = jnp.concatenate([tlb, utb], axis=1)    # (1, 2)

    def mx(w):  # weights that feed the MXU
        return w.astype(mxu_dtype)

    kp = [emb, mx(qw), qb, mx(kw), kb, mx(vw), vb, mx(a2w), a2b, s1, a3w]
    for w, b in c_lin:
        kp += [mx(w), b]
    kp += [mx(chw), chb]
    for w, b in u_lin:
        kp += [mx(w), b]
    kp += [mx(uhw), uhb]
    return kp


def efin_forward(feature_list, is_treat, params, *, block_b=None,
                 mxu_dtype=jnp.float32, vmem_limit_bytes=48 * 1024 * 1024):
    # NOTE: in the reference forward, is_treat only contributes its shape
    # (torch.ones_like(t_true)); it is not needed numerically in the kernel.
    del is_treat
    B, F = feature_list.shape

    # batch tile: multiple of 8, capped at 512 so padded intermediates fit
    # comfortably in v7x's 64 MiB VMEM as well as v5e/v6e.
    if block_b is None:
        TB = min(512, _round_up(B, 8))
    else:
        TB = block_b
    TB = max(8, _round_up(TB, 8))
    Bp = _round_up(B, TB)
    if Bp != B:
        feature_list = jnp.pad(feature_list, ((0, Bp - B), (0, 0)))

    kp = _preprocess_params(params, mxu_dtype)
    n_params = len(kp)

    def shared_spec(shape):
        nd = len(shape)
        return pl.BlockSpec(shape, lambda i, _nd=nd: (0,) * _nd)

    in_specs = [pl.BlockSpec((TB, F), lambda i: (i, 0))]
    in_specs += [shared_spec(p.shape) for p in kp]
    out_specs = pl.BlockSpec((TB, 8), lambda i: (i, 0))
    out_shape = jax.ShapeDtypeStruct((Bp, 8), jnp.float32)

    packed = pl.pallas_call(
        functools.partial(_efin_kernel, n_params),
        grid=(Bp // TB,),
        in_specs=in_specs,
        out_specs=out_specs,
        out_shape=out_shape,
        compiler_params=pltpu.CompilerParams(
            dimension_semantics=("parallel",),
            vmem_limit_bytes=vmem_limit_bytes),
    )(feature_list, *kp)

    packed = packed[:B]
    return tuple(packed[:, j:j + 1] for j in range(6))


# ---------------------------------------------------------------------------
# Deterministic parameter init (PyTorch-Linear-style)
# ---------------------------------------------------------------------------
def init_efin_params(key, input_dim, hu_dim, hc_dim):
    ki = iter(jax.random.split(key, 128))

    def linear(in_d, out_d, bias=True):
        bound = 1.0 / math.sqrt(in_d)
        w = jax.random.uniform(next(ki), (in_d, out_d), jnp.float32, -bound, bound)
        if not bias:
            return [w]
        b = jax.random.uniform(next(ki), (1, out_d), jnp.float32, -bound, bound)
        return [w, b]

    params = []
    params.append(jax.random.normal(next(ki), (input_dim, hu_dim), jnp.float32))
    for _ in range(3):                                  # Q_w, K_w, V_w
        params.extend(linear(hu_dim, hu_dim))
    params.extend(linear(hu_dim, hu_dim, bias=False))   # att_embed_1 (no bias)
    params.extend(linear(hu_dim, hu_dim))               # att_embed_2 (bias)
    bound = 1.0 / math.sqrt(hu_dim)                     # att_embed_3 (no bias), (1, hu)
    params.append(jax.random.uniform(next(ki), (1, hu_dim), jnp.float32, -bound, bound))
    params.extend(linear(1, hu_dim))                    # t_rep as (1,hu) W^T + (1,hu) b
    c_cfg = [input_dim * hu_dim, hc_dim, hc_dim, hc_dim // 2, hc_dim // 2, hc_dim // 4]
    for i in range(1, len(c_cfg)):                      # control MLP (5 Linear layers)
        params.extend(linear(c_cfg[i - 1], c_cfg[i]))
    params.extend(linear(hc_dim // 4, 1))               # c_logit
    params.extend(linear(hc_dim // 4, 1))               # c_tau
    u_cfg = [hu_dim, hu_dim, hu_dim, hu_dim // 2, hu_dim // 2, hu_dim // 4]
    for i in range(1, len(u_cfg)):                      # uplift MLP (5 Linear layers)
        params.extend(linear(u_cfg[i - 1], u_cfg[i]))
    params.extend(linear(hu_dim // 4, 1))               # t_logit
    params.extend(linear(hu_dim // 4, 1))               # u_tau
    return params


if __name__ == "__main__":
    # small, module-consistent shapes; B deliberately NOT a multiple of the
    # tile so the padding / remainder path is exercised too.
    input_dim, hu_dim, hc_dim = 8, 32, 64   # num_layers=5, act='elu', is_self=None
    B = 60

    key = jax.random.PRNGKey(0)
    k_feat, k_treat, k_param = jax.random.split(key, 3)
    feature_list = jax.random.normal(k_feat, (B, input_dim), jnp.float32)
    is_treat = (jax.random.uniform(k_treat, (B,)) > 0.5).astype(jnp.float32)
    params = init_efin_params(k_param, input_dim, hu_dim, hc_dim)

    refs = _efin_reference(feature_list, params)
    names = ("c_logit", "c_prob", "c_tau", "t_logit", "t_prob", "u_tau")

    # f32 MXU path, small tile so the 1-D grid has several pipelined steps
    outs = jax.block_until_ready(
        efin_forward(feature_list, is_treat, params, block_b=16))
    for name, o, r in zip(names, outs, refs):
        assert o.shape == (B, 1), (name, o.shape)
        assert bool(jnp.all(jnp.isfinite(o))), name
        assert bool(jnp.allclose(o, r, rtol=1e-4, atol=1e-4)), (
            name, float(jnp.max(jnp.abs(o - r))))

    # bf16 MXU-operand path (v6e/v7x friendly); elementwise math stays f32
    outs_bf16 = jax.block_until_ready(
        efin_forward(feature_list, is_treat, params, block_b=16,
                     mxu_dtype=jnp.bfloat16))
    for name, o, r in zip(names, outs_bf16, refs):
        assert bool(jnp.all(jnp.isfinite(o))), name
        assert bool(jnp.allclose(o, r, rtol=1e-1, atol=1e-1)), (
            name, float(jnp.max(jnp.abs(o - r))))

    print("KERNEL_OK")
</pallas_src>

<mosaic_0001>
module attributes {stable_mosaic.version = 11 : i64} {
  func.func @_efin_kernel(%arg0: i32, %arg1: memref<16x8xf32, #tpu.memory_space<vmem>>, %arg2: memref<8x32xf32, #tpu.memory_space<vmem>>, %arg3: memref<32x32xf32, #tpu.memory_space<vmem>>, %arg4: memref<1x32xf32, #tpu.memory_space<vmem>>, %arg5: memref<32x32xf32, #tpu.memory_space<vmem>>, %arg6: memref<1x32xf32, #tpu.memory_space<vmem>>, %arg7: memref<32x32xf32, #tpu.memory_space<vmem>>, %arg8: memref<1x32xf32, #tpu.memory_space<vmem>>, %arg9: memref<32x32xf32, #tpu.memory_space<vmem>>, %arg10: memref<1x32xf32, #tpu.memory_space<vmem>>, %arg11: memref<1x32xf32, #tpu.memory_space<vmem>>, %arg12: memref<1x32xf32, #tpu.memory_space<vmem>>, %arg13: memref<256x64xf32, #tpu.memory_space<vmem>>, %arg14: memref<1x64xf32, #tpu.memory_space<vmem>>, %arg15: memref<64x64xf32, #tpu.memory_space<vmem>>, %arg16: memref<1x64xf32, #tpu.memory_space<vmem>>, %arg17: memref<64x32xf32, #tpu.memory_space<vmem>>, %arg18: memref<1x32xf32, #tpu.memory_space<vmem>>, %arg19: memref<32x32xf32, #tpu.memory_space<vmem>>, %arg20: memref<1x32xf32, #tpu.memory_space<vmem>>, %arg21: memref<32x16xf32, #tpu.memory_space<vmem>>, %arg22: memref<1x16xf32, #tpu.memory_space<vmem>>, %arg23: memref<16x2xf32, #tpu.memory_space<vmem>>, %arg24: memref<1x2xf32, #tpu.memory_space<vmem>>, %arg25: memref<32x32xf32, #tpu.memory_space<vmem>>, %arg26: memref<1x32xf32, #tpu.memory_space<vmem>>, %arg27: memref<32x32xf32, #tpu.memory_space<vmem>>, %arg28: memref<1x32xf32, #tpu.memory_space<vmem>>, %arg29: memref<32x16xf32, #tpu.memory_space<vmem>>, %arg30: memref<1x16xf32, #tpu.memory_space<vmem>>, %arg31: memref<16x16xf32, #tpu.memory_space<vmem>>, %arg32: memref<1x16xf32, #tpu.memory_space<vmem>>, %arg33: memref<16x8xf32, #tpu.memory_space<vmem>>, %arg34: memref<1x8xf32, #tpu.memory_space<vmem>>, %arg35: memref<8x2xf32, #tpu.memory_space<vmem>>, %arg36: memref<1x2xf32, #tpu.memory_space<vmem>>, %arg37: memref<16x8xf32, #tpu.memory_space<vmem>>) attributes {dimension_semantics = [#tpu.dimension_semantics<parallel>], iteration_bounds = array<i64: 4>, scalar_prefetch = 0 : i64, scratch_operands = 0 : i64, tpu.core_type = #tpu.core_type<tc>, window_params = [{transform_indices = @transform_0, window_bounds = array<i64: 16, 8>}, {pipeline_mode = #tpu.pipeline_mode<synchronous>, transform_indices = @transform_1, window_bounds = array<i64: 8, 32>}, {pipeline_mode = #tpu.pipeline_mode<synchronous>, transform_indices = @transform_2, window_bounds = array<i64: 32, 32>}, {pipeline_mode = #tpu.pipeline_mode<synchronous>, transform_indices = @transform_3, window_bounds = array<i64: 1, 32>}, {pipeline_mode = #tpu.pipeline_mode<synchronous>, transform_indices = @transform_4, window_bounds = array<i64: 32, 32>}, {pipeline_mode = #tpu.pipeline_mode<synchronous>, transform_indices = @transform_5, window_bounds = array<i64: 1, 32>}, {pipeline_mode = #tpu.pipeline_mode<synchronous>, transform_indices = @transform_6, window_bounds = array<i64: 32, 32>}, {pipeline_mode = #tpu.pipeline_mode<synchronous>, transform_indices = @transform_7, window_bounds = array<i64: 1, 32>}, {pipeline_mode = #tpu.pipeline_mode<synchronous>, transform_indices = @transform_8, window_bounds = array<i64: 32, 32>}, {pipeline_mode = #tpu.pipeline_mode<synchronous>, transform_indices = @transform_9, window_bounds = array<i64: 1, 32>}, {pipeline_mode = #tpu.pipeline_mode<synchronous>, transform_indices = @transform_10, window_bounds = array<i64: 1, 32>}, {pipeline_mode = #tpu.pipeline_mode<synchronous>, transform_indices = @transform_11, window_bounds = array<i64: 1, 32>}, {pipeline_mode = #tpu.pipeline_mode<synchronous>, transform_indices = @transform_12, window_bounds = array<i64: 256, 64>}, {pipeline_mode = #tpu.pipeline_mode<synchronous>, transform_indices = @transform_13, window_bounds = array<i64: 1, 64>}, {pipeline_mode = #tpu.pipeline_mode<synchronous>, transform_indices = @transform_14, window_bounds = array<i64: 64, 64>}, {pipeline_mode = #tpu.pipeline_mode<synchronous>, transform_indices = @transform_15, window_bounds = array<i64: 1, 64>}, {pipeline_mode = #tpu.pipeline_mode<synchronous>, transform_indices = @transform_16, window_bounds = array<i64: 64, 32>}, {pipeline_mode = #tpu.pipeline_mode<synchronous>, transform_indices = @transform_17, window_bounds = array<i64: 1, 32>}, {pipeline_mode = #tpu.pipeline_mode<synchronous>, transform_indices = @transform_18, window_bounds = array<i64: 32, 32>}, {pipeline_mode = #tpu.pipeline_mode<synchronous>, transform_indices = @transform_19, window_bounds = array<i64: 1, 32>}, {pipeline_mode = #tpu.pipeline_mode<synchronous>, transform_indices = @transform_20, window_bounds = array<i64: 32, 16>}, {pipeline_mode = #tpu.pipeline_mode<synchronous>, transform_indices = @transform_21, window_bounds = array<i64: 1, 16>}, {pipeline_mode = #tpu.pipeline_mode<synchronous>, transform_indices = @transform_22, window_bounds = array<i64: 16, 2>}, {pipeline_mode = #tpu.pipeline_mode<synchronous>, transform_indices = @transform_23, window_bounds = array<i64: 1, 2>}, {pipeline_mode = #tpu.pipeline_mode<synchronous>, transform_indices = @transform_24, window_bounds = array<i64: 32, 32>}, {pipeline_mode = #tpu.pipeline_mode<synchronous>, transform_indices = @transform_25, window_bounds = array<i64: 1, 32>}, {pipeline_mode = #tpu.pipeline_mode<synchronous>, transform_indices = @transform_26, window_bounds = array<i64: 32, 32>}, {pipeline_mode = #tpu.pipeline_mode<synchronous>, transform_indices = @transform_27, window_bounds = array<i64: 1, 32>}, {pipeline_mode = #tpu.pipeline_mode<synchronous>, transform_indices = @transform_28, window_bounds = array<i64: 32, 16>}, {pipeline_mode = #tpu.pipeline_mode<synchronous>, transform_indices = @transform_29, window_bounds = array<i64: 1, 16>}, {pipeline_mode = #tpu.pipeline_mode<synchronous>, transform_indices = @transform_30, window_bounds = array<i64: 16, 16>}, {pipeline_mode = #tpu.pipeline_mode<synchronous>, transform_indices = @transform_31, window_bounds = array<i64: 1, 16>}, {pipeline_mode = #tpu.pipeline_mode<synchronous>, transform_indices = @transform_32, window_bounds = array<i64: 16, 8>}, {pipeline_mode = #tpu.pipeline_mode<synchronous>, transform_indices = @transform_33, window_bounds = array<i64: 1, 8>}, {pipeline_mode = #tpu.pipeline_mode<synchronous>, transform_indices = @transform_34, window_bounds = array<i64: 8, 2>}, {pipeline_mode = #tpu.pipeline_mode<synchronous>, transform_indices = @transform_35, window_bounds = array<i64: 1, 2>}, {transform_indices = @transform_36, window_bounds = array<i64: 16, 8>}]} {
    %c0 = arith.constant 0 : index
    %c0_0 = arith.constant 0 : index
    %0 = vector.load %arg2[%c0, %c0_0] : memref<8x32xf32, #tpu.memory_space<vmem>>, vector<8x32xf32>
    %c0_1 = arith.constant 0 : index
    %c0_2 = arith.constant 0 : index
    %1 = vector.load %arg3[%c0_1, %c0_2] : memref<32x32xf32, #tpu.memory_space<vmem>>, vector<32x32xf32>
    %c0_3 = arith.constant 0 : index
    %c0_4 = arith.constant 0 : index
    %2 = vector.load %arg4[%c0_3, %c0_4] : memref<1x32xf32, #tpu.memory_space<vmem>>, vector<1x32xf32>
    %c0_5 = arith.constant 0 : index
    %c0_6 = arith.constant 0 : index
    %3 = vector.load %arg5[%c0_5, %c0_6] : memref<32x32xf32, #tpu.memory_space<vmem>>, vector<32x32xf32>
    %c0_7 = arith.constant 0 : index
    %c0_8 = arith.constant 0 : index
    %4 = vector.load %arg6[%c0_7, %c0_8] : memref<1x32xf32, #tpu.memory_space<vmem>>, vector<1x32xf32>
    %c0_9 = arith.constant 0 : index
    %c0_10 = arith.constant 0 : index
    %5 = vector.load %arg7[%c0_9, %c0_10] : memref<32x32xf32, #tpu.memory_space<vmem>>, vector<32x32xf32>
    %c0_11 = arith.constant 0 : index
    %c0_12 = arith.constant 0 : index
    %6 = vector.load %arg8[%c0_11, %c0_12] : memref<1x32xf32, #tpu.memory_space<vmem>>, vector<1x32xf32>
    %c0_13 = arith.constant 0 : index
    %c0_14 = arith.constant 0 : index
    %7 = vector.load %arg9[%c0_13, %c0_14] : memref<32x32xf32, #tpu.memory_space<vmem>>, vector<32x32xf32>
    %c0_15 = arith.constant 0 : index
    %c0_16 = arith.constant 0 : index
    %8 = vector.load %arg10[%c0_15, %c0_16] : memref<1x32xf32, #tpu.memory_space<vmem>>, vector<1x32xf32>
    %c0_17 = arith.constant 0 : index
    %c0_18 = arith.constant 0 : index
    %9 = vector.load %arg11[%c0_17, %c0_18] : memref<1x32xf32, #tpu.memory_space<vmem>>, vector<1x32xf32>
    %c0_19 = arith.constant 0 : index
    %c0_20 = arith.constant 0 : index
    %10 = vector.load %arg12[%c0_19, %c0_20] : memref<1x32xf32, #tpu.memory_space<vmem>>, vector<1x32xf32>
    %c0_21 = arith.constant 0 : index
    %c0_22 = arith.constant 0 : index
    %11 = vector.load %arg13[%c0_21, %c0_22] : memref<256x64xf32, #tpu.memory_space<vmem>>, vector<256x64xf32>
    %c0_23 = arith.constant 0 : index
    %c0_24 = arith.constant 0 : index
    %12 = vector.load %arg14[%c0_23, %c0_24] : memref<1x64xf32, #tpu.memory_space<vmem>>, vector<1x64xf32>
    %c0_25 = arith.constant 0 : index
    %c0_26 = arith.constant 0 : index
    %13 = vector.load %arg15[%c0_25, %c0_26] : memref<64x64xf32, #tpu.memory_space<vmem>>, vector<64x64xf32>
    %c0_27 = arith.constant 0 : index
    %c0_28 = arith.constant 0 : index
    %14 = vector.load %arg16[%c0_27, %c0_28] : memref<1x64xf32, #tpu.memory_space<vmem>>, vector<1x64xf32>
    %c0_29 = arith.constant 0 : index
    %c0_30 = arith.constant 0 : index
    %15 = vector.load %arg17[%c0_29, %c0_30] : memref<64x32xf32, #tpu.memory_space<vmem>>, vector<64x32xf32>
    %c0_31 = arith.constant 0 : index
    %c0_32 = arith.constant 0 : index
    %16 = vector.load %arg18[%c0_31, %c0_32] : memref<1x32xf32, #tpu.memory_space<vmem>>, vector<1x32xf32>
    %c0_33 = arith.constant 0 : index
    %c0_34 = arith.constant 0 : index
    %17 = vector.load %arg19[%c0_33, %c0_34] : memref<32x32xf32, #tpu.memory_space<vmem>>, vector<32x32xf32>
    %c0_35 = arith.constant 0 : index
    %c0_36 = arith.constant 0 : index
    %18 = vector.load %arg20[%c0_35, %c0_36] : memref<1x32xf32, #tpu.memory_space<vmem>>, vector<1x32xf32>
    %c0_37 = arith.constant 0 : index
    %c0_38 = arith.constant 0 : index
    %19 = vector.load %arg21[%c0_37, %c0_38] : memref<32x16xf32, #tpu.memory_space<vmem>>, vector<32x16xf32>
    %c0_39 = arith.constant 0 : index
    %c0_40 = arith.constant 0 : index
    %20 = vector.load %arg22[%c0_39, %c0_40] : memref<1x16xf32, #tpu.memory_space<vmem>>, vector<1x16xf32>
    %c0_41 = arith.constant 0 : index
    %c0_42 = arith.constant 0 : index
    %21 = vector.load %arg23[%c0_41, %c0_42] : memref<16x2xf32, #tpu.memory_space<vmem>>, vector<16x2xf32>
    %c0_43 = arith.constant 0 : index
    %c0_44 = arith.constant 0 : index
    %22 = vector.load %arg24[%c0_43, %c0_44] : memref<1x2xf32, #tpu.memory_space<vmem>>, vector<1x2xf32>
    %c0_45 = arith.constant 0 : index
    %c0_46 = arith.constant 0 : index
    %23 = vector.load %arg25[%c0_45, %c0_46] : memref<32x32xf32, #tpu.memory_space<vmem>>, vector<32x32xf32>
    %c0_47 = arith.constant 0 : index
    %c0_48 = arith.constant 0 : index
    %24 = vector.load %arg26[%c0_47, %c0_48] : memref<1x32xf32, #tpu.memory_space<vmem>>, vector<1x32xf32>
    %c0_49 = arith.constant 0 : index
    %c0_50 = arith.constant 0 : index
    %25 = vector.load %arg27[%c0_49, %c0_50] : memref<32x32xf32, #tpu.memory_space<vmem>>, vector<32x32xf32>
    %c0_51 = arith.constant 0 : index
    %c0_52 = arith.constant 0 : index
    %26 = vector.load %arg28[%c0_51, %c0_52] : memref<1x32xf32, #tpu.memory_space<vmem>>, vector<1x32xf32>
    %c0_53 = arith.constant 0 : index
    %c0_54 = arith.constant 0 : index
    %27 = vector.load %arg29[%c0_53, %c0_54] : memref<32x16xf32, #tpu.memory_space<vmem>>, vector<32x16xf32>
    %c0_55 = arith.constant 0 : index
    %c0_56 = arith.constant 0 : index
    %28 = vector.load %arg30[%c0_55, %c0_56] : memref<1x16xf32, #tpu.memory_space<vmem>>, vector<1x16xf32>
    %c0_57 = arith.constant 0 : index
    %c0_58 = arith.constant 0 : index
    %29 = vector.load %arg31[%c0_57, %c0_58] : memref<16x16xf32, #tpu.memory_space<vmem>>, vector<16x16xf32>
    %c0_59 = arith.constant 0 : index
    %c0_60 = arith.constant 0 : index
    %30 = vector.load %arg32[%c0_59, %c0_60] : memref<1x16xf32, #tpu.memory_space<vmem>>, vector<1x16xf32>
    %c0_61 = arith.constant 0 : index
    %c0_62 = arith.constant 0 : index
    %31 = vector.load %arg33[%c0_61, %c0_62] : memref<16x8xf32, #tpu.memory_space<vmem>>, vector<16x8xf32>
    %c0_63 = arith.constant 0 : index
    %c0_64 = arith.constant 0 : index
    %32 = vector.load %arg34[%c0_63, %c0_64] : memref<1x8xf32, #tpu.memory_space<vmem>>, vector<1x8xf32>
    %c0_65 = arith.constant 0 : index
    %c0_66 = arith.constant 0 : index
    %33 = vector.load %arg35[%c0_65, %c0_66] : memref<8x2xf32, #tpu.memory_space<vmem>>, vector<8x2xf32>
    %c0_67 = arith.constant 0 : index
    %c0_68 = arith.constant 0 : index
    %34 = vector.load %arg36[%c0_67, %c0_68] : memref<1x2xf32, #tpu.memory_space<vmem>>, vector<1x2xf32>
    %c0_69 = arith.constant 0 : index
    %c0_70 = arith.constant 0 : index
    %35 = vector.load %arg1[%c0_69, %c0_70] : memref<16x8xf32, #tpu.memory_space<vmem>>, vector<16x8xf32>
    %36 = vector.shape_cast %35 : vector<16x8xf32> to vector<16x8x1xf32>
    %37 = vector.shape_cast %0 : vector<8x32xf32> to vector<1x8x32xf32>
    %38 = vector.broadcast %36 : vector<16x8x1xf32> to vector<16x8x32xf32>
    %39 = vector.broadcast %37 : vector<1x8x32xf32> to vector<16x8x32xf32>
    %40 = arith.mulf %38, %39 : vector<16x8x32xf32>
    %41 = arith.mulf %40, %40 : vector<16x8x32xf32>
    %cst = arith.constant dense<0.000000e+00> : vector<16x32xf32>
    %42 = vector.multi_reduction <add>, %41, %cst [1] : vector<16x8x32xf32> to vector<16x32xf32>
    %43 = vector.shape_cast %42 : vector<16x32xf32> to vector<16x1x32xf32>
    %cst_71 = arith.constant 9.99999996E-13 : f32
    %44 = vector.broadcast %cst_71 : f32 to vector<16x1x32xf32>
    %45 = arith.addf %43, %44 : vector<16x1x32xf32>
    %46 = math.rsqrt %45 : vector<16x1x32xf32>
    %47 = vector.broadcast %46 : vector<16x1x32xf32> to vector<16x8x32xf32>
    %48 = arith.mulf %40, %47 : vector<16x8x32xf32>
    %49 = vector.shape_cast %48 : vector<16x8x32xf32> to vector<128x32xf32>
    %cst_72 = arith.constant dense<0.000000e+00> : vector<128x32xf32>
    %50 = tpu.matmul %49, %1, %cst_72 {dimension_numbers = #tpu.dot_dimension_numbers<[1], [0], [0], [1], [0, 0, 1, 1], [], []>} : vector<128x32xf32>, vector<32x32xf32>, vector<128x32xf32> -> vector<128x32xf32>
    %51 = vector.broadcast %2 : vector<1x32xf32> to vector<128x32xf32>
    %52 = arith.addf %50, %51 : vector<128x32xf32>
    %53 = vector.shape_cast %52 : vector<128x32xf32> to vector<16x8x32xf32>
    %cst_73 = arith.constant dense<0.000000e+00> : vector<128x32xf32>
    %54 = tpu.matmul %49, %3, %cst_73 {dimension_numbers = #tpu.dot_dimension_numbers<[1], [0], [0], [1], [0, 0, 1, 1], [], []>} : vector<128x32xf32>, vector<32x32xf32>, vector<128x32xf32> -> vector<128x32xf32>
    %55 = vector.broadcast %4 : vector<1x32xf32> to vector<128x32xf32>
    %56 = arith.addf %54, %55 : vector<128x32xf32>
    %57 = vector.shape_cast %56 : vector<128x32xf32> to vector<16x8x32xf32>
    %cst_74 = arith.constant dense<0.000000e+00> : vector<128x32xf32>
    %58 = tpu.matmul %49, %5, %cst_74 {dimension_numbers = #tpu.dot_dimension_numbers<[1], [0], [0], [1], [0, 0, 1, 1], [], []>} : vector<128x32xf32>, vector<32x32xf32>, vector<128x32xf32> -> vector<128x32xf32>
    %59 = vector.broadcast %6 : vector<1x32xf32> to vector<128x32xf32>
    %60 = arith.addf %58, %59 : vector<128x32xf32>
    %61 = vector.shape_cast %60 : vector<128x32xf32> to vector<16x8x32xf32>
    "tpu.trace_start"() <{level = 10 : i32, message = "bqh,bkh->bqk"}> : () -> ()
    %cst_75 = arith.constant dense<0.000000e+00> : vector<16x8x8xf32>
    %62 = tpu.matmul %53, %57, %cst_75 {dimension_numbers = #tpu.dot_dimension_numbers<[2], [2], [1], [1], [0, 0, 0, 1, 1, 1], [0], [0]>} : vector<16x8x32xf32>, vector<16x8x32xf32>, vector<16x8x8xf32> -> vector<16x8x8xf32>
    "tpu.trace_stop"() : () -> ()
    %cst_76 = arith.constant 0.176776692 : f32
    %63 = vector.broadcast %cst_76 : f32 to vector<16x8x8xf32>
    %64 = arith.mulf %62, %63 : vector<16x8x8xf32>
    %65 = arith.negf %64 : vector<16x8x8xf32>
    %66 = math.exp %65 : vector<16x8x8xf32>
    %cst_77 = arith.constant 1.000000e+00 : f32
    %67 = vector.broadcast %cst_77 : f32 to vector<16x8x8xf32>
    %68 = arith.addf %67, %66 : vector<16x8x8xf32>
    %69 = arith.divf %67, %68 : vector<16x8x8xf32>
    %cst_78 = arith.constant dense<0xFF800000> : vector<16x8xf32>
    %70 = vector.multi_reduction <maximumf>, %69, %cst_78 [2] : vector<16x8x8xf32> to vector<16x8xf32>
    %71 = vector.shape_cast %70 : vector<16x8xf32> to vector<16x8x1xf32>
    %72 = vector.broadcast %71 : vector<16x8x1xf32> to vector<16x8x8xf32>
    %73 = arith.subf %69, %72 : vector<16x8x8xf32>
    %74 = math.exp %73 : vector<16x8x8xf32>
    %cst_79 = arith.constant dense<0.000000e+00> : vector<16x8xf32>
    %75 = vector.multi_reduction <add>, %74, %cst_79 [2] : vector<16x8x8xf32> to vector<16x8xf32>
    %76 = vector.shape_cast %75 : vector<16x8xf32> to vector<16x8x1xf32>
    %77 = tpu.reciprocal %76 {approx = true} : vector<16x8x1xf32> -> vector<16x8x1xf32>
    %78 = arith.mulf %76, %77 : vector<16x8x1xf32>
    %cst_80 = arith.constant 2.000000e+00 : f32
    %79 = vector.broadcast %cst_80 : f32 to vector<16x8x1xf32>
    %80 = arith.subf %79, %78 : vector<16x8x1xf32>
    %81 = arith.mulf %77, %80 : vector<16x8x1xf32>
    %82 = arith.mulf %76, %81 : vector<16x8x1xf32>
    %cst_81 = arith.constant 2.000000e+00 : f32
    %83 = vector.broadcast %cst_81 : f32 to vector<16x8x1xf32>
    %84 = arith.subf %83, %82 : vector<16x8x1xf32>
    %85 = arith.mulf %81, %84 : vector<16x8x1xf32>
    %86 = vector.broadcast %85 : vector<16x8x1xf32> to vector<16x8x8xf32>
    %87 = arith.mulf %74, %86 : vector<16x8x8xf32>
    "tpu.trace_start"() <{level = 10 : i32, message = "bqk,bkh->bqh"}> : () -> ()
    %cst_82 = arith.constant dense<0.000000e+00> : vector<16x8x32xf32>
    %88 = tpu.matmul %87, %61, %cst_82 {dimension_numbers = #tpu.dot_dimension_numbers<[2], [1], [1], [2], [0, 0, 0, 1, 1, 2], [0], [0]>} : vector<16x8x8xf32>, vector<16x8x32xf32>, vector<16x8x32xf32> -> vector<16x8x32xf32>
    "tpu.trace_stop"() : () -> ()
    %89 = vector.extract_strided_slice %88 {offsets = [0, 0, 0], sizes = [16, 1, 32], strides = [1, 1, 1]} : vector<16x8x32xf32> to vector<16x1x32xf32>
    %90 = vector.shape_cast %89 : vector<16x1x32xf32> to vector<16x32xf32>
    %91 = vector.extract_strided_slice %11 {offsets = [0, 0], sizes = [32, 64], strides = [1, 1]} : vector<256x64xf32> to vector<32x64xf32>
    %cst_83 = arith.constant dense<0.000000e+00> : vector<16x64xf32>
    %92 = tpu.matmul %90, %91, %cst_83 {dimension_numbers = #tpu.dot_dimension_numbers<[1], [0], [0], [1], [0, 0, 1, 1], [], []>} : vector<16x32xf32>, vector<32x64xf32>, vector<16x64xf32> -> vector<16x64xf32>
    %93 = vector.broadcast %12 : vector<1x64xf32> to vector<16x64xf32>
    %94 = arith.addf %92, %93 : vector<16x64xf32>
    %95 = vector.extract_strided_slice %88 {offsets = [0, 1, 0], sizes = [16, 1, 32], strides = [1, 1, 1]} : vector<16x8x32xf32> to vector<16x1x32xf32>
    %96 = vector.shape_cast %95 : vector<16x1x32xf32> to vector<16x32xf32>
    %97 = vector.extract_strided_slice %11 {offsets = [32, 0], sizes = [32, 64], strides = [1, 1]} : vector<256x64xf32> to vector<32x64xf32>
    %cst_84 = arith.constant dense<0.000000e+00> : vector<16x64xf32>
    %98 = tpu.matmul %96, %97, %cst_84 {dimension_numbers = #tpu.dot_dimension_numbers<[1], [0], [0], [1], [0, 0, 1, 1], [], []>} : vector<16x32xf32>, vector<32x64xf32>, vector<16x64xf32> -> vector<16x64xf32>
    %99 = arith.addf %94, %98 : vector<16x64xf32>
    %100 = vector.extract_strided_slice %88 {offsets = [0, 2, 0], sizes = [16, 1, 32], strides = [1, 1, 1]} : vector<16x8x32xf32> to vector<16x1x32xf32>
    %101 = vector.shape_cast %100 : vector<16x1x32xf32> to vector<16x32xf32>
    %102 = vector.extract_strided_slice %11 {offsets = [64, 0], sizes = [32, 64], strides = [1, 1]} : vector<256x64xf32> to vector<32x64xf32>
    %cst_85 = arith.constant dense<0.000000e+00> : vector<16x64xf32>
    %103 = tpu.matmul %101, %102, %cst_85 {dimension_numbers = #tpu.dot_dimension_numbers<[1], [0], [0], [1], [0, 0, 1, 1], [], []>} : vector<16x32xf32>, vector<32x64xf32>, vector<16x64xf32> -> vector<16x64xf32>
    %104 = arith.addf %99, %103 : vector<16x64xf32>
    %105 = vector.extract_strided_slice %88 {offsets = [0, 3, 0], sizes = [16, 1, 32], strides = [1, 1, 1]} : vector<16x8x32xf32> to vector<16x1x32xf32>
    %106 = vector.shape_cast %105 : vector<16x1x32xf32> to vector<16x32xf32>
    %107 = vector.extract_strided_slice %11 {offsets = [96, 0], sizes = [32, 64], strides = [1, 1]} : vector<256x64xf32> to vector<32x64xf32>
    %cst_86 = arith.constant dense<0.000000e+00> : vector<16x64xf32>
    %108 = tpu.matmul %106, %107, %cst_86 {dimension_numbers = #tpu.dot_dimension_numbers<[1], [0], [0], [1], [0, 0, 1, 1], [], []>} : vector<16x32xf32>, vector<32x64xf32>, vector<16x64xf32> -> vector<16x64xf32>
    %109 = arith.addf %104, %108 : vector<16x64xf32>
    %110 = vector.extract_strided_slice %88 {offsets = [0, 4, 0], sizes = [16, 1, 32], strides = [1, 1, 1]} : vector<16x8x32xf32> to vector<16x1x32xf32>
    %111 = vector.shape_cast %110 : vector<16x1x32xf32> to vector<16x32xf32>
    %112 = vector.extract_strided_slice %11 {offsets = [128, 0], sizes = [32, 64], strides = [1, 1]} : vector<256x64xf32> to vector<32x64xf32>
    %cst_87 = arith.constant dense<0.000000e+00> : vector<16x64xf32>
    %113 = tpu.matmul %111, %112, %cst_87 {dimension_numbers = #tpu.dot_dimension_numbers<[1], [0], [0], [1], [0, 0, 1, 1], [], []>} : vector<16x32xf32>, vector<32x64xf32>, vector<16x64xf32> -> vector<16x64xf32>
    %114 = arith.addf %109, %113 : vector<16x64xf32>
    %115 = vector.extract_strided_slice %88 {offsets = [0, 5, 0], sizes = [16, 1, 32], strides = [1, 1, 1]} : vector<16x8x32xf32> to vector<16x1x32xf32>
    %116 = vector.shape_cast %115 : vector<16x1x32xf32> to vector<16x32xf32>
    %117 = vector.extract_strided_slice %11 {offsets = [160, 0], sizes = [32, 64], strides = [1, 1]} : vector<256x64xf32> to vector<32x64xf32>
    %cst_88 = arith.constant dense<0.000000e+00> : vector<16x64xf32>
    %118 = tpu.matmul %116, %117, %cst_88 {dimension_numbers = #tpu.dot_dimension_numbers<[1], [0], [0], [1], [0, 0, 1, 1], [], []>} : vector<16x32xf32>, vector<32x64xf32>, vector<16x64xf32> -> vector<16x64xf32>
    %119 = arith.addf %114, %118 : vector<16x64xf32>
    %120 = vector.extract_strided_slice %88 {offsets = [0, 6, 0], sizes = [16, 1, 32], strides = [1, 1, 1]} : vector<16x8x32xf32> to vector<16x1x32xf32>
    %121 = vector.shape_cast %120 : vector<16x1x32xf32> to vector<16x32xf32>
    %122 = vector.extract_strided_slice %11 {offsets = [192, 0], sizes = [32, 64], strides = [1, 1]} : vector<256x64xf32> to vector<32x64xf32>
    %cst_89 = arith.constant dense<0.000000e+00> : vector<16x64xf32>
    %123 = tpu.matmul %121, %122, %cst_89 {dimension_numbers = #tpu.dot_dimension_numbers<[1], [0], [0], [1], [0, 0, 1, 1], [], []>} : vector<16x32xf32>, vector<32x64xf32>, vector<16x64xf32> -> vector<16x64xf32>
    %124 = arith.addf %119, %123 : vector<16x64xf32>
    %125 = vector.extract_strided_slice %88 {offsets = [0, 7, 0], sizes = [16, 1, 32], strides = [1, 1, 1]} : vector<16x8x32xf32> to vector<16x1x32xf32>
    %126 = vector.shape_cast %125 : vector<16x1x32xf32> to vector<16x32xf32>
    %127 = vector.extract_strided_slice %11 {offsets = [224, 0], sizes = [32, 64], strides = [1, 1]} : vector<256x64xf32> to vector<32x64xf32>
    %cst_90 = arith.constant dense<0.000000e+00> : vector<16x64xf32>
    %128 = tpu.matmul %126, %127, %cst_90 {dimension_numbers = #tpu.dot_dimension_numbers<[1], [0], [0], [1], [0, 0, 1, 1], [], []>} : vector<16x32xf32>, vector<32x64xf32>, vector<16x64xf32> -> vector<16x64xf32>
    %129 = arith.addf %124, %128 : vector<16x64xf32>
    %cst_91 = arith.constant 0.000000e+00 : f32
    %130 = vector.broadcast %cst_91 : f32 to vector<16x64xf32>
    %131 = arith.cmpf ogt, %129, %130 : vector<16x64xf32>
    %cst_92 = arith.constant 0.000000e+00 : f32
    %132 = vector.broadcast %cst_92 : f32 to vector<16x64xf32>
    %133 = arith.minimumf %129, %132 : vector<16x64xf32>
    %134 = math.exp %133 : vector<16x64xf32>
    %cst_93 = arith.constant 1.000000e+00 : f32
    %135 = vector.broadcast %cst_93 : f32 to vector<16x64xf32>
    %136 = arith.subf %134, %135 : vector<16x64xf32>
    %137 = arith.select %131, %129, %136 : vector<16x64xi1>, vector<16x64xf32>
    %cst_94 = arith.constant dense<0.000000e+00> : vector<16x64xf32>
    %138 = tpu.matmul %137, %13, %cst_94 {dimension_numbers = #tpu.dot_dimension_numbers<[1], [0], [0], [1], [0, 0, 1, 1], [], []>} : vector<16x64xf32>, vector<64x64xf32>, vector<16x64xf32> -> vector<16x64xf32>
    %139 = vector.broadcast %14 : vector<1x64xf32> to vector<16x64xf32>
    %140 = arith.addf %138, %139 : vector<16x64xf32>
    %cst_95 = arith.constant 0.000000e+00 : f32
    %141 = vector.broadcast %cst_95 : f32 to vector<16x64xf32>
    %142 = arith.cmpf ogt, %140, %141 : vector<16x64xf32>
    %cst_96 = arith.constant 0.000000e+00 : f32
    %143 = vector.broadcast %cst_96 : f32 to vector<16x64xf32>
    %144 = arith.minimumf %140, %143 : vector<16x64xf32>
    %145 = math.exp %144 : vector<16x64xf32>
    %cst_97 = arith.constant 1.000000e+00 : f32
    %146 = vector.broadcast %cst_97 : f32 to vector<16x64xf32>
    %147 = arith.subf %145, %146 : vector<16x64xf32>
    %148 = arith.select %142, %140, %147 : vector<16x64xi1>, vector<16x64xf32>
    %cst_98 = arith.constant dense<0.000000e+00> : vector<16x32xf32>
    %149 = tpu.matmul %148, %15, %cst_98 {dimension_numbers = #tpu.dot_dimension_numbers<[1], [0], [0], [1], [0, 0, 1, 1], [], []>} : vector<16x64xf32>, vector<64x32xf32>, vector<16x32xf32> -> vector<16x32xf32>
    %150 = vector.broadcast %16 : vector<1x32xf32> to vector<16x32xf32>
    %151 = arith.addf %149, %150 : vector<16x32xf32>
    %cst_99 = arith.constant 0.000000e+00 : f32
    %152 = vector.broadcast %cst_99 : f32 to vector<16x32xf32>
    %153 = arith.cmpf ogt, %151, %152 : vector<16x32xf32>
    %cst_100 = arith.constant 0.000000e+00 : f32
    %154 = vector.broadcast %cst_100 : f32 to vector<16x32xf32>
    %155 = arith.minimumf %151, %154 : vector<16x32xf32>
    %156 = math.exp %155 : vector<16x32xf32>
    %cst_101 = arith.constant 1.000000e+00 : f32
    %157 = vector.broadcast %cst_101 : f32 to vector<16x32xf32>
    %158 = arith.subf %156, %157 : vector<16x32xf32>
    %159 = arith.select %153, %151, %158 : vector<16x32xi1>, vector<16x32xf32>
    %cst_102 = arith.constant dense<0.000000e+00> : vector<16x32xf32>
    %160 = tpu.matmul %159, %17, %cst_102 {dimension_numbers = #tpu.dot_dimension_numbers<[1], [0], [0], [1], [0, 0, 1, 1], [], []>} : vector<16x32xf32>, vector<32x32xf32>, vector<16x32xf32> -> vector<16x32xf32>
    %161 = vector.broadcast %18 : vector<1x32xf32> to vector<16x32xf32>
    %162 = arith.addf %160, %161 : vector<16x32xf32>
    %cst_103 = arith.constant 0.000000e+00 : f32
    %163 = vector.broadcast %cst_103 : f32 to vector<16x32xf32>
    %164 = arith.cmpf ogt, %162, %163 : vector<16x32xf32>
    %cst_104 = arith.constant 0.000000e+00 : f32
    %165 = vector.broadcast %cst_104 : f32 to vector<16x32xf32>
    %166 = arith.minimumf %162, %165 : vector<16x32xf32>
    %167 = math.exp %166 : vector<16x32xf32>
    %cst_105 = arith.constant 1.000000e+00 : f32
    %168 = vector.broadcast %cst_105 : f32 to vector<16x32xf32>
    %169 = arith.subf %167, %168 : vector<16x32xf32>
    %170 = arith.select %164, %162, %169 : vector<16x32xi1>, vector<16x32xf32>
    %cst_106 = arith.constant dense<0.000000e+00> : vector<16x16xf32>
    %171 = tpu.matmul %170, %19, %cst_106 {dimension_numbers = #tpu.dot_dimension_numbers<[1], [0], [0], [1], [0, 0, 1, 1], [], []>} : vector<16x32xf32>, vector<32x16xf32>, vector<16x16xf32> -> vector<16x16xf32>
    %172 = vector.broadcast %20 : vector<1x16xf32> to vector<16x16xf32>
    %173 = arith.addf %171, %172 : vector<16x16xf32>
    %cst_107 = arith.constant 0.000000e+00 : f32
    %174 = vector.broadcast %cst_107 : f32 to vector<16x16xf32>
    %175 = arith.cmpf ogt, %173, %174 : vector<16x16xf32>
    %cst_108 = arith.constant 0.000000e+00 : f32
    %176 = vector.broadcast %cst_108 : f32 to vector<16x16xf32>
    %177 = arith.minimumf %173, %176 : vector<16x16xf32>
    %178 = math.exp %177 : vector<16x16xf32>
    %cst_109 = arith.constant 1.000000e+00 : f32
    %179 = vector.broadcast %cst_109 : f32 to vector<16x16xf32>
    %180 = arith.subf %178, %179 : vector<16x16xf32>
    %181 = arith.select %175, %173, %180 : vector<16x16xi1>, vector<16x16xf32>
    %cst_110 = arith.constant dense<0.000000e+00> : vector<16x2xf32>
    %182 = tpu.matmul %181, %21, %cst_110 {dimension_numbers = #tpu.dot_dimension_numbers<[1], [0], [0], [1], [0, 0, 1, 1], [], []>} : vector<16x16xf32>, vector<16x2xf32>, vector<16x2xf32> -> vector<16x2xf32>
    %183 = vector.broadcast %22 : vector<1x2xf32> to vector<16x2xf32>
    %184 = arith.addf %182, %183 : vector<16x2xf32>
    %185 = vector.extract_strided_slice %184 {offsets = [0, 0], sizes = [16, 1], strides = [1, 1]} : vector<16x2xf32> to vector<16x1xf32>
    %186 = vector.extract_strided_slice %184 {offsets = [0, 1], sizes = [16, 1], strides = [1, 1]} : vector<16x2xf32> to vector<16x1xf32>
    %187 = arith.negf %185 : vector<16x1xf32>
    %188 = math.exp %187 : vector<16x1xf32>
    %cst_111 = arith.constant 1.000000e+00 : f32
    %189 = vector.broadcast %cst_111 : f32 to vector<16x1xf32>
    %190 = arith.addf %189, %188 : vector<16x1xf32>
    %191 = arith.divf %189, %190 : vector<16x1xf32>
    %192 = vector.shape_cast %40 : vector<16x8x32xf32> to vector<128x32xf32>
    %cst_112 = arith.constant dense<0.000000e+00> : vector<128x32xf32>
    %193 = tpu.matmul %192, %7, %cst_112 {dimension_numbers = #tpu.dot_dimension_numbers<[1], [0], [0], [1], [0, 0, 1, 1], [], []>} : vector<128x32xf32>, vector<32x32xf32>, vector<128x32xf32> -> vector<128x32xf32>
    %194 = vector.broadcast %8 : vector<1x32xf32> to vector<128x32xf32>
    %195 = arith.addf %193, %194 : vector<128x32xf32>
    %196 = arith.negf %195 : vector<128x32xf32>
    %197 = math.exp %196 : vector<128x32xf32>
    %cst_113 = arith.constant 1.000000e+00 : f32
    %198 = vector.broadcast %cst_113 : f32 to vector<128x32xf32>
    %199 = arith.addf %198, %197 : vector<128x32xf32>
    %200 = arith.divf %198, %199 : vector<128x32xf32>
    %201 = vector.broadcast %9 : vector<1x32xf32> to vector<128x32xf32>
    %202 = arith.addf %201, %200 : vector<128x32xf32>
    %cst_114 = arith.constant 0.000000e+00 : f32
    %203 = vector.broadcast %cst_114 : f32 to vector<128x32xf32>
    %204 = arith.maximumf %202, %203 : vector<128x32xf32>
    %205 = vector.shape_cast %204 : vector<128x32xf32> to vector<16x8x32xf32>
    %206 = vector.shape_cast %10 : vector<1x32xf32> to vector<1x1x32xf32>
    %207 = vector.broadcast %206 : vector<1x1x32xf32> to vector<16x8x32xf32>
    %208 = arith.mulf %205, %207 : vector<16x8x32xf32>
    %cst_115 = arith.constant dense<0.000000e+00> : vector<16x8xf32>
    %209 = vector.multi_reduction <add>, %208, %cst_115 [2] : vector<16x8x32xf32> to vector<16x8xf32>
    %cst_116 = arith.constant dense<0xFF800000> : vector<16xf32>
    %210 = vector.multi_reduction <maximumf>, %209, %cst_116 [1] : vector<16x8xf32> to vector<16xf32>
    %211 = vector.shape_cast %210 : vector<16xf32> to vector<16x1xf32>
    %212 = vector.broadcast %211 : vector<16x1xf32> to vector<16x8xf32>
    %213 = arith.subf %209, %212 : vector<16x8xf32>
    %214 = math.exp %213 : vector<16x8xf32>
    %cst_117 = arith.constant dense<0.000000e+00> : vector<16xf32>
    %215 = vector.multi_reduction <add>, %214, %cst_117 [1] : vector<16x8xf32> to vector<16xf32>
    %216 = vector.shape_cast %215 : vector<16xf32> to vector<16x1xf32>
    %217 = tpu.reciprocal %216 {approx = true} : vector<16x1xf32> -> vector<16x1xf32>
    %218 = arith.mulf %216, %217 : vector<16x1xf32>
    %cst_118 = arith.constant 2.000000e+00 : f32
    %219 = vector.broadcast %cst_118 : f32 to vector<16x1xf32>
    %220 = arith.subf %219, %218 : vector<16x1xf32>
    %221 = arith.mulf %217, %220 : vector<16x1xf32>
    %222 = arith.mulf %216, %221 : vector<16x1xf32>
    %cst_119 = arith.constant 2.000000e+00 : f32
    %223 = vector.broadcast %cst_119 : f32 to vector<16x1xf32>
    %224 = arith.subf %223, %222 : vector<16x1xf32>
    %225 = arith.mulf %221, %224 : vector<16x1xf32>
    %226 = vector.broadcast %225 : vector<16x1xf32> to vector<16x8xf32>
    %227 = arith.mulf %214, %226 : vector<16x8xf32>
    %228 = vector.shape_cast %227 : vector<16x8xf32> to vector<16x8x1xf32>
    %229 = vector.broadcast %228 : vector<16x8x1xf32> to vector<16x8x32xf32>
    %230 = arith.mulf %229, %40 : vector<16x8x32xf32>
    %cst_120 = arith.constant dense<0.000000e+00> : vector<16x32xf32>
    %231 = vector.multi_reduction <add>, %230, %cst_120 [1] : vector<16x8x32xf32> to vector<16x32xf32>
    %cst_121 = arith.constant dense<0.000000e+00> : vector<16x32xf32>
    %232 = tpu.matmul %231, %23, %cst_121 {dimension_numbers = #tpu.dot_dimension_numbers<[1], [0], [0], [1], [0, 0, 1, 1], [], []>} : vector<16x32xf32>, vector<32x32xf32>, vector<16x32xf32> -> vector<16x32xf32>
    %233 = vector.broadcast %24 : vector<1x32xf32> to vector<16x32xf32>
    %234 = arith.addf %232, %233 : vector<16x32xf32>
    %cst_122 = arith.constant 0.000000e+00 : f32
    %235 = vector.broadcast %cst_122 : f32 to vector<16x32xf32>
    %236 = arith.cmpf ogt, %234, %235 : vector<16x32xf32>
    %cst_123 = arith.constant 0.000000e+00 : f32
    %237 = vector.broadcast %cst_123 : f32 to vector<16x32xf32>
    %238 = arith.minimumf %234, %237 : vector<16x32xf32>
    %239 = math.exp %238 : vector<16x32xf32>
    %cst_124 = arith.constant 1.000000e+00 : f32
    %240 = vector.broadcast %cst_124 : f32 to vector<16x32xf32>
    %241 = arith.subf %239, %240 : vector<16x32xf32>
    %242 = arith.select %236, %234, %241 : vector<16x32xi1>, vector<16x32xf32>
    %cst_125 = arith.constant dense<0.000000e+00> : vector<16x32xf32>
    %243 = tpu.matmul %242, %25, %cst_125 {dimension_numbers = #tpu.dot_dimension_numbers<[1], [0], [0], [1], [0, 0, 1, 1], [], []>} : vector<16x32xf32>, vector<32x32xf32>, vector<16x32xf32> -> vector<16x32xf32>
    %244 = vector.broadcast %26 : vector<1x32xf32> to vector<16x32xf32>
    %245 = arith.addf %243, %244 : vector<16x32xf32>
    %cst_126 = arith.constant 0.000000e+00 : f32
    %246 = vector.broadcast %cst_126 : f32 to vector<16x32xf32>
    %247 = arith.cmpf ogt, %245, %246 : vector<16x32xf32>
    %cst_127 = arith.constant 0.000000e+00 : f32
    %248 = vector.broadcast %cst_127 : f32 to vector<16x32xf32>
    %249 = arith.minimumf %245, %248 : vector<16x32xf32>
    %250 = math.exp %249 : vector<16x32xf32>
    %cst_128 = arith.constant 1.000000e+00 : f32
    %251 = vector.broadcast %cst_128 : f32 to vector<16x32xf32>
    %252 = arith.subf %250, %251 : vector<16x32xf32>
    %253 = arith.select %247, %245, %252 : vector<16x32xi1>, vector<16x32xf32>
    %cst_129 = arith.constant dense<0.000000e+00> : vector<16x16xf32>
    %254 = tpu.matmul %253, %27, %cst_129 {dimension_numbers = #tpu.dot_dimension_numbers<[1], [0], [0], [1], [0, 0, 1, 1], [], []>} : vector<16x32xf32>, vector<32x16xf32>, vector<16x16xf32> -> vector<16x16xf32>
    %255 = vector.broadcast %28 : vector<1x16xf32> to vector<16x16xf32>
    %256 = arith.addf %254, %255 : vector<16x16xf32>
    %cst_130 = arith.constant 0.000000e+00 : f32
    %257 = vector.broadcast %cst_130 : f32 to vector<16x16xf32>
    %258 = arith.cmpf ogt, %256, %257 : vector<16x16xf32>
    %cst_131 = arith.constant 0.000000e+00 : f32
    %259 = vector.broadcast %cst_131 : f32 to vector<16x16xf32>
    %260 = arith.minimumf %256, %259 : vector<16x16xf32>
    %261 = math.exp %260 : vector<16x16xf32>
    %cst_132 = arith.constant 1.000000e+00 : f32
    %262 = vector.broadcast %cst_132 : f32 to vector<16x16xf32>
    %263 = arith.subf %261, %262 : vector<16x16xf32>
    %264 = arith.select %258, %256, %263 : vector<16x16xi1>, vector<16x16xf32>
    %cst_133 = arith.constant dense<0.000000e+00> : vector<16x16xf32>
    %265 = tpu.matmul %264, %29, %cst_133 {dimension_numbers = #tpu.dot_dimension_numbers<[1], [0], [0], [1], [0, 0, 1, 1], [], []>} : vector<16x16xf32>, vector<16x16xf32>, vector<16x16xf32> -> vector<16x16xf32>
    %266 = vector.broadcast %30 : vector<1x16xf32> to vector<16x16xf32>
    %267 = arith.addf %265, %266 : vector<16x16xf32>
    %cst_134 = arith.constant 0.000000e+00 : f32
    %268 = vector.broadcast %cst_134 : f32 to vector<16x16xf32>
    %269 = arith.cmpf ogt, %267, %268 : vector<16x16xf32>
    %cst_135 = arith.constant 0.000000e+00 : f32
    %270 = vector.broadcast %cst_135 : f32 to vector<16x16xf32>
    %271 = arith.minimumf %267, %270 : vector<16x16xf32>
    %272 = math.exp %271 : vector<16x16xf32>
    %cst_136 = arith.constant 1.000000e+00 : f32
    %273 = vector.broadcast %cst_136 : f32 to vector<16x16xf32>
    %274 = arith.subf %272, %273 : vector<16x16xf32>
    %275 = arith.select %269, %267, %274 : vector<16x16xi1>, vector<16x16xf32>
    %cst_137 = arith.constant dense<0.000000e+00> : vector<16x8xf32>
    %276 = tpu.matmul %275, %31, %cst_137 {dimension_numbers = #tpu.dot_dimension_numbers<[1], [0], [0], [1], [0, 0, 1, 1], [], []>} : vector<16x16xf32>, vector<16x8xf32>, vector<16x8xf32> -> vector<16x8xf32>
    %277 = vector.broadcast %32 : vector<1x8xf32> to vector<16x8xf32>
    %278 = arith.addf %276, %277 : vector<16x8xf32>
    %cst_138 = arith.constant 0.000000e+00 : f32
    %279 = vector.broadcast %cst_138 : f32 to vector<16x8xf32>
    %280 = arith.cmpf ogt, %278, %279 : vector<16x8xf32>
    %cst_139 = arith.constant 0.000000e+00 : f32
    %281 = vector.broadcast %cst_139 : f32 to vector<16x8xf32>
    %282 = arith.minimumf %278, %281 : vector<16x8xf32>
    %283 = math.exp %282 : vector<16x8xf32>
    %cst_140 = arith.constant 1.000000e+00 : f32
    %284 = vector.broadcast %cst_140 : f32 to vector<16x8xf32>
    %285 = arith.subf %283, %284 : vector<16x8xf32>
    %286 = arith.select %280, %278, %285 : vector<16x8xi1>, vector<16x8xf32>
    %cst_141 = arith.constant dense<0.000000e+00> : vector<16x2xf32>
    %287 = tpu.matmul %286, %33, %cst_141 {dimension_numbers = #tpu.dot_dimension_numbers<[1], [0], [0], [1], [0, 0, 1, 1], [], []>} : vector<16x8xf32>, vector<8x2xf32>, vector<16x2xf32> -> vector<16x2xf32>
    %288 = vector.broadcast %34 : vector<1x2xf32> to vector<16x2xf32>
    %289 = arith.addf %287, %288 : vector<16x2xf32>
    %290 = vector.extract_strided_slice %289 {offsets = [0, 0], sizes = [16, 1], strides = [1, 1]} : vector<16x2xf32> to vector<16x1xf32>
    %291 = vector.extract_strided_slice %289 {offsets = [0, 1], sizes = [16, 1], strides = [1, 1]} : vector<16x2xf32> to vector<16x1xf32>
    %292 = arith.negf %290 : vector<16x1xf32>
    %293 = math.exp %292 : vector<16x1xf32>
    %cst_142 = arith.constant 1.000000e+00 : f32
    %294 = vector.broadcast %cst_142 : f32 to vector<16x1xf32>
    %295 = arith.addf %294, %293 : vector<16x1xf32>
    %296 = arith.divf %294, %295 : vector<16x1xf32>
    %cst_143 = arith.constant 0.000000e+00 : f32
    %297 = vector.broadcast %cst_143 : f32 to vector<16x2xf32>
    %298 = tpu.concatenate %185, %191, %186, %290, %296, %291, %297 in 1 : vector<16x1xf32>, vector<16x1xf32>, vector<16x1xf32>, vector<16x1xf32>, vector<16x1xf32>, vector<16x1xf32>, vector<16x2xf32> -> vector<16x8xf32>
    %c0_144 = arith.constant 0 : index
    %c0_145 = arith.constant 0 : index
    %299 = vector.load %arg37[%c0_144, %c0_145] : memref<16x8xf32, #tpu.memory_space<vmem>>, vector<16x8xf32>
    tpu.vector_store %arg37[%c0_144, %c0_145], %298 {strides = array<i32>} : memref<16x8xf32, #tpu.memory_space<vmem>>, vector<16x8xf32>,
    return
  }
  func.func @transform_0(%arg0: i32) -> (i32, i32) {
    %c0_i32 = arith.constant 0 : i32
    %c0_i32_0 = arith.constant 0 : i32
    return %arg0, %c0_i32 : i32, i32
  }
  func.func @transform_1(%arg0: i32) -> (i32, i32) {
    %c0_i32 = arith.constant 0 : i32
    %c0_i32_0 = arith.constant 0 : i32
    %c0_i32_1 = arith.constant 0 : i32
    return %c0_i32, %c0_i32_0 : i32, i32
  }
  func.func @transform_2(%arg0: i32) -> (i32, i32) {
    %c0_i32 = arith.constant 0 : i32
    %c0_i32_0 = arith.constant 0 : i32
    %c0_i32_1 = arith.constant 0 : i32
    return %c0_i32, %c0_i32_0 : i32, i32
  }
  func.func @transform_3(%arg0: i32) -> (i32, i32) {
    %c0_i32 = arith.constant 0 : i32
    %c0_i32_0 = arith.constant 0 : i32
    %c0_i32_1 = arith.constant 0 : i32
    return %c0_i32, %c0_i32_0 : i32, i32
  }
  func.func @transform_4(%arg0: i32) -> (i32, i32) {
    %c0_i32 = arith.constant 0 : i32
    %c0_i32_0 = arith.constant 0 : i32
    %c0_i32_1 = arith.constant 0 : i32
    return %c0_i32, %c0_i32_0 : i32, i32
  }
  func.func @transform_5(%arg0: i32) -> (i32, i32) {
    %c0_i32 = arith.constant 0 : i32
    %c0_i32_0 = arith.constant 0 : i32
    %c0_i32_1 = arith.constant 0 : i32
    return %c0_i32, %c0_i32_0 : i32, i32
  }
  func.func @transform_6(%arg0: i32) -> (i32, i32) {
    %c0_i32 = arith.constant 0 : i32
    %c0_i32_0 = arith.constant 0 : i32
    %c0_i32_1 = arith.constant 0 : i32
    return %c0_i32, %c0_i32_0 : i32, i32
  }
  func.func @transform_7(%arg0: i32) -> (i32, i32) {
    %c0_i32 = arith.constant 0 : i32
    %c0_i32_0 = arith.constant 0 : i32
    %c0_i32_1 = arith.constant 0 : i32
    return %c0_i32, %c0_i32_0 : i32, i32
  }
  func.func @transform_8(%arg0: i32) -> (i32, i32) {
    %c0_i32 = arith.constant 0 : i32
    %c0_i32_0 = arith.constant 0 : i32
    %c0_i32_1 = arith.constant 0 : i32
    return %c0_i32, %c0_i32_0 : i32, i32
  }
  func.func @transform_9(%arg0: i32) -> (i32, i32) {
    %c0_i32 = arith.constant 0 : i32
    %c0_i32_0 = arith.constant 0 : i32
    %c0_i32_1 = arith.constant 0 : i32
    return %c0_i32, %c0_i32_0 : i32, i32
  }
  func.func @transform_10(%arg0: i32) -> (i32, i32) {
    %c0_i32 = arith.constant 0 : i32
    %c0_i32_0 = arith.constant 0 : i32
    %c0_i32_1 = arith.constant 0 : i32
    return %c0_i32, %c0_i32_0 : i32, i32
  }
  func.func @transform_11(%arg0: i32) -> (i32, i32) {
    %c0_i32 = arith.constant 0 : i32
    %c0_i32_0 = arith.constant 0 : i32
    %c0_i32_1 = arith.constant 0 : i32
    return %c0_i32, %c0_i32_0 : i32, i32
  }
  func.func @transform_12(%arg0: i32) -> (i32, i32) {
    %c0_i32 = arith.constant 0 : i32
    %c0_i32_0 = arith.constant 0 : i32
    %c0_i32_1 = arith.constant 0 : i32
    return %c0_i32, %c0_i32_0 : i32, i32
  }
  func.func @transform_13(%arg0: i32) -> (i32, i32) {
    %c0_i32 = arith.constant 0 : i32
    %c0_i32_0 = arith.constant 0 : i32
    %c0_i32_1 = arith.constant 0 : i32
    return %c0_i32, %c0_i32_0 : i32, i32
  }
  func.func @transform_14(%arg0: i32) -> (i32, i32) {
    %c0_i32 = arith.constant 0 : i32
    %c0_i32_0 = arith.constant 0 : i32
    %c0_i32_1 = arith.constant 0 : i32
    return %c0_i32, %c0_i32_0 : i32, i32
  }
  func.func @transform_15(%arg0: i32) -> (i32, i32) {
    %c0_i32 = arith.constant 0 : i32
    %c0_i32_0 = arith.constant 0 : i32
    %c0_i32_1 = arith.constant 0 : i32
    return %c0_i32, %c0_i32_0 : i32, i32
  }
  func.func @transform_16(%arg0: i32) -> (i32, i32) {
    %c0_i32 = arith.constant 0 : i32
    %c0_i32_0 = arith.constant 0 : i32
    %c0_i32_1 = arith.constant 0 : i32
    return %c0_i32, %c0_i32_0 : i32, i32
  }
  func.func @transform_17(%arg0: i32) -> (i32, i32) {
    %c0_i32 = arith.constant 0 : i32
    %c0_i32_0 = arith.constant 0 : i32
    %c0_i32_1 = arith.constant 0 : i32
    return %c0_i32, %c0_i32_0 : i32, i32
  }
  func.func @transform_18(%arg0: i32) -> (i32, i32) {
    %c0_i32 = arith.constant 0 : i32
    %c0_i32_0 = arith.constant 0 : i32
    %c0_i32_1 = arith.constant 0 : i32
    return %c0_i32, %c0_i32_0 : i32, i32
  }
  func.func @transform_19(%arg0: i32) -> (i32, i32) {
    %c0_i32 = arith.constant 0 : i32
    %c0_i32_0 = arith.constant 0 : i32
    %c0_i32_1 = arith.constant 0 : i32
    return %c0_i32, %c0_i32_0 : i32, i32
  }
  func.func @transform_20(%arg0: i32) -> (i32, i32) {
    %c0_i32 = arith.constant 0 : i32
    %c0_i32_0 = arith.constant 0 : i32
    %c0_i32_1 = arith.constant 0 : i32
    return %c0_i32, %c0_i32_0 : i32, i32
  }
  func.func @transform_21(%arg0: i32) -> (i32, i32) {
    %c0_i32 = arith.constant 0 : i32
    %c0_i32_0 = arith.constant 0 : i32
    %c0_i32_1 = arith.constant 0 : i32
    return %c0_i32, %c0_i32_0 : i32, i32
  }
  func.func @transform_22(%arg0: i32) -> (i32, i32) {
    %c0_i32 = arith.constant 0 : i32
    %c0_i32_0 = arith.constant 0 : i32
    %c0_i32_1 = arith.constant 0 : i32
    return %c0_i32, %c0_i32_0 : i32, i32
  }
  func.func @transform_23(%arg0: i32) -> (i32, i32) {
    %c0_i32 = arith.constant 0 : i32
    %c0_i32_0 = arith.constant 0 : i32
    %c0_i32_1 = arith.constant 0 : i32
    return %c0_i32, %c0_i32_0 : i32, i32
  }
  func.func @transform_24(%arg0: i32) -> (i32, i32) {
    %c0_i32 = arith.constant 0 : i32
    %c0_i32_0 = arith.constant 0 : i32
    %c0_i32_1 = arith.constant 0 : i32
    return %c0_i32, %c0_i32_0 : i32, i32
  }
  func.func @transform_25(%arg0: i32) -> (i32, i32) {
    %c0_i32 = arith.constant 0 : i32
    %c0_i32_0 = arith.constant 0 : i32
    %c0_i32_1 = arith.constant 0 : i32
    return %c0_i32, %c0_i32_0 : i32, i32
  }
  func.func @transform_26(%arg0: i32) -> (i32, i32) {
    %c0_i32 = arith.constant 0 : i32
    %c0_i32_0 = arith.constant 0 : i32
    %c0_i32_1 = arith.constant 0 : i32
    return %c0_i32, %c0_i32_0 : i32, i32
  }
  func.func @transform_27(%arg0: i32) -> (i32, i32) {
    %c0_i32 = arith.constant 0 : i32
    %c0_i32_0 = arith.constant 0 : i32
    %c0_i32_1 = arith.constant 0 : i32
    return %c0_i32, %c0_i32_0 : i32, i32
  }
  func.func @transform_28(%arg0: i32) -> (i32, i32) {
    %c0_i32 = arith.constant 0 : i32
    %c0_i32_0 = arith.constant 0 : i32
    %c0_i32_1 = arith.constant 0 : i32
    return %c0_i32, %c0_i32_0 : i32, i32
  }
  func.func @transform_29(%arg0: i32) -> (i32, i32) {
    %c0_i32 = arith.constant 0 : i32
    %c0_i32_0 = arith.constant 0 : i32
    %c0_i32_1 = arith.constant 0 : i32
    return %c0_i32, %c0_i32_0 : i32, i32
  }
  func.func @transform_30(%arg0: i32) -> (i32, i32) {
    %c0_i32 = arith.constant 0 : i32
    %c0_i32_0 = arith.constant 0 : i32
    %c0_i32_1 = arith.constant 0 : i32
    return %c0_i32, %c0_i32_0 : i32, i32
  }
  func.func @transform_31(%arg0: i32) -> (i32, i32) {
    %c0_i32 = arith.constant 0 : i32
    %c0_i32_0 = arith.constant 0 : i32
    %c0_i32_1 = arith.constant 0 : i32
    return %c0_i32, %c0_i32_0 : i32, i32
  }
  func.func @transform_32(%arg0: i32) -> (i32, i32) {
    %c0_i32 = arith.constant 0 : i32
    %c0_i32_0 = arith.constant 0 : i32
    %c0_i32_1 = arith.constant 0 : i32
    return %c0_i32, %c0_i32_0 : i32, i32
  }
  func.func @transform_33(%arg0: i32) -> (i32, i32) {
    %c0_i32 = arith.constant 0 : i32
    %c0_i32_0 = arith.constant 0 : i32
    %c0_i32_1 = arith.constant 0 : i32
    return %c0_i32, %c0_i32_0 : i32, i32
  }
  func.func @transform_34(%arg0: i32) -> (i32, i32) {
    %c0_i32 = arith.constant 0 : i32
    %c0_i32_0 = arith.constant 0 : i32
    %c0_i32_1 = arith.constant 0 : i32
    return %c0_i32, %c0_i32_0 : i32, i32
  }
  func.func @transform_35(%arg0: i32) -> (i32, i32) {
    %c0_i32 = arith.constant 0 : i32
    %c0_i32_0 = arith.constant 0 : i32
    %c0_i32_1 = arith.constant 0 : i32
    return %c0_i32, %c0_i32_0 : i32, i32
  }
  func.func @transform_36(%arg0: i32) -> (i32, i32) {
    %c0_i32 = arith.constant 0 : i32
    %c0_i32_0 = arith.constant 0 : i32
    return %arg0, %c0_i32 : i32, i32
  }
}

</mosaic_0001>

<llo_original>
// kernel: tpu_custom_call.1
$region0: #{tpu_custom_call.1}
  #allocation0 [shape = 'u32[]', space=smem, size = 0x4, offset = 0x4, fixed_abs, tag = 'smem constant byte address 0x4 - core index']
  #allocation1 [shape = 'u32[144,128]{1,0:T(1,128)}', space=vmem, size = 0x12000, scoped, tag = 'internal scratch']
  %s0 = inlined_call_operand.smem [shape: u32[37], index: -1, kind: input, shape index: {}]
  %s1 = sld [smem:[%s0]]
  %s2 = scalar_lea.smem %s0, 1
  %s3 = sld [smem:[%s2]]
  %s4 = scalar_lea.smem %s0, 2
  %s5 = sld [smem:[%s4]]
  %s6 = scalar_lea.smem %s0, 3
  %s7 = sld [smem:[%s6]]
  %s8 = scalar_lea.smem %s0, 4
  %s9 = sld [smem:[%s8]]
  %s10 = scalar_lea.smem %s0, 5
  %s11 = sld [smem:[%s10]]
  %s12 = scalar_lea.smem %s0, 6
  %s13 = sld [smem:[%s12]]
  %s14 = scalar_lea.smem %s0, 7
  %s15 = sld [smem:[%s14]]
  %s16 = scalar_lea.smem %s0, 8
  %s17 = sld [smem:[%s16]]
  %s18 = scalar_lea.smem %s0, 9
  %s19 = sld [smem:[%s18]]
  %s20 = scalar_lea.smem %s0, 10
  %s21 = sld [smem:[%s20]]
  %s22 = scalar_lea.smem %s0, 11
  %s23 = sld [smem:[%s22]]
  %s24 = scalar_lea.smem %s0, 12
  %s25 = sld [smem:[%s24]]
  %s26 = scalar_lea.smem %s0, 13
  %s27 = sld [smem:[%s26]]
  %s28 = scalar_lea.smem %s0, 14
  %s29 = sld [smem:[%s28]]
  %s30 = scalar_lea.smem %s0, 15
  %s31 = sld [smem:[%s30]]
  %s32 = scalar_lea.smem %s0, 16
  %s33 = sld [smem:[%s32]]
  %s34 = scalar_lea.smem %s0, 17
  %s35 = sld [smem:[%s34]]
  %s36 = scalar_lea.smem %s0, 18
  %s37 = sld [smem:[%s36]]
  %s38 = scalar_lea.smem %s0, 19
  %s39 = sld [smem:[%s38]]
  %s40 = scalar_lea.smem %s0, 20
  %s41 = sld [smem:[%s40]]
  %s42 = scalar_lea.smem %s0, 21
  %s43 = sld [smem:[%s42]]
  %s44 = scalar_lea.smem %s0, 22
  %s45 = sld [smem:[%s44]]
  %s46 = scalar_lea.smem %s0, 23
  %s47 = sld [smem:[%s46]]
  %s48 = scalar_lea.smem %s0, 24
  %s49 = sld [smem:[%s48]]
  %s50 = scalar_lea.smem %s0, 25
  %s51 = sld [smem:[%s50]]
  %s52 = scalar_lea.smem %s0, 26
  %s53 = sld [smem:[%s52]]
  %s54 = scalar_lea.smem %s0, 27
  %s55 = sld [smem:[%s54]]
  %s56 = scalar_lea.smem %s0, 28
  %s57 = sld [smem:[%s56]]
  %s58 = scalar_lea.smem %s0, 29
  %s59 = sld [smem:[%s58]]
  %s60 = scalar_lea.smem %s0, 30
  %s61 = sld [smem:[%s60]]
  %s62 = scalar_lea.smem %s0, 31
  %s63 = sld [smem:[%s62]]
  %s64 = scalar_lea.smem %s0, 32
  %s65 = sld [smem:[%s64]]
  %s66 = scalar_lea.smem %s0, 33
  %s67 = sld [smem:[%s66]]
  %s68 = scalar_lea.smem %s0, 34
  %s69 = sld [smem:[%s68]]
  %s70 = scalar_lea.smem %s0, 35
  %s71 = sld [smem:[%s70]]
  %s72 = scalar_lea.smem %s0, 36
  %s73 = sld [smem:[%s72]]
  %s74 = sld [smem:[#allocation0]]
  $region177: #{tpu_custom_call.1} parent=0
    _
  %s76 = ssub.s32 1, %s74
  %s77 = scalar_select 0, %s76, %s74
  loop: start=0, step=1, limit=6
  $region2: #{tpu_custom_call.1} parent=0 // loop_pre_header
    _
  $region3: #{tpu_custom_call.1} parent=0 // loop_header
    %s79 = sphi 0, %s83
    %p80 = scmp.ge.s32.totalorder %s79, 6
    %s89 = sphi 0, %s91
    %s92 = sphi 0, %s89
    %s93 = sphi 0, %s92
    %s109 = sphi 0, %s93
    %s113 = sphi 0, %s113
    %s115 = sphi 0, %s113
    %s116 = sphi 0, %s115
    %s130 = sphi 0, %s116
    %s134 = sphi 0, %s134
    %s136 = sphi 0, %s134
    %s137 = sphi 0, %s136
    %s151 = sphi 0, %s137
    %s155 = sphi 0, %s155
    %s157 = sphi 0, %s155
    %s158 = sphi 0, %s157
    %s172 = sphi 0, %s158
    %s176 = sphi 0, %s176
    %s178 = sphi 0, %s176
    %s179 = sphi 0, %s178
    %s193 = sphi 0, %s179
    %s197 = sphi 0, %s197
    %s199 = sphi 0, %s197
    %s200 = sphi 0, %s199
    %s214 = sphi 0, %s200
    %s218 = sphi 0, %s218
    %s220 = sphi 0, %s218
    %s221 = sphi 0, %s220
    %s235 = sphi 0, %s221
    %s239 = sphi 0, %s239
    %s241 = sphi 0, %s239
    %s242 = sphi 0, %s241
    %s256 = sphi 0, %s242
    %s260 = sphi 0, %s260
    %s262 = sphi 0, %s260
    %s263 = sphi 0, %s262
    %s277 = sphi 0, %s263
    %s281 = sphi 0, %s281
    %s283 = sphi 0, %s281
    %s284 = sphi 0, %s283
    %s298 = sphi 0, %s284
    %s302 = sphi 0, %s302
    %s304 = sphi 0, %s302
    %s305 = sphi 0, %s304
    %s319 = sphi 0, %s305
    %s323 = sphi 0, %s323
    %s325 = sphi 0, %s323
    %s326 = sphi 0, %s325
    %s340 = sphi 0, %s326
    %s344 = sphi 0, %s344
    %s346 = sphi 0, %s344
    %s347 = sphi 0, %s346
    %s361 = sphi 0, %s347
    %s365 = sphi 0, %s365
    %s367 = sphi 0, %s365
    %s368 = sphi 0, %s367
    %s382 = sphi 0, %s368
    %s386 = sphi 0, %s386
    %s388 = sphi 0, %s386
    %s389 = sphi 0, %s388
    %s403 = sphi 0, %s389
    %s407 = sphi 0, %s407
    %s409 = sphi 0, %s407
    %s410 = sphi 0, %s409
    %s424 = sphi 0, %s410
    %s428 = sphi 0, %s428
    %s430 = sphi 0, %s428
    %s431 = sphi 0, %s430
    %s445 = sphi 0, %s431
    %s449 = sphi 0, %s449
    %s451 = sphi 0, %s449
    %s452 = sphi 0, %s451
    %s466 = sphi 0, %s452
    %s470 = sphi 0, %s470
    %s472 = sphi 0, %s470
    %s473 = sphi 0, %s472
    %s487 = sphi 0, %s473
    %s491 = sphi 0, %s491
    %s493 = sphi 0, %s491
    %s494 = sphi 0, %s493
    %s508 = sphi 0, %s494
    %s512 = sphi 0, %s512
    %s514 = sphi 0, %s512
    %s515 = sphi 0, %s514
    %s529 = sphi 0, %s515
    %s533 = sphi 0, %s533
    %s535 = sphi 0, %s533
    %s536 = sphi 0, %s535
    %s550 = sphi 0, %s536
    %s554 = sphi 0, %s554
    %s556 = sphi 0, %s554
    %s557 = sphi 0, %s556
    %s571 = sphi 0, %s557
    %s575 = sphi 0, %s575
    %s577 = sphi 0, %s575
    %s578 = sphi 0, %s577
    %s592 = sphi 0, %s578
    %s596 = sphi 0, %s596
    %s598 = sphi 0, %s596
    %s599 = sphi 0, %s598
    %s613 = sphi 0, %s599
    %s617 = sphi 0, %s617
    %s619 = sphi 0, %s617
    %s620 = sphi 0, %s619
    %s634 = sphi 0, %s620
    %s638 = sphi 0, %s638
    %s640 = sphi 0, %s638
    %s641 = sphi 0, %s640
    %s655 = sphi 0, %s641
    %s659 = sphi 0, %s659
    %s661 = sphi 0, %s659
    %s662 = sphi 0, %s661
    %s676 = sphi 0, %s662
    %s680 = sphi 0, %s680
    %s682 = sphi 0, %s680
    %s683 = sphi 0, %s682
    %s697 = sphi 0, %s683
    %s701 = sphi 0, %s701
    %s703 = sphi 0, %s701
    %s704 = sphi 0, %s703
    %s718 = sphi 0, %s704
    %s722 = sphi 0, %s722
    %s724 = sphi 0, %s722
    %s725 = sphi 0, %s724
    %s739 = sphi 0, %s725
    %s743 = sphi 0, %s743
    %s745 = sphi 0, %s743
    %s746 = sphi 0, %s745
    %s760 = sphi 0, %s746
    %s764 = sphi 0, %s764
    %s766 = sphi 0, %s764
    %s767 = sphi 0, %s766
    %s781 = sphi 0, %s767
    %s785 = sphi 0, %s785
    %s787 = sphi 0, %s785
    %s788 = sphi 0, %s787
    %s802 = sphi 0, %s788
    %s806 = sphi 0, %s806
    %s808 = sphi 0, %s806
    %s809 = sphi 0, %s808
    %s823 = sphi 0, %s809
    %s827 = sphi 0, %s827
    %s829 = sphi 0, %s827
    %s830 = sphi 0, %s829
    %s844 = sphi 0, %s830
    %s850 = sphi 0, %s852
    %s853 = sphi 0, %s850
    %s854 = sphi 0, %s853
    %s870 = sphi 0, %s854
  $region4: #{tpu_custom_call.1} parent=0 // loop_header_branch
    %82 = sbr.rel (%p80) target = $region8
  $region5: #{tpu_custom_call.1} parent=0 // loop_body
    %s84 = ssub.s32 %s79, 1
    %s85 = ssub.s32 %s79, 2
    %s86 = sadd.s32 %s79, 1
    %s87 = ssub.s32 %s79, %s86
    %p88 = scmp.eq.s32.totalorder %s87, 0
    %s90 = sadd.s32 %s89, 1
    %s91 = scalar_select %p88, %s89, %s90
    %p94 = pneg %p88
    %p95 = scmp.eq.s32.totalorder %s79, 3
    %p96 = por %p94, %p95
    %p97 = scmp.ne.s32.totalorder %s89, %s92
    %p98 = scmp.eq.s32.totalorder %s79, 0
    %p99 = por %p97, %p98
    %p100 = scmp.ne.s32.totalorder %s89, %s92
    %p101 = scmp.eq.s32.totalorder %s84, 3
    %p102 = por %p100, %p101
    %p103 = scmp.ne.s32.totalorder %s92, %s93
    %p104 = scmp.eq.s32.totalorder %s84, 0
    %p105 = por %p103, %p104
    %p106 = scmp.ne.s32.totalorder %s92, %s93
    %p107 = scmp.eq.s32.totalorder %s85, 3
    %p108 = por %p106, %p107
    %p110 = scmp.ne.s32.totalorder %s93, %s109
    %p111 = scmp.eq.s32.totalorder %s85, 0
    %p112 = por %p110, %p111
    %s114 = sadd.s32 %s113, 1
    %p117 = scmp.eq.s32.totalorder %s79, 3
    %p118 = scmp.ne.s32.totalorder %s113, %s115
    %p119 = scmp.eq.s32.totalorder %s79, 0
    %p120 = por %p118, %p119
    %p121 = scmp.ne.s32.totalorder %s113, %s115
    %p122 = scmp.eq.s32.totalorder %s84, 3
    %p123 = por %p121, %p122
    %p124 = scmp.ne.s32.totalorder %s115, %s116
    %p125 = scmp.eq.s32.totalorder %s84, 0
    %p126 = por %p124, %p125
    %p127 = scmp.ne.s32.totalorder %s115, %s116
    %p128 = scmp.eq.s32.totalorder %s85, 3
    %p129 = por %p127, %p128
    %p131 = scmp.ne.s32.totalorder %s116, %s130
    %p132 = scmp.eq.s32.totalorder %s85, 0
    %p133 = por %p131, %p132
    %s135 = sadd.s32 %s134, 1
    %p138 = scmp.eq.s32.totalorder %s79, 3
    %p139 = scmp.ne.s32.totalorder %s134, %s136
    %p140 = scmp.eq.s32.totalorder %s79, 0
    %p141 = por %p139, %p140
    %p142 = scmp.ne.s32.totalorder %s134, %s136
    %p143 = scmp.eq.s32.totalorder %s84, 3
    %p144 = por %p142, %p143
    %p145 = scmp.ne.s32.totalorder %s136, %s137
    %p146 = scmp.eq.s32.totalorder %s84, 0
    %p147 = por %p145, %p146
    %p148 = scmp.ne.s32.totalorder %s136, %s137
    %p149 = scmp.eq.s32.totalorder %s85, 3
    %p150 = por %p148, %p149
    %p152 = scmp.ne.s32.totalorder %s137, %s151
    %p153 = scmp.eq.s32.totalorder %s85, 0
    %p154 = por %p152, %p153
    %s156 = sadd.s32 %s155, 1
    %p159 = scmp.eq.s32.totalorder %s79, 3
    %p160 = scmp.ne.s32.totalorder %s155, %s157
    %p161 = scmp.eq.s32.totalorder %s79, 0
    %p162 = por %p160, %p161
    %p163 = scmp.ne.s32.totalorder %s155, %s157
    %p164 = scmp.eq.s32.totalorder %s84, 3
    %p165 = por %p163, %p164
    %p166 = scmp.ne.s32.totalorder %s157, %s158
    %p167 = scmp.eq.s32.totalorder %s84, 0
    %p168 = por %p166, %p167
    %p169 = scmp.ne.s32.totalorder %s157, %s158
    %p170 = scmp.eq.s32.totalorder %s85, 3
    %p171 = por %p169, %p170
    %p173 = scmp.ne.s32.totalorder %s158, %s172
    %p174 = scmp.eq.s32.totalorder %s85, 0
    %p175 = por %p173, %p174
    %s177 = sadd.s32 %s176, 1
    %p180 = scmp.eq.s32.totalorder %s79, 3
    %p181 = scmp.ne.s32.totalorder %s176, %s178
    %p182 = scmp.eq.s32.totalorder %s79, 0
    %p183 = por %p181, %p182
    %p184 = scmp.ne.s32.totalorder %s176, %s178
    %p185 = scmp.eq.s32.totalorder %s84, 3
    %p186 = por %p184, %p185
    %p187 = scmp.ne.s32.totalorder %s178, %s179
    %p188 = scmp.eq.s32.totalorder %s84, 0
    %p189 = por %p187, %p188
    %p190 = scmp.ne.s32.totalorder %s178, %s179
    %p191 = scmp.eq.s32.totalorder %s85, 3
    %p192 = por %p190, %p191
    %p194 = scmp.ne.s32.totalorder %s179, %s193
    %p195 = scmp.eq.s32.totalorder %s85, 0
    %p196 = por %p194, %p195
    %s198 = sadd.s32 %s197, 1
    %p201 = scmp.eq.s32.totalorder %s79, 3
    %p202 = scmp.ne.s32.totalorder %s197, %s199
    %p203 = scmp.eq.s32.totalorder %s79, 0
    %p204 = por %p202, %p203
    %p205 = scmp.ne.s32.totalorder %s197, %s199
    %p206 = scmp.eq.s32.totalorder %s84, 3
    %p207 = por %p205, %p206
    %p208 = scmp.ne.s32.totalorder %s199, %s200
    %p209 = scmp.eq.s32.totalorder %s84, 0
    %p210 = por %p208, %p209
    %p211 = scmp.ne.s32.totalorder %s199, %s200
    %p212 = scmp.eq.s32.totalorder %s85, 3
    %p213 = por %p211, %p212
    %p215 = scmp.ne.s32.totalorder %s200, %s214
    %p216 = scmp.eq.s32.totalorder %s85, 0
    %p217 = por %p215, %p216
    %s219 = sadd.s32 %s218, 1
    %p222 = scmp.eq.s32.totalorder %s79, 3
    %p223 = scmp.ne.s32.totalorder %s218, %s220
    %p224 = scmp.eq.s32.totalorder %s79, 0
    %p225 = por %p223, %p224
    %p226 = scmp.ne.s32.totalorder %s218, %s220
    %p227 = scmp.eq.s32.totalorder %s84, 3
    %p228 = por %p226, %p227
    %p229 = scmp.ne.s32.totalorder %s220, %s221
    %p230 = scmp.eq.s32.totalorder %s84, 0
    %p231 = por %p229, %p230
    %p232 = scmp.ne.s32.totalorder %s220, %s221
    %p233 = scmp.eq.s32.totalorder %s85, 3
    %p234 = por %p232, %p233
    %p236 = scmp.ne.s32.totalorder %s221, %s235
    %p237 = scmp.eq.s32.totalorder %s85, 0
    %p238 = por %p236, %p237
    %s240 = sadd.s32 %s239, 1
    %p243 = scmp.eq.s32.totalorder %s79, 3
    %p244 = scmp.ne.s32.totalorder %s239, %s241
    %p245 = scmp.eq.s32.totalorder %s79, 0
    %p246 = por %p244, %p245
    %p247 = scmp.ne.s32.totalorder %s239, %s241
    %p248 = scmp.eq.s32.totalorder %s84, 3
    %p249 = por %p247, %p248
    %p250 = scmp.ne.s32.totalorder %s241, %s242
    %p251 = scmp.eq.s32.totalorder %s84, 0
    %p252 = por %p250, %p251
    %p253 = scmp.ne.s32.totalorder %s241, %s242
    %p254 = scmp.eq.s32.totalorder %s85, 3
    %p255 = por %p253, %p254
    %p257 = scmp.ne.s32.totalorder %s242, %s256
    %p258 = scmp.eq.s32.totalorder %s85, 0
    %p259 = por %p257, %p258
    %s261 = sadd.s32 %s260, 1
    %p264 = scmp.eq.s32.totalorder %s79, 3
    %p265 = scmp.ne.s32.totalorder %s260, %s262
    %p266 = scmp.eq.s32.totalorder %s79, 0
    %p267 = por %p265, %p266
    %p268 = scmp.ne.s32.totalorder %s260, %s262
    %p269 = scmp.eq.s32.totalorder %s84, 3
    %p270 = por %p268, %p269
    %p271 = scmp.ne.s32.totalorder %s262, %s263
    %p272 = scmp.eq.s32.totalorder %s84, 0
    %p273 = por %p271, %p272
    %p274 = scmp.ne.s32.totalorder %s262, %s263
    %p275 = scmp.eq.s32.totalorder %s85, 3
    %p276 = por %p274, %p275
    %p278 = scmp.ne.s32.totalorder %s263, %s277
    %p279 = scmp.eq.s32.totalorder %s85, 0
    %p280 = por %p278, %p279
    %s282 = sadd.s32 %s281, 1
    %p285 = scmp.eq.s32.totalorder %s79, 3
    %p286 = scmp.ne.s32.totalorder %s281, %s283
    %p287 = scmp.eq.s32.totalorder %s79, 0
    %p288 = por %p286, %p287
    %p289 = scmp.ne.s32.totalorder %s281, %s283
    %p290 = scmp.eq.s32.totalorder %s84, 3
    %p291 = por %p289, %p290
    %p292 = scmp.ne.s32.totalorder %s283, %s284
    %p293 = scmp.eq.s32.totalorder %s84, 0
    %p294 = por %p292, %p293
    %p295 = scmp.ne.s32.totalorder %s283, %s284
    %p296 = scmp.eq.s32.totalorder %s85, 3
    %p297 = por %p295, %p296
    %p299 = scmp.ne.s32.totalorder %s284, %s298
    %p300 = scmp.eq.s32.totalorder %s85, 0
    %p301 = por %p299, %p300
    %s303 = sadd.s32 %s302, 1
    %p306 = scmp.eq.s32.totalorder %s79, 3
    %p307 = scmp.ne.s32.totalorder %s302, %s304
    %p308 = scmp.eq.s32.totalorder %s79, 0
    %p309 = por %p307, %p308
    %p310 = scmp.ne.s32.totalorder %s302, %s304
    %p311 = scmp.eq.s32.totalorder %s84, 3
    %p312 = por %p310, %p311
    %p313 = scmp.ne.s32.totalorder %s304, %s305
    %p314 = scmp.eq.s32.totalorder %s84, 0
    %p315 = por %p313, %p314
    %p316 = scmp.ne.s32.totalorder %s304, %s305
    %p317 = scmp.eq.s32.totalorder %s85, 3
    %p318 = por %p316, %p317
    %p320 = scmp.ne.s32.totalorder %s305, %s319
    %p321 = scmp.eq.s32.totalorder %s85, 0
    %p322 = por %p320, %p321
    %s324 = sadd.s32 %s323, 1
    %p327 = scmp.eq.s32.totalorder %s79, 3
    %p328 = scmp.ne.s32.totalorder %s323, %s325
    %p329 = scmp.eq.s32.totalorder %s79, 0
    %p330 = por %p328, %p329
    %p331 = scmp.ne.s32.totalorder %s323, %s325
    %p332 = scmp.eq.s32.totalorder %s84, 3
    %p333 = por %p331, %p332
    %p334 = scmp.ne.s32.totalorder %s325, %s326
    %p335 = scmp.eq.s32.totalorder %s84, 0
    %p336 = por %p334, %p335
    %p337 = scmp.ne.s32.totalorder %s325, %s326
    %p338 = scmp.eq.s32.totalorder %s85, 3
    %p339 = por %p337, %p338
    %p341 = scmp.ne.s32.totalorder %s326, %s340
    %p342 = scmp.eq.s32.totalorder %s85, 0
    %p343 = por %p341, %p342
    %s345 = sadd.s32 %s344, 1
    %p348 = scmp.eq.s32.totalorder %s79, 3
    %p349 = scmp.ne.s32.totalorder %s344, %s346
    %p350 = scmp.eq.s32.totalorder %s79, 0
    %p351 = por %p349, %p350
    %p352 = scmp.ne.s32.totalorder %s344, %s346
    %p353 = scmp.eq.s32.totalorder %s84, 3
    %p354 = por %p352, %p353
    %p355 = scmp.ne.s32.totalorder %s346, %s347
    %p356 = scmp.eq.s32.totalorder %s84, 0
    %p357 = por %p355, %p356
    %p358 = scmp.ne.s32.totalorder %s346, %s347
    %p359 = scmp.eq.s32.totalorder %s85, 3
    %p360 = por %p358, %p359
    %p362 = scmp.ne.s32.totalorder %s347, %s361
    %p363 = scmp.eq.s32.totalorder %s85, 0
    %p364 = por %p362, %p363
    %s366 = sadd.s32 %s365, 1
    %p369 = scmp.eq.s32.totalorder %s79, 3
    %p370 = scmp.ne.s32.totalorder %s365, %s367
    %p371 = scmp.eq.s32.totalorder %s79, 0
    %p372 = por %p370, %p371
    %p373 = scmp.ne.s32.totalorder %s365, %s367
    %p374 = scmp.eq.s32.totalorder %s84, 3
    %p375 = por %p373, %p374
    %p376 = scmp.ne.s32.totalorder %s367, %s368
    %p377 = scmp.eq.s32.totalorder %s84, 0
    %p378 = por %p376, %p377
    %p379 = scmp.ne.s32.totalorder %s367, %s368
    %p380 = scmp.eq.s32.totalorder %s85, 3
    %p381 = por %p379, %p380
    %p383 = scmp.ne.s32.totalorder %s368, %s382
    %p384 = scmp.eq.s32.totalorder %s85, 0
    %p385 = por %p383, %p384
    %s387 = sadd.s32 %s386, 1
    %p390 = scmp.eq.s32.totalorder %s79, 3
    %p391 = scmp.ne.s32.totalorder %s386, %s388
    %p392 = scmp.eq.s32.totalorder %s79, 0
    %p393 = por %p391, %p392
    %p394 = scmp.ne.s32.totalorder %s386, %s388
    %p395 = scmp.eq.s32.totalorder %s84, 3
    %p396 = por %p394, %p395
    %p397 = scmp.ne.s32.totalorder %s388, %s389
    %p398 = scmp.eq.s32.totalorder %s84, 0
    %p399 = por %p397, %p398
    %p400 = scmp.ne.s32.totalorder %s388, %s389
    %p401 = scmp.eq.s32.totalorder %s85, 3
    %p402 = por %p400, %p401
    %p404 = scmp.ne.s32.totalorder %s389, %s403
    %p405 = scmp.eq.s32.totalorder %s85, 0
    %p406 = por %p404, %p405
    %s408 = sadd.s32 %s407, 1
    %p411 = scmp.eq.s32.totalorder %s79, 3
    %p412 = scmp.ne.s32.totalorder %s407, %s409
    %p413 = scmp.eq.s32.totalorder %s79, 0
    %p414 = por %p412, %p413
    %p415 = scmp.ne.s32.totalorder %s407, %s409
    %p416 = scmp.eq.s32.totalorder %s84, 3
    %p417 = por %p415, %p416
    %p418 = scmp.ne.s32.totalorder %s409, %s410
    %p419 = scmp.eq.s32.totalorder %s84, 0
    %p420 = por %p418, %p419
    %p421 = scmp.ne.s32.totalorder %s409, %s410
    %p422 = scmp.eq.s32.totalorder %s85, 3
    %p423 = por %p421, %p422
    %p425 = scmp.ne.s32.totalorder %s410, %s424
    %p426 = scmp.eq.s32.totalorder %s85, 0
    %p427 = por %p425, %p426
    %s429 = sadd.s32 %s428, 1
    %p432 = scmp.eq.s32.totalorder %s79, 3
    %p433 = scmp.ne.s32.totalorder %s428, %s430
    %p434 = scmp.eq.s32.totalorder %s79, 0
    %p435 = por %p433, %p434
    %p436 = scmp.ne.s32.totalorder %s428, %s430
    %p437 = scmp.eq.s32.totalorder %s84, 3
    %p438 = por %p436, %p437
    %p439 = scmp.ne.s32.totalorder %s430, %s431
    %p440 = scmp.eq.s32.totalorder %s84, 0
    %p441 = por %p439, %p440
    %p442 = scmp.ne.s32.totalorder %s430, %s431
    %p443 = scmp.eq.s32.totalorder %s85, 3
    %p444 = por %p442, %p443
    %p446 = scmp.ne.s32.totalorder %s431, %s445
    %p447 = scmp.eq.s32.totalorder %s85, 0
    %p448 = por %p446, %p447
    %s450 = sadd.s32 %s449, 1
    %p453 = scmp.eq.s32.totalorder %s79, 3
    %p454 = scmp.ne.s32.totalorder %s449, %s451
    %p455 = scmp.eq.s32.totalorder %s79, 0
    %p456 = por %p454, %p455
    %p457 = scmp.ne.s32.totalorder %s449, %s451
    %p458 = scmp.eq.s32.totalorder %s84, 3
    %p459 = por %p457, %p458
    %p460 = scmp.ne.s32.totalorder %s451, %s452
    %p461 = scmp.eq.s32.totalorder %s84, 0
    %p462 = por %p460, %p461
    %p463 = scmp.ne.s32.totalorder %s451, %s452
    %p464 = scmp.eq.s32.totalorder %s85, 3
    %p465 = por %p463, %p464
    %p467 = scmp.ne.s32.totalorder %s452, %s466
    %p468 = scmp.eq.s32.totalorder %s85, 0
    %p469 = por %p467, %p468
    %s471 = sadd.s32 %s470, 1
    %p474 = scmp.eq.s32.totalorder %s79, 3
    %p475 = scmp.ne.s32.totalorder %s470, %s472
    %p476 = scmp.eq.s32.totalorder %s79, 0
    %p477 = por %p475, %p476
    %p478 = scmp.ne.s32.totalorder %s470, %s472
    %p479 = scmp.eq.s32.totalorder %s84, 3
    %p480 = por %p478, %p479
    %p481 = scmp.ne.s32.totalorder %s472, %s473
    %p482 = scmp.eq.s32.totalorder %s84, 0
    %p483 = por %p481, %p482
    %p484 = scmp.ne.s32.totalorder %s472, %s473
    %p485 = scmp.eq.s32.totalorder %s85, 3
    %p486 = por %p484, %p485
    %p488 = scmp.ne.s32.totalorder %s473, %s487
    %p489 = scmp.eq.s32.totalorder %s85, 0
    %p490 = por %p488, %p489
    %s492 = sadd.s32 %s491, 1
    %p495 = scmp.eq.s32.totalorder %s79, 3
    %p496 = scmp.ne.s32.totalorder %s491, %s493
    %p497 = scmp.eq.s32.totalorder %s79, 0
    %p498 = por %p496, %p497
    %p499 = scmp.ne.s32.totalorder %s491, %s493
    %p500 = scmp.eq.s32.totalorder %s84, 3
    %p501 = por %p499, %p500
    %p502 = scmp.ne.s32.totalorder %s493, %s494
    %p503 = scmp.eq.s32.totalorder %s84, 0
    %p504 = por %p502, %p503
    %p505 = scmp.ne.s32.totalorder %s493, %s494
    %p506 = scmp.eq.s32.totalorder %s85, 3
    %p507 = por %p505, %p506
    %p509 = scmp.ne.s32.totalorder %s494, %s508
    %p510 = scmp.eq.s32.totalorder %s85, 0
    %p511 = por %p509, %p510
    %s513 = sadd.s32 %s512, 1
    %p516 = scmp.eq.s32.totalorder %s79, 3
    %p517 = scmp.ne.s32.totalorder %s512, %s514
    %p518 = scmp.eq.s32.totalorder %s79, 0
    %p519 = por %p517, %p518
    %p520 = scmp.ne.s32.totalorder %s512, %s514
    %p521 = scmp.eq.s32.totalorder %s84, 3
    %p522 = por %p520, %p521
    %p523 = scmp.ne.s32.totalorder %s514, %s515
    %p524 = scmp.eq.s32.totalorder %s84, 0
    %p525 = por %p523, %p524
    %p526 = scmp.ne.s32.totalorder %s514, %s515
    %p527 = scmp.eq.s32.totalorder %s85, 3
    %p528 = por %p526, %p527
    %p530 = scmp.ne.s32.totalorder %s515, %s529
    %p531 = scmp.eq.s32.totalorder %s85, 0
    %p532 = por %p530, %p531
    %s534 = sadd.s32 %s533, 1
    %p537 = scmp.eq.s32.totalorder %s79, 3
    %p538 = scmp.ne.s32.totalorder %s533, %s535
    %p539 = scmp.eq.s32.totalorder %s79, 0
    %p540 = por %p538, %p539
    %p541 = scmp.ne.s32.totalorder %s533, %s535
    %p542 = scmp.eq.s32.totalorder %s84, 3
    %p543 = por %p541, %p542
    %p544 = scmp.ne.s32.totalorder %s535, %s536
    %p545 = scmp.eq.s32.totalorder %s84, 0
    %p546 = por %p544, %p545
    %p547 = scmp.ne.s32.totalorder %s535, %s536
    %p548 = scmp.eq.s32.totalorder %s85, 3
    %p549 = por %p547, %p548
    %p551 = scmp.ne.s32.totalorder %s536, %s550
    %p552 = scmp.eq.s32.totalorder %s85, 0
    %p553 = por %p551, %p552
    %s555 = sadd.s32 %s554, 1
    %p558 = scmp.eq.s32.totalorder %s79, 3
    %p559 = scmp.ne.s32.totalorder %s554, %s556
    %p560 = scmp.eq.s32.totalorder %s79, 0
    %p561 = por %p559, %p560
    %p562 = scmp.ne.s32.totalorder %s554, %s556
    %p563 = scmp.eq.s32.totalorder %s84, 3
    %p564 = por %p562, %p563
    %p565 = scmp.ne.s32.totalorder %s556, %s557
    %p566 = scmp.eq.s32.totalorder %s84, 0
    %p567 = por %p565, %p566
    %p568 = scmp.ne.s32.totalorder %s556, %s557
    %p569 = scmp.eq.s32.totalorder %s85, 3
    %p570 = por %p568, %p569
    %p572 = scmp.ne.s32.totalorder %s557, %s571
    %p573 = scmp.eq.s32.totalorder %s85, 0
    %p574 = por %p572, %p573
    %s576 = sadd.s32 %s575, 1
    %p579 = scmp.eq.s32.totalorder %s79, 3
    %p580 = scmp.ne.s32.totalorder %s575, %s577
    %p581 = scmp.eq.s32.totalorder %s79, 0
    %p582 = por %p580, %p581
    %p583 = scmp.ne.s32.totalorder %s575, %s577
    %p584 = scmp.eq.s32.totalorder %s84, 3
    %p585 = por %p583, %p584
    %p586 = scmp.ne.s32.totalorder %s577, %s578
    %p587 = scmp.eq.s32.totalorder %s84, 0
    %p588 = por %p586, %p587
    %p589 = scmp.ne.s32.totalorder %s577, %s578
    %p590 = scmp.eq.s32.totalorder %s85, 3
    %p591 = por %p589, %p590
    %p593 = scmp.ne.s32.totalorder %s578, %s592
    %p594 = scmp.eq.s32.totalorder %s85, 0
    %p595 = por %p593, %p594
    %s597 = sadd.s32 %s596, 1
    %p600 = scmp.eq.s32.totalorder %s79, 3
    %p601 = scmp.ne.s32.totalorder %s596, %s598
    %p602 = scmp.eq.s32.totalorder %s79, 0
    %p603 = por %p601, %p602
    %p604 = scmp.ne.s32.totalorder %s596, %s598
    %p605 = scmp.eq.s32.totalorder %s84, 3
    %p606 = por %p604, %p605
    %p607 = scmp.ne.s32.totalorder %s598, %s599
    %p608 = scmp.eq.s32.totalorder %s84, 0
    %p609 = por %p607, %p608
    %p610 = scmp.ne.s32.totalorder %s598, %s599
    %p611 = scmp.eq.s32.totalorder %s85, 3
    %p612 = por %p610, %p611
    %p614 = scmp.ne.s32.totalorder %s599, %s613
    %p615 = scmp.eq.s32.totalorder %s85, 0
    %p616 = por %p614, %p615
    %s618 = sadd.s32 %s617, 1
    %p621 = scmp.eq.s32.totalorder %s79, 3
    %p622 = scmp.ne.s32.totalorder %s617, %s619
    %p623 = scmp.eq.s32.totalorder %s79, 0
    %p624 = por %p622, %p623
    %p625 = scmp.ne.s32.totalorder %s617, %s619
    %p626 = scmp.eq.s32.totalorder %s84, 3
    %p627 = por %p625, %p626
    %p628 = scmp.ne.s32.totalorder %s619, %s620
    %p629 = scmp.eq.s32.totalorder %s84, 0
    %p630 = por %p628, %p629
    %p631 = scmp.ne.s32.totalorder %s619, %s620
    %p632 = scmp.eq.s32.totalorder %s85, 3
    %p633 = por %p631, %p632
    %p635 = scmp.ne.s32.totalorder %s620, %s634
    %p636 = scmp.eq.s32.totalorder %s85, 0
    %p637 = por %p635, %p636
    %s639 = sadd.s32 %s638, 1
    %p642 = scmp.eq.s32.totalorder %s79, 3
    %p643 = scmp.ne.s32.totalorder %s638, %s640
    %p644 = scmp.eq.s32.totalorder %s79, 0
    %p645 = por %p643, %p644
    %p646 = scmp.ne.s32.totalorder %s638, %s640
    %p647 = scmp.eq.s32.totalorder %s84, 3
    %p648 = por %p646, %p647
    %p649 = scmp.ne.s32.totalorder %s640, %s641
    %p650 = scmp.eq.s32.totalorder %s84, 0
    %p651 = por %p649, %p650
    %p652 = scmp.ne.s32.totalorder %s640, %s641
    %p653 = scmp.eq.s32.totalorder %s85, 3
    %p654 = por %p652, %p653
    %p656 = scmp.ne.s32.totalorder %s641, %s655
    %p657 = scmp.eq.s32.totalorder %s85, 0
    %p658 = por %p656, %p657
    %s660 = sadd.s32 %s659, 1
    %p663 = scmp.eq.s32.totalorder %s79, 3
    %p664 = scmp.ne.s32.totalorder %s659, %s661
    %p665 = scmp.eq.s32.totalorder %s79, 0
    %p666 = por %p664, %p665
    %p667 = scmp.ne.s32.totalorder %s659, %s661
    %p668 = scmp.eq.s32.totalorder %s84, 3
    %p669 = por %p667, %p668
    %p670 = scmp.ne.s32.totalorder %s661, %s662
    %p671 = scmp.eq.s32.totalorder %s84, 0
    %p672 = por %p670, %p671
    %p673 = scmp.ne.s32.totalorder %s661, %s662
    %p674 = scmp.eq.s32.totalorder %s85, 3
    %p675 = por %p673, %p674
    %p677 = scmp.ne.s32.totalorder %s662, %s676
    %p678 = scmp.eq.s32.totalorder %s85, 0
    %p679 = por %p677, %p678
    %s681 = sadd.s32 %s680, 1
    %p684 = scmp.eq.s32.totalorder %s79, 3
    %p685 = scmp.ne.s32.totalorder %s680, %s682
    %p686 = scmp.eq.s32.totalorder %s79, 0
    %p687 = por %p685, %p686
    %p688 = scmp.ne.s32.totalorder %s680, %s682
    %p689 = scmp.eq.s32.totalorder %s84, 3
    %p690 = por %p688, %p689
    %p691 = scmp.ne.s32.totalorder %s682, %s683
    %p692 = scmp.eq.s32.totalorder %s84, 0
    %p693 = por %p691, %p692
    %p694 = scmp.ne.s32.totalorder %s682, %s683
    %p695 = scmp.eq.s32.totalorder %s85, 3
    %p696 = por %p694, %p695
    %p698 = scmp.ne.s32.totalorder %s683, %s697
    %p699 = scmp.eq.s32.totalorder %s85, 0
    %p700 = por %p698, %p699
    %s702 = sadd.s32 %s701, 1
    %p705 = scmp.eq.s32.totalorder %s79, 3
    %p706 = scmp.ne.s32.totalorder %s701, %s703
    %p707 = scmp.eq.s32.totalorder %s79, 0
    %p708 = por %p706, %p707
    %p709 = scmp.ne.s32.totalorder %s701, %s703
    %p710 = scmp.eq.s32.totalorder %s84, 3
    %p711 = por %p709, %p710
    %p712 = scmp.ne.s32.totalorder %s703, %s704
    %p713 = scmp.eq.s32.totalorder %s84, 0
    %p714 = por %p712, %p713
    %p715 = scmp.ne.s32.totalorder %s703, %s704
    %p716 = scmp.eq.s32.totalorder %s85, 3
    %p717 = por %p715, %p716
    %p719 = scmp.ne.s32.totalorder %s704, %s718
    %p720 = scmp.eq.s32.totalorder %s85, 0
    %p721 = por %p719, %p720
    %s723 = sadd.s32 %s722, 1
    %p726 = scmp.eq.s32.totalorder %s79, 3
    %p727 = scmp.ne.s32.totalorder %s722, %s724
    %p728 = scmp.eq.s32.totalorder %s79, 0
    %p729 = por %p727, %p728
    %p730 = scmp.ne.s32.totalorder %s722, %s724
    %p731 = scmp.eq.s32.totalorder %s84, 3
    %p732 = por %p730, %p731
    %p733 = scmp.ne.s32.totalorder %s724, %s725
    %p734 = scmp.eq.s32.totalorder %s84, 0
    %p735 = por %p733, %p734
    %p736 = scmp.ne.s32.totalorder %s724, %s725
    %p737 = scmp.eq.s32.totalorder %s85, 3
    %p738 = por %p736, %p737
    %p740 = scmp.ne.s32.totalorder %s725, %s739
    %p741 = scmp.eq.s32.totalorder %s85, 0
    %p742 = por %p740, %p741
    %s744 = sadd.s32 %s743, 1
    %p747 = scmp.eq.s32.totalorder %s79, 3
    %p748 = scmp.ne.s32.totalorder %s743, %s745
    %p749 = scmp.eq.s32.totalorder %s79, 0
    %p750 = por %p748, %p749
    %p751 = scmp.ne.s32.totalorder %s743, %s745
    %p752 = scmp.eq.s32.totalorder %s84, 3
    %p753 = por %p751, %p752
    %p754 = scmp.ne.s32.totalorder %s745, %s746
    %p755 = scmp.eq.s32.totalorder %s84, 0
    %p756 = por %p754, %p755
    %p757 = scmp.ne.s32.totalorder %s745, %s746
    %p758 = scmp.eq.s32.totalorder %s85, 3
    %p759 = por %p757, %p758
    %p761 = scmp.ne.s32.totalorder %s746, %s760
    %p762 = scmp.eq.s32.totalorder %s85, 0
    %p763 = por %p761, %p762
    %s765 = sadd.s32 %s764, 1
    %p768 = scmp.eq.s32.totalorder %s79, 3
    %p769 = scmp.ne.s32.totalorder %s764, %s766
    %p770 = scmp.eq.s32.totalorder %s79, 0
    %p771 = por %p769, %p770
    %p772 = scmp.ne.s32.totalorder %s764, %s766
    %p773 = scmp.eq.s32.totalorder %s84, 3
    %p774 = por %p772, %p773
    %p775 = scmp.ne.s32.totalorder %s766, %s767
    %p776 = scmp.eq.s32.totalorder %s84, 0
    %p777 = por %p775, %p776
    %p778 = scmp.ne.s32.totalorder %s766, %s767
    %p779 = scmp.eq.s32.totalorder %s85, 3
    %p780 = por %p778, %p779
    %p782 = scmp.ne.s32.totalorder %s767, %s781
    %p783 = scmp.eq.s32.totalorder %s85, 0
    %p784 = por %p782, %p783
    %s786 = sadd.s32 %s785, 1
    %p789 = scmp.eq.s32.totalorder %s79, 3
    %p790 = scmp.ne.s32.totalorder %s785, %s787
    %p791 = scmp.eq.s32.totalorder %s79, 0
    %p792 = por %p790, %p791
    %p793 = scmp.ne.s32.totalorder %s785, %s787
    %p794 = scmp.eq.s32.totalorder %s84, 3
    %p795 = por %p793, %p794
    %p796 = scmp.ne.s32.totalorder %s787, %s788
    %p797 = scmp.eq.s32.totalorder %s84, 0
    %p798 = por %p796, %p797
    %p799 = scmp.ne.s32.totalorder %s787, %s788
    %p800 = scmp.eq.s32.totalorder %s85, 3
    %p801 = por %p799, %p800
    %p803 = scmp.ne.s32.totalorder %s788, %s802
    %p804 = scmp.eq.s32.totalorder %s85, 0
    %p805 = por %p803, %p804
    %s807 = sadd.s32 %s806, 1
    %p810 = scmp.eq.s32.totalorder %s79, 3
    %p811 = scmp.ne.s32.totalorder %s806, %s808
    %p812 = scmp.eq.s32.totalorder %s79, 0
    %p813 = por %p811, %p812
    %p814 = scmp.ne.s32.totalorder %s806, %s808
    %p815 = scmp.eq.s32.totalorder %s84, 3
    %p816 = por %p814, %p815
    %p817 = scmp.ne.s32.totalorder %s808, %s809
    %p818 = scmp.eq.s32.totalorder %s84, 0
    %p819 = por %p817, %p818
    %p820 = scmp.ne.s32.totalorder %s808, %s809
    %p821 = scmp.eq.s32.totalorder %s85, 3
    %p822 = por %p820, %p821
    %p824 = scmp.ne.s32.totalorder %s809, %s823
    %p825 = scmp.eq.s32.totalorder %s85, 0
    %p826 = por %p824, %p825
    %s828 = sadd.s32 %s827, 1
    %p831 = scmp.eq.s32.totalorder %s79, 3
    %p832 = scmp.ne.s32.totalorder %s827, %s829
    %p833 = scmp.eq.s32.totalorder %s79, 0
    %p834 = por %p832, %p833
    %p835 = scmp.ne.s32.totalorder %s827, %s829
    %p836 = scmp.eq.s32.totalorder %s84, 3
    %p837 = por %p835, %p836
    %p838 = scmp.ne.s32.totalorder %s829, %s830
    %p839 = scmp.eq.s32.totalorder %s84, 0
    %p840 = por %p838, %p839
    %p841 = scmp.ne.s32.totalorder %s829, %s830
    %p842 = scmp.eq.s32.totalorder %s85, 3
    %p843 = por %p841, %p842
    %p845 = scmp.ne.s32.totalorder %s830, %s844
    %p846 = scmp.eq.s32.totalorder %s85, 0
    %p847 = por %p845, %p846
    %s848 = ssub.s32 %s79, %s86
    %p849 = scmp.eq.s32.totalorder %s848, 0
    %s851 = sadd.s32 %s850, 1
    %s852 = scalar_select %p849, %s850, %s851
    %p855 = pneg %p849
    %p856 = scmp.eq.s32.totalorder %s79, 3
    %p857 = por %p855, %p856
    %p858 = scmp.ne.s32.totalorder %s850, %s853
    %p859 = scmp.eq.s32.totalorder %s79, 0
    %p860 = por %p858, %p859
    %p861 = scmp.ne.s32.totalorder %s850, %s853
    %p862 = scmp.eq.s32.totalorder %s84, 3
    %p863 = por %p861, %p862
    %p864 = scmp.ne.s32.totalorder %s853, %s854
    %p865 = scmp.eq.s32.totalorder %s84, 0
    %p866 = por %p864, %p865
    %p867 = scmp.ne.s32.totalorder %s853, %s854
    %p868 = scmp.eq.s32.totalorder %s85, 3
    %p869 = por %p867, %p868
    %p871 = scmp.ne.s32.totalorder %s854, %s870
    %p872 = scmp.eq.s32.totalorder %s85, 0
    %p873 = por %p871, %p872
    %p874 = scmp.le.s32.totalorder 1, %s79
    %p875 = scmp.lt.s32.totalorder %s79, 5
    %p876 = pnand %p874, %p875
    %p877 = pneg %p876
    // Predicated region
    $region9: #{tpu_custom_call.1} parent=5 // pred_check
      _
    $region10: #{tpu_custom_call.1} parent=5 // pred_check_branch
      %879 = sbr.rel (%p876) target = $region12
    $region11: #{tpu_custom_call.1} parent=5 // pred_region
      %s880 = ssub.s32 %s79, 1
      // Predicated region
      $region13: #{tpu_custom_call.1} parent=11 // pred_check
        %p881 = pneg %p126
      $region14: #{tpu_custom_call.1} parent=11 // pred_check_branch
        %883 = sbr.rel (%p881) target = $region16
      $region15: #{tpu_custom_call.1} parent=11 // pred_region
        _
      $region16: #{tpu_custom_call.1} parent=11 // pred_fallthru
        _
      // Predicated region
      $region17: #{tpu_custom_call.1} parent=11 // pred_check
        %p884 = pneg %p147
      $region18: #{tpu_custom_call.1} parent=11 // pred_check_branch
        %886 = sbr.rel (%p884) target = $region20
      $region19: #{tpu_custom_call.1} parent=11 // pred_region
        _
      $region20: #{tpu_custom_call.1} parent=11 // pred_fallthru
        _
      // Predicated region
      $region21: #{tpu_custom_call.1} parent=11 // pred_check
        %p887 = pneg %p168
      $region22: #{tpu_custom_call.1} parent=11 // pred_check_branch
        %889 = sbr.rel (%p887) target = $region24
      $region23: #{tpu_custom_call.1} parent=11 // pred_region
        _
      $region24: #{tpu_custom_call.1} parent=11 // pred_fallthru
        _
      // Predicated region
      $region25: #{tpu_custom_call.1} parent=11 // pred_check
        %p890 = pneg %p189
      $region26: #{tpu_custom_call.1} parent=11 // pred_check_branch
        %892 = sbr.rel (%p890) target = $region28
      $region27: #{tpu_custom_call.1} parent=11 // pred_region
        _
      $region28: #{tpu_custom_call.1} parent=11 // pred_fallthru
        _
      // Predicated region
      $region29: #{tpu_custom_call.1} parent=11 // pred_check
        %p893 = pneg %p210
      $region30: #{tpu_custom_call.1} parent=11 // pred_check_branch
        %895 = sbr.rel (%p893) target = $region32
      $region31: #{tpu_custom_call.1} parent=11 // pred_region
        _
      $region32: #{tpu_custom_call.1} parent=11 // pred_fallthru
        _
      // Predicated region
      $region33: #{tpu_custom_call.1} parent=11 // pred_check
        %p896 = pneg %p231
      $region34: #{tpu_custom_call.1} parent=11 // pred_check_branch
        %898 = sbr.rel (%p896) target = $region36
      $region35: #{tpu_custom_call.1} parent=11 // pred_region
        _
      $region36: #{tpu_custom_call.1} parent=11 // pred_fallthru
        _
      // Predicated region
      $region37: #{tpu_custom_call.1} parent=11 // pred_check
        %p899 = pneg %p252
      $region38: #{tpu_custom_call.1} parent=11 // pred_check_branch
        %901 = sbr.rel (%p899) target = $region40
      $region39: #{tpu_custom_call.1} parent=11 // pred_region
        _
      $region40: #{tpu_custom_call.1} parent=11 // pred_fallthru
        _
      // Predicated region
      $region41: #{tpu_custom_call.1} parent=11 // pred_check
        %p902 = pneg %p273
      $region42: #{tpu_custom_call.1} parent=11 // pred_check_branch
        %904 = sbr.rel (%p902) target = $region44
      $region43: #{tpu_custom_call.1} parent=11 // pred_region
        _
      $region44: #{tpu_custom_call.1} parent=11 // pred_fallthru
        _
      // Predicated region
      $region45: #{tpu_custom_call.1} parent=11 // pred_check
        %p905 = pneg %p294
      $region46: #{tpu_custom_call.1} parent=11 // pred_check_branch
        %907 = sbr.rel (%p905) target = $region48
      $region47: #{tpu_custom_call.1} parent=11 // pred_region
        _
      $region48: #{tpu_custom_call.1} parent=11 // pred_fallthru
        _
      // Predicated region
      $region49: #{tpu_custom_call.1} parent=11 // pred_check
        %p908 = pneg %p315
      $region50: #{tpu_custom_call.1} parent=11 // pred_check_branch
        %910 = sbr.rel (%p908) target = $region52
      $region51: #{tpu_custom_call.1} parent=11 // pred_region
        _
      $region52: #{tpu_custom_call.1} parent=11 // pred_fallthru
        _
      // Predicated region
      $region53: #{tpu_custom_call.1} parent=11 // pred_check
        %p911 = pneg %p336
      $region54: #{tpu_custom_call.1} parent=11 // pred_check_branch
        %913 = sbr.rel (%p911) target = $region56
      $region55: #{tpu_custom_call.1} parent=11 // pred_region
        _
      $region56: #{tpu_custom_call.1} parent=11 // pred_fallthru
        _
      // Predicated region
      $region57: #{tpu_custom_call.1} parent=11 // pred_check
        %p914 = pneg %p357
      $region58: #{tpu_custom_call.1} parent=11 // pred_check_branch
        %916 = sbr.rel (%p914) target = $region60
      $region59: #{tpu_custom_call.1} parent=11 // pred_region
        _
      $region60: #{tpu_custom_call.1} parent=11 // pred_fallthru
        _
      // Predicated region
      $region61: #{tpu_custom_call.1} parent=11 // pred_check
        %p917 = pneg %p378
      $region62: #{tpu_custom_call.1} parent=11 // pred_check_branch
        %919 = sbr.rel (%p917) target = $region64
      $region63: #{tpu_custom_call.1} parent=11 // pred_region
        _
      $region64: #{tpu_custom_call.1} parent=11 // pred_fallthru
        _
      // Predicated region
      $region65: #{tpu_custom_call.1} parent=11 // pred_check
        %p920 = pneg %p399
      $region66: #{tpu_custom_call.1} parent=11 // pred_check_branch
        %922 = sbr.rel (%p920) target = $region68
      $region67: #{tpu_custom_call.1} parent=11 // pred_region
        _
      $region68: #{tpu_custom_call.1} parent=11 // pred_fallthru
        _
      // Predicated region
      $region69: #{tpu_custom_call.1} parent=11 // pred_check
        %p923 = pneg %p420
      $region70: #{tpu_custom_call.1} parent=11 // pred_check_branch
        %925 = sbr.rel (%p923) target = $region72
      $region71: #{tpu_custom_call.1} parent=11 // pred_region
        _
      $region72: #{tpu_custom_call.1} parent=11 // pred_fallthru
        _
      // Predicated region
      $region73: #{tpu_custom_call.1} parent=11 // pred_check
        %p926 = pneg %p441
      $region74: #{tpu_custom_call.1} parent=11 // pred_check_branch
        %928 = sbr.rel (%p926) target = $region76
      $region75: #{tpu_custom_call.1} parent=11 // pred_region
        _
      $region76: #{tpu_custom_call.1} parent=11 // pred_fallthru
        _
      // Predicated region
      $region77: #{tpu_custom_call.1} parent=11 // pred_check
        %p929 = pneg %p462
      $region78: #{tpu_custom_call.1} parent=11 // pred_check_branch
        %931 = sbr.rel (%p929) target = $region80
      $region79: #{tpu_custom_call.1} parent=11 // pred_region
        _
      $region80: #{tpu_custom_call.1} parent=11 // pred_fallthru
        _
      // Predicated region
      $region81: #{tpu_custom_call.1} parent=11 // pred_check
        %p932 = pneg %p483
      $region82: #{tpu_custom_call.1} parent=11 // pred_check_branch
        %934 = sbr.rel (%p932) target = $region84
      $region83: #{tpu_custom_call.1} parent=11 // pred_region
        _
      $region84: #{tpu_custom_call.1} parent=11 // pred_fallthru
        _
      // Predicated region
      $region85: #{tpu_custom_call.1} parent=11 // pred_check
        %p935 = pneg %p504
      $region86: #{tpu_custom_call.1} parent=11 // pred_check_branch
        %937 = sbr.rel (%p935) target = $region88
      $region87: #{tpu_custom_call.1} parent=11 // pred_region
        _
      $region88: #{tpu_custom_call.1} parent=11 // pred_fallthru
        _
      // Predicated region
      $region89: #{tpu_custom_call.1} parent=11 // pred_check
        %p938 = pneg %p525
      $region90: #{tpu_custom_call.1} parent=11 // pred_check_branch
        %940 = sbr.rel (%p938) target = $region92
      $region91: #{tpu_custom_call.1} parent=11 // pred_region
        _
      $region92: #{tpu_custom_call.1} parent=11 // pred_fallthru
        _
      // Predicated region
      $region93: #{tpu_custom_call.1} parent=11 // pred_check
        %p941 = pneg %p546
      $region94: #{tpu_custom_call.1} parent=11 // pred_check_branch
        %943 = sbr.rel (%p941) target = $region96
      $region95: #{tpu_custom_call.1} parent=11 // pred_region
        _
      $region96: #{tpu_custom_call.1} parent=11 // pred_fallthru
        _
      // Predicated region
      $region97: #{tpu_custom_call.1} parent=11 // pred_check
        %p944 = pneg %p567
      $region98: #{tpu_custom_call.1} parent=11 // pred_check_branch
        %946 = sbr.rel (%p944) target = $region100
      $region99: #{tpu_custom_call.1} parent=11 // pred_region
        _
      $region100: #{tpu_custom_call.1} parent=11 // pred_fallthru
        _
      // Predicated region
      $region101: #{tpu_custom_call.1} parent=11 // pred_check
        %p947 = pneg %p588
      $region102: #{tpu_custom_call.1} parent=11 // pred_check_branch
        %949 = sbr.rel (%p947) target = $region104
      $region103: #{tpu_custom_call.1} parent=11 // pred_region
        _
      $region104: #{tpu_custom_call.1} parent=11 // pred_fallthru
        _
      // Predicated region
      $region105: #{tpu_custom_call.1} parent=11 // pred_check
        %p950 = pneg %p609
      $region106: #{tpu_custom_call.1} parent=11 // pred_check_branch
        %952 = sbr.rel (%p950) target = $region108
      $region107: #{tpu_custom_call.1} parent=11 // pred_region
        _
      $region108: #{tpu_custom_call.1} parent=11 // pred_fallthru
        _
      // Predicated region
      $region109: #{tpu_custom_call.1} parent=11 // pred_check
        %p953 = pneg %p630
      $region110: #{tpu_custom_call.1} parent=11 // pred_check_branch
        %955 = sbr.rel (%p953) target = $region112
      $region111: #{tpu_custom_call.1} parent=11 // pred_region
        _
      $region112: #{tpu_custom_call.1} parent=11 // pred_fallthru
        _
      // Predicated region
      $region113: #{tpu_custom_call.1} parent=11 // pred_check
        %p956 = pneg %p651
      $region114: #{tpu_custom_call.1} parent=11 // pred_check_branch
        %958 = sbr.rel (%p956) target = $region116
      $region115: #{tpu_custom_call.1} parent=11 // pred_region
        _
      $region116: #{tpu_custom_call.1} parent=11 // pred_fallthru
        _
      // Predicated region
      $region117: #{tpu_custom_call.1} parent=11 // pred_check
        %p959 = pneg %p672
      $region118: #{tpu_custom_call.1} parent=11 // pred_check_branch
        %961 = sbr.rel (%p959) target = $region120
      $region119: #{tpu_custom_call.1} parent=11 // pred_region
        _
      $region120: #{tpu_custom_call.1} parent=11 // pred_fallthru
        _
      // Predicated region
      $region121: #{tpu_custom_call.1} parent=11 // pred_check
        %p962 = pneg %p693
      $region122: #{tpu_custom_call.1} parent=11 // pred_check_branch
        %964 = sbr.rel (%p962) target = $region124
      $region123: #{tpu_custom_call.1} parent=11 // pred_region
        _
      $region124: #{tpu_custom_call.1} parent=11 // pred_fallthru
        _
      // Predicated region
      $region125: #{tpu_custom_call.1} parent=11 // pred_check
        %p965 = pneg %p714
      $region126: #{tpu_custom_call.1} parent=11 // pred_check_branch
        %967 = sbr.rel (%p965) target = $region128
      $region127: #{tpu_custom_call.1} parent=11 // pred_region
        _
      $region128: #{tpu_custom_call.1} parent=11 // pred_fallthru
        _
      // Predicated region
      $region129: #{tpu_custom_call.1} parent=11 // pred_check
        %p968 = pneg %p735
      $region130: #{tpu_custom_call.1} parent=11 // pred_check_branch
        %970 = sbr.rel (%p968) target = $region132
      $region131: #{tpu_custom_call.1} parent=11 // pred_region
        _
      $region132: #{tpu_custom_call.1} parent=11 // pred_fallthru
        _
      // Predicated region
      $region133: #{tpu_custom_call.1} parent=11 // pred_check
        %p971 = pneg %p756
      $region134: #{tpu_custom_call.1} parent=11 // pred_check_branch
        %973 = sbr.rel (%p971) target = $region136
      $region135: #{tpu_custom_call.1} parent=11 // pred_region
        _
      $region136: #{tpu_custom_call.1} parent=11 // pred_fallthru
        _
      // Predicated region
      $region137: #{tpu_custom_call.1} parent=11 // pred_check
        %p974 = pneg %p777
      $region138: #{tpu_custom_call.1} parent=11 // pred_check_branch
        %976 = sbr.rel (%p974) target = $region140
      $region139: #{tpu_custom_call.1} parent=11 // pred_region
        _
      $region140: #{tpu_custom_call.1} parent=11 // pred_fallthru
        _
      // Predicated region
      $region141: #{tpu_custom_call.1} parent=11 // pred_check
        %p977 = pneg %p798
      $region142: #{tpu_custom_call.1} parent=11 // pred_check_branch
        %979 = sbr.rel (%p977) target = $region144
      $region143: #{tpu_custom_call.1} parent=11 // pred_region
        _
      $region144: #{tpu_custom_call.1} parent=11 // pred_fallthru
        _
      // Predicated region
      $region145: #{tpu_custom_call.1} parent=11 // pred_check
        %p980 = pneg %p819
      $region146: #{tpu_custom_call.1} parent=11 // pred_check_branch
        %982 = sbr.rel (%p980) target = $region148
      $region147: #{tpu_custom_call.1} parent=11 // pred_region
        _
      $region148: #{tpu_custom_call.1} parent=11 // pred_fallthru
        _
      // Predicated region
      $region149: #{tpu_custom_call.1} parent=11 // pred_check
        %p983 = pneg %p840
      $region150: #{tpu_custom_call.1} parent=11 // pred_check_branch
        %985 = sbr.rel (%p983) target = $region152
      $region151: #{tpu_custom_call.1} parent=11 // pred_region
        _
      $region152: #{tpu_custom_call.1} parent=11 // pred_fallthru
        _
    $region12: #{tpu_custom_call.1} parent=5 // pred_fallthru
      _
    %p986 = scmp.lt.s32.totalorder %s79, 4
    // Predicated region
    $region153: #{tpu_custom_call.1} parent=5 // pred_check
      %p987 = pneg %p986
    $region154: #{tpu_custom_call.1} parent=5 // pred_check_branch
      %989 = sbr.rel (%p987) target = $region156
    $region155: #{tpu_custom_call.1} parent=5 // pred_region
      // Predicated region
      $region157: #{tpu_custom_call.1} parent=155 // pred_check
        %p990 = pneg %p99
      $region158: #{tpu_custom_call.1} parent=155 // pred_check_branch
        %992 = sbr.rel (%p990) target = $region160
      $region159: #{tpu_custom_call.1} parent=155 // pred_region
        %s993 = smul.u32 2, %s79
        %p994 = scmp.lt.s32.totalorder %s993, 7
        %s995 = scalar_select %p994, %s993, 7
        %s996 = smul.addr %s995, 8
        %s997 = scalar_lea.vmem %s1, %s996
        %s998 = smul.u32 2, %s79
      $region160: #{tpu_custom_call.1} parent=155 // pred_fallthru
        _
    $region156: #{tpu_custom_call.1} parent=5 // pred_fallthru
      _
    %p999 = scmp.le.s32.totalorder 1, %s79
    %p1000 = scmp.lt.s32.totalorder %s79, 5
    %p1001 = pnand %p999, %p1000
    %p1002 = pneg %p1001
    // Predicated region
    $region161: #{tpu_custom_call.1} parent=5 // pred_check
      _
    $region162: #{tpu_custom_call.1} parent=5 // pred_check_branch
      %1004 = sbr.rel (%p1001) target = $region164
    $region163: #{tpu_custom_call.1} parent=5 // pred_region
      %s1005 = ssub.s32 %s79, 1
      %s1006 = smul.u32 2, %s84
      %p1007 = scmp.lt.s32.totalorder %s1006, 7
      %s1008 = scalar_select %p1007, %s1006, 7
      %s1009 = smul.addr %s1008, 8
      %s1010 = scalar_lea.vmem %s1, %s1009
      %p1011 = pneg %p105
      %p1012 = pneg %p102
      %p1013 = pneg %p126
      %p1014 = pneg %p123
      %p1015 = pneg %p147
      %p1016 = pneg %p144
      %p1017 = pneg %p168
      %p1018 = pneg %p165
      %p1019 = pneg %p189
      %p1020 = pneg %p186
      %p1021 = pneg %p210
      %p1022 = pneg %p207
      %p1023 = pneg %p231
      %p1024 = pneg %p228
      %p1025 = pneg %p252
      %p1026 = pneg %p249
      %p1027 = pneg %p273
      %p1028 = pneg %p270
      %p1029 = pneg %p294
      %p1030 = pneg %p291
      %p1031 = pneg %p315
      %p1032 = pneg %p312
      %p1033 = pneg %p336
      %p1034 = pneg %p333
      %p1035 = pneg %p357
      %p1036 = pneg %p354
      %p1037 = pneg %p378
      %p1038 = pneg %p375
      %p1039 = pneg %p399
      %p1040 = pneg %p396
      %p1041 = pneg %p420
      %p1042 = pneg %p417
      %p1043 = pneg %p441
      %p1044 = pneg %p438
      %p1045 = pneg %p462
      %p1046 = pneg %p459
      %p1047 = pneg %p483
      %p1048 = pneg %p480
      %p1049 = pneg %p504
      %p1050 = pneg %p501
      %p1051 = pneg %p525
      %p1052 = pneg %p522
      %p1053 = pneg %p546
      %p1054 = pneg %p543
      %p1055 = pneg %p567
      %p1056 = pneg %p564
      %p1057 = pneg %p588
      %p1058 = pneg %p585
      %p1059 = pneg %p609
      %p1060 = pneg %p606
      %p1061 = pneg %p630
      %p1062 = pneg %p627
      %p1063 = pneg %p651
      %p1064 = pneg %p648
      %p1065 = pneg %p672
      %p1066 = pneg %p669
      %p1067 = pneg %p693
      %p1068 = pneg %p690
      %p1069 = pneg %p714
      %p1070 = pneg %p711
      %p1071 = pneg %p735
      %p1072 = pneg %p732
      %p1073 = pneg %p756
      %p1074 = pneg %p753
      %p1075 = pneg %p777
      %p1076 = pneg %p774
      %p1077 = pneg %p798
      %p1078 = pneg %p795
      %p1079 = pneg %p819
      %p1080 = pneg %p816
      %p1081 = pneg %p840
      %p1082 = pneg %p837
      %p1083 = pneg %p866
      %p1084 = pneg %p863
      %s1085 = smul.u32 2, %s84
      %p1086 = scmp.lt.s32.totalorder %s1085, 7
      %s1087 = scalar_select %p1086, %s1085, 7
      %s1088 = smul.addr %s1087, 8
      %s1089 = scalar_lea.vmem %s73, %s1088
      %s1090 = smul.u32 2, %s84
      %p1091 = scmp.lt.s32.totalorder %s1090, 7
      %s1092 = scalar_select %p1091, %s1090, 7
      %s1093 = smul.addr %s1092, 8
      %s1094 = scalar_lea.vmem %s1, %s1093
      %s1095 = smul.u32 2, %s84
      %s1096 = smul.u32 2, %s84
      %p1097 = scmp.lt.s32.totalorder %s1096, 7
      %s1098 = scalar_select %p1097, %s1096, 7
      %s1099 = smul.addr %s1098, 8
      %s1100 = scalar_lea.vmem %s73, %s1099
      %s1101 = smul.u32 2, %s84
      %v1102 = vld [vmem:[%s3] sm:$0xff]
      %v1103 = vld [vmem:[%s5] sm:$0xff]
      %v1104 = vld [vmem:[%s5 + $0x8] sm:$0xff]
      %v1105 = vld [vmem:[%s5 + $0x10] sm:$0xff]
      %v1106 = vld [vmem:[%s5 + $0x18] sm:$0xff]
      %v1107 = vld [vmem:[%s7] sm:$0x1]
      %v1108 = vld [vmem:[%s9] sm:$0xff]
      %v1109 = vld [vmem:[%s9 + $0x8] sm:$0xff]
      %v1110 = vld [vmem:[%s9 + $0x10] sm:$0xff]
      %v1111 = vld [vmem:[%s9 + $0x18] sm:$0xff]
      %v1112 = vld [vmem:[%s11] sm:$0x1]
      %v1113 = vld [vmem:[%s13] sm:$0xff]
      %v1114 = vld [vmem:[%s13 + $0x8] sm:$0xff]
      %v1115 = vld [vmem:[%s13 + $0x10] sm:$0xff]
      %v1116 = vld [vmem:[%s13 + $0x18] sm:$0xff]
      %v1117 = vld [vmem:[%s15] sm:$0x1]
      %v1118 = vld [vmem:[%s17] sm:$0xff]
      %v1119 = vld [vmem:[%s17 + $0x8] sm:$0xff]
      %v1120 = vld [vmem:[%s17 + $0x10] sm:$0xff]
      %v1121 = vld [vmem:[%s17 + $0x18] sm:$0xff]
      %v1122 = vld [vmem:[%s19] sm:$0x1]
      %v1123 = vld [vmem:[%s21] sm:$0x1]
      %v1124 = vld [vmem:[%s23] sm:$0x1]
      %v1125 = vld [vmem:[%s25] sm:$0xff]
      %v1126 = vld [vmem:[%s25 + $0x8] sm:$0xff]
      %v1127 = vld [vmem:[%s25 + $0x10] sm:$0xff]
      %v1128 = vld [vmem:[%s25 + $0x18] sm:$0xff]
      %v1129 = vld [vmem:[%s25 + $0x20] sm:$0xff]
      %v1130 = vld [vmem:[%s25 + $0x28] sm:$0xff]
      %v1131 = vld [vmem:[%s25 + $0x30] sm:$0xff]
      %v1132 = vld [vmem:[%s25 + $0x38] sm:$0xff]
      %v1133 = vld [vmem:[%s25 + $0x40] sm:$0xff]
      %v1134 = vld [vmem:[%s25 + $0x48] sm:$0xff]
      %v1135 = vld [vmem:[%s25 + $0x50] sm:$0xff]
      %v1136 = vld [vmem:[%s25 + $0x58] sm:$0xff]
      %v1137 = vld [vmem:[%s25 + $0x60] sm:$0xff]
      %v1138 = vld [vmem:[%s25 + $0x68] sm:$0xff]
      %v1139 = vld [vmem:[%s25 + $0x70] sm:$0xff]
      %v1140 = vld [vmem:[%s25 + $0x78] sm:$0xff]
      %v1141 = vld [vmem:[%s25 + $0x80] sm:$0xff]
      %v1142 = vld [vmem:[%s25 + $0x88] sm:$0xff]
      %v1143 = vld [vmem:[%s25 + $0x90] sm:$0xff]
      %v1144 = vld [vmem:[%s25 + $0x98] sm:$0xff]
      %v1145 = vld [vmem:[%s25 + $0xa0] sm:$0xff]
      %v1146 = vld [vmem:[%s25 + $0xa8] sm:$0xff]
      %v1147 = vld [vmem:[%s25 + $0xb0] sm:$0xff]
      %v1148 = vld [vmem:[%s25 + $0xb8] sm:$0xff]
      %v1149 = vld [vmem:[%s25 + $0xc0] sm:$0xff]
      %v1150 = vld [vmem:[%s25 + $0xc8] sm:$0xff]
      %v1151 = vld [vmem:[%s25 + $0xd0] sm:$0xff]
      %v1152 = vld [vmem:[%s25 + $0xd8] sm:$0xff]
      %v1153 = vld [vmem:[%s25 + $0xe0] sm:$0xff]
      %v1154 = vld [vmem:[%s25 + $0xe8] sm:$0xff]
      %v1155 = vld [vmem:[%s25 + $0xf0] sm:$0xff]
      %v1156 = vld [vmem:[%s25 + $0xf8] sm:$0xff]
      %v1157 = vld [vmem:[%s27] sm:$0x1]
      %v1158 = vld [vmem:[%s29] sm:$0xff]
      %v1159 = vld [vmem:[%s29 + $0x8] sm:$0xff]
      %v1160 = vld [vmem:[%s29 + $0x10] sm:$0xff]
      %v1161 = vld [vmem:[%s29 + $0x18] sm:$0xff]
      %v1162 = vld [vmem:[%s29 + $0x20] sm:$0xff]
      %v1163 = vld [vmem:[%s29 + $0x28] sm:$0xff]
      %v1164 = vld [vmem:[%s29 + $0x30] sm:$0xff]
      %v1165 = vld [vmem:[%s29 + $0x38] sm:$0xff]
      %v1166 = vld [vmem:[%s31] sm:$0x1]
      %v1167 = vld [vmem:[%s33] sm:$0xff]
      %v1168 = vld [vmem:[%s33 + $0x8] sm:$0xff]
      %v1169 = vld [vmem:[%s33 + $0x10] sm:$0xff]
      %v1170 = vld [vmem:[%s33 + $0x18] sm:$0xff]
      %v1171 = vld [vmem:[%s33 + $0x20] sm:$0xff]
      %v1172 = vld [vmem:[%s33 + $0x28] sm:$0xff]
      %v1173 = vld [vmem:[%s33 + $0x30] sm:$0xff]
      %v1174 = vld [vmem:[%s33 + $0x38] sm:$0xff]
      %v1175 = vld [vmem:[%s35] sm:$0x1]
      %v1176 = vld [vmem:[%s37] sm:$0xff]
      %v1177 = vld [vmem:[%s37 + $0x8] sm:$0xff]
      %v1178 = vld [vmem:[%s37 + $0x10] sm:$0xff]
      %v1179 = vld [vmem:[%s37 + $0x18] sm:$0xff]
      %v1180 = vld [vmem:[%s39] sm:$0x1]
      %v1181 = vld [vmem:[%s41] sm:$0xff]
      %v1182 = vld [vmem:[%s41 + $0x8] sm:$0xff]
      %v1183 = vld [vmem:[%s41 + $0x10] sm:$0xff]
      %v1184 = vld [vmem:[%s41 + $0x18] sm:$0xff]
      %v1185 = vld [vmem:[%s43] sm:$0x1]
      %v1186 = vld [vmem:[%s45] sm:$0xff]
      %v1187 = vld [vmem:[%s45 + $0x8] sm:$0xff]
      %v1188 = vld [vmem:[%s47] sm:$0x1]
      %v1189 = vld [vmem:[%s49] sm:$0xff]
      %v1190 = vld [vmem:[%s49 + $0x8] sm:$0xff]
      %v1191 = vld [vmem:[%s49 + $0x10] sm:$0xff]
      %v1192 = vld [vmem:[%s49 + $0x18] sm:$0xff]
      %v1193 = vld [vmem:[%s51] sm:$0x1]
      %v1194 = vld [vmem:[%s53] sm:$0xff]
      %v1195 = vld [vmem:[%s53 + $0x8] sm:$0xff]
      %v1196 = vld [vmem:[%s53 + $0x10] sm:$0xff]
      %v1197 = vld [vmem:[%s53 + $0x18] sm:$0xff]
      %v1198 = vld [vmem:[%s55] sm:$0x1]
      %v1199 = vld [vmem:[%s57] sm:$0xff]
      %v1200 = vld [vmem:[%s57 + $0x8] sm:$0xff]
      %v1201 = vld [vmem:[%s57 + $0x10] sm:$0xff]
      %v1202 = vld [vmem:[%s57 + $0x18] sm:$0xff]
      %v1203 = vld [vmem:[%s59] sm:$0x1]
      %v1204 = vld [vmem:[%s61] sm:$0xff]
      %v1205 = vld [vmem:[%s61 + $0x8] sm:$0xff]
      %v1206 = vld [vmem:[%s63] sm:$0x1]
      %v1207 = vld [vmem:[%s65] sm:$0xff]
      %v1208 = vld [vmem:[%s65 + $0x8] sm:$0xff]
      %v1209 = vld [vmem:[%s67] sm:$0x1]
      %v1210 = vld [vmem:[%s69] sm:$0xff]
      %v1211 = vld [vmem:[%s71] sm:$0x1]
      %v1212 = vld [vmem:[%s1094] sm:$0xff]
      %v1213 = vld [vmem:[%s1094 + $0x8] sm:$0xff]
      %v1214 = vlaneseq
      %v1215 = vshrl.u32 %v1214, 7
      %v1216 = vsub.s32 0, %v1215
      %v1217 = vrot.slane %v1212, %v1216
      %1219 = vbcast.lane.b32.xlu0 %v1217, 256
      %v1220 = vpop.permute.xlu0 %1219
      %v1221 = vlaneseq
      %v1222 = vshrl.u32 %v1221, 7
      %v1223 = vsub.s32 1, %v1222
      %v1224 = vrot.slane %v1212, %v1223
      %1226 = vbcast.lane.b32.xlu0 %v1224, 256
      %v1227 = vpop.permute.xlu0 %1226
      %v1228 = vlaneseq
      %v1229 = vshrl.u32 %v1228, 7
      %v1230 = vsub.s32 2, %v1229
      %v1231 = vrot.slane %v1212, %v1230
      %1233 = vbcast.lane.b32.xlu0 %v1231, 256
      %v1234 = vpop.permute.xlu0 %1233
      %v1235 = vlaneseq
      %v1236 = vshrl.u32 %v1235, 7
      %v1237 = vsub.s32 3, %v1236
      %v1238 = vrot.slane %v1212, %v1237
      %1240 = vbcast.lane.b32.xlu0 %v1238, 256
      %v1241 = vpop.permute.xlu0 %1240
      %v1242 = vlaneseq
      %v1243 = vshrl.u32 %v1242, 7
      %v1244 = vsub.s32 4, %v1243
      %v1245 = vrot.slane %v1212, %v1244
      %1247 = vbcast.lane.b32.xlu0 %v1245, 256
      %v1248 = vpop.permute.xlu0 %1247
      %v1249 = vlaneseq
      %v1250 = vshrl.u32 %v1249, 7
      %v1251 = vsub.s32 5, %v1250
      %v1252 = vrot.slane %v1212, %v1251
      %1254 = vbcast.lane.b32.xlu0 %v1252, 256
      %v1255 = vpop.permute.xlu0 %1254
      %v1256 = vlaneseq
      %v1257 = vshrl.u32 %v1256, 7
      %v1258 = vsub.s32 6, %v1257
      %v1259 = vrot.slane %v1212, %v1258
      %1261 = vbcast.lane.b32.xlu0 %v1259, 256
      %v1262 = vpop.permute.xlu0 %1261
      %v1263 = vlaneseq
      %v1264 = vshrl.u32 %v1263, 7
      %v1265 = vsub.s32 7, %v1264
      %v1266 = vrot.slane %v1212, %v1265
      %1268 = vbcast.lane.b32.xlu0 %v1266, 256
      %v1269 = vpop.permute.xlu0 %1268
      %v1270 = vlaneseq
      %v1271 = vshrl.u32 %v1270, 7
      %v1272 = vsub.s32 0, %v1271
      %v1273 = vrot.slane %v1213, %v1272
      %1275 = vbcast.lane.b32.xlu0 %v1273, 256
      %v1276 = vpop.permute.xlu0 %1275
      %v1277 = vlaneseq
      %v1278 = vshrl.u32 %v1277, 7
      %v1279 = vsub.s32 1, %v1278
      %v1280 = vrot.slane %v1213, %v1279
      %1282 = vbcast.lane.b32.xlu0 %v1280, 256
      %v1283 = vpop.permute.xlu0 %1282
      %v1284 = vlaneseq
      %v1285 = vshrl.u32 %v1284, 7
      %v1286 = vsub.s32 2, %v1285
      %v1287 = vrot.slane %v1213, %v1286
      %1289 = vbcast.lane.b32.xlu0 %v1287, 256
      %v1290 = vpop.permute.xlu0 %1289
      %v1291 = vlaneseq
      %v1292 = vshrl.u32 %v1291, 7
      %v1293 = vsub.s32 3, %v1292
      %v1294 = vrot.slane %v1213, %v1293
      %1296 = vbcast.lane.b32.xlu0 %v1294, 256
      %v1297 = vpop.permute.xlu0 %1296
      %v1298 = vlaneseq
      %v1299 = vshrl.u32 %v1298, 7
      %v1300 = vsub.s32 4, %v1299
      %v1301 = vrot.slane %v1213, %v1300
      %1303 = vbcast.lane.b32.xlu0 %v1301, 256
      %v1304 = vpop.permute.xlu0 %1303
      %v1305 = vlaneseq
      %v1306 = vshrl.u32 %v1305, 7
      %v1307 = vsub.s32 5, %v1306
      %v1308 = vrot.slane %v1213, %v1307
      %1310 = vbcast.lane.b32.xlu0 %v1308, 256
      %v1311 = vpop.permute.xlu0 %1310
      %v1312 = vlaneseq
      %v1313 = vshrl.u32 %v1312, 7
      %v1314 = vsub.s32 6, %v1313
      %v1315 = vrot.slane %v1213, %v1314
      %1317 = vbcast.lane.b32.xlu0 %v1315, 256
      %v1318 = vpop.permute.xlu0 %1317
      %v1319 = vlaneseq
      %v1320 = vshrl.u32 %v1319, 7
      %v1321 = vsub.s32 7, %v1320
      %v1322 = vrot.slane %v1213, %v1321
      %1324 = vbcast.lane.b32.xlu0 %v1322, 256
      %v1325 = vpop.permute.xlu0 %1324
      %v1326 = vmul.f32 %v1220, %v1102
      %v1327 = vmul.f32 %v1227, %v1102
      %v1328 = vmul.f32 %v1234, %v1102
      %v1329 = vmul.f32 %v1241, %v1102
      %v1330 = vmul.f32 %v1248, %v1102
      %v1331 = vmul.f32 %v1255, %v1102
      %v1332 = vmul.f32 %v1262, %v1102
      %v1333 = vmul.f32 %v1269, %v1102
      %v1334 = vmul.f32 %v1276, %v1102
      %v1335 = vmul.f32 %v1283, %v1102
      %v1336 = vmul.f32 %v1290, %v1102
      %v1337 = vmul.f32 %v1297, %v1102
      %v1338 = vmul.f32 %v1304, %v1102
      %v1339 = vmul.f32 %v1311, %v1102
      %v1340 = vmul.f32 %v1318, %v1102
      %v1341 = vmul.f32 %v1325, %v1102
      %v1342 = vmul.f32 %v1326, %v1326
      %v1343 = vmul.f32 %v1327, %v1327
      %v1344 = vmul.f32 %v1328, %v1328
      %v1345 = vmul.f32 %v1329, %v1329
      %v1346 = vmul.f32 %v1330, %v1330
      %v1347 = vmul.f32 %v1331, %v1331
      %v1348 = vmul.f32 %v1332, %v1332
      %v1349 = vmul.f32 %v1333, %v1333
      %v1350 = vmul.f32 %v1334, %v1334
      %v1351 = vmul.f32 %v1335, %v1335
      %v1352 = vmul.f32 %v1336, %v1336
      %v1353 = vmul.f32 %v1337, %v1337
      %v1354 = vmul.f32 %v1338, %v1338
      %v1355 = vmul.f32 %v1339, %v1339
      %v1356 = vmul.f32 %v1340, %v1340
      %v1357 = vmul.f32 %v1341, %v1341
      %vm1358 = vcmask 261120
      %v1359 = vsel %vm1358, %v1342, 0.0
      %v1360 = vrot.slane %v1359, 4
      %v1361 = vadd.f32 %v1359, %v1360
      %v1362 = vrot.slane %v1361, 2
      %v1363 = vadd.f32 %v1361, %v1362
      %v1364 = vrot.slane %v1363, 1
      %v1365 = vadd.f32 %v1363, %v1364
      %v1366 = vsel %vm1358, %v1343, 0.0
      %v1367 = vrot.slane %v1366, 4
      %v1368 = vadd.f32 %v1366, %v1367
      %v1369 = vrot.slane %v1368, 2
      %v1370 = vadd.f32 %v1368, %v1369
      %v1371 = vrot.slane %v1370, 1
      %v1372 = vadd.f32 %v1370, %v1371
      %v1373 = vsel %vm1358, %v1344, 0.0
      %v1374 = vrot.slane %v1373, 4
      %v1375 = vadd.f32 %v1373, %v1374
      %v1376 = vrot.slane %v1375, 2
      %v1377 = vadd.f32 %v1375, %v1376
      %v1378 = vrot.slane %v1377, 1
      %v1379 = vadd.f32 %v1377, %v1378
      %v1380 = vsel %vm1358, %v1345, 0.0
      %v1381 = vrot.slane %v1380, 4
      %v1382 = vadd.f32 %v1380, %v1381
      %v1383 = vrot.slane %v1382, 2
      %v1384 = vadd.f32 %v1382, %v1383
      %v1385 = vrot.slane %v1384, 1
      %v1386 = vadd.f32 %v1384, %v1385
      %v1387 = vsel %vm1358, %v1346, 0.0
      %v1388 = vrot.slane %v1387, 4
      %v1389 = vadd.f32 %v1387, %v1388
      %v1390 = vrot.slane %v1389, 2
      %v1391 = vadd.f32 %v1389, %v1390
      %v1392 = vrot.slane %v1391, 1
      %v1393 = vadd.f32 %v1391, %v1392
      %v1394 = vsel %vm1358, %v1347, 0.0
      %v1395 = vrot.slane %v1394, 4
      %v1396 = vadd.f32 %v1394, %v1395
      %v1397 = vrot.slane %v1396, 2
      %v1398 = vadd.f32 %v1396, %v1397
      %v1399 = vrot.slane %v1398, 1
      %v1400 = vadd.f32 %v1398, %v1399
      %v1401 = vsel %vm1358, %v1348, 0.0
      %v1402 = vrot.slane %v1401, 4
      %v1403 = vadd.f32 %v1401, %v1402
      %v1404 = vrot.slane %v1403, 2
      %v1405 = vadd.f32 %v1403, %v1404
      %v1406 = vrot.slane %v1405, 1
      %v1407 = vadd.f32 %v1405, %v1406
      %v1408 = vsel %vm1358, %v1349, 0.0
      %v1409 = vrot.slane %v1408, 4
      %v1410 = vadd.f32 %v1408, %v1409
      %v1411 = vrot.slane %v1410, 2
      %v1412 = vadd.f32 %v1410, %v1411
      %v1413 = vrot.slane %v1412, 1
      %v1414 = vadd.f32 %v1412, %v1413
      %v1415 = vsel %vm1358, %v1350, 0.0
      %v1416 = vrot.slane %v1415, 4
      %v1417 = vadd.f32 %v1415, %v1416
      %v1418 = vrot.slane %v1417, 2
      %v1419 = vadd.f32 %v1417, %v1418
      %v1420 = vrot.slane %v1419, 1
      %v1421 = vadd.f32 %v1419, %v1420
      %v1422 = vsel %vm1358, %v1351, 0.0
      %v1423 = vrot.slane %v1422, 4
      %v1424 = vadd.f32 %v1422, %v1423
      %v1425 = vrot.slane %v1424, 2
      %v1426 = vadd.f32 %v1424, %v1425
      %v1427 = vrot.slane %v1426, 1
      %v1428 = vadd.f32 %v1426, %v1427
      %v1429 = vsel %vm1358, %v1352, 0.0
      %v1430 = vrot.slane %v1429, 4
      %v1431 = vadd.f32 %v1429, %v1430
      %v1432 = vrot.slane %v1431, 2
      %v1433 = vadd.f32 %v1431, %v1432
      %v1434 = vrot.slane %v1433, 1
      %v1435 = vadd.f32 %v1433, %v1434
      %v1436 = vsel %vm1358, %v1353, 0.0
      %v1437 = vrot.slane %v1436, 4
      %v1438 = vadd.f32 %v1436, %v1437
      %v1439 = vrot.slane %v1438, 2
      %v1440 = vadd.f32 %v1438, %v1439
      %v1441 = vrot.slane %v1440, 1
      %v1442 = vadd.f32 %v1440, %v1441
      %v1443 = vsel %vm1358, %v1354, 0.0
      %v1444 = vrot.slane %v1443, 4
      %v1445 = vadd.f32 %v1443, %v1444
      %v1446 = vrot.slane %v1445, 2
      %v1447 = vadd.f32 %v1445, %v1446
      %v1448 = vrot.slane %v1447, 1
      %v1449 = vadd.f32 %v1447, %v1448
      %v1450 = vsel %vm1358, %v1355, 0.0
      %v1451 = vrot.slane %v1450, 4
      %v1452 = vadd.f32 %v1450, %v1451
      %v1453 = vrot.slane %v1452, 2
      %v1454 = vadd.f32 %v1452, %v1453
      %v1455 = vrot.slane %v1454, 1
      %v1456 = vadd.f32 %v1454, %v1455
      %v1457 = vsel %vm1358, %v1356, 0.0
      %v1458 = vrot.slane %v1457, 4
      %v1459 = vadd.f32 %v1457, %v1458
      %v1460 = vrot.slane %v1459, 2
      %v1461 = vadd.f32 %v1459, %v1460
      %v1462 = vrot.slane %v1461, 1
      %v1463 = vadd.f32 %v1461, %v1462
      %v1464 = vsel %vm1358, %v1357, 0.0
      %v1465 = vrot.slane %v1464, 4
      %v1466 = vadd.f32 %v1464, %v1465
      %v1467 = vrot.slane %v1466, 2
      %v1468 = vadd.f32 %v1466, %v1467
      %v1469 = vrot.slane %v1468, 1
      %v1470 = vadd.f32 %v1468, %v1469
      %v1471 = vadd.f32 %v1365, 1e-12
      %v1472 = vadd.f32 %v1372, 1e-12
      %v1473 = vadd.f32 %v1379, 1e-12
      %v1474 = vadd.f32 %v1386, 1e-12
      %v1475 = vadd.f32 %v1393, 1e-12
      %v1476 = vadd.f32 %v1400, 1e-12
      %v1477 = vadd.f32 %v1407, 1e-12
      %v1478 = vadd.f32 %v1414, 1e-12
      %v1479 = vadd.f32 %v1421, 1e-12
      %v1480 = vadd.f32 %v1428, 1e-12
      %v1481 = vadd.f32 %v1435, 1e-12
      %v1482 = vadd.f32 %v1442, 1e-12
      %v1483 = vadd.f32 %v1449, 1e-12
      %v1484 = vadd.f32 %v1456, 1e-12
      %v1485 = vadd.f32 %v1463, 1e-12
      %v1486 = vadd.f32 %v1470, 1e-12
      %v1487 = vrsqrt.pop %v1471
      %v1488 = vrsqrt.pop %v1472
      %v1489 = vrsqrt.pop %v1473
      %v1490 = vrsqrt.pop %v1474
      %v1491 = vrsqrt.pop %v1475
      %v1492 = vrsqrt.pop %v1476
      %v1493 = vrsqrt.pop %v1477
      %v1494 = vrsqrt.pop %v1478
      %v1495 = vrsqrt.pop %v1479
      %v1496 = vrsqrt.pop %v1480
      %v1497 = vrsqrt.pop %v1481
      %v1498 = vrsqrt.pop %v1482
      %v1499 = vrsqrt.pop %v1483
      %v1500 = vrsqrt.pop %v1484
      %v1501 = vrsqrt.pop %v1485
      %v1502 = vrsqrt.pop %v1486
      %v1503 = vmul.f32 %v1326, %v1487
      %v1504 = vmul.f32 %v1327, %v1488
      %v1505 = vmul.f32 %v1328, %v1489
      %v1506 = vmul.f32 %v1329, %v1490
      %v1507 = vmul.f32 %v1330, %v1491
      %v1508 = vmul.f32 %v1331, %v1492
      %v1509 = vmul.f32 %v1332, %v1493
      %v1510 = vmul.f32 %v1333, %v1494
      %v1511 = vmul.f32 %v1334, %v1495
      %v1512 = vmul.f32 %v1335, %v1496
      %v1513 = vmul.f32 %v1336, %v1497
      %v1514 = vmul.f32 %v1337, %v1498
      %v1515 = vmul.f32 %v1338, %v1499
      %v1516 = vmul.f32 %v1339, %v1500
      %v1517 = vmul.f32 %v1340, %v1501
      %v1518 = vmul.f32 %v1341, %v1502
      %v1520 = vlaneseq
      %v1521 = vshrl.u32 %v1520, 7
      %v1522 = vsub.s32 0, %v1521
      %v1523 = vrot.slane %v1107, %v1522
      %v1526 = vsel %vm1358, %v1503, 0
      %v1529 = vsel %vm1358, %v1504, 0
      %v1532 = vsel %vm1358, %v1505, 0
      %v1535 = vsel %vm1358, %v1506, 0
      %v1538 = vsel %vm1358, %v1507, 0
      %v1541 = vsel %vm1358, %v1508, 0
      %v1544 = vsel %vm1358, %v1509, 0
      %v1547 = vsel %vm1358, %v1510, 0
      %v1550 = vsel %vm1358, %v1511, 0
      %v1553 = vsel %vm1358, %v1512, 0
      %v1556 = vsel %vm1358, %v1513, 0
      %v1559 = vsel %vm1358, %v1514, 0
      %v1562 = vsel %vm1358, %v1515, 0
      %v1565 = vsel %vm1358, %v1516, 0
      %v1568 = vsel %vm1358, %v1517, 0
      %v1571 = vsel %vm1358, %v1518, 0
      %1573 = vmatprep.subr.mxu0 0.0
      %1574 = vmatpush1.msra.mxu0 0.0
      %1575 = vmatprep.subr.mxu0 0.0
      %1576 = vmatpush1.msra.mxu0 0.0
      %1577 = vmatprep.subr.mxu0 0.0
      %1578 = vmatpush1.msra.mxu0 0.0
      %1579 = vmatprep.subr.mxu0 0.0
      %1580 = vmatpush1.msra.mxu0 0.0
      %1581 = vmatprep.subr.mxu0 0.0
      %1582 = vmatpush1.msra.mxu0 0.0
      %1583 = vmatprep.subr.mxu0 0.0
      %1584 = vmatpush1.msra.mxu0 0.0
      %1585 = vmatprep.subr.mxu0 0.0
      %1586 = vmatpush1.msra.mxu0 0.0
      %1587 = vmatprep.subr.mxu0 0.0
      %1588 = vmatpush1.msra.mxu0 0.0
      %1589 = vmatprep.subr.mxu0 0.0
      %1590 = vmatpush1.msra.mxu0 0.0
      %1591 = vmatprep.subr.mxu0 0.0
      %1592 = vmatpush1.msra.mxu0 0.0
      %1593 = vmatprep.subr.mxu0 0.0
      %1594 = vmatpush1.msra.mxu0 0.0
      %1595 = vmatprep.subr.mxu0 0.0
      %1596 = vmatpush1.msra.mxu0 0.0
      %1597 = vmatprep.subr.mxu0 0.0
      %1598 = vmatpush1.msra.mxu0 %v1106
      %1599 = vmatprep.subr.mxu0 0.0
      %1600 = vmatpush1.msra.mxu0 %v1105
      %1601 = vmatprep.subr.mxu0 0.0
      %1602 = vmatpush1.msra.mxu0 %v1104
      %1603 = vmatprep.subr.mxu0 0.0
      %1604 = vmatpush1.msra.mxu0 %v1103
      %1605 = vmatprep.subr.mxu0 0.0
      %1606 = vmatpush2.msra.mxu0 0.0
      %1607 = vmatprep.subr.mxu0 0.0
      %1608 = vmatpush2.msra.mxu0 0.0
      %1609 = vmatprep.subr.mxu0 0.0
      %1610 = vmatpush2.msra.mxu0 0.0
      %1611 = vmatprep.subr.mxu0 0.0
      %1612 = vmatpush2.msra.mxu0 0.0
      %1613 = vmatprep.subr.mxu0 0.0
      %1614 = vmatpush2.msra.mxu0 0.0
      %1615 = vmatprep.subr.mxu0 0.0
      %1616 = vmatpush2.msra.mxu0 0.0
      %1617 = vmatprep.subr.mxu0 0.0
      %1618 = vmatpush2.msra.mxu0 0.0
      %1619 = vmatprep.subr.mxu0 0.0
      %1620 = vmatpush2.msra.mxu0 0.0
      %1621 = vmatprep.subr.mxu0 0.0
      %1622 = vmatpush2.msra.mxu0 0.0
      %1623 = vmatprep.subr.mxu0 0.0
      %1624 = vmatpush2.msra.mxu0 0.0
      %1625 = vmatprep.subr.mxu0 0.0
      %1626 = vmatpush2.msra.mxu0 0.0
      %1627 = vmatprep.subr.mxu0 0.0
      %1628 = vmatpush2.msra.mxu0 0.0
      %1629 = vmatprep.subr.mxu0 0.0
      %1630 = vmatpush2.msra.mxu0 0.0
      %1631 = vmatprep.subr.mxu0 0.0
      %1632 = vmatpush2.msra.mxu0 0.0
      %1633 = vmatprep.subr.mxu0 0.0
      %1634 = vmatpush2.msra.mxu0 0.0
      %1635 = vmatprep.subr.mxu0 0.0
      %1636 = vmatpush2.msra.mxu0 0.0
      %1637 = vmatprep.mubr.f32.mxu0 0.0
      %1638 = vmatmul.mubr.f32.gmra.mxu0 %v1526
      %v1639 = vpop.f32.mrf.mxu0
      %v1640 = vadd.f32 %v1523, %v1639
      %v1641 = vpop.f32.mrf.mxu0
      %1642 = vmatprep.mubr.f32.mxu0 0.0
      %1643 = vmatmul.mubr.f32.gmra.mxu0 %v1529
      %v1644 = vpop.f32.mrf.mxu0
      %v1645 = vadd.f32 %v1523, %v1644
      %v1646 = vpop.f32.mrf.mxu0
      %1647 = vmatprep.mubr.f32.mxu0 0.0
      %1648 = vmatmul.mubr.f32.gmra.mxu0 %v1532
      %v1649 = vpop.f32.mrf.mxu0
      %v1650 = vadd.f32 %v1523, %v1649
      %v1651 = vpop.f32.mrf.mxu0
      %1652 = vmatprep.mubr.f32.mxu0 0.0
      %1653 = vmatmul.mubr.f32.gmra.mxu0 %v1535
      %v1654 = vpop.f32.mrf.mxu0
      %v1655 = vadd.f32 %v1523, %v1654
      %v1656 = vpop.f32.mrf.mxu0
      %1657 = vmatprep.mubr.f32.mxu0 0.0
      %1658 = vmatmul.mubr.f32.gmra.mxu0 %v1538
      %v1659 = vpop.f32.mrf.mxu0
      %v1660 = vadd.f32 %v1523, %v1659
      %v1661 = vpop.f32.mrf.mxu0
      %1662 = vmatprep.mubr.f32.mxu0 0.0
      %1663 = vmatmul.mubr.f32.gmra.mxu0 %v1541
      %v1664 = vpop.f32.mrf.mxu0
      %v1665 = vadd.f32 %v1523, %v1664
      %v1666 = vpop.f32.mrf.mxu0
      %1667 = vmatprep.mubr.f32.mxu0 0.0
      %1668 = vmatmul.mubr.f32.gmra.mxu0 %v1544
      %v1669 = vpop.f32.mrf.mxu0
      %v1670 = vadd.f32 %v1523, %v1669
      %v1671 = vpop.f32.mrf.mxu0
      %1672 = vmatprep.mubr.f32.mxu0 0.0
      %1673 = vmatmul.mubr.f32.gmra.mxu0 %v1547
      %v1674 = vpop.f32.mrf.mxu0
      %v1675 = vadd.f32 %v1523, %v1674
      %v1676 = vpop.f32.mrf.mxu0
      %1677 = vmatprep.mubr.f32.mxu0 0.0
      %1678 = vmatmul.mubr.f32.gmra.mxu0 %v1550
      %v1679 = vpop.f32.mrf.mxu0
      %v1680 = vadd.f32 %v1523, %v1679
      %v1681 = vpop.f32.mrf.mxu0
      %1682 = vmatprep.mubr.f32.mxu0 0.0
      %1683 = vmatmul.mubr.f32.gmra.mxu0 %v1553
      %v1684 = vpop.f32.mrf.mxu0
      %v1685 = vadd.f32 %v1523, %v1684
      %v1686 = vpop.f32.mrf.mxu0
      %1687 = vmatprep.mubr.f32.mxu0 0.0
      %1688 = vmatmul.mubr.f32.gmra.mxu0 %v1556
      %v1689 = vpop.f32.mrf.mxu0
      %v1690 = vadd.f32 %v1523, %v1689
      %v1691 = vpop.f32.mrf.mxu0
      %1692 = vmatprep.mubr.f32.mxu0 0.0
      %1693 = vmatmul.mubr.f32.gmra.mxu0 %v1559
      %v1694 = vpop.f32.mrf.mxu0
      %v1695 = vadd.f32 %v1523, %v1694
      %v1696 = vpop.f32.mrf.mxu0
      %1697 = vmatprep.mubr.f32.mxu0 0.0
      %1698 = vmatmul.mubr.f32.gmra.mxu0 %v1562
      %v1699 = vpop.f32.mrf.mxu0
      %v1700 = vadd.f32 %v1523, %v1699
      %v1701 = vpop.f32.mrf.mxu0
      %1702 = vmatprep.mubr.f32.mxu0 0.0
      %1703 = vmatmul.mubr.f32.gmra.mxu0 %v1565
      %v1704 = vpop.f32.mrf.mxu0
      %v1705 = vadd.f32 %v1523, %v1704
      %v1706 = vpop.f32.mrf.mxu0
      %1707 = vmatprep.mubr.f32.mxu0 0.0
      %1708 = vmatmul.mubr.f32.gmra.mxu0 %v1568
      %v1709 = vpop.f32.mrf.mxu0
      %v1710 = vadd.f32 %v1523, %v1709
      %v1711 = vpop.f32.mrf.mxu0
      %1712 = vmatprep.mubr.f32.mxu0 0.0
      %1713 = vmatmul.mubr.f32.gmra.mxu0 %v1571
      %v1714 = vpop.f32.mrf.mxu0
      %v1715 = vadd.f32 %v1523, %v1714
      %v1716 = vpop.f32.mrf.mxu0
      %1717 = vdwg.mxu0
      %v1719 = vlaneseq
      %v1720 = vshrl.u32 %v1719, 7
      %v1721 = vsub.s32 0, %v1720
      %v1722 = vrot.slane %v1112, %v1721
      %1724 = vmatprep.subr.mxu0 0.0
      %1725 = vmatpush1.msra.mxu0 0.0
      %1726 = vmatprep.subr.mxu0 0.0
      %1727 = vmatpush1.msra.mxu0 0.0
      %1728 = vmatprep.subr.mxu0 0.0
      %1729 = vmatpush1.msra.mxu0 0.0
      %1730 = vmatprep.subr.mxu0 0.0
      %1731 = vmatpush1.msra.mxu0 0.0
      %1732 = vmatprep.subr.mxu0 0.0
      %1733 = vmatpush1.msra.mxu0 0.0
      %1734 = vmatprep.subr.mxu0 0.0
      %1735 = vmatpush1.msra.mxu0 0.0
      %1736 = vmatprep.subr.mxu0 0.0
      %1737 = vmatpush1.msra.mxu0 0.0
      %1738 = vmatprep.subr.mxu0 0.0
      %1739 = vmatpush1.msra.mxu0 0.0
      %1740 = vmatprep.subr.mxu0 0.0
      %1741 = vmatpush1.msra.mxu0 0.0
      %1742 = vmatprep.subr.mxu0 0.0
      %1743 = vmatpush1.msra.mxu0 0.0
      %1744 = vmatprep.subr.mxu0 0.0
      %1745 = vmatpush1.msra.mxu0 0.0
      %1746 = vmatprep.subr.mxu0 0.0
      %1747 = vmatpush1.msra.mxu0 0.0
      %1748 = vmatprep.subr.mxu0 0.0
      %1749 = vmatpush1.msra.mxu0 %v1111
      %1750 = vmatprep.subr.mxu0 0.0
      %1751 = vmatpush1.msra.mxu0 %v1110
      %1752 = vmatprep.subr.mxu0 0.0
      %1753 = vmatpush1.msra.mxu0 %v1109
      %1754 = vmatprep.subr.mxu0 0.0
      %1755 = vmatpush1.msra.mxu0 %v1108
      %1756 = vmatprep.subr.mxu0 0.0
      %1757 = vmatpush2.msra.mxu0 0.0
      %1758 = vmatprep.subr.mxu0 0.0
      %1759 = vmatpush2.msra.mxu0 0.0
      %1760 = vmatprep.subr.mxu0 0.0
      %1761 = vmatpush2.msra.mxu0 0.0
      %1762 = vmatprep.subr.mxu0 0.0
      %1763 = vmatpush2.msra.mxu0 0.0
      %1764 = vmatprep.subr.mxu0 0.0
      %1765 = vmatpush2.msra.mxu0 0.0
      %1766 = vmatprep.subr.mxu0 0.0
      %1767 = vmatpush2.msra.mxu0 0.0
      %1768 = vmatprep.subr.mxu0 0.0
      %1769 = vmatpush2.msra.mxu0 0.0
      %1770 = vmatprep.subr.mxu0 0.0
      %1771 = vmatpush2.msra.mxu0 0.0
      %1772 = vmatprep.subr.mxu0 0.0
      %1773 = vmatpush2.msra.mxu0 0.0
      %1774 = vmatprep.subr.mxu0 0.0
      %1775 = vmatpush2.msra.mxu0 0.0
      %1776 = vmatprep.subr.mxu0 0.0
      %1777 = vmatpush2.msra.mxu0 0.0
      %1778 = vmatprep.subr.mxu0 0.0
      %1779 = vmatpush2.msra.mxu0 0.0
      %1780 = vmatprep.subr.mxu0 0.0
      %1781 = vmatpush2.msra.mxu0 0.0
      %1782 = vmatprep.subr.mxu0 0.0
      %1783 = vmatpush2.msra.mxu0 0.0
      %1784 = vmatprep.subr.mxu0 0.0
      %1785 = vmatpush2.msra.mxu0 0.0
      %1786 = vmatprep.subr.mxu0 0.0
      %1787 = vmatpush2.msra.mxu0 0.0
      %1788 = vmatprep.mubr.f32.mxu0 0.0
      %1789 = vmatmul.mubr.f32.gmra.mxu0 %v1526
      %v1790 = vpop.f32.mrf.mxu0
      %v1791 = vadd.f32 %v1722, %v1790
      %v1792 = vpop.f32.mrf.mxu0
      %1793 = vmatprep.mubr.f32.mxu0 0.0
      %1794 = vmatmul.mubr.f32.gmra.mxu0 %v1529
      %v1795 = vpop.f32.mrf.mxu0
      %v1796 = vadd.f32 %v1722, %v1795
      %v1797 = vpop.f32.mrf.mxu0
      %1798 = vmatprep.mubr.f32.mxu0 0.0
      %1799 = vmatmul.mubr.f32.gmra.mxu0 %v1532
      %v1800 = vpop.f32.mrf.mxu0
      %v1801 = vadd.f32 %v1722, %v1800
      %v1802 = vpop.f32.mrf.mxu0
      %1803 = vmatprep.mubr.f32.mxu0 0.0
      %1804 = vmatmul.mubr.f32.gmra.mxu0 %v1535
      %v1805 = vpop.f32.mrf.mxu0
      %v1806 = vadd.f32 %v1722, %v1805
      %v1807 = vpop.f32.mrf.mxu0
      %1808 = vmatprep.mubr.f32.mxu0 0.0
      %1809 = vmatmul.mubr.f32.gmra.mxu0 %v1538
      %v1810 = vpop.f32.mrf.mxu0
      %v1811 = vadd.f32 %v1722, %v1810
      %v1812 = vpop.f32.mrf.mxu0
      %1813 = vmatprep.mubr.f32.mxu0 0.0
      %1814 = vmatmul.mubr.f32.gmra.mxu0 %v1541
      %v1815 = vpop.f32.mrf.mxu0
      %v1816 = vadd.f32 %v1722, %v1815
      %v1817 = vpop.f32.mrf.mxu0
      %1818 = vmatprep.mubr.f32.mxu0 0.0
      %1819 = vmatmul.mubr.f32.gmra.mxu0 %v1544
      %v1820 = vpop.f32.mrf.mxu0
      %v1821 = vadd.f32 %v1722, %v1820
      %v1822 = vpop.f32.mrf.mxu0
      %1823 = vmatprep.mubr.f32.mxu0 0.0
      %1824 = vmatmul.mubr.f32.gmra.mxu0 %v1547
      %v1825 = vpop.f32.mrf.mxu0
      %v1826 = vadd.f32 %v1722, %v1825
      %v1827 = vpop.f32.mrf.mxu0
      %1828 = vmatprep.mubr.f32.mxu0 0.0
      %1829 = vmatmul.mubr.f32.gmra.mxu0 %v1550
      %v1830 = vpop.f32.mrf.mxu0
      %v1831 = vadd.f32 %v1722, %v1830
      %v1832 = vpop.f32.mrf.mxu0
      %1833 = vmatprep.mubr.f32.mxu0 0.0
      %1834 = vmatmul.mubr.f32.gmra.mxu0 %v1553
      %v1835 = vpop.f32.mrf.mxu0
      %v1836 = vadd.f32 %v1722, %v1835
      %v1837 = vpop.f32.mrf.mxu0
      %1838 = vmatprep.mubr.f32.mxu0 0.0
      %1839 = vmatmul.mubr.f32.gmra.mxu0 %v1556
      %v1840 = vpop.f32.mrf.mxu0
      %v1841 = vadd.f32 %v1722, %v1840
      %v1842 = vpop.f32.mrf.mxu0
      %1843 = vmatprep.mubr.f32.mxu0 0.0
      %1844 = vmatmul.mubr.f32.gmra.mxu0 %v1559
      %v1845 = vpop.f32.mrf.mxu0
      %v1846 = vadd.f32 %v1722, %v1845
      %v1847 = vpop.f32.mrf.mxu0
      %1848 = vmatprep.mubr.f32.mxu0 0.0
      %1849 = vmatmul.mubr.f32.gmra.mxu0 %v1562
      %v1850 = vpop.f32.mrf.mxu0
      %v1851 = vadd.f32 %v1722, %v1850
      %v1852 = vpop.f32.mrf.mxu0
      %1853 = vmatprep.mubr.f32.mxu0 0.0
      %1854 = vmatmul.mubr.f32.gmra.mxu0 %v1565
      %v1855 = vpop.f32.mrf.mxu0
      %v1856 = vadd.f32 %v1722, %v1855
      %v1857 = vpop.f32.mrf.mxu0
      %1858 = vmatprep.mubr.f32.mxu0 0.0
      %1859 = vmatmul.mubr.f32.gmra.mxu0 %v1568
      %v1860 = vpop.f32.mrf.mxu0
      %v1861 = vadd.f32 %v1722, %v1860
      %v1862 = vpop.f32.mrf.mxu0
      %1863 = vmatprep.mubr.f32.mxu0 0.0
      %1864 = vmatmul.mubr.f32.gmra.mxu0 %v1571
      %v1865 = vpop.f32.mrf.mxu0
      %v1866 = vadd.f32 %v1722, %v1865
      %v1867 = vpop.f32.mrf.mxu0
      %1868 = vdwg.mxu0
      %v1870 = vlaneseq
      %v1871 = vshrl.u32 %v1870, 7
      %v1872 = vsub.s32 0, %v1871
      %v1873 = vrot.slane %v1117, %v1872
      %1875 = vmatprep.subr.mxu0 0.0
      %1876 = vmatpush1.msra.mxu0 0.0
      %1877 = vmatprep.subr.mxu0 0.0
      %1878 = vmatpush1.msra.mxu0 0.0
      %1879 = vmatprep.subr.mxu0 0.0
      %1880 = vmatpush1.msra.mxu0 0.0
      %1881 = vmatprep.subr.mxu0 0.0
      %1882 = vmatpush1.msra.mxu0 0.0
      %1883 = vmatprep.subr.mxu0 0.0
      %1884 = vmatpush1.msra.mxu0 0.0
      %1885 = vmatprep.subr.mxu0 0.0
      %1886 = vmatpush1.msra.mxu0 0.0
      %1887 = vmatprep.subr.mxu0 0.0
      %1888 = vmatpush1.msra.mxu0 0.0
      %1889 = vmatprep.subr.mxu0 0.0
      %1890 = vmatpush1.msra.mxu0 0.0
      %1891 = vmatprep.subr.mxu0 0.0
      %1892 = vmatpush1.msra.mxu0 0.0
      %1893 = vmatprep.subr.mxu0 0.0
      %1894 = vmatpush1.msra.mxu0 0.0
      %1895 = vmatprep.subr.mxu0 0.0
      %1896 = vmatpush1.msra.mxu0 0.0
      %1897 = vmatprep.subr.mxu0 0.0
      %1898 = vmatpush1.msra.mxu0 0.0
      %1899 = vmatprep.subr.mxu0 0.0
      %1900 = vmatpush1.msra.mxu0 %v1116
      %1901 = vmatprep.subr.mxu0 0.0
      %1902 = vmatpush1.msra.mxu0 %v1115
      %1903 = vmatprep.subr.mxu0 0.0
      %1904 = vmatpush1.msra.mxu0 %v1114
      %1905 = vmatprep.subr.mxu0 0.0
      %1906 = vmatpush1.msra.mxu0 %v1113
      %1907 = vmatprep.subr.mxu0 0.0
      %1908 = vmatpush2.msra.mxu0 0.0
      %1909 = vmatprep.subr.mxu0 0.0
      %1910 = vmatpush2.msra.mxu0 0.0
      %1911 = vmatprep.subr.mxu0 0.0
      %1912 = vmatpush2.msra.mxu0 0.0
      %1913 = vmatprep.subr.mxu0 0.0
      %1914 = vmatpush2.msra.mxu0 0.0
      %1915 = vmatprep.subr.mxu0 0.0
      %1916 = vmatpush2.msra.mxu0 0.0
      %1917 = vmatprep.subr.mxu0 0.0
      %1918 = vmatpush2.msra.mxu0 0.0
      %1919 = vmatprep.subr.mxu0 0.0
      %1920 = vmatpush2.msra.mxu0 0.0
      %1921 = vmatprep.subr.mxu0 0.0
      %1922 = vmatpush2.msra.mxu0 0.0
      %1923 = vmatprep.subr.mxu0 0.0
      %1924 = vmatpush2.msra.mxu0 0.0
      %1925 = vmatprep.subr.mxu0 0.0
      %1926 = vmatpush2.msra.mxu0 0.0
      %1927 = vmatprep.subr.mxu0 0.0
      %1928 = vmatpush2.msra.mxu0 0.0
      %1929 = vmatprep.subr.mxu0 0.0
      %1930 = vmatpush2.msra.mxu0 0.0
      %1931 = vmatprep.subr.mxu0 0.0
      %1932 = vmatpush2.msra.mxu0 0.0
      %1933 = vmatprep.subr.mxu0 0.0
      %1934 = vmatpush2.msra.mxu0 0.0
      %1935 = vmatprep.subr.mxu0 0.0
      %1936 = vmatpush2.msra.mxu0 0.0
      %1937 = vmatprep.subr.mxu0 0.0
      %1938 = vmatpush2.msra.mxu0 0.0
      %1939 = vmatprep.mubr.f32.mxu0 0.0
      %1940 = vmatmul.mubr.f32.gmra.mxu0 %v1526
      %v1941 = vpop.f32.mrf.mxu0
      %v1942 = vadd.f32 %v1873, %v1941
      %v1943 = vpop.f32.mrf.mxu0
      %1944 = vmatprep.mubr.f32.mxu0 0.0
      %1945 = vmatmul.mubr.f32.gmra.mxu0 %v1529
      %v1946 = vpop.f32.mrf.mxu0
      %v1947 = vadd.f32 %v1873, %v1946
      %v1948 = vpop.f32.mrf.mxu0
      %1949 = vmatprep.mubr.f32.mxu0 0.0
      %1950 = vmatmul.mubr.f32.gmra.mxu0 %v1532
      %v1951 = vpop.f32.mrf.mxu0
      %v1952 = vadd.f32 %v1873, %v1951
      %v1953 = vpop.f32.mrf.mxu0
      %1954 = vmatprep.mubr.f32.mxu0 0.0
      %1955 = vmatmul.mubr.f32.gmra.mxu0 %v1535
      %v1956 = vpop.f32.mrf.mxu0
      %v1957 = vadd.f32 %v1873, %v1956
      %v1958 = vpop.f32.mrf.mxu0
      %1959 = vmatprep.mubr.f32.mxu0 0.0
      %1960 = vmatmul.mubr.f32.gmra.mxu0 %v1538
      %v1961 = vpop.f32.mrf.mxu0
      %v1962 = vadd.f32 %v1873, %v1961
      %v1963 = vpop.f32.mrf.mxu0
      %1964 = vmatprep.mubr.f32.mxu0 0.0
      %1965 = vmatmul.mubr.f32.gmra.mxu0 %v1541
      %v1966 = vpop.f32.mrf.mxu0
      %v1967 = vadd.f32 %v1873, %v1966
      %v1968 = vpop.f32.mrf.mxu0
      %1969 = vmatprep.mubr.f32.mxu0 0.0
      %1970 = vmatmul.mubr.f32.gmra.mxu0 %v1544
      %v1971 = vpop.f32.mrf.mxu0
      %v1972 = vadd.f32 %v1873, %v1971
      %v1973 = vpop.f32.mrf.mxu0
      %1974 = vmatprep.mubr.f32.mxu0 0.0
      %1975 = vmatmul.mubr.f32.gmra.mxu0 %v1547
      %v1976 = vpop.f32.mrf.mxu0
      %v1977 = vadd.f32 %v1873, %v1976
      %v1978 = vpop.f32.mrf.mxu0
      %1979 = vmatprep.mubr.f32.mxu0 0.0
      %1980 = vmatmul.mubr.f32.gmra.mxu0 %v1550
      %v1981 = vpop.f32.mrf.mxu0
      %v1982 = vadd.f32 %v1873, %v1981
      %v1983 = vpop.f32.mrf.mxu0
      %1984 = vmatprep.mubr.f32.mxu0 0.0
      %1985 = vmatmul.mubr.f32.gmra.mxu0 %v1553
      %v1986 = vpop.f32.mrf.mxu0
      %v1987 = vadd.f32 %v1873, %v1986
      %v1988 = vpop.f32.mrf.mxu0
      %1989 = vmatprep.mubr.f32.mxu0 0.0
      %1990 = vmatmul.mubr.f32.gmra.mxu0 %v1556
      %v1991 = vpop.f32.mrf.mxu0
      %v1992 = vadd.f32 %v1873, %v1991
      %v1993 = vpop.f32.mrf.mxu0
      %1994 = vmatprep.mubr.f32.mxu0 0.0
      %1995 = vmatmul.mubr.f32.gmra.mxu0 %v1559
      %v1996 = vpop.f32.mrf.mxu0
      %v1997 = vadd.f32 %v1873, %v1996
      %v1998 = vpop.f32.mrf.mxu0
      %1999 = vmatprep.mubr.f32.mxu0 0.0
      %2000 = vmatmul.mubr.f32.gmra.mxu0 %v1562
      %v2001 = vpop.f32.mrf.mxu0
      %v2002 = vadd.f32 %v1873, %v2001
      %v2003 = vpop.f32.mrf.mxu0
      %2004 = vmatprep.mubr.f32.mxu0 0.0
      %2005 = vmatmul.mubr.f32.gmra.mxu0 %v1565
      %v2006 = vpop.f32.mrf.mxu0
      %v2007 = vadd.f32 %v1873, %v2006
      %v2008 = vpop.f32.mrf.mxu0
      %2009 = vmatprep.mubr.f32.mxu0 0.0
      %2010 = vmatmul.mubr.f32.gmra.mxu0 %v1568
      %v2011 = vpop.f32.mrf.mxu0
      %v2012 = vadd.f32 %v1873, %v2011
      %v2013 = vpop.f32.mrf.mxu0
      %2014 = vmatprep.mubr.f32.mxu0 0.0
      %2015 = vmatmul.mubr.f32.gmra.mxu0 %v1571
      %v2016 = vpop.f32.mrf.mxu0
      %v2017 = vadd.f32 %v1873, %v2016
      %v2018 = vpop.f32.mrf.mxu0
      %2019 = vdwg.mxu0
      %v2021 = vsel %vm1358, %v1640, 0
      %v2024 = vsel %vm1358, %v1791, 0
      %2026 = vmatprep.subr.mxu0 0.0
      %2027 = vmatpush1.xpose.msra.mxu0 0.0
      %2028 = vmatprep.subr.mxu0 0.0
      %2029 = vmatpush1.xpose.msra.mxu0 0.0
      %2030 = vmatprep.subr.mxu0 0.0
      %2031 = vmatpush1.xpose.msra.mxu0 0.0
      %2032 = vmatprep.subr.mxu0 0.0
      %2033 = vmatpush1.xpose.msra.mxu0 0.0
      %2034 = vmatprep.subr.mxu0 0.0
      %2035 = vmatpush1.xpose.msra.mxu0 0.0
      %2036 = vmatprep.subr.mxu0 0.0
      %2037 = vmatpush1.xpose.msra.mxu0 0.0
      %2038 = vmatprep.subr.mxu0 0.0
      %2039 = vmatpush1.xpose.msra.mxu0 0.0
      %2040 = vmatprep.subr.mxu0 0.0
      %2041 = vmatpush1.xpose.msra.mxu0 0.0
      %2042 = vmatprep.subr.mxu0 0.0
      %2043 = vmatpush1.xpose.msra.mxu0 0.0
      %2044 = vmatprep.subr.mxu0 0.0
      %2045 = vmatpush1.xpose.msra.mxu0 0.0
      %2046 = vmatprep.subr.mxu0 0.0
      %2047 = vmatpush1.xpose.msra.mxu0 0.0
      %2048 = vmatprep.subr.mxu0 0.0
      %2049 = vmatpush1.xpose.msra.mxu0 0.0
      %2050 = vmatprep.subr.mxu0 0.0
      %2051 = vmatpush1.xpose.msra.mxu0 0.0
      %2052 = vmatprep.subr.mxu0 0.0
      %2053 = vmatpush1.xpose.msra.mxu0 0.0
      %2054 = vmatprep.subr.mxu0 0.0
      %2055 = vmatpush1.xpose.msra.mxu0 0.0
      %2056 = vmatprep.subr.mxu0 0.0
      %2057 = vmatpush1.xpose.msra.mxu0 %v2024
      %2058 = vmatprep.subr.mxu0 0.0
      %2059 = vmatpush2.xpose.msra.mxu0 0.0
      %2060 = vmatprep.subr.mxu0 0.0
      %2061 = vmatpush2.xpose.msra.mxu0 0.0
      %2062 = vmatprep.subr.mxu0 0.0
      %2063 = vmatpush2.xpose.msra.mxu0 0.0
      %2064 = vmatprep.subr.mxu0 0.0
      %2065 = vmatpush2.xpose.msra.mxu0 0.0
      %2066 = vmatprep.subr.mxu0 0.0
      %2067 = vmatpush2.xpose.msra.mxu0 0.0
      %2068 = vmatprep.subr.mxu0 0.0
      %2069 = vmatpush2.xpose.msra.mxu0 0.0
      %2070 = vmatprep.subr.mxu0 0.0
      %2071 = vmatpush2.xpose.msra.mxu0 0.0
      %2072 = vmatprep.subr.mxu0 0.0
      %2073 = vmatpush2.xpose.msra.mxu0 0.0
      %2074 = vmatprep.subr.mxu0 0.0
      %2075 = vmatpush2.xpose.msra.mxu0 0.0
      %2076 = vmatprep.subr.mxu0 0.0
      %2077 = vmatpush2.xpose.msra.mxu0 0.0
      %2078 = vmatprep.subr.mxu0 0.0
      %2079 = vmatpush2.xpose.msra.mxu0 0.0
      %2080 = vmatprep.subr.mxu0 0.0
      %2081 = vmatpush2.xpose.msra.mxu0 0.0
      %2082 = vmatprep.subr.mxu0 0.0
      %2083 = vmatpush2.xpose.msra.mxu0 0.0
      %2084 = vmatprep.subr.mxu0 0.0
      %2085 = vmatpush2.xpose.msra.mxu0 0.0
      %2086 = vmatprep.subr.mxu0 0.0
      %2087 = vmatpush2.xpose.msra.mxu0 0.0
      %2088 = vmatprep.subr.mxu0 0.0
      %2089 = vmatpush2.xpose.msra.mxu0 0.0
      %2090 = vmatprep.mubr.f32.mxu0 0.0
      %2091 = vmatmul.mubr.f32.gmra.mxu0 %v2021
      %v2092 = vpop.f32.mrf.mxu0
      %v2093 = vadd.f32 0.0, %v2092
      %v2094 = vpop.f32.mrf.mxu0
      %2095 = vdwg.mxu0
      %v2097 = vsel %vm1358, %v1645, 0
      %v2100 = vsel %vm1358, %v1796, 0
      %2102 = vmatprep.subr.mxu0 0.0
      %2103 = vmatpush1.xpose.msra.mxu0 0.0
      %2104 = vmatprep.subr.mxu0 0.0
      %2105 = vmatpush1.xpose.msra.mxu0 0.0
      %2106 = vmatprep.subr.mxu0 0.0
      %2107 = vmatpush1.xpose.msra.mxu0 0.0
      %2108 = vmatprep.subr.mxu0 0.0
      %2109 = vmatpush1.xpose.msra.mxu0 0.0
      %2110 = vmatprep.subr.mxu0 0.0
      %2111 = vmatpush1.xpose.msra.mxu0 0.0
      %2112 = vmatprep.subr.mxu0 0.0
      %2113 = vmatpush1.xpose.msra.mxu0 0.0
      %2114 = vmatprep.subr.mxu0 0.0
      %2115 = vmatpush1.xpose.msra.mxu0 0.0
      %2116 = vmatprep.subr.mxu0 0.0
      %2117 = vmatpush1.xpose.msra.mxu0 0.0
      %2118 = vmatprep.subr.mxu0 0.0
      %2119 = vmatpush1.xpose.msra.mxu0 0.0
      %2120 = vmatprep.subr.mxu0 0.0
      %2121 = vmatpush1.xpose.msra.mxu0 0.0
      %2122 = vmatprep.subr.mxu0 0.0
      %2123 = vmatpush1.xpose.msra.mxu0 0.0
      %2124 = vmatprep.subr.mxu0 0.0
      %2125 = vmatpush1.xpose.msra.mxu0 0.0
      %2126 = vmatprep.subr.mxu0 0.0
      %2127 = vmatpush1.xpose.msra.mxu0 0.0
      %2128 = vmatprep.subr.mxu0 0.0
      %2129 = vmatpush1.xpose.msra.mxu0 0.0
      %2130 = vmatprep.subr.mxu0 0.0
      %2131 = vmatpush1.xpose.msra.mxu0 0.0
      %2132 = vmatprep.subr.mxu0 0.0
      %2133 = vmatpush1.xpose.msra.mxu0 %v2100
      %2134 = vmatprep.subr.mxu0 0.0
      %2135 = vmatpush2.xpose.msra.mxu0 0.0
      %2136 = vmatprep.subr.mxu0 0.0
      %2137 = vmatpush2.xpose.msra.mxu0 0.0
      %2138 = vmatprep.subr.mxu0 0.0
      %2139 = vmatpush2.xpose.msra.mxu0 0.0
      %2140 = vmatprep.subr.mxu0 0.0
      %2141 = vmatpush2.xpose.msra.mxu0 0.0
      %2142 = vmatprep.subr.mxu0 0.0
      %2143 = vmatpush2.xpose.msra.mxu0 0.0
      %2144 = vmatprep.subr.mxu0 0.0
      %2145 = vmatpush2.xpose.msra.mxu0 0.0
      %2146 = vmatprep.subr.mxu0 0.0
      %2147 = vmatpush2.xpose.msra.mxu0 0.0
      %2148 = vmatprep.subr.mxu0 0.0
      %2149 = vmatpush2.xpose.msra.mxu0 0.0
      %2150 = vmatprep.subr.mxu0 0.0
      %2151 = vmatpush2.xpose.msra.mxu0 0.0
      %2152 = vmatprep.subr.mxu0 0.0
      %2153 = vmatpush2.xpose.msra.mxu0 0.0
      %2154 = vmatprep.subr.mxu0 0.0
      %2155 = vmatpush2.xpose.msra.mxu0 0.0
      %2156 = vmatprep.subr.mxu0 0.0
      %2157 = vmatpush2.xpose.msra.mxu0 0.0
      %2158 = vmatprep.subr.mxu0 0.0
      %2159 = vmatpush2.xpose.msra.mxu0 0.0
      %2160 = vmatprep.subr.mxu0 0.0
      %2161 = vmatpush2.xpose.msra.mxu0 0.0
      %2162 = vmatprep.subr.mxu0 0.0
      %2163 = vmatpush2.xpose.msra.mxu0 0.0
      %2164 = vmatprep.subr.mxu0 0.0
      %2165 = vmatpush2.xpose.msra.mxu0 0.0
      %2166 = vmatprep.mubr.f32.mxu0 0.0
      %2167 = vmatmul.mubr.f32.gmra.mxu0 %v2097
      %v2168 = vpop.f32.mrf.mxu0
      %v2169 = vadd.f32 0.0, %v2168
      %v2170 = vpop.f32.mrf.mxu0
      %2171 = vdwg.mxu0
      %v2173 = vsel %vm1358, %v1650, 0
      %v2176 = vsel %vm1358, %v1801, 0
      %2178 = vmatprep.subr.mxu0 0.0
      %2179 = vmatpush1.xpose.msra.mxu0 0.0
      %2180 = vmatprep.subr.mxu0 0.0
      %2181 = vmatpush1.xpose.msra.mxu0 0.0
      %2182 = vmatprep.subr.mxu0 0.0
      %2183 = vmatpush1.xpose.msra.mxu0 0.0
      %2184 = vmatprep.subr.mxu0 0.0
      %2185 = vmatpush1.xpose.msra.mxu0 0.0
      %2186 = vmatprep.subr.mxu0 0.0
      %2187 = vmatpush1.xpose.msra.mxu0 0.0
      %2188 = vmatprep.subr.mxu0 0.0
      %2189 = vmatpush1.xpose.msra.mxu0 0.0
      %2190 = vmatprep.subr.mxu0 0.0
      %2191 = vmatpush1.xpose.msra.mxu0 0.0
      %2192 = vmatprep.subr.mxu0 0.0
      %2193 = vmatpush1.xpose.msra.mxu0 0.0
      %2194 = vmatprep.subr.mxu0 0.0
      %2195 = vmatpush1.xpose.msra.mxu0 0.0
      %2196 = vmatprep.subr.mxu0 0.0
      %2197 = vmatpush1.xpose.msra.mxu0 0.0
      %2198 = vmatprep.subr.mxu0 0.0
      %2199 = vmatpush1.xpose.msra.mxu0 0.0
      %2200 = vmatprep.subr.mxu0 0.0
      %2201 = vmatpush1.xpose.msra.mxu0 0.0
      %2202 = vmatprep.subr.mxu0 0.0
      %2203 = vmatpush1.xpose.msra.mxu0 0.0
      %2204 = vmatprep.subr.mxu0 0.0
      %2205 = vmatpush1.xpose.msra.mxu0 0.0
      %2206 = vmatprep.subr.mxu0 0.0
      %2207 = vmatpush1.xpose.msra.mxu0 0.0
      %2208 = vmatprep.subr.mxu0 0.0
      %2209 = vmatpush1.xpose.msra.mxu0 %v2176
      %2210 = vmatprep.subr.mxu0 0.0
      %2211 = vmatpush2.xpose.msra.mxu0 0.0
      %2212 = vmatprep.subr.mxu0 0.0
      %2213 = vmatpush2.xpose.msra.mxu0 0.0
      %2214 = vmatprep.subr.mxu0 0.0
      %2215 = vmatpush2.xpose.msra.mxu0 0.0
      %2216 = vmatprep.subr.mxu0 0.0
      %2217 = vmatpush2.xpose.msra.mxu0 0.0
      %2218 = vmatprep.subr.mxu0 0.0
      %2219 = vmatpush2.xpose.msra.mxu0 0.0
      %2220 = vmatprep.subr.mxu0 0.0
      %2221 = vmatpush2.xpose.msra.mxu0 0.0
      %2222 = vmatprep.subr.mxu0 0.0
      %2223 = vmatpush2.xpose.msra.mxu0 0.0
      %2224 = vmatprep.subr.mxu0 0.0
      %2225 = vmatpush2.xpose.msra.mxu0 0.0
      %2226 = vmatprep.subr.mxu0 0.0
      %2227 = vmatpush2.xpose.msra.mxu0 0.0
      %2228 = vmatprep.subr.mxu0 0.0
      %2229 = vmatpush2.xpose.msra.mxu0 0.0
      %2230 = vmatprep.subr.mxu0 0.0
      %2231 = vmatpush2.xpose.msra.mxu0 0.0
      %2232 = vmatprep.subr.mxu0 0.0
      %2233 = vmatpush2.xpose.msra.mxu0 0.0
      %2234 = vmatprep.subr.mxu0 0.0
      %2235 = vmatpush2.xpose.msra.mxu0 0.0
      %2236 = vmatprep.subr.mxu0 0.0
      %2237 = vmatpush2.xpose.msra.mxu0 0.0
      %2238 = vmatprep.subr.mxu0 0.0
      %2239 = vmatpush2.xpose.msra.mxu0 0.0
      %2240 = vmatprep.subr.mxu0 0.0
      %2241 = vmatpush2.xpose.msra.mxu0 0.0
      %2242 = vmatprep.mubr.f32.mxu0 0.0
      %2243 = vmatmul.mubr.f32.gmra.mxu0 %v2173
      %v2244 = vpop.f32.mrf.mxu0
      %v2245 = vadd.f32 0.0, %v2244
      %v2246 = vpop.f32.mrf.mxu0
      %2247 = vdwg.mxu0
      %v2249 = vsel %vm1358, %v1655, 0
      %v2252 = vsel %vm1358, %v1806, 0
      %2254 = vmatprep.subr.mxu0 0.0
      %2255 = vmatpush1.xpose.msra.mxu0 0.0
      %2256 = vmatprep.subr.mxu0 0.0
      %2257 = vmatpush1.xpose.msra.mxu0 0.0
      %2258 = vmatprep.subr.mxu0 0.0
      %2259 = vmatpush1.xpose.msra.mxu0 0.0
      %2260 = vmatprep.subr.mxu0 0.0
      %2261 = vmatpush1.xpose.msra.mxu0 0.0
      %2262 = vmatprep.subr.mxu0 0.0
      %2263 = vmatpush1.xpose.msra.mxu0 0.0
      %2264 = vmatprep.subr.mxu0 0.0
      %2265 = vmatpush1.xpose.msra.mxu0 0.0
      %2266 = vmatprep.subr.mxu0 0.0
      %2267 = vmatpush1.xpose.msra.mxu0 0.0
      %2268 = vmatprep.subr.mxu0 0.0
      %2269 = vmatpush1.xpose.msra.mxu0 0.0
      %2270 = vmatprep.subr.mxu0 0.0
      %2271 = vmatpush1.xpose.msra.mxu0 0.0
      %2272 = vmatprep.subr.mxu0 0.0
      %2273 = vmatpush1.xpose.msra.mxu0 0.0
      %2274 = vmatprep.subr.mxu0 0.0
      %2275 = vmatpush1.xpose.msra.mxu0 0.0
      %2276 = vmatprep.subr.mxu0 0.0
      %2277 = vmatpush1.xpose.msra.mxu0 0.0
      %2278 = vmatprep.subr.mxu0 0.0
      %2279 = vmatpush1.xpose.msra.mxu0 0.0
      %2280 = vmatprep.subr.mxu0 0.0
      %2281 = vmatpush1.xpose.msra.mxu0 0.0
      %2282 = vmatprep.subr.mxu0 0.0
      %2283 = vmatpush1.xpose.msra.mxu0 0.0
      %2284 = vmatprep.subr.mxu0 0.0
      %2285 = vmatpush1.xpose.msra.mxu0 %v2252
      %2286 = vmatprep.subr.mxu0 0.0
      %2287 = vmatpush2.xpose.msra.mxu0 0.0
      %2288 = vmatprep.subr.mxu0 0.0
      %2289 = vmatpush2.xpose.msra.mxu0 0.0
      %2290 = vmatprep.subr.mxu0 0.0
      %2291 = vmatpush2.xpose.msra.mxu0 0.0
      %2292 = vmatprep.subr.mxu0 0.0
      %2293 = vmatpush2.xpose.msra.mxu0 0.0
      %2294 = vmatprep.subr.mxu0 0.0
      %2295 = vmatpush2.xpose.msra.mxu0 0.0
      %2296 = vmatprep.subr.mxu0 0.0
      %2297 = vmatpush2.xpose.msra.mxu0 0.0
      %2298 = vmatprep.subr.mxu0 0.0
      %2299 = vmatpush2.xpose.msra.mxu0 0.0
      %2300 = vmatprep.subr.mxu0 0.0
      %2301 = vmatpush2.xpose.msra.mxu0 0.0
      %2302 = vmatprep.subr.mxu0 0.0
      %2303 = vmatpush2.xpose.msra.mxu0 0.0
      %2304 = vmatprep.subr.mxu0 0.0
      %2305 = vmatpush2.xpose.msra.mxu0 0.0
      %2306 = vmatprep.subr.mxu0 0.0
      %2307 = vmatpush2.xpose.msra.mxu0 0.0
      %2308 = vmatprep.subr.mxu0 0.0
      %2309 = vmatpush2.xpose.msra.mxu0 0.0
      %2310 = vmatprep.subr.mxu0 0.0
      %2311 = vmatpush2.xpose.msra.mxu0 0.0
      %2312 = vmatprep.subr.mxu0 0.0
      %2313 = vmatpush2.xpose.msra.mxu0 0.0
      %2314 = vmatprep.subr.mxu0 0.0
      %2315 = vmatpush2.xpose.msra.mxu0 0.0
      %2316 = vmatprep.subr.mxu0 0.0
      %2317 = vmatpush2.xpose.msra.mxu0 0.0
      %2318 = vmatprep.mubr.f32.mxu0 0.0
      %2319 = vmatmul.mubr.f32.gmra.mxu0 %v2249
      %v2320 = vpop.f32.mrf.mxu0
      %v2321 = vadd.f32 0.0, %v2320
      %v2322 = vpop.f32.mrf.mxu0
      %2323 = vdwg.mxu0
      %v2325 = vsel %vm1358, %v1660, 0
      %v2328 = vsel %vm1358, %v1811, 0
      %2330 = vmatprep.subr.mxu0 0.0
      %2331 = vmatpush1.xpose.msra.mxu0 0.0
      %2332 = vmatprep.subr.mxu0 0.0
      %2333 = vmatpush1.xpose.msra.mxu0 0.0
      %2334 = vmatprep.subr.mxu0 0.0
      %2335 = vmatpush1.xpose.msra.mxu0 0.0
      %2336 = vmatprep.subr.mxu0 0.0
      %2337 = vmatpush1.xpose.msra.mxu0 0.0
      %2338 = vmatprep.subr.mxu0 0.0
      %2339 = vmatpush1.xpose.msra.mxu0 0.0
      %2340 = vmatprep.subr.mxu0 0.0
      %2341 = vmatpush1.xpose.msra.mxu0 0.0
      %2342 = vmatprep.subr.mxu0 0.0
      %2343 = vmatpush1.xpose.msra.mxu0 0.0
      %2344 = vmatprep.subr.mxu0 0.0
      %2345 = vmatpush1.xpose.msra.mxu0 0.0
      %2346 = vmatprep.subr.mxu0 0.0
      %2347 = vmatpush1.xpose.msra.mxu0 0.0
      %2348 = vmatprep.subr.mxu0 0.0
      %2349 = vmatpush1.xpose.msra.mxu0 0.0
      %2350 = vmatprep.subr.mxu0 0.0
      %2351 = vmatpush1.xpose.msra.mxu0 0.0
      %2352 = vmatprep.subr.mxu0 0.0
      %2353 = vmatpush1.xpose.msra.mxu0 0.0
      %2354 = vmatprep.subr.mxu0 0.0
      %2355 = vmatpush1.xpose.msra.mxu0 0.0
      %2356 = vmatprep.subr.mxu0 0.0
      %2357 = vmatpush1.xpose.msra.mxu0 0.0
      %2358 = vmatprep.subr.mxu0 0.0
      %2359 = vmatpush1.xpose.msra.mxu0 0.0
      %2360 = vmatprep.subr.mxu0 0.0
      %2361 = vmatpush1.xpose.msra.mxu0 %v2328
      %2362 = vmatprep.subr.mxu0 0.0
      %2363 = vmatpush2.xpose.msra.mxu0 0.0
      %2364 = vmatprep.subr.mxu0 0.0
      %2365 = vmatpush2.xpose.msra.mxu0 0.0
      %2366 = vmatprep.subr.mxu0 0.0
      %2367 = vmatpush2.xpose.msra.mxu0 0.0
      %2368 = vmatprep.subr.mxu0 0.0
      %2369 = vmatpush2.xpose.msra.mxu0 0.0
      %2370 = vmatprep.subr.mxu0 0.0
      %2371 = vmatpush2.xpose.msra.mxu0 0.0
      %2372 = vmatprep.subr.mxu0 0.0
      %2373 = vmatpush2.xpose.msra.mxu0 0.0
      %2374 = vmatprep.subr.mxu0 0.0
      %2375 = vmatpush2.xpose.msra.mxu0 0.0
      %2376 = vmatprep.subr.mxu0 0.0
      %2377 = vmatpush2.xpose.msra.mxu0 0.0
      %2378 = vmatprep.subr.mxu0 0.0
      %2379 = vmatpush2.xpose.msra.mxu0 0.0
      %2380 = vmatprep.subr.mxu0 0.0
      %2381 = vmatpush2.xpose.msra.mxu0 0.0
      %2382 = vmatprep.subr.mxu0 0.0
      %2383 = vmatpush2.xpose.msra.mxu0 0.0
      %2384 = vmatprep.subr.mxu0 0.0
      %2385 = vmatpush2.xpose.msra.mxu0 0.0
      %2386 = vmatprep.subr.mxu0 0.0
      %2387 = vmatpush2.xpose.msra.mxu0 0.0
      %2388 = vmatprep.subr.mxu0 0.0
      %2389 = vmatpush2.xpose.msra.mxu0 0.0
      %2390 = vmatprep.subr.mxu0 0.0
      %2391 = vmatpush2.xpose.msra.mxu0 0.0
      %2392 = vmatprep.subr.mxu0 0.0
      %2393 = vmatpush2.xpose.msra.mxu0 0.0
      %2394 = vmatprep.mubr.f32.mxu0 0.0
      %2395 = vmatmul.mubr.f32.gmra.mxu0 %v2325
      %v2396 = vpop.f32.mrf.mxu0
      %v2397 = vadd.f32 0.0, %v2396
      %v2398 = vpop.f32.mrf.mxu0
      %2399 = vdwg.mxu0
      %v2401 = vsel %vm1358, %v1665, 0
      %v2404 = vsel %vm1358, %v1816, 0
      %2406 = vmatprep.subr.mxu0 0.0
      %2407 = vmatpush1.xpose.msra.mxu0 0.0
      %2408 = vmatprep.subr.mxu0 0.0
      %2409 = vmatpush1.xpose.msra.mxu0 0.0
      %2410 = vmatprep.subr.mxu0 0.0
      %2411 = vmatpush1.xpose.msra.mxu0 0.0
      %2412 = vmatprep.subr.mxu0 0.0
      %2413 = vmatpush1.xpose.msra.mxu0 0.0
      %2414 = vmatprep.subr.mxu0 0.0
      %2415 = vmatpush1.xpose.msra.mxu0 0.0
      %2416 = vmatprep.subr.mxu0 0.0
      %2417 = vmatpush1.xpose.msra.mxu0 0.0
      %2418 = vmatprep.subr.mxu0 0.0
      %2419 = vmatpush1.xpose.msra.mxu0 0.0
      %2420 = vmatprep.subr.mxu0 0.0
      %2421 = vmatpush1.xpose.msra.mxu0 0.0
      %2422 = vmatprep.subr.mxu0 0.0
      %2423 = vmatpush1.xpose.msra.mxu0 0.0
      %2424 = vmatprep.subr.mxu0 0.0
      %2425 = vmatpush1.xpose.msra.mxu0 0.0
      %2426 = vmatprep.subr.mxu0 0.0
      %2427 = vmatpush1.xpose.msra.mxu0 0.0
      %2428 = vmatprep.subr.mxu0 0.0
      %2429 = vmatpush1.xpose.msra.mxu0 0.0
      %2430 = vmatprep.subr.mxu0 0.0
      %2431 = vmatpush1.xpose.msra.mxu0 0.0
      %2432 = vmatprep.subr.mxu0 0.0
      %2433 = vmatpush1.xpose.msra.mxu0 0.0
      %2434 = vmatprep.subr.mxu0 0.0
      %2435 = vmatpush1.xpose.msra.mxu0 0.0
      %2436 = vmatprep.subr.mxu0 0.0
      %2437 = vmatpush1.xpose.msra.mxu0 %v2404
      %2438 = vmatprep.subr.mxu0 0.0
      %2439 = vmatpush2.xpose.msra.mxu0 0.0
      %2440 = vmatprep.subr.mxu0 0.0
      %2441 = vmatpush2.xpose.msra.mxu0 0.0
      %2442 = vmatprep.subr.mxu0 0.0
      %2443 = vmatpush2.xpose.msra.mxu0 0.0
      %2444 = vmatprep.subr.mxu0 0.0
      %2445 = vmatpush2.xpose.msra.mxu0 0.0
      %2446 = vmatprep.subr.mxu0 0.0
      %2447 = vmatpush2.xpose.msra.mxu0 0.0
      %2448 = vmatprep.subr.mxu0 0.0
      %2449 = vmatpush2.xpose.msra.mxu0 0.0
      %2450 = vmatprep.subr.mxu0 0.0
      %2451 = vmatpush2.xpose.msra.mxu0 0.0
      %2452 = vmatprep.subr.mxu0 0.0
      %2453 = vmatpush2.xpose.msra.mxu0 0.0
      %2454 = vmatprep.subr.mxu0 0.0
      %2455 = vmatpush2.xpose.msra.mxu0 0.0
      %2456 = vmatprep.subr.mxu0 0.0
      %2457 = vmatpush2.xpose.msra.mxu0 0.0
      %2458 = vmatprep.subr.mxu0 0.0
      %2459 = vmatpush2.xpose.msra.mxu0 0.0
      %2460 = vmatprep.subr.mxu0 0.0
      %2461 = vmatpush2.xpose.msra.mxu0 0.0
      %2462 = vmatprep.subr.mxu0 0.0
      %2463 = vmatpush2.xpose.msra.mxu0 0.0
      %2464 = vmatprep.subr.mxu0 0.0
      %2465 = vmatpush2.xpose.msra.mxu0 0.0
      %2466 = vmatprep.subr.mxu0 0.0
      %2467 = vmatpush2.xpose.msra.mxu0 0.0
      %2468 = vmatprep.subr.mxu0 0.0
      %2469 = vmatpush2.xpose.msra.mxu0 0.0
      %2470 = vmatprep.mubr.f32.mxu0 0.0
      %2471 = vmatmul.mubr.f32.gmra.mxu0 %v2401
      %v2472 = vpop.f32.mrf.mxu0
      %v2473 = vadd.f32 0.0, %v2472
      %v2474 = vpop.f32.mrf.mxu0
      %2475 = vdwg.mxu0
      %v2477 = vsel %vm1358, %v1670, 0
      %v2480 = vsel %vm1358, %v1821, 0
      %2482 = vmatprep.subr.mxu0 0.0
      %2483 = vmatpush1.xpose.msra.mxu0 0.0
      %2484 = vmatprep.subr.mxu0 0.0
      %2485 = vmatpush1.xpose.msra.mxu0 0.0
      %2486 = vmatprep.subr.mxu0 0.0
      %2487 = vmatpush1.xpose.msra.mxu0 0.0
      %2488 = vmatprep.subr.mxu0 0.0
      %2489 = vmatpush1.xpose.msra.mxu0 0.0
      %2490 = vmatprep.subr.mxu0 0.0
      %2491 = vmatpush1.xpose.msra.mxu0 0.0
      %2492 = vmatprep.subr.mxu0 0.0
      %2493 = vmatpush1.xpose.msra.mxu0 0.0
      %2494 = vmatprep.subr.mxu0 0.0
      %2495 = vmatpush1.xpose.msra.mxu0 0.0
      %2496 = vmatprep.subr.mxu0 0.0
      %2497 = vmatpush1.xpose.msra.mxu0 0.0
      %2498 = vmatprep.subr.mxu0 0.0
      %2499 = vmatpush1.xpose.msra.mxu0 0.0
      %2500 = vmatprep.subr.mxu0 0.0
      %2501 = vmatpush1.xpose.msra.mxu0 0.0
      %2502 = vmatprep.subr.mxu0 0.0
      %2503 = vmatpush1.xpose.msra.mxu0 0.0
      %2504 = vmatprep.subr.mxu0 0.0
      %2505 = vmatpush1.xpose.msra.mxu0 0.0
      %2506 = vmatprep.subr.mxu0 0.0
      %2507 = vmatpush1.xpose.msra.mxu0 0.0
      %2508 = vmatprep.subr.mxu0 0.0
      %2509 = vmatpush1.xpose.msra.mxu0 0.0
      %2510 = vmatprep.subr.mxu0 0.0
      %2511 = vmatpush1.xpose.msra.mxu0 0.0
      %2512 = vmatprep.subr.mxu0 0.0
      %2513 = vmatpush1.xpose.msra.mxu0 %v2480
      %2514 = vmatprep.subr.mxu0 0.0
      %2515 = vmatpush2.xpose.msra.mxu0 0.0
      %2516 = vmatprep.subr.mxu0 0.0
      %2517 = vmatpush2.xpose.msra.mxu0 0.0
      %2518 = vmatprep.subr.mxu0 0.0
      %2519 = vmatpush2.xpose.msra.mxu0 0.0
      %2520 = vmatprep.subr.mxu0 0.0
      %2521 = vmatpush2.xpose.msra.mxu0 0.0
      %2522 = vmatprep.subr.mxu0 0.0
      %2523 = vmatpush2.xpose.msra.mxu0 0.0
      %2524 = vmatprep.subr.mxu0 0.0
      %2525 = vmatpush2.xpose.msra.mxu0 0.0
      %2526 = vmatprep.subr.mxu0 0.0
      %2527 = vmatpush2.xpose.msra.mxu0 0.0
      %2528 = vmatprep.subr.mxu0 0.0
      %2529 = vmatpush2.xpose.msra.mxu0 0.0
      %2530 = vmatprep.subr.mxu0 0.0
      %2531 = vmatpush2.xpose.msra.mxu0 0.0
      %2532 = vmatprep.subr.mxu0 0.0
      %2533 = vmatpush2.xpose.msra.mxu0 0.0
      %2534 = vmatprep.subr.mxu0 0.0
      %2535 = vmatpush2.xpose.msra.mxu0 0.0
      %2536 = vmatprep.subr.mxu0 0.0
      %2537 = vmatpush2.xpose.msra.mxu0 0.0
      %2538 = vmatprep.subr.mxu0 0.0
      %2539 = vmatpush2.xpose.msra.mxu0 0.0
      %2540 = vmatprep.subr.mxu0 0.0
      %2541 = vmatpush2.xpose.msra.mxu0 0.0
      %2542 = vmatprep.subr.mxu0 0.0
      %2543 = vmatpush2.xpose.msra.mxu0 0.0
      %2544 = vmatprep.subr.mxu0 0.0
      %2545 = vmatpush2.xpose.msra.mxu0 0.0
      %2546 = vmatprep.mubr.f32.mxu0 0.0
      %2547 = vmatmul.mubr.f32.gmra.mxu0 %v2477
      %v2548 = vpop.f32.mrf.mxu0
      %v2549 = vadd.f32 0.0, %v2548
      %v2550 = vpop.f32.mrf.mxu0
      %2551 = vdwg.mxu0
      %v2553 = vsel %vm1358, %v1675, 0
      %v2556 = vsel %vm1358, %v1826, 0
      %2558 = vmatprep.subr.mxu0 0.0
      %2559 = vmatpush1.xpose.msra.mxu0 0.0
      %2560 = vmatprep.subr.mxu0 0.0
      %2561 = vmatpush1.xpose.msra.mxu0 0.0
      %2562 = vmatprep.subr.mxu0 0.0
      %2563 = vmatpush1.xpose.msra.mxu0 0.0
      %2564 = vmatprep.subr.mxu0 0.0
      %2565 = vmatpush1.xpose.msra.mxu0 0.0
      %2566 = vmatprep.subr.mxu0 0.0
      %2567 = vmatpush1.xpose.msra.mxu0 0.0
      %2568 = vmatprep.subr.mxu0 0.0
      %2569 = vmatpush1.xpose.msra.mxu0 0.0
      %2570 = vmatprep.subr.mxu0 0.0
      %2571 = vmatpush1.xpose.msra.mxu0 0.0
      %2572 = vmatprep.subr.mxu0 0.0
      %2573 = vmatpush1.xpose.msra.mxu0 0.0
      %2574 = vmatprep.subr.mxu0 0.0
      %2575 = vmatpush1.xpose.msra.mxu0 0.0
      %2576 = vmatprep.subr.mxu0 0.0
      %2577 = vmatpush1.xpose.msra.mxu0 0.0
      %2578 = vmatprep.subr.mxu0 0.0
      %2579 = vmatpush1.xpose.msra.mxu0 0.0
      %2580 = vmatprep.subr.mxu0 0.0
      %2581 = vmatpush1.xpose.msra.mxu0 0.0
      %2582 = vmatprep.subr.mxu0 0.0
      %2583 = vmatpush1.xpose.msra.mxu0 0.0
      %2584 = vmatprep.subr.mxu0 0.0
      %2585 = vmatpush1.xpose.msra.mxu0 0.0
      %2586 = vmatprep.subr.mxu0 0.0
      %2587 = vmatpush1.xpose.msra.mxu0 0.0
      %2588 = vmatprep.subr.mxu0 0.0
      %2589 = vmatpush1.xpose.msra.mxu0 %v2556
      %2590 = vmatprep.subr.mxu0 0.0
      %2591 = vmatpush2.xpose.msra.mxu0 0.0
      %2592 = vmatprep.subr.mxu0 0.0
      %2593 = vmatpush2.xpose.msra.mxu0 0.0
      %2594 = vmatprep.subr.mxu0 0.0
      %2595 = vmatpush2.xpose.msra.mxu0 0.0
      %2596 = vmatprep.subr.mxu0 0.0
      %2597 = vmatpush2.xpose.msra.mxu0 0.0
      %2598 = vmatprep.subr.mxu0 0.0
      %2599 = vmatpush2.xpose.msra.mxu0 0.0
      %2600 = vmatprep.subr.mxu0 0.0
      %2601 = vmatpush2.xpose.msra.mxu0 0.0
      %2602 = vmatprep.subr.mxu0 0.0
      %2603 = vmatpush2.xpose.msra.mxu0 0.0
      %2604 = vmatprep.subr.mxu0 0.0
      %2605 = vmatpush2.xpose.msra.mxu0 0.0
      %2606 = vmatprep.subr.mxu0 0.0
      %2607 = vmatpush2.xpose.msra.mxu0 0.0
      %2608 = vmatprep.subr.mxu0 0.0
      %2609 = vmatpush2.xpose.msra.mxu0 0.0
      %2610 = vmatprep.subr.mxu0 0.0
      %2611 = vmatpush2.xpose.msra.mxu0 0.0
      %2612 = vmatprep.subr.mxu0 0.0
      %2613 = vmatpush2.xpose.msra.mxu0 0.0
      %2614 = vmatprep.subr.mxu0 0.0
      %2615 = vmatpush2.xpose.msra.mxu0 0.0
      %2616 = vmatprep.subr.mxu0 0.0
      %2617 = vmatpush2.xpose.msra.mxu0 0.0
      %2618 = vmatprep.subr.mxu0 0.0
      %2619 = vmatpush2.xpose.msra.mxu0 0.0
      %2620 = vmatprep.subr.mxu0 0.0
      %2621 = vmatpush2.xpose.msra.mxu0 0.0
      %2622 = vmatprep.mubr.f32.mxu0 0.0
      %2623 = vmatmul.mubr.f32.gmra.mxu0 %v2553
      %v2624 = vpop.f32.mrf.mxu0
      %v2625 = vadd.f32 0.0, %v2624
      %v2626 = vpop.f32.mrf.mxu0
      %2627 = vdwg.mxu0
      %v2629 = vsel %vm1358, %v1680, 0
      %v2632 = vsel %vm1358, %v1831, 0
      %2634 = vmatprep.subr.mxu0 0.0
      %2635 = vmatpush1.xpose.msra.mxu0 0.0
      %2636 = vmatprep.subr.mxu0 0.0
      %2637 = vmatpush1.xpose.msra.mxu0 0.0
      %2638 = vmatprep.subr.mxu0 0.0
      %2639 = vmatpush1.xpose.msra.mxu0 0.0
      %2640 = vmatprep.subr.mxu0 0.0
      %2641 = vmatpush1.xpose.msra.mxu0 0.0
      %2642 = vmatprep.subr.mxu0 0.0
      %2643 = vmatpush1.xpose.msra.mxu0 0.0
      %2644 = vmatprep.subr.mxu0 0.0
      %2645 = vmatpush1.xpose.msra.mxu0 0.0
      %2646 = vmatprep.subr.mxu0 0.0
      %2647 = vmatpush1.xpose.msra.mxu0 0.0
      %2648 = vmatprep.subr.mxu0 0.0
      %2649 = vmatpush1.xpose.msra.mxu0 0.0
      %2650 = vmatprep.subr.mxu0 0.0
      %2651 = vmatpush1.xpose.msra.mxu0 0.0
      %2652 = vmatprep.subr.mxu0 0.0
      %2653 = vmatpush1.xpose.msra.mxu0 0.0
      %2654 = vmatprep.subr.mxu0 0.0
      %2655 = vmatpush1.xpose.msra.mxu0 0.0
      %2656 = vmatprep.subr.mxu0 0.0
      %2657 = vmatpush1.xpose.msra.mxu0 0.0
      %2658 = vmatprep.subr.mxu0 0.0
      %2659 = vmatpush1.xpose.msra.mxu0 0.0
      %2660 = vmatprep.subr.mxu0 0.0
      %2661 = vmatpush1.xpose.msra.mxu0 0.0
      %2662 = vmatprep.subr.mxu0 0.0
      %2663 = vmatpush1.xpose.msra.mxu0 0.0
      %2664 = vmatprep.subr.mxu0 0.0
      %2665 = vmatpush1.xpose.msra.mxu0 %v2632
      %2666 = vmatprep.subr.mxu0 0.0
      %2667 = vmatpush2.xpose.msra.mxu0 0.0
      %2668 = vmatprep.subr.mxu0 0.0
      %2669 = vmatpush2.xpose.msra.mxu0 0.0
      %2670 = vmatprep.subr.mxu0 0.0
      %2671 = vmatpush2.xpose.msra.mxu0 0.0
      %2672 = vmatprep.subr.mxu0 0.0
      %2673 = vmatpush2.xpose.msra.mxu0 0.0
      %2674 = vmatprep.subr.mxu0 0.0
      %2675 = vmatpush2.xpose.msra.mxu0 0.0
      %2676 = vmatprep.subr.mxu0 0.0
      %2677 = vmatpush2.xpose.msra.mxu0 0.0
      %2678 = vmatprep.subr.mxu0 0.0
      %2679 = vmatpush2.xpose.msra.mxu0 0.0
      %2680 = vmatprep.subr.mxu0 0.0
      %2681 = vmatpush2.xpose.msra.mxu0 0.0
      %2682 = vmatprep.subr.mxu0 0.0
      %2683 = vmatpush2.xpose.msra.mxu0 0.0
      %2684 = vmatprep.subr.mxu0 0.0
      %2685 = vmatpush2.xpose.msra.mxu0 0.0
      %2686 = vmatprep.subr.mxu0 0.0
      %2687 = vmatpush2.xpose.msra.mxu0 0.0
      %2688 = vmatprep.subr.mxu0 0.0
      %2689 = vmatpush2.xpose.msra.mxu0 0.0
      %2690 = vmatprep.subr.mxu0 0.0
      %2691 = vmatpush2.xpose.msra.mxu0 0.0
      %2692 = vmatprep.subr.mxu0 0.0
      %2693 = vmatpush2.xpose.msra.mxu0 0.0
      %2694 = vmatprep.subr.mxu0 0.0
      %2695 = vmatpush2.xpose.msra.mxu0 0.0
      %2696 = vmatprep.subr.mxu0 0.0
      %2697 = vmatpush2.xpose.msra.mxu0 0.0
      %2698 = vmatprep.mubr.f32.mxu0 0.0
      %2699 = vmatmul.mubr.f32.gmra.mxu0 %v2629
      %v2700 = vpop.f32.mrf.mxu0
      %v2701 = vadd.f32 0.0, %v2700
      %v2702 = vpop.f32.mrf.mxu0
      %2703 = vdwg.mxu0
      %v2705 = vsel %vm1358, %v1685, 0
      %v2708 = vsel %vm1358, %v1836, 0
      %2710 = vmatprep.subr.mxu0 0.0
      %2711 = vmatpush1.xpose.msra.mxu0 0.0
      %2712 = vmatprep.subr.mxu0 0.0
      %2713 = vmatpush1.xpose.msra.mxu0 0.0
      %2714 = vmatprep.subr.mxu0 0.0
      %2715 = vmatpush1.xpose.msra.mxu0 0.0
      %2716 = vmatprep.subr.mxu0 0.0
      %2717 = vmatpush1.xpose.msra.mxu0 0.0
      %2718 = vmatprep.subr.mxu0 0.0
      %2719 = vmatpush1.xpose.msra.mxu0 0.0
      %2720 = vmatprep.subr.mxu0 0.0
      %2721 = vmatpush1.xpose.msra.mxu0 0.0
      %2722 = vmatprep.subr.mxu0 0.0
      %2723 = vmatpush1.xpose.msra.mxu0 0.0
      %2724 = vmatprep.subr.mxu0 0.0
      %2725 = vmatpush1.xpose.msra.mxu0 0.0
      %2726 = vmatprep.subr.mxu0 0.0
      %2727 = vmatpush1.xpose.msra.mxu0 0.0
      %2728 = vmatprep.subr.mxu0 0.0
      %2729 = vmatpush1.xpose.msra.mxu0 0.0
      %2730 = vmatprep.subr.mxu0 0.0
      %2731 = vmatpush1.xpose.msra.mxu0 0.0
      %2732 = vmatprep.subr.mxu0 0.0
      %2733 = vmatpush1.xpose.msra.mxu0 0.0
      %2734 = vmatprep.subr.mxu0 0.0
      %2735 = vmatpush1.xpose.msra.mxu0 0.0
      %2736 = vmatprep.subr.mxu0 0.0
      %2737 = vmatpush1.xpose.msra.mxu0 0.0
      %2738 = vmatprep.subr.mxu0 0.0
      %2739 = vmatpush1.xpose.msra.mxu0 0.0
      %2740 = vmatprep.subr.mxu0 0.0
      %2741 = vmatpush1.xpose.msra.mxu0 %v2708
      %2742 = vmatprep.subr.mxu0 0.0
      %2743 = vmatpush2.xpose.msra.mxu0 0.0
      %2744 = vmatprep.subr.mxu0 0.0
      %2745 = vmatpush2.xpose.msra.mxu0 0.0
      %2746 = vmatprep.subr.mxu0 0.0
      %2747 = vmatpush2.xpose.msra.mxu0 0.0
      %2748 = vmatprep.subr.mxu0 0.0
      %2749 = vmatpush2.xpose.msra.mxu0 0.0
      %2750 = vmatprep.subr.mxu0 0.0
      %2751 = vmatpush2.xpose.msra.mxu0 0.0
      %2752 = vmatprep.subr.mxu0 0.0
      %2753 = vmatpush2.xpose.msra.mxu0 0.0
      %2754 = vmatprep.subr.mxu0 0.0
      %2755 = vmatpush2.xpose.msra.mxu0 0.0
      %2756 = vmatprep.subr.mxu0 0.0
      %2757 = vmatpush2.xpose.msra.mxu0 0.0
      %2758 = vmatprep.subr.mxu0 0.0
      %2759 = vmatpush2.xpose.msra.mxu0 0.0
      %2760 = vmatprep.subr.mxu0 0.0
      %2761 = vmatpush2.xpose.msra.mxu0 0.0
      %2762 = vmatprep.subr.mxu0 0.0
      %2763 = vmatpush2.xpose.msra.mxu0 0.0
      %2764 = vmatprep.subr.mxu0 0.0
      %2765 = vmatpush2.xpose.msra.mxu0 0.0
      %2766 = vmatprep.subr.mxu0 0.0
      %2767 = vmatpush2.xpose.msra.mxu0 0.0
      %2768 = vmatprep.subr.mxu0 0.0
      %2769 = vmatpush2.xpose.msra.mxu0 0.0
      %2770 = vmatprep.subr.mxu0 0.0
      %2771 = vmatpush2.xpose.msra.mxu0 0.0
      %2772 = vmatprep.subr.mxu0 0.0
      %2773 = vmatpush2.xpose.msra.mxu0 0.0
      %2774 = vmatprep.mubr.f32.mxu0 0.0
      %2775 = vmatmul.mubr.f32.gmra.mxu0 %v2705
      %v2776 = vpop.f32.mrf.mxu0
      %v2777 = vadd.f32 0.0, %v2776
      %v2778 = vpop.f32.mrf.mxu0
      %2779 = vdwg.mxu0
      %v2781 = vsel %vm1358, %v1690, 0
      %v2784 = vsel %vm1358, %v1841, 0
      %2786 = vmatprep.subr.mxu0 0.0
      %2787 = vmatpush1.xpose.msra.mxu0 0.0
      %2788 = vmatprep.subr.mxu0 0.0
      %2789 = vmatpush1.xpose.msra.mxu0 0.0
      %2790 = vmatprep.subr.mxu0 0.0
      %2791 = vmatpush1.xpose.msra.mxu0 0.0
      %2792 = vmatprep.subr.mxu0 0.0
      %2793 = vmatpush1.xpose.msra.mxu0 0.0
      %2794 = vmatprep.subr.mxu0 0.0
      %2795 = vmatpush1.xpose.msra.mxu0 0.0
      %2796 = vmatprep.subr.mxu0 0.0
      %2797 = vmatpush1.xpose.msra.mxu0 0.0
      %2798 = vmatprep.subr.mxu0 0.0
      %2799 = vmatpush1.xpose.msra.mxu0 0.0
      %2800 = vmatprep.subr.mxu0 0.0
      %2801 = vmatpush1.xpose.msra.mxu0 0.0
      %2802 = vmatprep.subr.mxu0 0.0
      %2803 = vmatpush1.xpose.msra.mxu0 0.0
      %2804 = vmatprep.subr.mxu0 0.0
      %2805 = vmatpush1.xpose.msra.mxu0 0.0
      %2806 = vmatprep.subr.mxu0 0.0
      %2807 = vmatpush1.xpose.msra.mxu0 0.0
      %2808 = vmatprep.subr.mxu0 0.0
      %2809 = vmatpush1.xpose.msra.mxu0 0.0
      %2810 = vmatprep.subr.mxu0 0.0
      %2811 = vmatpush1.xpose.msra.mxu0 0.0
      %2812 = vmatprep.subr.mxu0 0.0
      %2813 = vmatpush1.xpose.msra.mxu0 0.0
      %2814 = vmatprep.subr.mxu0 0.0
      %2815 = vmatpush1.xpose.msra.mxu0 0.0
      %2816 = vmatprep.subr.mxu0 0.0
      %2817 = vmatpush1.xpose.msra.mxu0 %v2784
      %2818 = vmatprep.subr.mxu0 0.0
      %2819 = vmatpush2.xpose.msra.mxu0 0.0
      %2820 = vmatprep.subr.mxu0 0.0
      %2821 = vmatpush2.xpose.msra.mxu0 0.0
      %2822 = vmatprep.subr.mxu0 0.0
      %2823 = vmatpush2.xpose.msra.mxu0 0.0
      %2824 = vmatprep.subr.mxu0 0.0
      %2825 = vmatpush2.xpose.msra.mxu0 0.0
      %2826 = vmatprep.subr.mxu0 0.0
      %2827 = vmatpush2.xpose.msra.mxu0 0.0
      %2828 = vmatprep.subr.mxu0 0.0
      %2829 = vmatpush2.xpose.msra.mxu0 0.0
      %2830 = vmatprep.subr.mxu0 0.0
      %2831 = vmatpush2.xpose.msra.mxu0 0.0
      %2832 = vmatprep.subr.mxu0 0.0
      %2833 = vmatpush2.xpose.msra.mxu0 0.0
      %2834 = vmatprep.subr.mxu0 0.0
      %2835 = vmatpush2.xpose.msra.mxu0 0.0
      %2836 = vmatprep.subr.mxu0 0.0
      %2837 = vmatpush2.xpose.msra.mxu0 0.0
      %2838 = vmatprep.subr.mxu0 0.0
      %2839 = vmatpush2.xpose.msra.mxu0 0.0
      %2840 = vmatprep.subr.mxu0 0.0
      %2841 = vmatpush2.xpose.msra.mxu0 0.0
      %2842 = vmatprep.subr.mxu0 0.0
      %2843 = vmatpush2.xpose.msra.mxu0 0.0
      %2844 = vmatprep.subr.mxu0 0.0
      %2845 = vmatpush2.xpose.msra.mxu0 0.0
      %2846 = vmatprep.subr.mxu0 0.0
      %2847 = vmatpush2.xpose.msra.mxu0 0.0
      %2848 = vmatprep.subr.mxu0 0.0
      %2849 = vmatpush2.xpose.msra.mxu0 0.0
      %2850 = vmatprep.mubr.f32.mxu0 0.0
      %2851 = vmatmul.mubr.f32.gmra.mxu0 %v2781
      %v2852 = vpop.f32.mrf.mxu0
      %v2853 = vadd.f32 0.0, %v2852
      %v2854 = vpop.f32.mrf.mxu0
      %2855 = vdwg.mxu0
      %v2857 = vsel %vm1358, %v1695, 0
      %v2860 = vsel %vm1358, %v1846, 0
      %2862 = vmatprep.subr.mxu0 0.0
      %2863 = vmatpush1.xpose.msra.mxu0 0.0
      %2864 = vmatprep.subr.mxu0 0.0
      %2865 = vmatpush1.xpose.msra.mxu0 0.0
      %2866 = vmatprep.subr.mxu0 0.0
      %2867 = vmatpush1.xpose.msra.mxu0 0.0
      %2868 = vmatprep.subr.mxu0 0.0
      %2869 = vmatpush1.xpose.msra.mxu0 0.0
      %2870 = vmatprep.subr.mxu0 0.0
      %2871 = vmatpush1.xpose.msra.mxu0 0.0
      %2872 = vmatprep.subr.mxu0 0.0
      %2873 = vmatpush1.xpose.msra.mxu0 0.0
      %2874 = vmatprep.subr.mxu0 0.0
      %2875 = vmatpush1.xpose.msra.mxu0 0.0
      %2876 = vmatprep.subr.mxu0 0.0
      %2877 = vmatpush1.xpose.msra.mxu0 0.0
      %2878 = vmatprep.subr.mxu0 0.0
      %2879 = vmatpush1.xpose.msra.mxu0 0.0
      %2880 = vmatprep.subr.mxu0 0.0
      %2881 = vmatpush1.xpose.msra.mxu0 0.0
      %2882 = vmatprep.subr.mxu0 0.0
      %2883 = vmatpush1.xpose.msra.mxu0 0.0
      %2884 = vmatprep.subr.mxu0 0.0
      %2885 = vmatpush1.xpose.msra.mxu0 0.0
      %2886 = vmatprep.subr.mxu0 0.0
      %2887 = vmatpush1.xpose.msra.mxu0 0.0
      %2888 = vmatprep.subr.mxu0 0.0
      %2889 = vmatpush1.xpose.msra.mxu0 0.0
      %2890 = vmatprep.subr.mxu0 0.0
      %2891 = vmatpush1.xpose.msra.mxu0 0.0
      %2892 = vmatprep.subr.mxu0 0.0
      %2893 = vmatpush1.xpose.msra.mxu0 %v2860
      %2894 = vmatprep.subr.mxu0 0.0
      %2895 = vmatpush2.xpose.msra.mxu0 0.0
      %2896 = vmatprep.subr.mxu0 0.0
      %2897 = vmatpush2.xpose.msra.mxu0 0.0
      %2898 = vmatprep.subr.mxu0 0.0
      %2899 = vmatpush2.xpose.msra.mxu0 0.0
      %2900 = vmatprep.subr.mxu0 0.0
      %2901 = vmatpush2.xpose.msra.mxu0 0.0
      %2902 = vmatprep.subr.mxu0 0.0
      %2903 = vmatpush2.xpose.msra.mxu0 0.0
      %2904 = vmatprep.subr.mxu0 0.0
      %2905 = vmatpush2.xpose.msra.mxu0 0.0
      %2906 = vmatprep.subr.mxu0 0.0
      %2907 = vmatpush2.xpose.msra.mxu0 0.0
      %2908 = vmatprep.subr.mxu0 0.0
      %2909 = vmatpush2.xpose.msra.mxu0 0.0
      %2910 = vmatprep.subr.mxu0 0.0
      %2911 = vmatpush2.xpose.msra.mxu0 0.0
      %2912 = vmatprep.subr.mxu0 0.0
      %2913 = vmatpush2.xpose.msra.mxu0 0.0
      %2914 = vmatprep.subr.mxu0 0.0
      %2915 = vmatpush2.xpose.msra.mxu0 0.0
      %2916 = vmatprep.subr.mxu0 0.0
      %2917 = vmatpush2.xpose.msra.mxu0 0.0
      %2918 = vmatprep.subr.mxu0 0.0
      %2919 = vmatpush2.xpose.msra.mxu0 0.0
      %2920 = vmatprep.subr.mxu0 0.0
      %2921 = vmatpush2.xpose.msra.mxu0 0.0
      %2922 = vmatprep.subr.mxu0 0.0
      %2923 = vmatpush2.xpose.msra.mxu0 0.0
      %2924 = vmatprep.subr.mxu0 0.0
      %2925 = vmatpush2.xpose.msra.mxu0 0.0
      %2926 = vmatprep.mubr.f32.mxu0 0.0
      %2927 = vmatmul.mubr.f32.gmra.mxu0 %v2857
      %v2928 = vpop.f32.mrf.mxu0
      %v2929 = vadd.f32 0.0, %v2928
      %v2930 = vpop.f32.mrf.mxu0
      %2931 = vdwg.mxu0
      %v2933 = vsel %vm1358, %v1700, 0
      %v2936 = vsel %vm1358, %v1851, 0
      %2938 = vmatprep.subr.mxu0 0.0
      %2939 = vmatpush1.xpose.msra.mxu0 0.0
      %2940 = vmatprep.subr.mxu0 0.0
      %2941 = vmatpush1.xpose.msra.mxu0 0.0
      %2942 = vmatprep.subr.mxu0 0.0
      %2943 = vmatpush1.xpose.msra.mxu0 0.0
      %2944 = vmatprep.subr.mxu0 0.0
      %2945 = vmatpush1.xpose.msra.mxu0 0.0
      %2946 = vmatprep.subr.mxu0 0.0
      %2947 = vmatpush1.xpose.msra.mxu0 0.0
      %2948 = vmatprep.subr.mxu0 0.0
      %2949 = vmatpush1.xpose.msra.mxu0 0.0
      %2950 = vmatprep.subr.mxu0 0.0
      %2951 = vmatpush1.xpose.msra.mxu0 0.0
      %2952 = vmatprep.subr.mxu0 0.0
      %2953 = vmatpush1.xpose.msra.mxu0 0.0
      %2954 = vmatprep.subr.mxu0 0.0
      %2955 = vmatpush1.xpose.msra.mxu0 0.0
      %2956 = vmatprep.subr.mxu0 0.0
      %2957 = vmatpush1.xpose.msra.mxu0 0.0
      %2958 = vmatprep.subr.mxu0 0.0
      %2959 = vmatpush1.xpose.msra.mxu0 0.0
      %2960 = vmatprep.subr.mxu0 0.0
      %2961 = vmatpush1.xpose.msra.mxu0 0.0
      %2962 = vmatprep.subr.mxu0 0.0
      %2963 = vmatpush1.xpose.msra.mxu0 0.0
      %2964 = vmatprep.subr.mxu0 0.0
      %2965 = vmatpush1.xpose.msra.mxu0 0.0
      %2966 = vmatprep.subr.mxu0 0.0
      %2967 = vmatpush1.xpose.msra.mxu0 0.0
      %2968 = vmatprep.subr.mxu0 0.0
      %2969 = vmatpush1.xpose.msra.mxu0 %v2936
      %2970 = vmatprep.subr.mxu0 0.0
      %2971 = vmatpush2.xpose.msra.mxu0 0.0
      %2972 = vmatprep.subr.mxu0 0.0
      %2973 = vmatpush2.xpose.msra.mxu0 0.0
      %2974 = vmatprep.subr.mxu0 0.0
      %2975 = vmatpush2.xpose.msra.mxu0 0.0
      %2976 = vmatprep.subr.mxu0 0.0
      %2977 = vmatpush2.xpose.msra.mxu0 0.0
      %2978 = vmatprep.subr.mxu0 0.0
      %2979 = vmatpush2.xpose.msra.mxu0 0.0
      %2980 = vmatprep.subr.mxu0 0.0
      %2981 = vmatpush2.xpose.msra.mxu0 0.0
      %2982 = vmatprep.subr.mxu0 0.0
      %2983 = vmatpush2.xpose.msra.mxu0 0.0
      %2984 = vmatprep.subr.mxu0 0.0
      %2985 = vmatpush2.xpose.msra.mxu0 0.0
      %2986 = vmatprep.subr.mxu0 0.0
      %2987 = vmatpush2.xpose.msra.mxu0 0.0
      %2988 = vmatprep.subr.mxu0 0.0
      %2989 = vmatpush2.xpose.msra.mxu0 0.0
      %2990 = vmatprep.subr.mxu0 0.0
      %2991 = vmatpush2.xpose.msra.mxu0 0.0
      %2992 = vmatprep.subr.mxu0 0.0
      %2993 = vmatpush2.xpose.msra.mxu0 0.0
      %2994 = vmatprep.subr.mxu0 0.0
      %2995 = vmatpush2.xpose.msra.mxu0 0.0
      %2996 = vmatprep.subr.mxu0 0.0
      %2997 = vmatpush2.xpose.msra.mxu0 0.0
      %2998 = vmatprep.subr.mxu0 0.0
      %2999 = vmatpush2.xpose.msra.mxu0 0.0
      %3000 = vmatprep.subr.mxu0 0.0
      %3001 = vmatpush2.xpose.msra.mxu0 0.0
      %3002 = vmatprep.mubr.f32.mxu0 0.0
      %3003 = vmatmul.mubr.f32.gmra.mxu0 %v2933
      %v3004 = vpop.f32.mrf.mxu0
      %v3005 = vadd.f32 0.0, %v3004
      %v3006 = vpop.f32.mrf.mxu0
      %3007 = vdwg.mxu0
      %v3009 = vsel %vm1358, %v1705, 0
      %v3012 = vsel %vm1358, %v1856, 0
      %3014 = vmatprep.subr.mxu0 0.0
      %3015 = vmatpush1.xpose.msra.mxu0 0.0
      %3016 = vmatprep.subr.mxu0 0.0
      %3017 = vmatpush1.xpose.msra.mxu0 0.0
      %3018 = vmatprep.subr.mxu0 0.0
      %3019 = vmatpush1.xpose.msra.mxu0 0.0
      %3020 = vmatprep.subr.mxu0 0.0
      %3021 = vmatpush1.xpose.msra.mxu0 0.0
      %3022 = vmatprep.subr.mxu0 0.0
      %3023 = vmatpush1.xpose.msra.mxu0 0.0
      %3024 = vmatprep.subr.mxu0 0.0
      %3025 = vmatpush1.xpose.msra.mxu0 0.0
      %3026 = vmatprep.subr.mxu0 0.0
      %3027 = vmatpush1.xpose.msra.mxu0 0.0
      %3028 = vmatprep.subr.mxu0 0.0
      %3029 = vmatpush1.xpose.msra.mxu0 0.0
      %3030 = vmatprep.subr.mxu0 0.0
      %3031 = vmatpush1.xpose.msra.mxu0 0.0
      %3032 = vmatprep.subr.mxu0 0.0
      %3033 = vmatpush1.xpose.msra.mxu0 0.0
      %3034 = vmatprep.subr.mxu0 0.0
      %3035 = vmatpush1.xpose.msra.mxu0 0.0
      %3036 = vmatprep.subr.mxu0 0.0
      %3037 = vmatpush1.xpose.msra.mxu0 0.0
      %3038 = vmatprep.subr.mxu0 0.0
      %3039 = vmatpush1.xpose.msra.mxu0 0.0
      %3040 = vmatprep.subr.mxu0 0.0
      %3041 = vmatpush1.xpose.msra.mxu0 0.0
      %3042 = vmatprep.subr.mxu0 0.0
      %3043 = vmatpush1.xpose.msra.mxu0 0.0
      %3044 = vmatprep.subr.mxu0 0.0
      %3045 = vmatpush1.xpose.msra.mxu0 %v3012
      %3046 = vmatprep.subr.mxu0 0.0
      %3047 = vmatpush2.xpose.msra.mxu0 0.0
      %3048 = vmatprep.subr.mxu0 0.0
      %3049 = vmatpush2.xpose.msra.mxu0 0.0
      %3050 = vmatprep.subr.mxu0 0.0
      %3051 = vmatpush2.xpose.msra.mxu0 0.0
      %3052 = vmatprep.subr.mxu0 0.0
      %3053 = vmatpush2.xpose.msra.mxu0 0.0
      %3054 = vmatprep.subr.mxu0 0.0
      %3055 = vmatpush2.xpose.msra.mxu0 0.0
      %3056 = vmatprep.subr.mxu0 0.0
      %3057 = vmatpush2.xpose.msra.mxu0 0.0
      %3058 = vmatprep.subr.mxu0 0.0
      %3059 = vmatpush2.xpose.msra.mxu0 0.0
      %3060 = vmatprep.subr.mxu0 0.0
      %3061 = vmatpush2.xpose.msra.mxu0 0.0
      %3062 = vmatprep.subr.mxu0 0.0
      %3063 = vmatpush2.xpose.msra.mxu0 0.0
      %3064 = vmatprep.subr.mxu0 0.0
      %3065 = vmatpush2.xpose.msra.mxu0 0.0
      %3066 = vmatprep.subr.mxu0 0.0
      %3067 = vmatpush2.xpose.msra.mxu0 0.0
      %3068 = vmatprep.subr.mxu0 0.0
      %3069 = vmatpush2.xpose.msra.mxu0 0.0
      %3070 = vmatprep.subr.mxu0 0.0
      %3071 = vmatpush2.xpose.msra.mxu0 0.0
      %3072 = vmatprep.subr.mxu0 0.0
      %3073 = vmatpush2.xpose.msra.mxu0 0.0
      %3074 = vmatprep.subr.mxu0 0.0
      %3075 = vmatpush2.xpose.msra.mxu0 0.0
      %3076 = vmatprep.subr.mxu0 0.0
      %3077 = vmatpush2.xpose.msra.mxu0 0.0
      %3078 = vmatprep.mubr.f32.mxu0 0.0
      %3079 = vmatmul.mubr.f32.gmra.mxu0 %v3009
      %v3080 = vpop.f32.mrf.mxu0
      %v3081 = vadd.f32 0.0, %v3080
      %v3082 = vpop.f32.mrf.mxu0
      %3083 = vdwg.mxu0
      %v3085 = vsel %vm1358, %v1710, 0
      %v3088 = vsel %vm1358, %v1861, 0
      %3090 = vmatprep.subr.mxu0 0.0
      %3091 = vmatpush1.xpose.msra.mxu0 0.0
      %3092 = vmatprep.subr.mxu0 0.0
      %3093 = vmatpush1.xpose.msra.mxu0 0.0
      %3094 = vmatprep.subr.mxu0 0.0
      %3095 = vmatpush1.xpose.msra.mxu0 0.0
      %3096 = vmatprep.subr.mxu0 0.0
      %3097 = vmatpush1.xpose.msra.mxu0 0.0
      %3098 = vmatprep.subr.mxu0 0.0
      %3099 = vmatpush1.xpose.msra.mxu0 0.0
      %3100 = vmatprep.subr.mxu0 0.0
      %3101 = vmatpush1.xpose.msra.mxu0 0.0
      %3102 = vmatprep.subr.mxu0 0.0
      %3103 = vmatpush1.xpose.msra.mxu0 0.0
      %3104 = vmatprep.subr.mxu0 0.0
      %3105 = vmatpush1.xpose.msra.mxu0 0.0
      %3106 = vmatprep.subr.mxu0 0.0
      %3107 = vmatpush1.xpose.msra.mxu0 0.0
      %3108 = vmatprep.subr.mxu0 0.0
      %3109 = vmatpush1.xpose.msra.mxu0 0.0
      %3110 = vmatprep.subr.mxu0 0.0
      %3111 = vmatpush1.xpose.msra.mxu0 0.0
      %3112 = vmatprep.subr.mxu0 0.0
      %3113 = vmatpush1.xpose.msra.mxu0 0.0
      %3114 = vmatprep.subr.mxu0 0.0
      %3115 = vmatpush1.xpose.msra.mxu0 0.0
      %3116 = vmatprep.subr.mxu0 0.0
      %3117 = vmatpush1.xpose.msra.mxu0 0.0
      %3118 = vmatprep.subr.mxu0 0.0
      %3119 = vmatpush1.xpose.msra.mxu0 0.0
      %3120 = vmatprep.subr.mxu0 0.0
      %3121 = vmatpush1.xpose.msra.mxu0 %v3088
      %3122 = vmatprep.subr.mxu0 0.0
      %3123 = vmatpush2.xpose.msra.mxu0 0.0
      %3124 = vmatprep.subr.mxu0 0.0
      %3125 = vmatpush2.xpose.msra.mxu0 0.0
      %3126 = vmatprep.subr.mxu0 0.0
      %3127 = vmatpush2.xpose.msra.mxu0 0.0
      %3128 = vmatprep.subr.mxu0 0.0
      %3129 = vmatpush2.xpose.msra.mxu0 0.0
      %3130 = vmatprep.subr.mxu0 0.0
      %3131 = vmatpush2.xpose.msra.mxu0 0.0
      %3132 = vmatprep.subr.mxu0 0.0
      %3133 = vmatpush2.xpose.msra.mxu0 0.0
      %3134 = vmatprep.subr.mxu0 0.0
      %3135 = vmatpush2.xpose.msra.mxu0 0.0
      %3136 = vmatprep.subr.mxu0 0.0
      %3137 = vmatpush2.xpose.msra.mxu0 0.0
      %3138 = vmatprep.subr.mxu0 0.0
      %3139 = vmatpush2.xpose.msra.mxu0 0.0
      %3140 = vmatprep.subr.mxu0 0.0
      %3141 = vmatpush2.xpose.msra.mxu0 0.0
      %3142 = vmatprep.subr.mxu0 0.0
      %3143 = vmatpush2.xpose.msra.mxu0 0.0
      %3144 = vmatprep.subr.mxu0 0.0
      %3145 = vmatpush2.xpose.msra.mxu0 0.0
      %3146 = vmatprep.subr.mxu0 0.0
      %3147 = vmatpush2.xpose.msra.mxu0 0.0
      %3148 = vmatprep.subr.mxu0 0.0
      %3149 = vmatpush2.xpose.msra.mxu0 0.0
      %3150 = vmatprep.subr.mxu0 0.0
      %3151 = vmatpush2.xpose.msra.mxu0 0.0
      %3152 = vmatprep.subr.mxu0 0.0
      %3153 = vmatpush2.xpose.msra.mxu0 0.0
      %3154 = vmatprep.mubr.f32.mxu0 0.0
      %3155 = vmatmul.mubr.f32.gmra.mxu0 %v3085
      %v3156 = vpop.f32.mrf.mxu0
      %v3157 = vadd.f32 0.0, %v3156
      %v3158 = vpop.f32.mrf.mxu0
      %3159 = vdwg.mxu0
      %v3161 = vsel %vm1358, %v1715, 0
      %v3164 = vsel %vm1358, %v1866, 0
      %3166 = vmatprep.subr.mxu0 0.0
      %3167 = vmatpush1.xpose.msra.mxu0 0.0
      %3168 = vmatprep.subr.mxu0 0.0
      %3169 = vmatpush1.xpose.msra.mxu0 0.0
      %3170 = vmatprep.subr.mxu0 0.0
      %3171 = vmatpush1.xpose.msra.mxu0 0.0
      %3172 = vmatprep.subr.mxu0 0.0
      %3173 = vmatpush1.xpose.msra.mxu0 0.0
      %3174 = vmatprep.subr.mxu0 0.0
      %3175 = vmatpush1.xpose.msra.mxu0 0.0
      %3176 = vmatprep.subr.mxu0 0.0
      %3177 = vmatpush1.xpose.msra.mxu0 0.0
      %3178 = vmatprep.subr.mxu0 0.0
      %3179 = vmatpush1.xpose.msra.mxu0 0.0
      %3180 = vmatprep.subr.mxu0 0.0
      %3181 = vmatpush1.xpose.msra.mxu0 0.0
      %3182 = vmatprep.subr.mxu0 0.0
      %3183 = vmatpush1.xpose.msra.mxu0 0.0
      %3184 = vmatprep.subr.mxu0 0.0
      %3185 = vmatpush1.xpose.msra.mxu0 0.0
      %3186 = vmatprep.subr.mxu0 0.0
      %3187 = vmatpush1.xpose.msra.mxu0 0.0
      %3188 = vmatprep.subr.mxu0 0.0
      %3189 = vmatpush1.xpose.msra.mxu0 0.0
      %3190 = vmatprep.subr.mxu0 0.0
      %3191 = vmatpush1.xpose.msra.mxu0 0.0
      %3192 = vmatprep.subr.mxu0 0.0
      %3193 = vmatpush1.xpose.msra.mxu0 0.0
      %3194 = vmatprep.subr.mxu0 0.0
      %3195 = vmatpush1.xpose.msra.mxu0 0.0
      %3196 = vmatprep.subr.mxu0 0.0
      %3197 = vmatpush1.xpose.msra.mxu0 %v3164
      %3198 = vmatprep.subr.mxu0 0.0
      %3199 = vmatpush2.xpose.msra.mxu0 0.0
      %3200 = vmatprep.subr.mxu0 0.0
      %3201 = vmatpush2.xpose.msra.mxu0 0.0
      %3202 = vmatprep.subr.mxu0 0.0
      %3203 = vmatpush2.xpose.msra.mxu0 0.0
      %3204 = vmatprep.subr.mxu0 0.0
      %3205 = vmatpush2.xpose.msra.mxu0 0.0
      %3206 = vmatprep.subr.mxu0 0.0
      %3207 = vmatpush2.xpose.msra.mxu0 0.0
      %3208 = vmatprep.subr.mxu0 0.0
      %3209 = vmatpush2.xpose.msra.mxu0 0.0
      %3210 = vmatprep.subr.mxu0 0.0
      %3211 = vmatpush2.xpose.msra.mxu0 0.0
      %3212 = vmatprep.subr.mxu0 0.0
      %3213 = vmatpush2.xpose.msra.mxu0 0.0
      %3214 = vmatprep.subr.mxu0 0.0
      %3215 = vmatpush2.xpose.msra.mxu0 0.0
      %3216 = vmatprep.subr.mxu0 0.0
      %3217 = vmatpush2.xpose.msra.mxu0 0.0
      %3218 = vmatprep.subr.mxu0 0.0
      %3219 = vmatpush2.xpose.msra.mxu0 0.0
      %3220 = vmatprep.subr.mxu0 0.0
      %3221 = vmatpush2.xpose.msra.mxu0 0.0
      %3222 = vmatprep.subr.mxu0 0.0
      %3223 = vmatpush2.xpose.msra.mxu0 0.0
      %3224 = vmatprep.subr.mxu0 0.0
      %3225 = vmatpush2.xpose.msra.mxu0 0.0
      %3226 = vmatprep.subr.mxu0 0.0
      %3227 = vmatpush2.xpose.msra.mxu0 0.0
      %3228 = vmatprep.subr.mxu0 0.0
      %3229 = vmatpush2.xpose.msra.mxu0 0.0
      %3230 = vmatprep.mubr.f32.mxu0 0.0
      %3231 = vmatmul.mubr.f32.gmra.mxu0 %v3161
      %v3232 = vpop.f32.mrf.mxu0
      %v3233 = vadd.f32 0.0, %v3232
      %v3234 = vpop.f32.mrf.mxu0
      %3235 = vdwg.mxu0
      %v3236 = vmul.f32 %v2093, 0.17677669
      %v3237 = vmul.f32 %v2169, 0.17677669
      %v3238 = vmul.f32 %v2245, 0.17677669
      %v3239 = vmul.f32 %v2321, 0.17677669
      %v3240 = vmul.f32 %v2397, 0.17677669
      %v3241 = vmul.f32 %v2473, 0.17677669
      %v3242 = vmul.f32 %v2549, 0.17677669
      %v3243 = vmul.f32 %v2625, 0.17677669
      %v3244 = vmul.f32 %v2701, 0.17677669
      %v3245 = vmul.f32 %v2777, 0.17677669
      %v3246 = vmul.f32 %v2853, 0.17677669
      %v3247 = vmul.f32 %v2929, 0.17677669
      %v3248 = vmul.f32 %v3005, 0.17677669
      %v3249 = vmul.f32 %v3081, 0.17677669
      %v3250 = vmul.f32 %v3157, 0.17677669
      %v3251 = vmul.f32 %v3233, 0.17677669
      %v3252 = vxor.u32 %v3236, 2147483648
      %v3253 = vxor.u32 %v3237, 2147483648
      %v3254 = vxor.u32 %v3238, 2147483648
      %v3255 = vxor.u32 %v3239, 2147483648
      %v3256 = vxor.u32 %v3240, 2147483648
      %v3257 = vxor.u32 %v3241, 2147483648
      %v3258 = vxor.u32 %v3242, 2147483648
      %v3259 = vxor.u32 %v3243, 2147483648
      %v3260 = vxor.u32 %v3244, 2147483648
      %v3261 = vxor.u32 %v3245, 2147483648
      %v3262 = vxor.u32 %v3246, 2147483648
      %v3263 = vxor.u32 %v3247, 2147483648
      %v3264 = vxor.u32 %v3248, 2147483648
      %v3265 = vxor.u32 %v3249, 2147483648
      %v3266 = vxor.u32 %v3250, 2147483648
      %v3267 = vxor.u32 %v3251, 2147483648
      %v3268 = vmul.f32 %v3252, 1.442695
      %v3269 = vpow.pop %v3268
      %v3270 = vmul.f32 %v3253, 1.442695
      %v3271 = vpow.pop %v3270
      %v3272 = vmul.f32 %v3254, 1.442695
      %v3273 = vpow.pop %v3272
      %v3274 = vmul.f32 %v3255, 1.442695
      %v3275 = vpow.pop %v3274
      %v3276 = vmul.f32 %v3256, 1.442695
      %v3277 = vpow.pop %v3276
      %v3278 = vmul.f32 %v3257, 1.442695
      %v3279 = vpow.pop %v3278
      %v3280 = vmul.f32 %v3258, 1.442695
      %v3281 = vpow.pop %v3280
      %v3282 = vmul.f32 %v3259, 1.442695
      %v3283 = vpow.pop %v3282
      %v3284 = vmul.f32 %v3260, 1.442695
      %v3285 = vpow.pop %v3284
      %v3286 = vmul.f32 %v3261, 1.442695
      %v3287 = vpow.pop %v3286
      %v3288 = vmul.f32 %v3262, 1.442695
      %v3289 = vpow.pop %v3288
      %v3290 = vmul.f32 %v3263, 1.442695
      %v3291 = vpow.pop %v3290
      %v3292 = vmul.f32 %v3264, 1.442695
      %v3293 = vpow.pop %v3292
      %v3294 = vmul.f32 %v3265, 1.442695
      %v3295 = vpow.pop %v3294
      %v3296 = vmul.f32 %v3266, 1.442695
      %v3297 = vpow.pop %v3296
      %v3298 = vmul.f32 %v3267, 1.442695
      %v3299 = vpow.pop %v3298
      %v3300 = vadd.f32 %v3269, 1.0
      %v3301 = vadd.f32 %v3271, 1.0
      %v3302 = vadd.f32 %v3273, 1.0
      %v3303 = vadd.f32 %v3275, 1.0
      %v3304 = vadd.f32 %v3277, 1.0
      %v3305 = vadd.f32 %v3279, 1.0
      %v3306 = vadd.f32 %v3281, 1.0
      %v3307 = vadd.f32 %v3283, 1.0
      %v3308 = vadd.f32 %v3285, 1.0
      %v3309 = vadd.f32 %v3287, 1.0
      %v3310 = vadd.f32 %v3289, 1.0
      %v3311 = vadd.f32 %v3291, 1.0
      %v3312 = vadd.f32 %v3293, 1.0
      %v3313 = vadd.f32 %v3295, 1.0
      %v3314 = vadd.f32 %v3297, 1.0
      %v3315 = vadd.f32 %v3299, 1.0
      %v3316 = vrcp.pop %v3300
      %v3317 = vmul.f32 1.0, %v3316
      %v3318 = vrcp.pop %v3301
      %v3319 = vmul.f32 1.0, %v3318
      %v3320 = vrcp.pop %v3302
      %v3321 = vmul.f32 1.0, %v3320
      %v3322 = vrcp.pop %v3303
      %v3323 = vmul.f32 1.0, %v3322
      %v3324 = vrcp.pop %v3304
      %v3325 = vmul.f32 1.0, %v3324
      %v3326 = vrcp.pop %v3305
      %v3327 = vmul.f32 1.0, %v3326
      %v3328 = vrcp.pop %v3306
      %v3329 = vmul.f32 1.0, %v3328
      %v3330 = vrcp.pop %v3307
      %v3331 = vmul.f32 1.0, %v3330
      %v3332 = vrcp.pop %v3308
      %v3333 = vmul.f32 1.0, %v3332
      %v3334 = vrcp.pop %v3309
      %v3335 = vmul.f32 1.0, %v3334
      %v3336 = vrcp.pop %v3310
      %v3337 = vmul.f32 1.0, %v3336
      %v3338 = vrcp.pop %v3311
      %v3339 = vmul.f32 1.0, %v3338
      %v3340 = vrcp.pop %v3312
      %v3341 = vmul.f32 1.0, %v3340
      %v3342 = vrcp.pop %v3313
      %v3343 = vmul.f32 1.0, %v3342
      %v3344 = vrcp.pop %v3314
      %v3345 = vmul.f32 1.0, %v3344
      %v3346 = vrcp.pop %v3315
      %v3347 = vmul.f32 1.0, %v3346
      %vm3348 = vcmask 64512
      %v3349 = vsel %vm3348, %v3317, -inf
      %3350 = vmax.xlane.f32.xlu0 %v3349
      %v3351 = vpop.xlane.xlu0 %3350
      %v3352 = vsel %vm3348, %v3319, -inf
      %3353 = vmax.xlane.f32.xlu0 %v3352
      %v3354 = vpop.xlane.xlu0 %3353
      %v3355 = vsel %vm3348, %v3321, -inf
      %3356 = vmax.xlane.f32.xlu0 %v3355
      %v3357 = vpop.xlane.xlu0 %3356
      %v3358 = vsel %vm3348, %v3323, -inf
      %3359 = vmax.xlane.f32.xlu0 %v3358
      %v3360 = vpop.xlane.xlu0 %3359
      %v3361 = vsel %vm3348, %v3325, -inf
      %3362 = vmax.xlane.f32.xlu0 %v3361
      %v3363 = vpop.xlane.xlu0 %3362
      %v3364 = vsel %vm3348, %v3327, -inf
      %3365 = vmax.xlane.f32.xlu0 %v3364
      %v3366 = vpop.xlane.xlu0 %3365
      %v3367 = vsel %vm3348, %v3329, -inf
      %3368 = vmax.xlane.f32.xlu0 %v3367
      %v3369 = vpop.xlane.xlu0 %3368
      %v3370 = vsel %vm3348, %v3331, -inf
      %3371 = vmax.xlane.f32.xlu0 %v3370
      %v3372 = vpop.xlane.xlu0 %3371
      %v3373 = vsel %vm3348, %v3333, -inf
      %3374 = vmax.xlane.f32.xlu0 %v3373
      %v3375 = vpop.xlane.xlu0 %3374
      %v3376 = vsel %vm3348, %v3335, -inf
      %3377 = vmax.xlane.f32.xlu0 %v3376
      %v3378 = vpop.xlane.xlu0 %3377
      %v3379 = vsel %vm3348, %v3337, -inf
      %3380 = vmax.xlane.f32.xlu0 %v3379
      %v3381 = vpop.xlane.xlu0 %3380
      %v3382 = vsel %vm3348, %v3339, -inf
      %3383 = vmax.xlane.f32.xlu0 %v3382
      %v3384 = vpop.xlane.xlu0 %3383
      %v3385 = vsel %vm3348, %v3341, -inf
      %3386 = vmax.xlane.f32.xlu0 %v3385
      %v3387 = vpop.xlane.xlu0 %3386
      %v3388 = vsel %vm3348, %v3343, -inf
      %3389 = vmax.xlane.f32.xlu0 %v3388
      %v3390 = vpop.xlane.xlu0 %3389
      %v3391 = vsel %vm3348, %v3345, -inf
      %3392 = vmax.xlane.f32.xlu0 %v3391
      %v3393 = vpop.xlane.xlu0 %3392
      %v3394 = vsel %vm3348, %v3347, -inf
      %3395 = vmax.xlane.f32.xlu0 %v3394
      %v3396 = vpop.xlane.xlu0 %3395
      %v3397 = vsub.f32 %v3317, %v3351
      %v3398 = vsub.f32 %v3319, %v3354
      %v3399 = vsub.f32 %v3321, %v3357
      %v3400 = vsub.f32 %v3323, %v3360
      %v3401 = vsub.f32 %v3325, %v3363
      %v3402 = vsub.f32 %v3327, %v3366
      %v3403 = vsub.f32 %v3329, %v3369
      %v3404 = vsub.f32 %v3331, %v3372
      %v3405 = vsub.f32 %v3333, %v3375
      %v3406 = vsub.f32 %v3335, %v3378
      %v3407 = vsub.f32 %v3337, %v3381
      %v3408 = vsub.f32 %v3339, %v3384
      %v3409 = vsub.f32 %v3341, %v3387
      %v3410 = vsub.f32 %v3343, %v3390
      %v3411 = vsub.f32 %v3345, %v3393
      %v3412 = vsub.f32 %v3347, %v3396
      %v3413 = vmul.f32 %v3397, 1.442695
      %v3414 = vpow.pop %v3413
      %v3415 = vmul.f32 %v3398, 1.442695
      %v3416 = vpow.pop %v3415
      %v3417 = vmul.f32 %v3399, 1.442695
      %v3418 = vpow.pop %v3417
      %v3419 = vmul.f32 %v3400, 1.442695
      %v3420 = vpow.pop %v3419
      %v3421 = vmul.f32 %v3401, 1.442695
      %v3422 = vpow.pop %v3421
      %v3423 = vmul.f32 %v3402, 1.442695
      %v3424 = vpow.pop %v3423
      %v3425 = vmul.f32 %v3403, 1.442695
      %v3426 = vpow.pop %v3425
      %v3427 = vmul.f32 %v3404, 1.442695
      %v3428 = vpow.pop %v3427
      %v3429 = vmul.f32 %v3405, 1.442695
      %v3430 = vpow.pop %v3429
      %v3431 = vmul.f32 %v3406, 1.442695
      %v3432 = vpow.pop %v3431
      %v3433 = vmul.f32 %v3407, 1.442695
      %v3434 = vpow.pop %v3433
      %v3435 = vmul.f32 %v3408, 1.442695
      %v3436 = vpow.pop %v3435
      %v3437 = vmul.f32 %v3409, 1.442695
      %v3438 = vpow.pop %v3437
      %v3439 = vmul.f32 %v3410, 1.442695
      %v3440 = vpow.pop %v3439
      %v3441 = vmul.f32 %v3411, 1.442695
      %v3442 = vpow.pop %v3441
      %v3443 = vmul.f32 %v3412, 1.442695
      %v3444 = vpow.pop %v3443
      %v3445 = vsel %vm3348, %v3414, 0.0
      %3446 = vadd.xlane.f32.xlu0 %v3445
      %v3447 = vpop.xlane.xlu0 %3446
      %v3448 = vsel %vm3348, %v3416, 0.0
      %3449 = vadd.xlane.f32.xlu0 %v3448
      %v3450 = vpop.xlane.xlu0 %3449
      %v3451 = vsel %vm3348, %v3418, 0.0
      %3452 = vadd.xlane.f32.xlu0 %v3451
      %v3453 = vpop.xlane.xlu0 %3452
      %v3454 = vsel %vm3348, %v3420, 0.0
      %3455 = vadd.xlane.f32.xlu0 %v3454
      %v3456 = vpop.xlane.xlu0 %3455
      %v3457 = vsel %vm3348, %v3422, 0.0
      %3458 = vadd.xlane.f32.xlu0 %v3457
      %v3459 = vpop.xlane.xlu0 %3458
      %v3460 = vsel %vm3348, %v3424, 0.0
      %3461 = vadd.xlane.f32.xlu0 %v3460
      %v3462 = vpop.xlane.xlu0 %3461
      %v3463 = vsel %vm3348, %v3426, 0.0
      %3464 = vadd.xlane.f32.xlu0 %v3463
      %v3465 = vpop.xlane.xlu0 %3464
      %v3466 = vsel %vm3348, %v3428, 0.0
      %3467 = vadd.xlane.f32.xlu0 %v3466
      %v3468 = vpop.xlane.xlu0 %3467
      %v3469 = vsel %vm3348, %v3430, 0.0
      %3470 = vadd.xlane.f32.xlu0 %v3469
      %v3471 = vpop.xlane.xlu0 %3470
      %v3472 = vsel %vm3348, %v3432, 0.0
      %3473 = vadd.xlane.f32.xlu0 %v3472
      %v3474 = vpop.xlane.xlu0 %3473
      %v3475 = vsel %vm3348, %v3434, 0.0
      %3476 = vadd.xlane.f32.xlu0 %v3475
      %v3477 = vpop.xlane.xlu0 %3476
      %v3478 = vsel %vm3348, %v3436, 0.0
      %3479 = vadd.xlane.f32.xlu0 %v3478
      %v3480 = vpop.xlane.xlu0 %3479
      %v3481 = vsel %vm3348, %v3438, 0.0
      %3482 = vadd.xlane.f32.xlu0 %v3481
      %v3483 = vpop.xlane.xlu0 %3482
      %v3484 = vsel %vm3348, %v3440, 0.0
      %3485 = vadd.xlane.f32.xlu0 %v3484
      %v3486 = vpop.xlane.xlu0 %3485
      %v3487 = vsel %vm3348, %v3442, 0.0
      %3488 = vadd.xlane.f32.xlu0 %v3487
      %v3489 = vpop.xlane.xlu0 %3488
      %v3490 = vsel %vm3348, %v3444, 0.0
      %3491 = vadd.xlane.f32.xlu0 %v3490
      %v3492 = vpop.xlane.xlu0 %3491
      %v3493 = vrcp.pop %v3447
      %v3494 = vrcp.pop %v3450
      %v3495 = vrcp.pop %v3453
      %v3496 = vrcp.pop %v3456
      %v3497 = vrcp.pop %v3459
      %v3498 = vrcp.pop %v3462
      %v3499 = vrcp.pop %v3465
      %v3500 = vrcp.pop %v3468
      %v3501 = vrcp.pop %v3471
      %v3502 = vrcp.pop %v3474
      %v3503 = vrcp.pop %v3477
      %v3504 = vrcp.pop %v3480
      %v3505 = vrcp.pop %v3483
      %v3506 = vrcp.pop %v3486
      %v3507 = vrcp.pop %v3489
      %v3508 = vrcp.pop %v3492
      %v3509 = vmul.f32 %v3447, %v3493
      %v3510 = vmul.f32 %v3450, %v3494
      %v3511 = vmul.f32 %v3453, %v3495
      %v3512 = vmul.f32 %v3456, %v3496
      %v3513 = vmul.f32 %v3459, %v3497
      %v3514 = vmul.f32 %v3462, %v3498
      %v3515 = vmul.f32 %v3465, %v3499
      %v3516 = vmul.f32 %v3468, %v3500
      %v3517 = vmul.f32 %v3471, %v3501
      %v3518 = vmul.f32 %v3474, %v3502
      %v3519 = vmul.f32 %v3477, %v3503
      %v3520 = vmul.f32 %v3480, %v3504
      %v3521 = vmul.f32 %v3483, %v3505
      %v3522 = vmul.f32 %v3486, %v3506
      %v3523 = vmul.f32 %v3489, %v3507
      %v3524 = vmul.f32 %v3492, %v3508
      %v3525 = vsub.f32 2.0, %v3509
      %v3526 = vsub.f32 2.0, %v3510
      %v3527 = vsub.f32 2.0, %v3511
      %v3528 = vsub.f32 2.0, %v3512
      %v3529 = vsub.f32 2.0, %v3513
      %v3530 = vsub.f32 2.0, %v3514
      %v3531 = vsub.f32 2.0, %v3515
      %v3532 = vsub.f32 2.0, %v3516
      %v3533 = vsub.f32 2.0, %v3517
      %v3534 = vsub.f32 2.0, %v3518
      %v3535 = vsub.f32 2.0, %v3519
      %v3536 = vsub.f32 2.0, %v3520
      %v3537 = vsub.f32 2.0, %v3521
      %v3538 = vsub.f32 2.0, %v3522
      %v3539 = vsub.f32 2.0, %v3523
      %v3540 = vsub.f32 2.0, %v3524
      %v3541 = vmul.f32 %v3493, %v3525
      %v3542 = vmul.f32 %v3494, %v3526
      %v3543 = vmul.f32 %v3495, %v3527
      %v3544 = vmul.f32 %v3496, %v3528
      %v3545 = vmul.f32 %v3497, %v3529
      %v3546 = vmul.f32 %v3498, %v3530
      %v3547 = vmul.f32 %v3499, %v3531
      %v3548 = vmul.f32 %v3500, %v3532
      %v3549 = vmul.f32 %v3501, %v3533
      %v3550 = vmul.f32 %v3502, %v3534
      %v3551 = vmul.f32 %v3503, %v3535
      %v3552 = vmul.f32 %v3504, %v3536
      %v3553 = vmul.f32 %v3505, %v3537
      %v3554 = vmul.f32 %v3506, %v3538
      %v3555 = vmul.f32 %v3507, %v3539
      %v3556 = vmul.f32 %v3508, %v3540
      %v3557 = vmul.f32 %v3447, %v3541
      %v3558 = vmul.f32 %v3450, %v3542
      %v3559 = vmul.f32 %v3453, %v3543
      %v3560 = vmul.f32 %v3456, %v3544
      %v3561 = vmul.f32 %v3459, %v3545
      %v3562 = vmul.f32 %v3462, %v3546
      %v3563 = vmul.f32 %v3465, %v3547
      %v3564 = vmul.f32 %v3468, %v3548
      %v3565 = vmul.f32 %v3471, %v3549
      %v3566 = vmul.f32 %v3474, %v3550
      %v3567 = vmul.f32 %v3477, %v3551
      %v3568 = vmul.f32 %v3480, %v3552
      %v3569 = vmul.f32 %v3483, %v3553
      %v3570 = vmul.f32 %v3486, %v3554
      %v3571 = vmul.f32 %v3489, %v3555
      %v3572 = vmul.f32 %v3492, %v3556
      %v3573 = vsub.f32 2.0, %v3557
      %v3574 = vsub.f32 2.0, %v3558
      %v3575 = vsub.f32 2.0, %v3559
      %v3576 = vsub.f32 2.0, %v3560
      %v3577 = vsub.f32 2.0, %v3561
      %v3578 = vsub.f32 2.0, %v3562
      %v3579 = vsub.f32 2.0, %v3563
      %v3580 = vsub.f32 2.0, %v3564
      %v3581 = vsub.f32 2.0, %v3565
      %v3582 = vsub.f32 2.0, %v3566
      %v3583 = vsub.f32 2.0, %v3567
      %v3584 = vsub.f32 2.0, %v3568
      %v3585 = vsub.f32 2.0, %v3569
      %v3586 = vsub.f32 2.0, %v3570
      %v3587 = vsub.f32 2.0, %v3571
      %v3588 = vsub.f32 2.0, %v3572
      %v3589 = vmul.f32 %v3541, %v3573
      %v3590 = vmul.f32 %v3542, %v3574
      %v3591 = vmul.f32 %v3543, %v3575
      %v3592 = vmul.f32 %v3544, %v3576
      %v3593 = vmul.f32 %v3545, %v3577
      %v3594 = vmul.f32 %v3546, %v3578
      %v3595 = vmul.f32 %v3547, %v3579
      %v3596 = vmul.f32 %v3548, %v3580
      %v3597 = vmul.f32 %v3549, %v3581
      %v3598 = vmul.f32 %v3550, %v3582
      %v3599 = vmul.f32 %v3551, %v3583
      %v3600 = vmul.f32 %v3552, %v3584
      %v3601 = vmul.f32 %v3553, %v3585
      %v3602 = vmul.f32 %v3554, %v3586
      %v3603 = vmul.f32 %v3555, %v3587
      %v3604 = vmul.f32 %v3556, %v3588
      %v3605 = vmul.f32 %v3414, %v3589
      %v3606 = vmul.f32 %v3416, %v3590
      %v3607 = vmul.f32 %v3418, %v3591
      %v3608 = vmul.f32 %v3420, %v3592
      %v3609 = vmul.f32 %v3422, %v3593
      %v3610 = vmul.f32 %v3424, %v3594
      %v3611 = vmul.f32 %v3426, %v3595
      %v3612 = vmul.f32 %v3428, %v3596
      %v3613 = vmul.f32 %v3430, %v3597
      %v3614 = vmul.f32 %v3432, %v3598
      %v3615 = vmul.f32 %v3434, %v3599
      %v3616 = vmul.f32 %v3436, %v3600
      %v3617 = vmul.f32 %v3438, %v3601
      %v3618 = vmul.f32 %v3440, %v3602
      %v3619 = vmul.f32 %v3442, %v3603
      %v3620 = vmul.f32 %v3444, %v3604
      %v3622 = vsel %vm3348, %v3605, 0
      %3624 = vmatprep.subr.mxu0 0.0
      %3625 = vmatpush1.msra.mxu0 0.0
      %3626 = vmatprep.subr.mxu0 0.0
      %3627 = vmatpush1.msra.mxu0 0.0
      %3628 = vmatprep.subr.mxu0 0.0
      %3629 = vmatpush1.msra.mxu0 0.0
      %3630 = vmatprep.subr.mxu0 0.0
      %3631 = vmatpush1.msra.mxu0 0.0
      %3632 = vmatprep.subr.mxu0 0.0
      %3633 = vmatpush1.msra.mxu0 0.0
      %3634 = vmatprep.subr.mxu0 0.0
      %3635 = vmatpush1.msra.mxu0 0.0
      %3636 = vmatprep.subr.mxu0 0.0
      %3637 = vmatpush1.msra.mxu0 0.0
      %3638 = vmatprep.subr.mxu0 0.0
      %3639 = vmatpush1.msra.mxu0 0.0
      %3640 = vmatprep.subr.mxu0 0.0
      %3641 = vmatpush1.msra.mxu0 0.0
      %3642 = vmatprep.subr.mxu0 0.0
      %3643 = vmatpush1.msra.mxu0 0.0
      %3644 = vmatprep.subr.mxu0 0.0
      %3645 = vmatpush1.msra.mxu0 0.0
      %3646 = vmatprep.subr.mxu0 0.0
      %3647 = vmatpush1.msra.mxu0 0.0
      %3648 = vmatprep.subr.mxu0 0.0
      %3649 = vmatpush1.msra.mxu0 0.0
      %3650 = vmatprep.subr.mxu0 0.0
      %3651 = vmatpush1.msra.mxu0 0.0
      %3652 = vmatprep.subr.mxu0 0.0
      %3653 = vmatpush1.msra.mxu0 0.0
      %3654 = vmatprep.subr.mxu0 0.0
      %3655 = vmatpush1.msra.mxu0 %v1942
      %3656 = vmatprep.subr.mxu0 0.0
      %3657 = vmatpush2.msra.mxu0 0.0
      %3658 = vmatprep.subr.mxu0 0.0
      %3659 = vmatpush2.msra.mxu0 0.0
      %3660 = vmatprep.subr.mxu0 0.0
      %3661 = vmatpush2.msra.mxu0 0.0
      %3662 = vmatprep.subr.mxu0 0.0
      %3663 = vmatpush2.msra.mxu0 0.0
      %3664 = vmatprep.subr.mxu0 0.0
      %3665 = vmatpush2.msra.mxu0 0.0
      %3666 = vmatprep.subr.mxu0 0.0
      %3667 = vmatpush2.msra.mxu0 0.0
      %3668 = vmatprep.subr.mxu0 0.0
      %3669 = vmatpush2.msra.mxu0 0.0
      %3670 = vmatprep.subr.mxu0 0.0
      %3671 = vmatpush2.msra.mxu0 0.0
      %3672 = vmatprep.subr.mxu0 0.0
      %3673 = vmatpush2.msra.mxu0 0.0
      %3674 = vmatprep.subr.mxu0 0.0
      %3675 = vmatpush2.msra.mxu0 0.0
      %3676 = vmatprep.subr.mxu0 0.0
      %3677 = vmatpush2.msra.mxu0 0.0
      %3678 = vmatprep.subr.mxu0 0.0
      %3679 = vmatpush2.msra.mxu0 0.0
      %3680 = vmatprep.subr.mxu0 0.0
      %3681 = vmatpush2.msra.mxu0 0.0
      %3682 = vmatprep.subr.mxu0 0.0
      %3683 = vmatpush2.msra.mxu0 0.0
      %3684 = vmatprep.subr.mxu0 0.0
      %3685 = vmatpush2.msra.mxu0 0.0
      %3686 = vmatprep.subr.mxu0 0.0
      %3687 = vmatpush2.msra.mxu0 0.0
      %3688 = vmatprep.mubr.f32.mxu0 0.0
      %3689 = vmatmul.mubr.f32.gmra.mxu0 %v3622
      %v3690 = vpop.f32.mrf.mxu0
      %v3691 = vadd.f32 0.0, %v3690
      %v3692 = vpop.f32.mrf.mxu0
      %3693 = vdwg.mxu0
      %v3695 = vsel %vm3348, %v3606, 0
      %3697 = vmatprep.subr.mxu0 0.0
      %3698 = vmatpush1.msra.mxu0 0.0
      %3699 = vmatprep.subr.mxu0 0.0
      %3700 = vmatpush1.msra.mxu0 0.0
      %3701 = vmatprep.subr.mxu0 0.0
      %3702 = vmatpush1.msra.mxu0 0.0
      %3703 = vmatprep.subr.mxu0 0.0
      %3704 = vmatpush1.msra.mxu0 0.0
      %3705 = vmatprep.subr.mxu0 0.0
      %3706 = vmatpush1.msra.mxu0 0.0
      %3707 = vmatprep.subr.mxu0 0.0
      %3708 = vmatpush1.msra.mxu0 0.0
      %3709 = vmatprep.subr.mxu0 0.0
      %3710 = vmatpush1.msra.mxu0 0.0
      %3711 = vmatprep.subr.mxu0 0.0
      %3712 = vmatpush1.msra.mxu0 0.0
      %3713 = vmatprep.subr.mxu0 0.0
      %3714 = vmatpush1.msra.mxu0 0.0
      %3715 = vmatprep.subr.mxu0 0.0
      %3716 = vmatpush1.msra.mxu0 0.0
      %3717 = vmatprep.subr.mxu0 0.0
      %3718 = vmatpush1.msra.mxu0 0.0
      %3719 = vmatprep.subr.mxu0 0.0
      %3720 = vmatpush1.msra.mxu0 0.0
      %3721 = vmatprep.subr.mxu0 0.0
      %3722 = vmatpush1.msra.mxu0 0.0
      %3723 = vmatprep.subr.mxu0 0.0
      %3724 = vmatpush1.msra.mxu0 0.0
      %3725 = vmatprep.subr.mxu0 0.0
      %3726 = vmatpush1.msra.mxu0 0.0
      %3727 = vmatprep.subr.mxu0 0.0
      %3728 = vmatpush1.msra.mxu0 %v1947
      %3729 = vmatprep.subr.mxu0 0.0
      %3730 = vmatpush2.msra.mxu0 0.0
      %3731 = vmatprep.subr.mxu0 0.0
      %3732 = vmatpush2.msra.mxu0 0.0
      %3733 = vmatprep.subr.mxu0 0.0
      %3734 = vmatpush2.msra.mxu0 0.0
      %3735 = vmatprep.subr.mxu0 0.0
      %3736 = vmatpush2.msra.mxu0 0.0
      %3737 = vmatprep.subr.mxu0 0.0
      %3738 = vmatpush2.msra.mxu0 0.0
      %3739 = vmatprep.subr.mxu0 0.0
      %3740 = vmatpush2.msra.mxu0 0.0
      %3741 = vmatprep.subr.mxu0 0.0
      %3742 = vmatpush2.msra.mxu0 0.0
      %3743 = vmatprep.subr.mxu0 0.0
      %3744 = vmatpush2.msra.mxu0 0.0
      %3745 = vmatprep.subr.mxu0 0.0
      %3746 = vmatpush2.msra.mxu0 0.0
      %3747 = vmatprep.subr.mxu0 0.0
      %3748 = vmatpush2.msra.mxu0 0.0
      %3749 = vmatprep.subr.mxu0 0.0
      %3750 = vmatpush2.msra.mxu0 0.0
      %3751 = vmatprep.subr.mxu0 0.0
      %3752 = vmatpush2.msra.mxu0 0.0
      %3753 = vmatprep.subr.mxu0 0.0
      %3754 = vmatpush2.msra.mxu0 0.0
      %3755 = vmatprep.subr.mxu0 0.0
      %3756 = vmatpush2.msra.mxu0 0.0
      %3757 = vmatprep.subr.mxu0 0.0
      %3758 = vmatpush2.msra.mxu0 0.0
      %3759 = vmatprep.subr.mxu0 0.0
      %3760 = vmatpush2.msra.mxu0 0.0
      %3761 = vmatprep.mubr.f32.mxu0 0.0
      %3762 = vmatmul.mubr.f32.gmra.mxu0 %v3695
      %v3763 = vpop.f32.mrf.mxu0
      %v3764 = vadd.f32 0.0, %v3763
      %v3765 = vpop.f32.mrf.mxu0
      %3766 = vdwg.mxu0
      %v3768 = vsel %vm3348, %v3607, 0
      %3770 = vmatprep.subr.mxu0 0.0
      %3771 = vmatpush1.msra.mxu0 0.0
      %3772 = vmatprep.subr.mxu0 0.0
      %3773 = vmatpush1.msra.mxu0 0.0
      %3774 = vmatprep.subr.mxu0 0.0
      %3775 = vmatpush1.msra.mxu0 0.0
      %3776 = vmatprep.subr.mxu0 0.0
      %3777 = vmatpush1.msra.mxu0 0.0
      %3778 = vmatprep.subr.mxu0 0.0
      %3779 = vmatpush1.msra.mxu0 0.0
      %3780 = vmatprep.subr.mxu0 0.0
      %3781 = vmatpush1.msra.mxu0 0.0
      %3782 = vmatprep.subr.mxu0 0.0
      %3783 = vmatpush1.msra.mxu0 0.0
      %3784 = vmatprep.subr.mxu0 0.0
      %3785 = vmatpush1.msra.mxu0 0.0
      %3786 = vmatprep.subr.mxu0 0.0
      %3787 = vmatpush1.msra.mxu0 0.0
      %3788 = vmatprep.subr.mxu0 0.0
      %3789 = vmatpush1.msra.mxu0 0.0
      %3790 = vmatprep.subr.mxu0 0.0
      %3791 = vmatpush1.msra.mxu0 0.0
      %3792 = vmatprep.subr.mxu0 0.0
      %3793 = vmatpush1.msra.mxu0 0.0
      %3794 = vmatprep.subr.mxu0 0.0
      %3795 = vmatpush1.msra.mxu0 0.0
      %3796 = vmatprep.subr.mxu0 0.0
      %3797 = vmatpush1.msra.mxu0 0.0
      %3798 = vmatprep.subr.mxu0 0.0
      %3799 = vmatpush1.msra.mxu0 0.0
      %3800 = vmatprep.subr.mxu0 0.0
      %3801 = vmatpush1.msra.mxu0 %v1952
      %3802 = vmatprep.subr.mxu0 0.0
      %3803 = vmatpush2.msra.mxu0 0.0
      %3804 = vmatprep.subr.mxu0 0.0
      %3805 = vmatpush2.msra.mxu0 0.0
      %3806 = vmatprep.subr.mxu0 0.0
      %3807 = vmatpush2.msra.mxu0 0.0
      %3808 = vmatprep.subr.mxu0 0.0
      %3809 = vmatpush2.msra.mxu0 0.0
      %3810 = vmatprep.subr.mxu0 0.0
      %3811 = vmatpush2.msra.mxu0 0.0
      %3812 = vmatprep.subr.mxu0 0.0
      %3813 = vmatpush2.msra.mxu0 0.0
      %3814 = vmatprep.subr.mxu0 0.0
      %3815 = vmatpush2.msra.mxu0 0.0
      %3816 = vmatprep.subr.mxu0 0.0
      %3817 = vmatpush2.msra.mxu0 0.0
      %3818 = vmatprep.subr.mxu0 0.0
      %3819 = vmatpush2.msra.mxu0 0.0
      %3820 = vmatprep.subr.mxu0 0.0
      %3821 = vmatpush2.msra.mxu0 0.0
      %3822 = vmatprep.subr.mxu0 0.0
      %3823 = vmatpush2.msra.mxu0 0.0
      %3824 = vmatprep.subr.mxu0 0.0
      %3825 = vmatpush2.msra.mxu0 0.0
      %3826 = vmatprep.subr.mxu0 0.0
      %3827 = vmatpush2.msra.mxu0 0.0
      %3828 = vmatprep.subr.mxu0 0.0
      %3829 = vmatpush2.msra.mxu0 0.0
      %3830 = vmatprep.subr.mxu0 0.0
      %3831 = vmatpush2.msra.mxu0 0.0
      %3832 = vmatprep.subr.mxu0 0.0
      %3833 = vmatpush2.msra.mxu0 0.0
      %3834 = vmatprep.mubr.f32.mxu0 0.0
      %3835 = vmatmul.mubr.f32.gmra.mxu0 %v3768
      %v3836 = vpop.f32.mrf.mxu0
      %v3837 = vadd.f32 0.0, %v3836
      %v3838 = vpop.f32.mrf.mxu0
      %3839 = vdwg.mxu0
      %v3841 = vsel %vm3348, %v3608, 0
      %3843 = vmatprep.subr.mxu0 0.0
      %3844 = vmatpush1.msra.mxu0 0.0
      %3845 = vmatprep.subr.mxu0 0.0
      %3846 = vmatpush1.msra.mxu0 0.0
      %3847 = vmatprep.subr.mxu0 0.0
      %3848 = vmatpush1.msra.mxu0 0.0
      %3849 = vmatprep.subr.mxu0 0.0
      %3850 = vmatpush1.msra.mxu0 0.0
      %3851 = vmatprep.subr.mxu0 0.0
      %3852 = vmatpush1.msra.mxu0 0.0
      %3853 = vmatprep.subr.mxu0 0.0
      %3854 = vmatpush1.msra.mxu0 0.0
      %3855 = vmatprep.subr.mxu0 0.0
      %3856 = vmatpush1.msra.mxu0 0.0
      %3857 = vmatprep.subr.mxu0 0.0
      %3858 = vmatpush1.msra.mxu0 0.0
      %3859 = vmatprep.subr.mxu0 0.0
      %3860 = vmatpush1.msra.mxu0 0.0
      %3861 = vmatprep.subr.mxu0 0.0
      %3862 = vmatpush1.msra.mxu0 0.0
      %3863 = vmatprep.subr.mxu0 0.0
      %3864 = vmatpush1.msra.mxu0 0.0
      %3865 = vmatprep.subr.mxu0 0.0
      %3866 = vmatpush1.msra.mxu0 0.0
      %3867 = vmatprep.subr.mxu0 0.0
      %3868 = vmatpush1.msra.mxu0 0.0
      %3869 = vmatprep.subr.mxu0 0.0
      %3870 = vmatpush1.msra.mxu0 0.0
      %3871 = vmatprep.subr.mxu0 0.0
      %3872 = vmatpush1.msra.mxu0 0.0
      %3873 = vmatprep.subr.mxu0 0.0
      %3874 = vmatpush1.msra.mxu0 %v1957
      %3875 = vmatprep.subr.mxu0 0.0
      %3876 = vmatpush2.msra.mxu0 0.0
      %3877 = vmatprep.subr.mxu0 0.0
      %3878 = vmatpush2.msra.mxu0 0.0
      %3879 = vmatprep.subr.mxu0 0.0
      %3880 = vmatpush2.msra.mxu0 0.0
      %3881 = vmatprep.subr.mxu0 0.0
      %3882 = vmatpush2.msra.mxu0 0.0
      %3883 = vmatprep.subr.mxu0 0.0
      %3884 = vmatpush2.msra.mxu0 0.0
      %3885 = vmatprep.subr.mxu0 0.0
      %3886 = vmatpush2.msra.mxu0 0.0
      %3887 = vmatprep.subr.mxu0 0.0
      %3888 = vmatpush2.msra.mxu0 0.0
      %3889 = vmatprep.subr.mxu0 0.0
      %3890 = vmatpush2.msra.mxu0 0.0
      %3891 = vmatprep.subr.mxu0 0.0
      %3892 = vmatpush2.msra.mxu0 0.0
      %3893 = vmatprep.subr.mxu0 0.0
      %3894 = vmatpush2.msra.mxu0 0.0
      %3895 = vmatprep.subr.mxu0 0.0
      %3896 = vmatpush2.msra.mxu0 0.0
      %3897 = vmatprep.subr.mxu0 0.0
      %3898 = vmatpush2.msra.mxu0 0.0
      %3899 = vmatprep.subr.mxu0 0.0
      %3900 = vmatpush2.msra.mxu0 0.0
      %3901 = vmatprep.subr.mxu0 0.0
      %3902 = vmatpush2.msra.mxu0 0.0
      %3903 = vmatprep.subr.mxu0 0.0
      %3904 = vmatpush2.msra.mxu0 0.0
      %3905 = vmatprep.subr.mxu0 0.0
      %3906 = vmatpush2.msra.mxu0 0.0
      %3907 = vmatprep.mubr.f32.mxu0 0.0
      %3908 = vmatmul.mubr.f32.gmra.mxu0 %v3841
      %v3909 = vpop.f32.mrf.mxu0
      %v3910 = vadd.f32 0.0, %v3909
      %v3911 = vpop.f32.mrf.mxu0
      %3912 = vdwg.mxu0
      %v3914 = vsel %vm3348, %v3609, 0
      %3916 = vmatprep.subr.mxu0 0.0
      %3917 = vmatpush1.msra.mxu0 0.0
      %3918 = vmatprep.subr.mxu0 0.0
      %3919 = vmatpush1.msra.mxu0 0.0
      %3920 = vmatprep.subr.mxu0 0.0
      %3921 = vmatpush1.msra.mxu0 0.0
      %3922 = vmatprep.subr.mxu0 0.0
      %3923 = vmatpush1.msra.mxu0 0.0
      %3924 = vmatprep.subr.mxu0 0.0
      %3925 = vmatpush1.msra.mxu0 0.0
      %3926 = vmatprep.subr.mxu0 0.0
      %3927 = vmatpush1.msra.mxu0 0.0
      %3928 = vmatprep.subr.mxu0 0.0
      %3929 = vmatpush1.msra.mxu0 0.0
      %3930 = vmatprep.subr.mxu0 0.0
      %3931 = vmatpush1.msra.mxu0 0.0
      %3932 = vmatprep.subr.mxu0 0.0
      %3933 = vmatpush1.msra.mxu0 0.0
      %3934 = vmatprep.subr.mxu0 0.0
      %3935 = vmatpush1.msra.mxu0 0.0
      %3936 = vmatprep.subr.mxu0 0.0
      %3937 = vmatpush1.msra.mxu0 0.0
      %3938 = vmatprep.subr.mxu0 0.0
      %3939 = vmatpush1.msra.mxu0 0.0
      %3940 = vmatprep.subr.mxu0 0.0
      %3941 = vmatpush1.msra.mxu0 0.0
      %3942 = vmatprep.subr.mxu0 0.0
      %3943 = vmatpush1.msra.mxu0 0.0
      %3944 = vmatprep.subr.mxu0 0.0
      %3945 = vmatpush1.msra.mxu0 0.0
      %3946 = vmatprep.subr.mxu0 0.0
      %3947 = vmatpush1.msra.mxu0 %v1962
      %3948 = vmatprep.subr.mxu0 0.0
      %3949 = vmatpush2.msra.mxu0 0.0
      %3950 = vmatprep.subr.mxu0 0.0
      %3951 = vmatpush2.msra.mxu0 0.0
      %3952 = vmatprep.subr.mxu0 0.0
      %3953 = vmatpush2.msra.mxu0 0.0
      %3954 = vmatprep.subr.mxu0 0.0
      %3955 = vmatpush2.msra.mxu0 0.0
      %3956 = vmatprep.subr.mxu0 0.0
      %3957 = vmatpush2.msra.mxu0 0.0
      %3958 = vmatprep.subr.mxu0 0.0
      %3959 = vmatpush2.msra.mxu0 0.0
      %3960 = vmatprep.subr.mxu0 0.0
      %3961 = vmatpush2.msra.mxu0 0.0
      %3962 = vmatprep.subr.mxu0 0.0
      %3963 = vmatpush2.msra.mxu0 0.0
      %3964 = vmatprep.subr.mxu0 0.0
      %3965 = vmatpush2.msra.mxu0 0.0
      %3966 = vmatprep.subr.mxu0 0.0
      %3967 = vmatpush2.msra.mxu0 0.0
      %3968 = vmatprep.subr.mxu0 0.0
      %3969 = vmatpush2.msra.mxu0 0.0
      %3970 = vmatprep.subr.mxu0 0.0
      %3971 = vmatpush2.msra.mxu0 0.0
      %3972 = vmatprep.subr.mxu0 0.0
      %3973 = vmatpush2.msra.mxu0 0.0
      %3974 = vmatprep.subr.mxu0 0.0
      %3975 = vmatpush2.msra.mxu0 0.0
      %3976 = vmatprep.subr.mxu0 0.0
      %3977 = vmatpush2.msra.mxu0 0.0
      %3978 = vmatprep.subr.mxu0 0.0
      %3979 = vmatpush2.msra.mxu0 0.0
      %3980 = vmatprep.mubr.f32.mxu0 0.0
      %3981 = vmatmul.mubr.f32.gmra.mxu0 %v3914
      %v3982 = vpop.f32.mrf.mxu0
      %v3983 = vadd.f32 0.0, %v3982
      %v3984 = vpop.f32.mrf.mxu0
      %3985 = vdwg.mxu0
      %v3987 = vsel %vm3348, %v3610, 0
      %3989 = vmatprep.subr.mxu0 0.0
      %3990 = vmatpush1.msra.mxu0 0.0
      %3991 = vmatprep.subr.mxu0 0.0
      %3992 = vmatpush1.msra.mxu0 0.0
      %3993 = vmatprep.subr.mxu0 0.0
      %3994 = vmatpush1.msra.mxu0 0.0
      %3995 = vmatprep.subr.mxu0 0.0
      %3996 = vmatpush1.msra.mxu0 0.0
      %3997 = vmatprep.subr.mxu0 0.0
      %3998 = vmatpush1.msra.mxu0 0.0
      %3999 = vmatprep.subr.mxu0 0.0
      %4000 = vmatpush1.msra.mxu0 0.0
      %4001 = vmatprep.subr.mxu0 0.0
      %4002 = vmatpush1.msra.mxu0 0.0
      %4003 = vmatprep.subr.mxu0 0.0
      %4004 = vmatpush1.msra.mxu0 0.0
      %4005 = vmatprep.subr.mxu0 0.0
      %4006 = vmatpush1.msra.mxu0 0.0
      %4007 = vmatprep.subr.mxu0 0.0
      %4008 = vmatpush1.msra.mxu0 0.0
      %4009 = vmatprep.subr.mxu0 0.0
      %4010 = vmatpush1.msra.mxu0 0.0
      %4011 = vmatprep.subr.mxu0 0.0
      %4012 = vmatpush1.msra.mxu0 0.0
      %4013 = vmatprep.subr.mxu0 0.0
      %4014 = vmatpush1.msra.mxu0 0.0
      %4015 = vmatprep.subr.mxu0 0.0
      %4016 = vmatpush1.msra.mxu0 0.0
      %4017 = vmatprep.subr.mxu0 0.0
      %4018 = vmatpush1.msra.mxu0 0.0
      %4019 = vmatprep.subr.mxu0 0.0
      %4020 = vmatpush1.msra.mxu0 %v1967
      %4021 = vmatprep.subr.mxu0 0.0
      %4022 = vmatpush2.msra.mxu0 0.0
      %4023 = vmatprep.subr.mxu0 0.0
      %4024 = vmatpush2.msra.mxu0 0.0
      %4025 = vmatprep.subr.mxu0 0.0
      %4026 = vmatpush2.msra.mxu0 0.0
      %4027 = vmatprep.subr.mxu0 0.0
      %4028 = vmatpush2.msra.mxu0 0.0
      %4029 = vmatprep.subr.mxu0 0.0
      %4030 = vmatpush2.msra.mxu0 0.0
      %4031 = vmatprep.subr.mxu0 0.0
      %4032 = vmatpush2.msra.mxu0 0.0
      %4033 = vmatprep.subr.mxu0 0.0
      %4034 = vmatpush2.msra.mxu0 0.0
      %4035 = vmatprep.subr.mxu0 0.0
      %4036 = vmatpush2.msra.mxu0 0.0
      %4037 = vmatprep.subr.mxu0 0.0
      %4038 = vmatpush2.msra.mxu0 0.0
      %4039 = vmatprep.subr.mxu0 0.0
      %4040 = vmatpush2.msra.mxu0 0.0
      %4041 = vmatprep.subr.mxu0 0.0
      %4042 = vmatpush2.msra.mxu0 0.0
      %4043 = vmatprep.subr.mxu0 0.0
      %4044 = vmatpush2.msra.mxu0 0.0
      %4045 = vmatprep.subr.mxu0 0.0
      %4046 = vmatpush2.msra.mxu0 0.0
      %4047 = vmatprep.subr.mxu0 0.0
      %4048 = vmatpush2.msra.mxu0 0.0
      %4049 = vmatprep.subr.mxu0 0.0
      %4050 = vmatpush2.msra.mxu0 0.0
      %4051 = vmatprep.subr.mxu0 0.0
      %4052 = vmatpush2.msra.mxu0 0.0
      %4053 = vmatprep.mubr.f32.mxu0 0.0
      %4054 = vmatmul.mubr.f32.gmra.mxu0 %v3987
      %v4055 = vpop.f32.mrf.mxu0
      %v4056 = vadd.f32 0.0, %v4055
      %v4057 = vpop.f32.mrf.mxu0
      %4058 = vdwg.mxu0
      %v4060 = vsel %vm3348, %v3611, 0
      %4062 = vmatprep.subr.mxu0 0.0
      %4063 = vmatpush1.msra.mxu0 0.0
      %4064 = vmatprep.subr.mxu0 0.0
      %4065 = vmatpush1.msra.mxu0 0.0
      %4066 = vmatprep.subr.mxu0 0.0
      %4067 = vmatpush1.msra.mxu0 0.0
      %4068 = vmatprep.subr.mxu0 0.0
      %4069 = vmatpush1.msra.mxu0 0.0
      %4070 = vmatprep.subr.mxu0 0.0
      %4071 = vmatpush1.msra.mxu0 0.0
      %4072 = vmatprep.subr.mxu0 0.0
      %4073 = vmatpush1.msra.mxu0 0.0
      %4074 = vmatprep.subr.mxu0 0.0
      %4075 = vmatpush1.msra.mxu0 0.0
      %4076 = vmatprep.subr.mxu0 0.0
      %4077 = vmatpush1.msra.mxu0 0.0
      %4078 = vmatprep.subr.mxu0 0.0
      %4079 = vmatpush1.msra.mxu0 0.0
      %4080 = vmatprep.subr.mxu0 0.0
      %4081 = vmatpush1.msra.mxu0 0.0
      %4082 = vmatprep.subr.mxu0 0.0
      %4083 = vmatpush1.msra.mxu0 0.0
      %4084 = vmatprep.subr.mxu0 0.0
      %4085 = vmatpush1.msra.mxu0 0.0
      %4086 = vmatprep.subr.mxu0 0.0
      %4087 = vmatpush1.msra.mxu0 0.0
      %4088 = vmatprep.subr.mxu0 0.0
      %4089 = vmatpush1.msra.mxu0 0.0
      %4090 = vmatprep.subr.mxu0 0.0
      %4091 = vmatpush1.msra.mxu0 0.0
      %4092 = vmatprep.subr.mxu0 0.0
      %4093 = vmatpush1.msra.mxu0 %v1972
      %4094 = vmatprep.subr.mxu0 0.0
      %4095 = vmatpush2.msra.mxu0 0.0
      %4096 = vmatprep.subr.mxu0 0.0
      %4097 = vmatpush2.msra.mxu0 0.0
      %4098 = vmatprep.subr.mxu0 0.0
      %4099 = vmatpush2.msra.mxu0 0.0
      %4100 = vmatprep.subr.mxu0 0.0
      %4101 = vmatpush2.msra.mxu0 0.0
      %4102 = vmatprep.subr.mxu0 0.0
      %4103 = vmatpush2.msra.mxu0 0.0
      %4104 = vmatprep.subr.mxu0 0.0
      %4105 = vmatpush2.msra.mxu0 0.0
      %4106 = vmatprep.subr.mxu0 0.0
      %4107 = vmatpush2.msra.mxu0 0.0
      %4108 = vmatprep.subr.mxu0 0.0
      %4109 = vmatpush2.msra.mxu0 0.0
      %4110 = vmatprep.subr.mxu0 0.0
      %4111 = vmatpush2.msra.mxu0 0.0
      %4112 = vmatprep.subr.mxu0 0.0
      %4113 = vmatpush2.msra.mxu0 0.0
      %4114 = vmatprep.subr.mxu0 0.0
      %4115 = vmatpush2.msra.mxu0 0.0
      %4116 = vmatprep.subr.mxu0 0.0
      %4117 = vmatpush2.msra.mxu0 0.0
      %4118 = vmatprep.subr.mxu0 0.0
      %4119 = vmatpush2.msra.mxu0 0.0
      %4120 = vmatprep.subr.mxu0 0.0
      %4121 = vmatpush2.msra.mxu0 0.0
      %4122 = vmatprep.subr.mxu0 0.0
      %4123 = vmatpush2.msra.mxu0 0.0
      %4124 = vmatprep.subr.mxu0 0.0
      %4125 = vmatpush2.msra.mxu0 0.0
      %4126 = vmatprep.mubr.f32.mxu0 0.0
      %4127 = vmatmul.mubr.f32.gmra.mxu0 %v4060
      %v4128 = vpop.f32.mrf.mxu0
      %v4129 = vadd.f32 0.0, %v4128
      %v4130 = vpop.f32.mrf.mxu0
      %4131 = vdwg.mxu0
      %v4133 = vsel %vm3348, %v3612, 0
      %4135 = vmatprep.subr.mxu0 0.0
      %4136 = vmatpush1.msra.mxu0 0.0
      %4137 = vmatprep.subr.mxu0 0.0
      %4138 = vmatpush1.msra.mxu0 0.0
      %4139 = vmatprep.subr.mxu0 0.0
      %4140 = vmatpush1.msra.mxu0 0.0
      %4141 = vmatprep.subr.mxu0 0.0
      %4142 = vmatpush1.msra.mxu0 0.0
      %4143 = vmatprep.subr.mxu0 0.0
      %4144 = vmatpush1.msra.mxu0 0.0
      %4145 = vmatprep.subr.mxu0 0.0
      %4146 = vmatpush1.msra.mxu0 0.0
      %4147 = vmatprep.subr.mxu0 0.0
      %4148 = vmatpush1.msra.mxu0 0.0
      %4149 = vmatprep.subr.mxu0 0.0
      %4150 = vmatpush1.msra.mxu0 0.0
      %4151 = vmatprep.subr.mxu0 0.0
      %4152 = vmatpush1.msra.mxu0 0.0
      %4153 = vmatprep.subr.mxu0 0.0
      %4154 = vmatpush1.msra.mxu0 0.0
      %4155 = vmatprep.subr.mxu0 0.0
      %4156 = vmatpush1.msra.mxu0 0.0
      %4157 = vmatprep.subr.mxu0 0.0
      %4158 = vmatpush1.msra.mxu0 0.0
      %4159 = vmatprep.subr.mxu0 0.0
      %4160 = vmatpush1.msra.mxu0 0.0
      %4161 = vmatprep.subr.mxu0 0.0
      %4162 = vmatpush1.msra.mxu0 0.0
      %4163 = vmatprep.subr.mxu0 0.0
      %4164 = vmatpush1.msra.mxu0 0.0
      %4165 = vmatprep.subr.mxu0 0.0
      %4166 = vmatpush1.msra.mxu0 %v1977
      %4167 = vmatprep.subr.mxu0 0.0
      %4168 = vmatpush2.msra.mxu0 0.0
      %4169 = vmatprep.subr.mxu0 0.0
      %4170 = vmatpush2.msra.mxu0 0.0
      %4171 = vmatprep.subr.mxu0 0.0
      %4172 = vmatpush2.msra.mxu0 0.0
      %4173 = vmatprep.subr.mxu0 0.0
      %4174 = vmatpush2.msra.mxu0 0.0
      %4175 = vmatprep.subr.mxu0 0.0
      %4176 = vmatpush2.msra.mxu0 0.0
      %4177 = vmatprep.subr.mxu0 0.0
      %4178 = vmatpush2.msra.mxu0 0.0
      %4179 = vmatprep.subr.mxu0 0.0
      %4180 = vmatpush2.msra.mxu0 0.0
      %4181 = vmatprep.subr.mxu0 0.0
      %4182 = vmatpush2.msra.mxu0 0.0
      %4183 = vmatprep.subr.mxu0 0.0
      %4184 = vmatpush2.msra.mxu0 0.0
      %4185 = vmatprep.subr.mxu0 0.0
      %4186 = vmatpush2.msra.mxu0 0.0
      %4187 = vmatprep.subr.mxu0 0.0
      %4188 = vmatpush2.msra.mxu0 0.0
      %4189 = vmatprep.subr.mxu0 0.0
      %4190 = vmatpush2.msra.mxu0 0.0
      %4191 = vmatprep.subr.mxu0 0.0
      %4192 = vmatpush2.msra.mxu0 0.0
      %4193 = vmatprep.subr.mxu0 0.0
      %4194 = vmatpush2.msra.mxu0 0.0
      %4195 = vmatprep.subr.mxu0 0.0
      %4196 = vmatpush2.msra.mxu0 0.0
      %4197 = vmatprep.subr.mxu0 0.0
      %4198 = vmatpush2.msra.mxu0 0.0
      %4199 = vmatprep.mubr.f32.mxu0 0.0
      %4200 = vmatmul.mubr.f32.gmra.mxu0 %v4133
      %v4201 = vpop.f32.mrf.mxu0
      %v4202 = vadd.f32 0.0, %v4201
      %v4203 = vpop.f32.mrf.mxu0
      %4204 = vdwg.mxu0
      %v4206 = vsel %vm3348, %v3613, 0
      %4208 = vmatprep.subr.mxu0 0.0
      %4209 = vmatpush1.msra.mxu0 0.0
      %4210 = vmatprep.subr.mxu0 0.0
      %4211 = vmatpush1.msra.mxu0 0.0
      %4212 = vmatprep.subr.mxu0 0.0
      %4213 = vmatpush1.msra.mxu0 0.0
      %4214 = vmatprep.subr.mxu0 0.0
      %4215 = vmatpush1.msra.mxu0 0.0
      %4216 = vmatprep.subr.mxu0 0.0
      %4217 = vmatpush1.msra.mxu0 0.0
      %4218 = vmatprep.subr.mxu0 0.0
      %4219 = vmatpush1.msra.mxu0 0.0
      %4220 = vmatprep.subr.mxu0 0.0
      %4221 = vmatpush1.msra.mxu0 0.0
      %4222 = vmatprep.subr.mxu0 0.0
      %4223 = vmatpush1.msra.mxu0 0.0
      %4224 = vmatprep.subr.mxu0 0.0
      %4225 = vmatpush1.msra.mxu0 0.0
      %4226 = vmatprep.subr.mxu0 0.0
      %4227 = vmatpush1.msra.mxu0 0.0
      %4228 = vmatprep.subr.mxu0 0.0
      %4229 = vmatpush1.msra.mxu0 0.0
      %4230 = vmatprep.subr.mxu0 0.0
      %4231 = vmatpush1.msra.mxu0 0.0
      %4232 = vmatprep.subr.mxu0 0.0
      %4233 = vmatpush1.msra.mxu0 0.0
      %4234 = vmatprep.subr.mxu0 0.0
      %4235 = vmatpush1.msra.mxu0 0.0
      %4236 = vmatprep.subr.mxu0 0.0
      %4237 = vmatpush1.msra.mxu0 0.0
      %4238 = vmatprep.subr.mxu0 0.0
      %4239 = vmatpush1.msra.mxu0 %v1982
      %4240 = vmatprep.subr.mxu0 0.0
      %4241 = vmatpush2.msra.mxu0 0.0
      %4242 = vmatprep.subr.mxu0 0.0
      %4243 = vmatpush2.msra.mxu0 0.0
      %4244 = vmatprep.subr.mxu0 0.0
      %4245 = vmatpush2.msra.mxu0 0.0
      %4246 = vmatprep.subr.mxu0 0.0
      %4247 = vmatpush2.msra.mxu0 0.0
      %4248 = vmatprep.subr.mxu0 0.0
      %4249 = vmatpush2.msra.mxu0 0.0
      %4250 = vmatprep.subr.mxu0 0.0
      %4251 = vmatpush2.msra.mxu0 0.0
      %4252 = vmatprep.subr.mxu0 0.0
      %4253 = vmatpush2.msra.mxu0 0.0
      %4254 = vmatprep.subr.mxu0 0.0
      %4255 = vmatpush2.msra.mxu0 0.0
      %4256 = vmatprep.subr.mxu0 0.0
      %4257 = vmatpush2.msra.mxu0 0.0
      %4258 = vmatprep.subr.mxu0 0.0
      %4259 = vmatpush2.msra.mxu0 0.0
      %4260 = vmatprep.subr.mxu0 0.0
      %4261 = vmatpush2.msra.mxu0 0.0
      %4262 = vmatprep.subr.mxu0 0.0
      %4263 = vmatpush2.msra.mxu0 0.0
      %4264 = vmatprep.subr.mxu0 0.0
      %4265 = vmatpush2.msra.mxu0 0.0
      %4266 = vmatprep.subr.mxu0 0.0
      %4267 = vmatpush2.msra.mxu0 0.0
      %4268 = vmatprep.subr.mxu0 0.0
      %4269 = vmatpush2.msra.mxu0 0.0
      %4270 = vmatprep.subr.mxu0 0.0
      %4271 = vmatpush2.msra.mxu0 0.0
      %4272 = vmatprep.mubr.f32.mxu0 0.0
      %4273 = vmatmul.mubr.f32.gmra.mxu0 %v4206
      %v4274 = vpop.f32.mrf.mxu0
      %v4275 = vadd.f32 0.0, %v4274
      %v4276 = vpop.f32.mrf.mxu0
      %4277 = vdwg.mxu0
      %v4279 = vsel %vm3348, %v3614, 0
      %4281 = vmatprep.subr.mxu0 0.0
      %4282 = vmatpush1.msra.mxu0 0.0
      %4283 = vmatprep.subr.mxu0 0.0
      %4284 = vmatpush1.msra.mxu0 0.0
      %4285 = vmatprep.subr.mxu0 0.0
      %4286 = vmatpush1.msra.mxu0 0.0
      %4287 = vmatprep.subr.mxu0 0.0
      %4288 = vmatpush1.msra.mxu0 0.0
      %4289 = vmatprep.subr.mxu0 0.0
      %4290 = vmatpush1.msra.mxu0 0.0
      %4291 = vmatprep.subr.mxu0 0.0
      %4292 = vmatpush1.msra.mxu0 0.0
      %4293 = vmatprep.subr.mxu0 0.0
      %4294 = vmatpush1.msra.mxu0 0.0
      %4295 = vmatprep.subr.mxu0 0.0
      %4296 = vmatpush1.msra.mxu0 0.0
      %4297 = vmatprep.subr.mxu0 0.0
      %4298 = vmatpush1.msra.mxu0 0.0
      %4299 = vmatprep.subr.mxu0 0.0
      %4300 = vmatpush1.msra.mxu0 0.0
      %4301 = vmatprep.subr.mxu0 0.0
      %4302 = vmatpush1.msra.mxu0 0.0
      %4303 = vmatprep.subr.mxu0 0.0
      %4304 = vmatpush1.msra.mxu0 0.0
      %4305 = vmatprep.subr.mxu0 0.0
      %4306 = vmatpush1.msra.mxu0 0.0
      %4307 = vmatprep.subr.mxu0 0.0
      %4308 = vmatpush1.msra.mxu0 0.0
      %4309 = vmatprep.subr.mxu0 0.0
      %4310 = vmatpush1.msra.mxu0 0.0
      %4311 = vmatprep.subr.mxu0 0.0
      %4312 = vmatpush1.msra.mxu0 %v1987
      %4313 = vmatprep.subr.mxu0 0.0
      %4314 = vmatpush2.msra.mxu0 0.0
      %4315 = vmatprep.subr.mxu0 0.0
      %4316 = vmatpush2.msra.mxu0 0.0
      %4317 = vmatprep.subr.mxu0 0.0
      %4318 = vmatpush2.msra.mxu0 0.0
      %4319 = vmatprep.subr.mxu0 0.0
      %4320 = vmatpush2.msra.mxu0 0.0
      %4321 = vmatprep.subr.mxu0 0.0
      %4322 = vmatpush2.msra.mxu0 0.0
      %4323 = vmatprep.subr.mxu0 0.0
      %4324 = vmatpush2.msra.mxu0 0.0
      %4325 = vmatprep.subr.mxu0 0.0
      %4326 = vmatpush2.msra.mxu0 0.0
      %4327 = vmatprep.subr.mxu0 0.0
      %4328 = vmatpush2.msra.mxu0 0.0
      %4329 = vmatprep.subr.mxu0 0.0
      %4330 = vmatpush2.msra.mxu0 0.0
      %4331 = vmatprep.subr.mxu0 0.0
      %4332 = vmatpush2.msra.mxu0 0.0
      %4333 = vmatprep.subr.mxu0 0.0
      %4334 = vmatpush2.msra.mxu0 0.0
      %4335 = vmatprep.subr.mxu0 0.0
      %4336 = vmatpush2.msra.mxu0 0.0
      %4337 = vmatprep.subr.mxu0 0.0
      %4338 = vmatpush2.msra.mxu0 0.0
      %4339 = vmatprep.subr.mxu0 0.0
      %4340 = vmatpush2.msra.mxu0 0.0
      %4341 = vmatprep.subr.mxu0 0.0
      %4342 = vmatpush2.msra.mxu0 0.0
      %4343 = vmatprep.subr.mxu0 0.0
      %4344 = vmatpush2.msra.mxu0 0.0
      %4345 = vmatprep.mubr.f32.mxu0 0.0
      %4346 = vmatmul.mubr.f32.gmra.mxu0 %v4279
      %v4347 = vpop.f32.mrf.mxu0
      %v4348 = vadd.f32 0.0, %v4347
      %v4349 = vpop.f32.mrf.mxu0
      %4350 = vdwg.mxu0
      %v4352 = vsel %vm3348, %v3615, 0
      %4354 = vmatprep.subr.mxu0 0.0
      %4355 = vmatpush1.msra.mxu0 0.0
      %4356 = vmatprep.subr.mxu0 0.0
      %4357 = vmatpush1.msra.mxu0 0.0
      %4358 = vmatprep.subr.mxu0 0.0
      %4359 = vmatpush1.msra.mxu0 0.0
      %4360 = vmatprep.subr.mxu0 0.0
      %4361 = vmatpush1.msra.mxu0 0.0
      %4362 = vmatprep.subr.mxu0 0.0
      %4363 = vmatpush1.msra.mxu0 0.0
      %4364 = vmatprep.subr.mxu0 0.0
      %4365 = vmatpush1.msra.mxu0 0.0
      %4366 = vmatprep.subr.mxu0 0.0
      %4367 = vmatpush1.msra.mxu0 0.0
      %4368 = vmatprep.subr.mxu0 0.0
      %4369 = vmatpush1.msra.mxu0 0.0
      %4370 = vmatprep.subr.mxu0 0.0
      %4371 = vmatpush1.msra.mxu0 0.0
      %4372 = vmatprep.subr.mxu0 0.0
      %4373 = vmatpush1.msra.mxu0 0.0
      %4374 = vmatprep.subr.mxu0 0.0
      %4375 = vmatpush1.msra.mxu0 0.0
      %4376 = vmatprep.subr.mxu0 0.0
      %4377 = vmatpush1.msra.mxu0 0.0
      %4378 = vmatprep.subr.mxu0 0.0
      %4379 = vmatpush1.msra.mxu0 0.0
      %4380 = vmatprep.subr.mxu0 0.0
      %4381 = vmatpush1.msra.mxu0 0.0
      %4382 = vmatprep.subr.mxu0 0.0
      %4383 = vmatpush1.msra.mxu0 0.0
      %4384 = vmatprep.subr.mxu0 0.0
      %4385 = vmatpush1.msra.mxu0 %v1992
      %4386 = vmatprep.subr.mxu0 0.0
      %4387 = vmatpush2.msra.mxu0 0.0
      %4388 = vmatprep.subr.mxu0 0.0
      %4389 = vmatpush2.msra.mxu0 0.0
      %4390 = vmatprep.subr.mxu0 0.0
      %4391 = vmatpush2.msra.mxu0 0.0
      %4392 = vmatprep.subr.mxu0 0.0
      %4393 = vmatpush2.msra.mxu0 0.0
      %4394 = vmatprep.subr.mxu0 0.0
      %4395 = vmatpush2.msra.mxu0 0.0
      %4396 = vmatprep.subr.mxu0 0.0
      %4397 = vmatpush2.msra.mxu0 0.0
      %4398 = vmatprep.subr.mxu0 0.0
      %4399 = vmatpush2.msra.mxu0 0.0
      %4400 = vmatprep.subr.mxu0 0.0
      %4401 = vmatpush2.msra.mxu0 0.0
      %4402 = vmatprep.subr.mxu0 0.0
      %4403 = vmatpush2.msra.mxu0 0.0
      %4404 = vmatprep.subr.mxu0 0.0
      %4405 = vmatpush2.msra.mxu0 0.0
      %4406 = vmatprep.subr.mxu0 0.0
      %4407 = vmatpush2.msra.mxu0 0.0
      %4408 = vmatprep.subr.mxu0 0.0
      %4409 = vmatpush2.msra.mxu0 0.0
      %4410 = vmatprep.subr.mxu0 0.0
      %4411 = vmatpush2.msra.mxu0 0.0
      %4412 = vmatprep.subr.mxu0 0.0
      %4413 = vmatpush2.msra.mxu0 0.0
      %4414 = vmatprep.subr.mxu0 0.0
      %4415 = vmatpush2.msra.mxu0 0.0
      %4416 = vmatprep.subr.mxu0 0.0
      %4417 = vmatpush2.msra.mxu0 0.0
      %4418 = vmatprep.mubr.f32.mxu0 0.0
      %4419 = vmatmul.mubr.f32.gmra.mxu0 %v4352
      %v4420 = vpop.f32.mrf.mxu0
      %v4421 = vadd.f32 0.0, %v4420
      %v4422 = vpop.f32.mrf.mxu0
      %4423 = vdwg.mxu0
      %v4425 = vsel %vm3348, %v3616, 0
      %4427 = vmatprep.subr.mxu0 0.0
      %4428 = vmatpush1.msra.mxu0 0.0
      %4429 = vmatprep.subr.mxu0 0.0
      %4430 = vmatpush1.msra.mxu0 0.0
      %4431 = vmatprep.subr.mxu0 0.0
      %4432 = vmatpush1.msra.mxu0 0.0
      %4433 = vmatprep.subr.mxu0 0.0
      %4434 = vmatpush1.msra.mxu0 0.0
      %4435 = vmatprep.subr.mxu0 0.0
      %4436 = vmatpush1.msra.mxu0 0.0
      %4437 = vmatprep.subr.mxu0 0.0
      %4438 = vmatpush1.msra.mxu0 0.0
      %4439 = vmatprep.subr.mxu0 0.0
      %4440 = vmatpush1.msra.mxu0 0.0
      %4441 = vmatprep.subr.mxu0 0.0
      %4442 = vmatpush1.msra.mxu0 0.0
      %4443 = vmatprep.subr.mxu0 0.0
      %4444 = vmatpush1.msra.mxu0 0.0
      %4445 = vmatprep.subr.mxu0 0.0
      %4446 = vmatpush1.msra.mxu0 0.0
      %4447 = vmatprep.subr.mxu0 0.0
      %4448 = vmatpush1.msra.mxu0 0.0
      %4449 = vmatprep.subr.mxu0 0.0
      %4450 = vmatpush1.msra.mxu0 0.0
      %4451 = vmatprep.subr.mxu0 0.0
      %4452 = vmatpush1.msra.mxu0 0.0
      %4453 = vmatprep.subr.mxu0 0.0
      %4454 = vmatpush1.msra.mxu0 0.0
      %4455 = vmatprep.subr.mxu0 0.0
      %4456 = vmatpush1.msra.mxu0 0.0
      %4457 = vmatprep.subr.mxu0 0.0
      %4458 = vmatpush1.msra.mxu0 %v1997
      %4459 = vmatprep.subr.mxu0 0.0
      %4460 = vmatpush2.msra.mxu0 0.0
      %4461 = vmatprep.subr.mxu0 0.0
      %4462 = vmatpush2.msra.mxu0 0.0
      %4463 = vmatprep.subr.mxu0 0.0
      %4464 = vmatpush2.msra.mxu0 0.0
      %4465 = vmatprep.subr.mxu0 0.0
      %4466 = vmatpush2.msra.mxu0 0.0
      %4467 = vmatprep.subr.mxu0 0.0
      %4468 = vmatpush2.msra.mxu0 0.0
      %4469 = vmatprep.subr.mxu0 0.0
      %4470 = vmatpush2.msra.mxu0 0.0
      %4471 = vmatprep.subr.mxu0 0.0
      %4472 = vmatpush2.msra.mxu0 0.0
      %4473 = vmatprep.subr.mxu0 0.0
      %4474 = vmatpush2.msra.mxu0 0.0
      %4475 = vmatprep.subr.mxu0 0.0
      %4476 = vmatpush2.msra.mxu0 0.0
      %4477 = vmatprep.subr.mxu0 0.0
      %4478 = vmatpush2.msra.mxu0 0.0
      %4479 = vmatprep.subr.mxu0 0.0
      %4480 = vmatpush2.msra.mxu0 0.0
      %4481 = vmatprep.subr.mxu0 0.0
      %4482 = vmatpush2.msra.mxu0 0.0
      %4483 = vmatprep.subr.mxu0 0.0
      %4484 = vmatpush2.msra.mxu0 0.0
      %4485 = vmatprep.subr.mxu0 0.0
      %4486 = vmatpush2.msra.mxu0 0.0
      %4487 = vmatprep.subr.mxu0 0.0
      %4488 = vmatpush2.msra.mxu0 0.0
      %4489 = vmatprep.subr.mxu0 0.0
      %4490 = vmatpush2.msra.mxu0 0.0
      %4491 = vmatprep.mubr.f32.mxu0 0.0
      %4492 = vmatmul.mubr.f32.gmra.mxu0 %v4425
      %v4493 = vpop.f32.mrf.mxu0
      %v4494 = vadd.f32 0.0, %v4493
      %v4495 = vpop.f32.mrf.mxu0
      %4496 = vdwg.mxu0
      %v4498 = vsel %vm3348, %v3617, 0
      %4500 = vmatprep.subr.mxu0 0.0
      %4501 = vmatpush1.msra.mxu0 0.0
      %4502 = vmatprep.subr.mxu0 0.0
      %4503 = vmatpush1.msra.mxu0 0.0
      %4504 = vmatprep.subr.mxu0 0.0
      %4505 = vmatpush1.msra.mxu0 0.0
      %4506 = vmatprep.subr.mxu0 0.0
      %4507 = vmatpush1.msra.mxu0 0.0
      %4508 = vmatprep.subr.mxu0 0.0
      %4509 = vmatpush1.msra.mxu0 0.0
      %4510 = vmatprep.subr.mxu0 0.0
      %4511 = vmatpush1.msra.mxu0 0.0
      %4512 = vmatprep.subr.mxu0 0.0
      %4513 = vmatpush1.msra.mxu0 0.0
      %4514 = vmatprep.subr.mxu0 0.0
      %4515 = vmatpush1.msra.mxu0 0.0
      %4516 = vmatprep.subr.mxu0 0.0
      %4517 = vmatpush1.msra.mxu0 0.0
      %4518 = vmatprep.subr.mxu0 0.0
      %4519 = vmatpush1.msra.mxu0 0.0
      %4520 = vmatprep.subr.mxu0 0.0
      %4521 = vmatpush1.msra.mxu0 0.0
      %4522 = vmatprep.subr.mxu0 0.0
      %4523 = vmatpush1.msra.mxu0 0.0
      %4524 = vmatprep.subr.mxu0 0.0
      %4525 = vmatpush1.msra.mxu0 0.0
      %4526 = vmatprep.subr.mxu0 0.0
      %4527 = vmatpush1.msra.mxu0 0.0
      %4528 = vmatprep.subr.mxu0 0.0
      %4529 = vmatpush1.msra.mxu0 0.0
      %4530 = vmatprep.subr.mxu0 0.0
      %4531 = vmatpush1.msra.mxu0 %v2002
      %4532 = vmatprep.subr.mxu0 0.0
      %4533 = vmatpush2.msra.mxu0 0.0
      %4534 = vmatprep.subr.mxu0 0.0
      %4535 = vmatpush2.msra.mxu0 0.0
      %4536 = vmatprep.subr.mxu0 0.0
      %4537 = vmatpush2.msra.mxu0 0.0
      %4538 = vmatprep.subr.mxu0 0.0
      %4539 = vmatpush2.msra.mxu0 0.0
      %4540 = vmatprep.subr.mxu0 0.0
      %4541 = vmatpush2.msra.mxu0 0.0
      %4542 = vmatprep.subr.mxu0 0.0
      %4543 = vmatpush2.msra.mxu0 0.0
      %4544 = vmatprep.subr.mxu0 0.0
      %4545 = vmatpush2.msra.mxu0 0.0
      %4546 = vmatprep.subr.mxu0 0.0
      %4547 = vmatpush2.msra.mxu0 0.0
      %4548 = vmatprep.subr.mxu0 0.0
      %4549 = vmatpush2.msra.mxu0 0.0
      %4550 = vmatprep.subr.mxu0 0.0
      %4551 = vmatpush2.msra.mxu0 0.0
      %4552 = vmatprep.subr.mxu0 0.0
      %4553 = vmatpush2.msra.mxu0 0.0
      %4554 = vmatprep.subr.mxu0 0.0
      %4555 = vmatpush2.msra.mxu0 0.0
      %4556 = vmatprep.subr.mxu0 0.0
      %4557 = vmatpush2.msra.mxu0 0.0
      %4558 = vmatprep.subr.mxu0 0.0
      %4559 = vmatpush2.msra.mxu0 0.0
      %4560 = vmatprep.subr.mxu0 0.0
      %4561 = vmatpush2.msra.mxu0 0.0
      %4562 = vmatprep.subr.mxu0 0.0
      %4563 = vmatpush2.msra.mxu0 0.0
      %4564 = vmatprep.mubr.f32.mxu0 0.0
      %4565 = vmatmul.mubr.f32.gmra.mxu0 %v4498
      %v4566 = vpop.f32.mrf.mxu0
      %v4567 = vadd.f32 0.0, %v4566
      %v4568 = vpop.f32.mrf.mxu0
      %4569 = vdwg.mxu0
      %v4571 = vsel %vm3348, %v3618, 0
      %4573 = vmatprep.subr.mxu0 0.0
      %4574 = vmatpush1.msra.mxu0 0.0
      %4575 = vmatprep.subr.mxu0 0.0
      %4576 = vmatpush1.msra.mxu0 0.0
      %4577 = vmatprep.subr.mxu0 0.0
      %4578 = vmatpush1.msra.mxu0 0.0
      %4579 = vmatprep.subr.mxu0 0.0
      %4580 = vmatpush1.msra.mxu0 0.0
      %4581 = vmatprep.subr.mxu0 0.0
      %4582 = vmatpush1.msra.mxu0 0.0
      %4583 = vmatprep.subr.mxu0 0.0
      %4584 = vmatpush1.msra.mxu0 0.0
      %4585 = vmatprep.subr.mxu0 0.0
      %4586 = vmatpush1.msra.mxu0 0.0
      %4587 = vmatprep.subr.mxu0 0.0
      %4588 = vmatpush1.msra.mxu0 0.0
      %4589 = vmatprep.subr.mxu0 0.0
      %4590 = vmatpush1.msra.mxu0 0.0
      %4591 = vmatprep.subr.mxu0 0.0
      %4592 = vmatpush1.msra.mxu0 0.0
      %4593 = vmatprep.subr.mxu0 0.0
      %4594 = vmatpush1.msra.mxu0 0.0
      %4595 = vmatprep.subr.mxu0 0.0
      %4596 = vmatpush1.msra.mxu0 0.0
      %4597 = vmatprep.subr.mxu0 0.0
      %4598 = vmatpush1.msra.mxu0 0.0
      %4599 = vmatprep.subr.mxu0 0.0
      %4600 = vmatpush1.msra.mxu0 0.0
      %4601 = vmatprep.subr.mxu0 0.0
      %4602 = vmatpush1.msra.mxu0 0.0
      %4603 = vmatprep.subr.mxu0 0.0
      %4604 = vmatpush1.msra.mxu0 %v2007
      %4605 = vmatprep.subr.mxu0 0.0
      %4606 = vmatpush2.msra.mxu0 0.0
      %4607 = vmatprep.subr.mxu0 0.0
      %4608 = vmatpush2.msra.mxu0 0.0
      %4609 = vmatprep.subr.mxu0 0.0
      %4610 = vmatpush2.msra.mxu0 0.0
      %4611 = vmatprep.subr.mxu0 0.0
      %4612 = vmatpush2.msra.mxu0 0.0
      %4613 = vmatprep.subr.mxu0 0.0
      %4614 = vmatpush2.msra.mxu0 0.0
      %4615 = vmatprep.subr.mxu0 0.0
      %4616 = vmatpush2.msra.mxu0 0.0
      %4617 = vmatprep.subr.mxu0 0.0
      %4618 = vmatpush2.msra.mxu0 0.0
      %4619 = vmatprep.subr.mxu0 0.0
      %4620 = vmatpush2.msra.mxu0 0.0
      %4621 = vmatprep.subr.mxu0 0.0
      %4622 = vmatpush2.msra.mxu0 0.0
      %4623 = vmatprep.subr.mxu0 0.0
      %4624 = vmatpush2.msra.mxu0 0.0
      %4625 = vmatprep.subr.mxu0 0.0
      %4626 = vmatpush2.msra.mxu0 0.0
      %4627 = vmatprep.subr.mxu0 0.0
      %4628 = vmatpush2.msra.mxu0 0.0
      %4629 = vmatprep.subr.mxu0 0.0
      %4630 = vmatpush2.msra.mxu0 0.0
      %4631 = vmatprep.subr.mxu0 0.0
      %4632 = vmatpush2.msra.mxu0 0.0
      %4633 = vmatprep.subr.mxu0 0.0
      %4634 = vmatpush2.msra.mxu0 0.0
      %4635 = vmatprep.subr.mxu0 0.0
      %4636 = vmatpush2.msra.mxu0 0.0
      %4637 = vmatprep.mubr.f32.mxu0 0.0
      %4638 = vmatmul.mubr.f32.gmra.mxu0 %v4571
      %v4639 = vpop.f32.mrf.mxu0
      %v4640 = vadd.f32 0.0, %v4639
      %v4641 = vpop.f32.mrf.mxu0
      %4642 = vdwg.mxu0
      %v4644 = vsel %vm3348, %v3619, 0
      %4646 = vmatprep.subr.mxu0 0.0
      %4647 = vmatpush1.msra.mxu0 0.0
      %4648 = vmatprep.subr.mxu0 0.0
      %4649 = vmatpush1.msra.mxu0 0.0
      %4650 = vmatprep.subr.mxu0 0.0
      %4651 = vmatpush1.msra.mxu0 0.0
      %4652 = vmatprep.subr.mxu0 0.0
      %4653 = vmatpush1.msra.mxu0 0.0
      %4654 = vmatprep.subr.mxu0 0.0
      %4655 = vmatpush1.msra.mxu0 0.0
      %4656 = vmatprep.subr.mxu0 0.0
      %4657 = vmatpush1.msra.mxu0 0.0
      %4658 = vmatprep.subr.mxu0 0.0
      %4659 = vmatpush1.msra.mxu0 0.0
      %4660 = vmatprep.subr.mxu0 0.0
      %4661 = vmatpush1.msra.mxu0 0.0
      %4662 = vmatprep.subr.mxu0 0.0
      %4663 = vmatpush1.msra.mxu0 0.0
      %4664 = vmatprep.subr.mxu0 0.0
      %4665 = vmatpush1.msra.mxu0 0.0
      %4666 = vmatprep.subr.mxu0 0.0
      %4667 = vmatpush1.msra.mxu0 0.0
      %4668 = vmatprep.subr.mxu0 0.0
      %4669 = vmatpush1.msra.mxu0 0.0
      %4670 = vmatprep.subr.mxu0 0.0
      %4671 = vmatpush1.msra.mxu0 0.0
      %4672 = vmatprep.subr.mxu0 0.0
      %4673 = vmatpush1.msra.mxu0 0.0
      %4674 = vmatprep.subr.mxu0 0.0
      %4675 = vmatpush1.msra.mxu0 0.0
      %4676 = vmatprep.subr.mxu0 0.0
      %4677 = vmatpush1.msra.mxu0 %v2012
      %4678 = vmatprep.subr.mxu0 0.0
      %4679 = vmatpush2.msra.mxu0 0.0
      %4680 = vmatprep.subr.mxu0 0.0
      %4681 = vmatpush2.msra.mxu0 0.0
      %4682 = vmatprep.subr.mxu0 0.0
      %4683 = vmatpush2.msra.mxu0 0.0
      %4684 = vmatprep.subr.mxu0 0.0
      %4685 = vmatpush2.msra.mxu0 0.0
      %4686 = vmatprep.subr.mxu0 0.0
      %4687 = vmatpush2.msra.mxu0 0.0
      %4688 = vmatprep.subr.mxu0 0.0
      %4689 = vmatpush2.msra.mxu0 0.0
      %4690 = vmatprep.subr.mxu0 0.0
      %4691 = vmatpush2.msra.mxu0 0.0
      %4692 = vmatprep.subr.mxu0 0.0
      %4693 = vmatpush2.msra.mxu0 0.0
      %4694 = vmatprep.subr.mxu0 0.0
      %4695 = vmatpush2.msra.mxu0 0.0
      %4696 = vmatprep.subr.mxu0 0.0
      %4697 = vmatpush2.msra.mxu0 0.0
      %4698 = vmatprep.subr.mxu0 0.0
      %4699 = vmatpush2.msra.mxu0 0.0
      %4700 = vmatprep.subr.mxu0 0.0
      %4701 = vmatpush2.msra.mxu0 0.0
      %4702 = vmatprep.subr.mxu0 0.0
      %4703 = vmatpush2.msra.mxu0 0.0
      %4704 = vmatprep.subr.mxu0 0.0
      %4705 = vmatpush2.msra.mxu0 0.0
      %4706 = vmatprep.subr.mxu0 0.0
      %4707 = vmatpush2.msra.mxu0 0.0
      %4708 = vmatprep.subr.mxu0 0.0
      %4709 = vmatpush2.msra.mxu0 0.0
      %4710 = vmatprep.mubr.f32.mxu0 0.0
      %4711 = vmatmul.mubr.f32.gmra.mxu0 %v4644
      %v4712 = vpop.f32.mrf.mxu0
      %v4713 = vadd.f32 0.0, %v4712
      %v4714 = vpop.f32.mrf.mxu0
      %4715 = vdwg.mxu0
      %v4717 = vsel %vm3348, %v3620, 0
      %4719 = vmatprep.subr.mxu0 0.0
      %4720 = vmatpush1.msra.mxu0 0.0
      %4721 = vmatprep.subr.mxu0 0.0
      %4722 = vmatpush1.msra.mxu0 0.0
      %4723 = vmatprep.subr.mxu0 0.0
      %4724 = vmatpush1.msra.mxu0 0.0
      %4725 = vmatprep.subr.mxu0 0.0
      %4726 = vmatpush1.msra.mxu0 0.0
      %4727 = vmatprep.subr.mxu0 0.0
      %4728 = vmatpush1.msra.mxu0 0.0
      %4729 = vmatprep.subr.mxu0 0.0
      %4730 = vmatpush1.msra.mxu0 0.0
      %4731 = vmatprep.subr.mxu0 0.0
      %4732 = vmatpush1.msra.mxu0 0.0
      %4733 = vmatprep.subr.mxu0 0.0
      %4734 = vmatpush1.msra.mxu0 0.0
      %4735 = vmatprep.subr.mxu0 0.0
      %4736 = vmatpush1.msra.mxu0 0.0
      %4737 = vmatprep.subr.mxu0 0.0
      %4738 = vmatpush1.msra.mxu0 0.0
      %4739 = vmatprep.subr.mxu0 0.0
      %4740 = vmatpush1.msra.mxu0 0.0
      %4741 = vmatprep.subr.mxu0 0.0
      %4742 = vmatpush1.msra.mxu0 0.0
      %4743 = vmatprep.subr.mxu0 0.0
      %4744 = vmatpush1.msra.mxu0 0.0
      %4745 = vmatprep.subr.mxu0 0.0
      %4746 = vmatpush1.msra.mxu0 0.0
      %4747 = vmatprep.subr.mxu0 0.0
      %4748 = vmatpush1.msra.mxu0 0.0
      %4749 = vmatprep.subr.mxu0 0.0
      %4750 = vmatpush1.msra.mxu0 %v2017
      %4751 = vmatprep.subr.mxu0 0.0
      %4752 = vmatpush2.msra.mxu0 0.0
      %4753 = vmatprep.subr.mxu0 0.0
      %4754 = vmatpush2.msra.mxu0 0.0
      %4755 = vmatprep.subr.mxu0 0.0
      %4756 = vmatpush2.msra.mxu0 0.0
      %4757 = vmatprep.subr.mxu0 0.0
      %4758 = vmatpush2.msra.mxu0 0.0
      %4759 = vmatprep.subr.mxu0 0.0
      %4760 = vmatpush2.msra.mxu0 0.0
      %4761 = vmatprep.subr.mxu0 0.0
      %4762 = vmatpush2.msra.mxu0 0.0
      %4763 = vmatprep.subr.mxu0 0.0
      %4764 = vmatpush2.msra.mxu0 0.0
      %4765 = vmatprep.subr.mxu0 0.0
      %4766 = vmatpush2.msra.mxu0 0.0
      %4767 = vmatprep.subr.mxu0 0.0
      %4768 = vmatpush2.msra.mxu0 0.0
      %4769 = vmatprep.subr.mxu0 0.0
      %4770 = vmatpush2.msra.mxu0 0.0
      %4771 = vmatprep.subr.mxu0 0.0
      %4772 = vmatpush2.msra.mxu0 0.0
      %4773 = vmatprep.subr.mxu0 0.0
      %4774 = vmatpush2.msra.mxu0 0.0
      %4775 = vmatprep.subr.mxu0 0.0
      %4776 = vmatpush2.msra.mxu0 0.0
      %4777 = vmatprep.subr.mxu0 0.0
      %4778 = vmatpush2.msra.mxu0 0.0
      %4779 = vmatprep.subr.mxu0 0.0
      %4780 = vmatpush2.msra.mxu0 0.0
      %4781 = vmatprep.subr.mxu0 0.0
      %4782 = vmatpush2.msra.mxu0 0.0
      %4783 = vmatprep.mubr.f32.mxu0 0.0
      %4784 = vmatmul.mubr.f32.gmra.mxu0 %v4717
      %v4785 = vpop.f32.mrf.mxu0
      %v4786 = vadd.f32 0.0, %v4785
      %v4787 = vpop.f32.mrf.mxu0
      %4788 = vdwg.mxu0
      %v4790 = vlaneseq
      %v4791 = vshrl.u32 %v4790, 7
      %v4792 = vsub.s32 0, %v4791
      %v4793 = vrot.slane %v1157, %v4792
      %v4811 = vrot.slane %v3764, 7
      %vm4812 = vcmask 1041409
      %v4813 = vsel %vm4812, %v4811, %v3691
      %v4814 = vrot.slane %v3837, 6
      %vm4815 = vcmask 1042434
      %v4816 = vsel %vm4815, %v4814, %v4813
      %v4817 = vrot.slane %v3910, 5
      %vm4818 = vcmask 1043459
      %v4819 = vsel %vm4818, %v4817, %v4816
      %v4820 = vrot.slane %v3983, 4
      %vm4821 = vcmask 1044484
      %v4822 = vsel %vm4821, %v4820, %v4819
      %v4823 = vrot.slane %v4056, 3
      %vm4824 = vcmask 1045509
      %v4825 = vsel %vm4824, %v4823, %v4822
      %v4826 = vrot.slane %v4129, 2
      %vm4827 = vcmask 1046534
      %v4828 = vsel %vm4827, %v4826, %v4825
      %v4829 = vrot.slane %v4202, 1
      %vm4830 = vcmask 1047559
      %v4831 = vsel %vm4830, %v4829, %v4828
      %v4832 = vrot.slane %v4348, 7
      %v4833 = vsel %vm4812, %v4832, %v4275
      %v4834 = vrot.slane %v4421, 6
      %v4835 = vsel %vm4815, %v4834, %v4833
      %v4836 = vrot.slane %v4494, 5
      %v4837 = vsel %vm4818, %v4836, %v4835
      %v4838 = vrot.slane %v4567, 4
      %v4839 = vsel %vm4821, %v4838, %v4837
      %v4840 = vrot.slane %v4640, 3
      %v4841 = vsel %vm4824, %v4840, %v4839
      %v4842 = vrot.slane %v4713, 2
      %v4843 = vsel %vm4827, %v4842, %v4841
      %v4844 = vrot.slane %v4786, 1
      %v4845 = vsel %vm4830, %v4844, %v4843
      %v4846 = vsel %vm1358, %v4831, 0
      %v4848 = vsel %vm1358, %v4845, 0
      %4850 = vmatprep.subr.mxu0 0.0
      %4851 = vmatpush1.msra.mxu0 0.0
      %4852 = vmatprep.subr.mxu0 0.0
      %4853 = vmatpush1.msra.mxu0 0.0
      %4854 = vmatprep.subr.mxu0 0.0
      %4855 = vmatpush1.msra.mxu0 0.0
      %4856 = vmatprep.subr.mxu0 0.0
      %4857 = vmatpush1.msra.mxu0 0.0
      %4858 = vmatprep.subr.mxu0 0.0
      %4859 = vmatpush1.msra.mxu0 0.0
      %4860 = vmatprep.subr.mxu0 0.0
      %4861 = vmatpush1.msra.mxu0 0.0
      %4862 = vmatprep.subr.mxu0 0.0
      %4863 = vmatpush1.msra.mxu0 0.0
      %4864 = vmatprep.subr.mxu0 0.0
      %4865 = vmatpush1.msra.mxu0 0.0
      %4866 = vmatprep.subr.mxu0 0.0
      %4867 = vmatpush1.msra.mxu0 0.0
      %4868 = vmatprep.subr.mxu0 0.0
      %4869 = vmatpush1.msra.mxu0 0.0
      %4870 = vmatprep.subr.mxu0 0.0
      %4871 = vmatpush1.msra.mxu0 0.0
      %4872 = vmatprep.subr.mxu0 0.0
      %4873 = vmatpush1.msra.mxu0 0.0
      %4874 = vmatprep.subr.mxu0 0.0
      %4875 = vmatpush1.msra.mxu0 %v1128
      %4876 = vmatprep.subr.mxu0 0.0
      %4877 = vmatpush1.msra.mxu0 %v1127
      %4878 = vmatprep.subr.mxu0 0.0
      %4879 = vmatpush1.msra.mxu0 %v1126
      %4880 = vmatprep.subr.mxu0 0.0
      %4881 = vmatpush1.msra.mxu0 %v1125
      %4882 = vmatprep.subr.mxu0 0.0
      %4883 = vmatpush2.msra.mxu0 0.0
      %4884 = vmatprep.subr.mxu0 0.0
      %4885 = vmatpush2.msra.mxu0 0.0
      %4886 = vmatprep.subr.mxu0 0.0
      %4887 = vmatpush2.msra.mxu0 0.0
      %4888 = vmatprep.subr.mxu0 0.0
      %4889 = vmatpush2.msra.mxu0 0.0
      %4890 = vmatprep.subr.mxu0 0.0
      %4891 = vmatpush2.msra.mxu0 0.0
      %4892 = vmatprep.subr.mxu0 0.0
      %4893 = vmatpush2.msra.mxu0 0.0
      %4894 = vmatprep.subr.mxu0 0.0
      %4895 = vmatpush2.msra.mxu0 0.0
      %4896 = vmatprep.subr.mxu0 0.0
      %4897 = vmatpush2.msra.mxu0 0.0
      %4898 = vmatprep.subr.mxu0 0.0
      %4899 = vmatpush2.msra.mxu0 0.0
      %4900 = vmatprep.subr.mxu0 0.0
      %4901 = vmatpush2.msra.mxu0 0.0
      %4902 = vmatprep.subr.mxu0 0.0
      %4903 = vmatpush2.msra.mxu0 0.0
      %4904 = vmatprep.subr.mxu0 0.0
      %4905 = vmatpush2.msra.mxu0 0.0
      %4906 = vmatprep.subr.mxu0 0.0
      %4907 = vmatpush2.msra.mxu0 0.0
      %4908 = vmatprep.subr.mxu0 0.0
      %4909 = vmatpush2.msra.mxu0 0.0
      %4910 = vmatprep.subr.mxu0 0.0
      %4911 = vmatpush2.msra.mxu0 0.0
      %4912 = vmatprep.subr.mxu0 0.0
      %4913 = vmatpush2.msra.mxu0 0.0
      %4914 = vmatprep.mubr.f32.mxu0 0.0
      %4915 = vmatmul.mubr.f32.gmra.mxu0 %v4846
      %v4916 = vpop.f32.mrf.mxu0
      %v4917 = vadd.f32 %v4793, %v4916
      %v4918 = vpop.f32.mrf.mxu0
      %4919 = vmatprep.mubr.f32.mxu0 0.0
      %4920 = vmatmul.mubr.f32.gmra.mxu0 %v4848
      %v4921 = vpop.f32.mrf.mxu0
      %v4922 = vadd.f32 %v4793, %v4921
      %v4923 = vpop.f32.mrf.mxu0
      %4924 = vdwg.mxu0
      %v4925 = vrot.slane %v3691, 1
      %v4926 = vsel %vm4812, %v3764, %v4925
      %v4927 = vrot.slane %v3837, 7
      %v4928 = vsel %vm4815, %v4927, %v4926
      %v4929 = vrot.slane %v3910, 6
      %v4930 = vsel %vm4818, %v4929, %v4928
      %v4931 = vrot.slane %v3983, 5
      %v4932 = vsel %vm4821, %v4931, %v4930
      %v4933 = vrot.slane %v4056, 4
      %v4934 = vsel %vm4824, %v4933, %v4932
      %v4935 = vrot.slane %v4129, 3
      %v4936 = vsel %vm4827, %v4935, %v4934
      %v4937 = vrot.slane %v4202, 2
      %v4938 = vsel %vm4830, %v4937, %v4936
      %v4939 = vrot.slane %v4275, 1
      %v4940 = vsel %vm4812, %v4348, %v4939
      %v4941 = vrot.slane %v4421, 7
      %v4942 = vsel %vm4815, %v4941, %v4940
      %v4943 = vrot.slane %v4494, 6
      %v4944 = vsel %vm4818, %v4943, %v4942
      %v4945 = vrot.slane %v4567, 5
      %v4946 = vsel %vm4821, %v4945, %v4944
      %v4947 = vrot.slane %v4640, 4
      %v4948 = vsel %vm4824, %v4947, %v4946
      %v4949 = vrot.slane %v4713, 3
      %v4950 = vsel %vm4827, %v4949, %v4948
      %v4951 = vrot.slane %v4786, 2
      %v4952 = vsel %vm4830, %v4951, %v4950
      %v4953 = vsel %vm1358, %v4938, 0
      %v4955 = vsel %vm1358, %v4952, 0
      %4957 = vmatprep.subr.mxu0 0.0
      %4958 = vmatpush1.msra.mxu0 0.0
      %4959 = vmatprep.subr.mxu0 0.0
      %4960 = vmatpush1.msra.mxu0 0.0
      %4961 = vmatprep.subr.mxu0 0.0
      %4962 = vmatpush1.msra.mxu0 0.0
      %4963 = vmatprep.subr.mxu0 0.0
      %4964 = vmatpush1.msra.mxu0 0.0
      %4965 = vmatprep.subr.mxu0 0.0
      %4966 = vmatpush1.msra.mxu0 0.0
      %4967 = vmatprep.subr.mxu0 0.0
      %4968 = vmatpush1.msra.mxu0 0.0
      %4969 = vmatprep.subr.mxu0 0.0
      %4970 = vmatpush1.msra.mxu0 0.0
      %4971 = vmatprep.subr.mxu0 0.0
      %4972 = vmatpush1.msra.mxu0 0.0
      %4973 = vmatprep.subr.mxu0 0.0
      %4974 = vmatpush1.msra.mxu0 0.0
      %4975 = vmatprep.subr.mxu0 0.0
      %4976 = vmatpush1.msra.mxu0 0.0
      %4977 = vmatprep.subr.mxu0 0.0
      %4978 = vmatpush1.msra.mxu0 0.0
      %4979 = vmatprep.subr.mxu0 0.0
      %4980 = vmatpush1.msra.mxu0 0.0
      %4981 = vmatprep.subr.mxu0 0.0
      %4982 = vmatpush1.msra.mxu0 %v1132
      %4983 = vmatprep.subr.mxu0 0.0
      %4984 = vmatpush1.msra.mxu0 %v1131
      %4985 = vmatprep.subr.mxu0 0.0
      %4986 = vmatpush1.msra.mxu0 %v1130
      %4987 = vmatprep.subr.mxu0 0.0
      %4988 = vmatpush1.msra.mxu0 %v1129
      %4989 = vmatprep.subr.mxu0 0.0
      %4990 = vmatpush2.msra.mxu0 0.0
      %4991 = vmatprep.subr.mxu0 0.0
      %4992 = vmatpush2.msra.mxu0 0.0
      %4993 = vmatprep.subr.mxu0 0.0
      %4994 = vmatpush2.msra.mxu0 0.0
      %4995 = vmatprep.subr.mxu0 0.0
      %4996 = vmatpush2.msra.mxu0 0.0
      %4997 = vmatprep.subr.mxu0 0.0
      %4998 = vmatpush2.msra.mxu0 0.0
      %4999 = vmatprep.subr.mxu0 0.0
      %5000 = vmatpush2.msra.mxu0 0.0
      %5001 = vmatprep.subr.mxu0 0.0
      %5002 = vmatpush2.msra.mxu0 0.0
      %5003 = vmatprep.subr.mxu0 0.0
      %5004 = vmatpush2.msra.mxu0 0.0
      %5005 = vmatprep.subr.mxu0 0.0
      %5006 = vmatpush2.msra.mxu0 0.0
      %5007 = vmatprep.subr.mxu0 0.0
      %5008 = vmatpush2.msra.mxu0 0.0
      %5009 = vmatprep.subr.mxu0 0.0
      %5010 = vmatpush2.msra.mxu0 0.0
      %5011 = vmatprep.subr.mxu0 0.0
      %5012 = vmatpush2.msra.mxu0 0.0
      %5013 = vmatprep.subr.mxu0 0.0
      %5014 = vmatpush2.msra.mxu0 0.0
      %5015 = vmatprep.subr.mxu0 0.0
      %5016 = vmatpush2.msra.mxu0 0.0
      %5017 = vmatprep.subr.mxu0 0.0
      %5018 = vmatpush2.msra.mxu0 0.0
      %5019 = vmatprep.subr.mxu0 0.0
      %5020 = vmatpush2.msra.mxu0 0.0
      %5021 = vmatprep.mubr.f32.mxu0 0.0
      %5022 = vmatmul.mubr.f32.gmra.mxu0 %v4953
      %v5023 = vpop.f32.mrf.mxu0
      %v5024 = vadd.f32 0.0, %v5023
      %v5025 = vpop.f32.mrf.mxu0
      %5026 = vmatprep.mubr.f32.mxu0 0.0
      %5027 = vmatmul.mubr.f32.gmra.mxu0 %v4955
      %v5028 = vpop.f32.mrf.mxu0
      %v5029 = vadd.f32 0.0, %v5028
      %v5030 = vpop.f32.mrf.mxu0
      %5031 = vdwg.mxu0
      %v5032 = vadd.f32 %v4917, %v5024
      %v5033 = vadd.f32 %v4922, %v5029
      %v5034 = vrot.slane %v3691, 2
      %v5035 = vrot.slane %v3764, 1
      %v5036 = vsel %vm4812, %v5035, %v5034
      %v5037 = vsel %vm4815, %v3837, %v5036
      %v5038 = vrot.slane %v3910, 7
      %v5039 = vsel %vm4818, %v5038, %v5037
      %v5040 = vrot.slane %v3983, 6
      %v5041 = vsel %vm4821, %v5040, %v5039
      %v5042 = vrot.slane %v4056, 5
      %v5043 = vsel %vm4824, %v5042, %v5041
      %v5044 = vrot.slane %v4129, 4
      %v5045 = vsel %vm4827, %v5044, %v5043
      %v5046 = vrot.slane %v4202, 3
      %v5047 = vsel %vm4830, %v5046, %v5045
      %v5048 = vrot.slane %v4275, 2
      %v5049 = vrot.slane %v4348, 1
      %v5050 = vsel %vm4812, %v5049, %v5048
      %v5051 = vsel %vm4815, %v4421, %v5050
      %v5052 = vrot.slane %v4494, 7
      %v5053 = vsel %vm4818, %v5052, %v5051
      %v5054 = vrot.slane %v4567, 6
      %v5055 = vsel %vm4821, %v5054, %v5053
      %v5056 = vrot.slane %v4640, 5
      %v5057 = vsel %vm4824, %v5056, %v5055
      %v5058 = vrot.slane %v4713, 4
      %v5059 = vsel %vm4827, %v5058, %v5057
      %v5060 = vrot.slane %v4786, 3
      %v5061 = vsel %vm4830, %v5060, %v5059
      %v5062 = vsel %vm1358, %v5047, 0
      %v5064 = vsel %vm1358, %v5061, 0
      %5066 = vmatprep.subr.mxu0 0.0
      %5067 = vmatpush1.msra.mxu0 0.0
      %5068 = vmatprep.subr.mxu0 0.0
      %5069 = vmatpush1.msra.mxu0 0.0
      %5070 = vmatprep.subr.mxu0 0.0
      %5071 = vmatpush1.msra.mxu0 0.0
      %5072 = vmatprep.subr.mxu0 0.0
      %5073 = vmatpush1.msra.mxu0 0.0
      %5074 = vmatprep.subr.mxu0 0.0
      %5075 = vmatpush1.msra.mxu0 0.0
      %5076 = vmatprep.subr.mxu0 0.0
      %5077 = vmatpush1.msra.mxu0 0.0
      %5078 = vmatprep.subr.mxu0 0.0
      %5079 = vmatpush1.msra.mxu0 0.0
      %5080 = vmatprep.subr.mxu0 0.0
      %5081 = vmatpush1.msra.mxu0 0.0
      %5082 = vmatprep.subr.mxu0 0.0
      %5083 = vmatpush1.msra.mxu0 0.0
      %5084 = vmatprep.subr.mxu0 0.0
      %5085 = vmatpush1.msra.mxu0 0.0
      %5086 = vmatprep.subr.mxu0 0.0
      %5087 = vmatpush1.msra.mxu0 0.0
      %5088 = vmatprep.subr.mxu0 0.0
      %5089 = vmatpush1.msra.mxu0 0.0
      %5090 = vmatprep.subr.mxu0 0.0
      %5091 = vmatpush1.msra.mxu0 %v1136
      %5092 = vmatprep.subr.mxu0 0.0
      %5093 = vmatpush1.msra.mxu0 %v1135
      %5094 = vmatprep.subr.mxu0 0.0
      %5095 = vmatpush1.msra.mxu0 %v1134
      %5096 = vmatprep.subr.mxu0 0.0
      %5097 = vmatpush1.msra.mxu0 %v1133
      %5098 = vmatprep.subr.mxu0 0.0
      %5099 = vmatpush2.msra.mxu0 0.0
      %5100 = vmatprep.subr.mxu0 0.0
      %5101 = vmatpush2.msra.mxu0 0.0
      %5102 = vmatprep.subr.mxu0 0.0
      %5103 = vmatpush2.msra.mxu0 0.0
      %5104 = vmatprep.subr.mxu0 0.0
      %5105 = vmatpush2.msra.mxu0 0.0
      %5106 = vmatprep.subr.mxu0 0.0
      %5107 = vmatpush2.msra.mxu0 0.0
      %5108 = vmatprep.subr.mxu0 0.0
      %5109 = vmatpush2.msra.mxu0 0.0
      %5110 = vmatprep.subr.mxu0 0.0
      %5111 = vmatpush2.msra.mxu0 0.0
      %5112 = vmatprep.subr.mxu0 0.0
      %5113 = vmatpush2.msra.mxu0 0.0
      %5114 = vmatprep.subr.mxu0 0.0
      %5115 = vmatpush2.msra.mxu0 0.0
      %5116 = vmatprep.subr.mxu0 0.0
      %5117 = vmatpush2.msra.mxu0 0.0
      %5118 = vmatprep.subr.mxu0 0.0
      %5119 = vmatpush2.msra.mxu0 0.0
      %5120 = vmatprep.subr.mxu0 0.0
      %5121 = vmatpush2.msra.mxu0 0.0
      %5122 = vmatprep.subr.mxu0 0.0
      %5123 = vmatpush2.msra.mxu0 0.0
      %5124 = vmatprep.subr.mxu0 0.0
      %5125 = vmatpush2.msra.mxu0 0.0
      %5126 = vmatprep.subr.mxu0 0.0
      %5127 = vmatpush2.msra.mxu0 0.0
      %5128 = vmatprep.subr.mxu0 0.0
      %5129 = vmatpush2.msra.mxu0 0.0
      %5130 = vmatprep.mubr.f32.mxu0 0.0
      %5131 = vmatmul.mubr.f32.gmra.mxu0 %v5062
      %v5132 = vpop.f32.mrf.mxu0
      %v5133 = vadd.f32 0.0, %v5132
      %v5134 = vpop.f32.mrf.mxu0
      %5135 = vmatprep.mubr.f32.mxu0 0.0
      %5136 = vmatmul.mubr.f32.gmra.mxu0 %v5064
      %v5137 = vpop.f32.mrf.mxu0
      %v5138 = vadd.f32 0.0, %v5137
      %v5139 = vpop.f32.mrf.mxu0
      %5140 = vdwg.mxu0
      %v5141 = vadd.f32 %v5032, %v5133
      %v5142 = vadd.f32 %v5033, %v5138
      %v5143 = vrot.slane %v3691, 3
      %v5144 = vrot.slane %v3764, 2
      %v5145 = vsel %vm4812, %v5144, %v5143
      %v5146 = vrot.slane %v3837, 1
      %v5147 = vsel %vm4815, %v5146, %v5145
      %v5148 = vsel %vm4818, %v3910, %v5147
      %v5149 = vrot.slane %v3983, 7
      %v5150 = vsel %vm4821, %v5149, %v5148
      %v5151 = vrot.slane %v4056, 6
      %v5152 = vsel %vm4824, %v5151, %v5150
      %v5153 = vrot.slane %v4129, 5
      %v5154 = vsel %vm4827, %v5153, %v5152
      %v5155 = vrot.slane %v4202, 4
      %v5156 = vsel %vm4830, %v5155, %v5154
      %v5157 = vrot.slane %v4275, 3
      %v5158 = vrot.slane %v4348, 2
      %v5159 = vsel %vm4812, %v5158, %v5157
      %v5160 = vrot.slane %v4421, 1
      %v5161 = vsel %vm4815, %v5160, %v5159
      %v5162 = vsel %vm4818, %v4494, %v5161
      %v5163 = vrot.slane %v4567, 7
      %v5164 = vsel %vm4821, %v5163, %v5162
      %v5165 = vrot.slane %v4640, 6
      %v5166 = vsel %vm4824, %v5165, %v5164
      %v5167 = vrot.slane %v4713, 5
      %v5168 = vsel %vm4827, %v5167, %v5166
      %v5169 = vrot.slane %v4786, 4
      %v5170 = vsel %vm4830, %v5169, %v5168
      %v5171 = vsel %vm1358, %v5156, 0
      %v5173 = vsel %vm1358, %v5170, 0
      %5175 = vmatprep.subr.mxu0 0.0
      %5176 = vmatpush1.msra.mxu0 0.0
      %5177 = vmatprep.subr.mxu0 0.0
      %5178 = vmatpush1.msra.mxu0 0.0
      %5179 = vmatprep.subr.mxu0 0.0
      %5180 = vmatpush1.msra.mxu0 0.0
      %5181 = vmatprep.subr.mxu0 0.0
      %5182 = vmatpush1.msra.mxu0 0.0
      %5183 = vmatprep.subr.mxu0 0.0
      %5184 = vmatpush1.msra.mxu0 0.0
      %5185 = vmatprep.subr.mxu0 0.0
      %5186 = vmatpush1.msra.mxu0 0.0
      %5187 = vmatprep.subr.mxu0 0.0
      %5188 = vmatpush1.msra.mxu0 0.0
      %5189 = vmatprep.subr.mxu0 0.0
      %5190 = vmatpush1.msra.mxu0 0.0
      %5191 = vmatprep.subr.mxu0 0.0
      %5192 = vmatpush1.msra.mxu0 0.0
      %5193 = vmatprep.subr.mxu0 0.0
      %5194 = vmatpush1.msra.mxu0 0.0
      %5195 = vmatprep.subr.mxu0 0.0
      %5196 = vmatpush1.msra.mxu0 0.0
      %5197 = vmatprep.subr.mxu0 0.0
      %5198 = vmatpush1.msra.mxu0 0.0
      %5199 = vmatprep.subr.mxu0 0.0
      %5200 = vmatpush1.msra.mxu0 %v1140
      %5201 = vmatprep.subr.mxu0 0.0
      %5202 = vmatpush1.msra.mxu0 %v1139
      %5203 = vmatprep.subr.mxu0 0.0
      %5204 = vmatpush1.msra.mxu0 %v1138
      %5205 = vmatprep.subr.mxu0 0.0
      %5206 = vmatpush1.msra.mxu0 %v1137
      %5207 = vmatprep.subr.mxu0 0.0
      %5208 = vmatpush2.msra.mxu0 0.0
      %5209 = vmatprep.subr.mxu0 0.0
      %5210 = vmatpush2.msra.mxu0 0.0
      %5211 = vmatprep.subr.mxu0 0.0
      %5212 = vmatpush2.msra.mxu0 0.0
      %5213 = vmatprep.subr.mxu0 0.0
      %5214 = vmatpush2.msra.mxu0 0.0
      %5215 = vmatprep.subr.mxu0 0.0
      %5216 = vmatpush2.msra.mxu0 0.0
      %5217 = vmatprep.subr.mxu0 0.0
      %5218 = vmatpush2.msra.mxu0 0.0
      %5219 = vmatprep.subr.mxu0 0.0
      %5220 = vmatpush2.msra.mxu0 0.0
      %5221 = vmatprep.subr.mxu0 0.0
      %5222 = vmatpush2.msra.mxu0 0.0
      %5223 = vmatprep.subr.mxu0 0.0
      %5224 = vmatpush2.msra.mxu0 0.0
      %5225 = vmatprep.subr.mxu0 0.0
      %5226 = vmatpush2.msra.mxu0 0.0
      %5227 = vmatprep.subr.mxu0 0.0
      %5228 = vmatpush2.msra.mxu0 0.0
      %5229 = vmatprep.subr.mxu0 0.0
      %5230 = vmatpush2.msra.mxu0 0.0
      %5231 = vmatprep.subr.mxu0 0.0
      %5232 = vmatpush2.msra.mxu0 0.0
      %5233 = vmatprep.subr.mxu0 0.0
      %5234 = vmatpush2.msra.mxu0 0.0
      %5235 = vmatprep.subr.mxu0 0.0
      %5236 = vmatpush2.msra.mxu0 0.0
      %5237 = vmatprep.subr.mxu0 0.0
      %5238 = vmatpush2.msra.mxu0 0.0
      %5239 = vmatprep.mubr.f32.mxu0 0.0
      %5240 = vmatmul.mubr.f32.gmra.mxu0 %v5171
      %v5241 = vpop.f32.mrf.mxu0
      %v5242 = vadd.f32 0.0, %v5241
      %v5243 = vpop.f32.mrf.mxu0
      %5244 = vmatprep.mubr.f32.mxu0 0.0
      %5245 = vmatmul.mubr.f32.gmra.mxu0 %v5173
      %v5246 = vpop.f32.mrf.mxu0
      %v5247 = vadd.f32 0.0, %v5246
      %v5248 = vpop.f32.mrf.mxu0
      %5249 = vdwg.mxu0
      %v5250 = vadd.f32 %v5141, %v5242
      %v5251 = vadd.f32 %v5142, %v5247
      %v5252 = vrot.slane %v3691, 4
      %v5253 = vrot.slane %v3764, 3
      %v5254 = vsel %vm4812, %v5253, %v5252
      %v5255 = vrot.slane %v3837, 2
      %v5256 = vsel %vm4815, %v5255, %v5254
      %v5257 = vrot.slane %v3910, 1
      %v5258 = vsel %vm4818, %v5257, %v5256
      %v5259 = vsel %vm4821, %v3983, %v5258
      %v5260 = vrot.slane %v4056, 7
      %v5261 = vsel %vm4824, %v5260, %v5259
      %v5262 = vrot.slane %v4129, 6
      %v5263 = vsel %vm4827, %v5262, %v5261
      %v5264 = vrot.slane %v4202, 5
      %v5265 = vsel %vm4830, %v5264, %v5263
      %v5266 = vrot.slane %v4275, 4
      %v5267 = vrot.slane %v4348, 3
      %v5268 = vsel %vm4812, %v5267, %v5266
      %v5269 = vrot.slane %v4421, 2
      %v5270 = vsel %vm4815, %v5269, %v5268
      %v5271 = vrot.slane %v4494, 1
      %v5272 = vsel %vm4818, %v5271, %v5270
      %v5273 = vsel %vm4821, %v4567, %v5272
      %v5274 = vrot.slane %v4640, 7
      %v5275 = vsel %vm4824, %v5274, %v5273
      %v5276 = vrot.slane %v4713, 6
      %v5277 = vsel %vm4827, %v5276, %v5275
      %v5278 = vrot.slane %v4786, 5
      %v5279 = vsel %vm4830, %v5278, %v5277
      %v5280 = vsel %vm1358, %v5265, 0
      %v5282 = vsel %vm1358, %v5279, 0
      %5284 = vmatprep.subr.mxu0 0.0
      %5285 = vmatpush1.msra.mxu0 0.0
      %5286 = vmatprep.subr.mxu0 0.0
      %5287 = vmatpush1.msra.mxu0 0.0
      %5288 = vmatprep.subr.mxu0 0.0
      %5289 = vmatpush1.msra.mxu0 0.0
      %5290 = vmatprep.subr.mxu0 0.0
      %5291 = vmatpush1.msra.mxu0 0.0
      %5292 = vmatprep.subr.mxu0 0.0
      %5293 = vmatpush1.msra.mxu0 0.0
      %5294 = vmatprep.subr.mxu0 0.0
      %5295 = vmatpush1.msra.mxu0 0.0
      %5296 = vmatprep.subr.mxu0 0.0
      %5297 = vmatpush1.msra.mxu0 0.0
      %5298 = vmatprep.subr.mxu0 0.0
      %5299 = vmatpush1.msra.mxu0 0.0
      %5300 = vmatprep.subr.mxu0 0.0
      %5301 = vmatpush1.msra.mxu0 0.0
      %5302 = vmatprep.subr.mxu0 0.0
      %5303 = vmatpush1.msra.mxu0 0.0
      %5304 = vmatprep.subr.mxu0 0.0
      %5305 = vmatpush1.msra.mxu0 0.0
      %5306 = vmatprep.subr.mxu0 0.0
      %5307 = vmatpush1.msra.mxu0 0.0
      %5308 = vmatprep.subr.mxu0 0.0
      %5309 = vmatpush1.msra.mxu0 %v1144
      %5310 = vmatprep.subr.mxu0 0.0
      %5311 = vmatpush1.msra.mxu0 %v1143
      %5312 = vmatprep.subr.mxu0 0.0
      %5313 = vmatpush1.msra.mxu0 %v1142
      %5314 = vmatprep.subr.mxu0 0.0
      %5315 = vmatpush1.msra.mxu0 %v1141
      %5316 = vmatprep.subr.mxu0 0.0
      %5317 = vmatpush2.msra.mxu0 0.0
      %5318 = vmatprep.subr.mxu0 0.0
      %5319 = vmatpush2.msra.mxu0 0.0
      %5320 = vmatprep.subr.mxu0 0.0
      %5321 = vmatpush2.msra.mxu0 0.0
      %5322 = vmatprep.subr.mxu0 0.0
      %5323 = vmatpush2.msra.mxu0 0.0
      %5324 = vmatprep.subr.mxu0 0.0
      %5325 = vmatpush2.msra.mxu0 0.0
      %5326 = vmatprep.subr.mxu0 0.0
      %5327 = vmatpush2.msra.mxu0 0.0
      %5328 = vmatprep.subr.mxu0 0.0
      %5329 = vmatpush2.msra.mxu0 0.0
      %5330 = vmatprep.subr.mxu0 0.0
      %5331 = vmatpush2.msra.mxu0 0.0
      %5332 = vmatprep.subr.mxu0 0.0
      %5333 = vmatpush2.msra.mxu0 0.0
      %5334 = vmatprep.subr.mxu0 0.0
      %5335 = vmatpush2.msra.mxu0 0.0
      %5336 = vmatprep.subr.mxu0 0.0
      %5337 = vmatpush2.msra.mxu0 0.0
      %5338 = vmatprep.subr.mxu0 0.0
      %5339 = vmatpush2.msra.mxu0 0.0
      %5340 = vmatprep.subr.mxu0 0.0
      %5341 = vmatpush2.msra.mxu0 0.0
      %5342 = vmatprep.subr.mxu0 0.0
      %5343 = vmatpush2.msra.mxu0 0.0
      %5344 = vmatprep.subr.mxu0 0.0
      %5345 = vmatpush2.msra.mxu0 0.0
      %5346 = vmatprep.subr.mxu0 0.0
      %5347 = vmatpush2.msra.mxu0 0.0
      %5348 = vmatprep.mubr.f32.mxu0 0.0
      %5349 = vmatmul.mubr.f32.gmra.mxu0 %v5280
      %v5350 = vpop.f32.mrf.mxu0
      %v5351 = vadd.f32 0.0, %v5350
      %v5352 = vpop.f32.mrf.mxu0
      %5353 = vmatprep.mubr.f32.mxu0 0.0
      %5354 = vmatmul.mubr.f32.gmra.mxu0 %v5282
      %v5355 = vpop.f32.mrf.mxu0
      %v5356 = vadd.f32 0.0, %v5355
      %v5357 = vpop.f32.mrf.mxu0
      %5358 = vdwg.mxu0
      %v5359 = vadd.f32 %v5250, %v5351
      %v5360 = vadd.f32 %v5251, %v5356
      %v5361 = vrot.slane %v3691, 5
      %v5362 = vrot.slane %v3764, 4
      %v5363 = vsel %vm4812, %v5362, %v5361
      %v5364 = vrot.slane %v3837, 3
      %v5365 = vsel %vm4815, %v5364, %v5363
      %v5366 = vrot.slane %v3910, 2
      %v5367 = vsel %vm4818, %v5366, %v5365
      %v5368 = vrot.slane %v3983, 1
      %v5369 = vsel %vm4821, %v5368, %v5367
      %v5370 = vsel %vm4824, %v4056, %v5369
      %v5371 = vrot.slane %v4129, 7
      %v5372 = vsel %vm4827, %v5371, %v5370
      %v5373 = vrot.slane %v4202, 6
      %v5374 = vsel %vm4830, %v5373, %v5372
      %v5375 = vrot.slane %v4275, 5
      %v5376 = vrot.slane %v4348, 4
      %v5377 = vsel %vm4812, %v5376, %v5375
      %v5378 = vrot.slane %v4421, 3
      %v5379 = vsel %vm4815, %v5378, %v5377
      %v5380 = vrot.slane %v4494, 2
      %v5381 = vsel %vm4818, %v5380, %v5379
      %v5382 = vrot.slane %v4567, 1
      %v5383 = vsel %vm4821, %v5382, %v5381
      %v5384 = vsel %vm4824, %v4640, %v5383
      %v5385 = vrot.slane %v4713, 7
      %v5386 = vsel %vm4827, %v5385, %v5384
      %v5387 = vrot.slane %v4786, 6
      %v5388 = vsel %vm4830, %v5387, %v5386
      %v5389 = vsel %vm1358, %v5374, 0
      %v5391 = vsel %vm1358, %v5388, 0
      %5393 = vmatprep.subr.mxu0 0.0
      %5394 = vmatpush1.msra.mxu0 0.0
      %5395 = vmatprep.subr.mxu0 0.0
      %5396 = vmatpush1.msra.mxu0 0.0
      %5397 = vmatprep.subr.mxu0 0.0
      %5398 = vmatpush1.msra.mxu0 0.0
      %5399 = vmatprep.subr.mxu0 0.0
      %5400 = vmatpush1.msra.mxu0 0.0
      %5401 = vmatprep.subr.mxu0 0.0
      %5402 = vmatpush1.msra.mxu0 0.0
      %5403 = vmatprep.subr.mxu0 0.0
      %5404 = vmatpush1.msra.mxu0 0.0
      %5405 = vmatprep.subr.mxu0 0.0
      %5406 = vmatpush1.msra.mxu0 0.0
      %5407 = vmatprep.subr.mxu0 0.0
      %5408 = vmatpush1.msra.mxu0 0.0
      %5409 = vmatprep.subr.mxu0 0.0
      %5410 = vmatpush1.msra.mxu0 0.0
      %5411 = vmatprep.subr.mxu0 0.0
      %5412 = vmatpush1.msra.mxu0 0.0
      %5413 = vmatprep.subr.mxu0 0.0
      %5414 = vmatpush1.msra.mxu0 0.0
      %5415 = vmatprep.subr.mxu0 0.0
      %5416 = vmatpush1.msra.mxu0 0.0
      %5417 = vmatprep.subr.mxu0 0.0
      %5418 = vmatpush1.msra.mxu0 %v1148
      %5419 = vmatprep.subr.mxu0 0.0
      %5420 = vmatpush1.msra.mxu0 %v1147
      %5421 = vmatprep.subr.mxu0 0.0
      %5422 = vmatpush1.msra.mxu0 %v1146
      %5423 = vmatprep.subr.mxu0 0.0
      %5424 = vmatpush1.msra.mxu0 %v1145
      %5425 = vmatprep.subr.mxu0 0.0
      %5426 = vmatpush2.msra.mxu0 0.0
      %5427 = vmatprep.subr.mxu0 0.0
      %5428 = vmatpush2.msra.mxu0 0.0
      %5429 = vmatprep.subr.mxu0 0.0
      %5430 = vmatpush2.msra.mxu0 0.0
      %5431 = vmatprep.subr.mxu0 0.0
      %5432 = vmatpush2.msra.mxu0 0.0
      %5433 = vmatprep.subr.mxu0 0.0
      %5434 = vmatpush2.msra.mxu0 0.0
      %5435 = vmatprep.subr.mxu0 0.0
      %5436 = vmatpush2.msra.mxu0 0.0
      %5437 = vmatprep.subr.mxu0 0.0
      %5438 = vmatpush2.msra.mxu0 0.0
      %5439 = vmatprep.subr.mxu0 0.0
      %5440 = vmatpush2.msra.mxu0 0.0
      %5441 = vmatprep.subr.mxu0 0.0
      %5442 = vmatpush2.msra.mxu0 0.0
      %5443 = vmatprep.subr.mxu0 0.0
      %5444 = vmatpush2.msra.mxu0 0.0
      %5445 = vmatprep.subr.mxu0 0.0
      %5446 = vmatpush2.msra.mxu0 0.0
      %5447 = vmatprep.subr.mxu0 0.0
      %5448 = vmatpush2.msra.mxu0 0.0
      %5449 = vmatprep.subr.mxu0 0.0
      %5450 = vmatpush2.msra.mxu0 0.0
      %5451 = vmatprep.subr.mxu0 0.0
      %5452 = vmatpush2.msra.mxu0 0.0
      %5453 = vmatprep.subr.mxu0 0.0
      %5454 = vmatpush2.msra.mxu0 0.0
      %5455 = vmatprep.subr.mxu0 0.0
      %5456 = vmatpush2.msra.mxu0 0.0
      %5457 = vmatprep.mubr.f32.mxu0 0.0
      %5458 = vmatmul.mubr.f32.gmra.mxu0 %v5389
      %v5459 = vpop.f32.mrf.mxu0
      %v5460 = vadd.f32 0.0, %v5459
      %v5461 = vpop.f32.mrf.mxu0
      %5462 = vmatprep.mubr.f32.mxu0 0.0
      %5463 = vmatmul.mubr.f32.gmra.mxu0 %v5391
      %v5464 = vpop.f32.mrf.mxu0
      %v5465 = vadd.f32 0.0, %v5464
      %v5466 = vpop.f32.mrf.mxu0
      %5467 = vdwg.mxu0
      %v5468 = vadd.f32 %v5359, %v5460
      %v5469 = vadd.f32 %v5360, %v5465
      %v5470 = vrot.slane %v3691, 6
      %v5471 = vrot.slane %v3764, 5
      %v5472 = vsel %vm4812, %v5471, %v5470
      %v5473 = vrot.slane %v3837, 4
      %v5474 = vsel %vm4815, %v5473, %v5472
      %v5475 = vrot.slane %v3910, 3
      %v5476 = vsel %vm4818, %v5475, %v5474
      %v5477 = vrot.slane %v3983, 2
      %v5478 = vsel %vm4821, %v5477, %v5476
      %v5479 = vrot.slane %v4056, 1
      %v5480 = vsel %vm4824, %v5479, %v5478
      %v5481 = vsel %vm4827, %v4129, %v5480
      %v5482 = vrot.slane %v4202, 7
      %v5483 = vsel %vm4830, %v5482, %v5481
      %v5484 = vrot.slane %v4275, 6
      %v5485 = vrot.slane %v4348, 5
      %v5486 = vsel %vm4812, %v5485, %v5484
      %v5487 = vrot.slane %v4421, 4
      %v5488 = vsel %vm4815, %v5487, %v5486
      %v5489 = vrot.slane %v4494, 3
      %v5490 = vsel %vm4818, %v5489, %v5488
      %v5491 = vrot.slane %v4567, 2
      %v5492 = vsel %vm4821, %v5491, %v5490
      %v5493 = vrot.slane %v4640, 1
      %v5494 = vsel %vm4824, %v5493, %v5492
      %v5495 = vsel %vm4827, %v4713, %v5494
      %v5496 = vrot.slane %v4786, 7
      %v5497 = vsel %vm4830, %v5496, %v5495
      %v5498 = vsel %vm1358, %v5483, 0
      %v5500 = vsel %vm1358, %v5497, 0
      %5502 = vmatprep.subr.mxu0 0.0
      %5503 = vmatpush1.msra.mxu0 0.0
      %5504 = vmatprep.subr.mxu0 0.0
      %5505 = vmatpush1.msra.mxu0 0.0
      %5506 = vmatprep.subr.mxu0 0.0
      %5507 = vmatpush1.msra.mxu0 0.0
      %5508 = vmatprep.subr.mxu0 0.0
      %5509 = vmatpush1.msra.mxu0 0.0
      %5510 = vmatprep.subr.mxu0 0.0
      %5511 = vmatpush1.msra.mxu0 0.0
      %5512 = vmatprep.subr.mxu0 0.0
      %5513 = vmatpush1.msra.mxu0 0.0
      %5514 = vmatprep.subr.mxu0 0.0
      %5515 = vmatpush1.msra.mxu0 0.0
      %5516 = vmatprep.subr.mxu0 0.0
      %5517 = vmatpush1.msra.mxu0 0.0
      %5518 = vmatprep.subr.mxu0 0.0
      %5519 = vmatpush1.msra.mxu0 0.0
      %5520 = vmatprep.subr.mxu0 0.0
      %5521 = vmatpush1.msra.mxu0 0.0
      %5522 = vmatprep.subr.mxu0 0.0
      %5523 = vmatpush1.msra.mxu0 0.0
      %5524 = vmatprep.subr.mxu0 0.0
      %5525 = vmatpush1.msra.mxu0 0.0
      %5526 = vmatprep.subr.mxu0 0.0
      %5527 = vmatpush1.msra.mxu0 %v1152
      %5528 = vmatprep.subr.mxu0 0.0
      %5529 = vmatpush1.msra.mxu0 %v1151
      %5530 = vmatprep.subr.mxu0 0.0
      %5531 = vmatpush1.msra.mxu0 %v1150
      %5532 = vmatprep.subr.mxu0 0.0
      %5533 = vmatpush1.msra.mxu0 %v1149
      %5534 = vmatprep.subr.mxu0 0.0
      %5535 = vmatpush2.msra.mxu0 0.0
      %5536 = vmatprep.subr.mxu0 0.0
      %5537 = vmatpush2.msra.mxu0 0.0
      %5538 = vmatprep.subr.mxu0 0.0
      %5539 = vmatpush2.msra.mxu0 0.0
      %5540 = vmatprep.subr.mxu0 0.0
      %5541 = vmatpush2.msra.mxu0 0.0
      %5542 = vmatprep.subr.mxu0 0.0
      %5543 = vmatpush2.msra.mxu0 0.0
      %5544 = vmatprep.subr.mxu0 0.0
      %5545 = vmatpush2.msra.mxu0 0.0
      %5546 = vmatprep.subr.mxu0 0.0
      %5547 = vmatpush2.msra.mxu0 0.0
      %5548 = vmatprep.subr.mxu0 0.0
      %5549 = vmatpush2.msra.mxu0 0.0
      %5550 = vmatprep.subr.mxu0 0.0
      %5551 = vmatpush2.msra.mxu0 0.0
      %5552 = vmatprep.subr.mxu0 0.0
      %5553 = vmatpush2.msra.mxu0 0.0
      %5554 = vmatprep.subr.mxu0 0.0
      %5555 = vmatpush2.msra.mxu0 0.0
      %5556 = vmatprep.subr.mxu0 0.0
      %5557 = vmatpush2.msra.mxu0 0.0
      %5558 = vmatprep.subr.mxu0 0.0
      %5559 = vmatpush2.msra.mxu0 0.0
      %5560 = vmatprep.subr.mxu0 0.0
      %5561 = vmatpush2.msra.mxu0 0.0
      %5562 = vmatprep.subr.mxu0 0.0
      %5563 = vmatpush2.msra.mxu0 0.0
      %5564 = vmatprep.subr.mxu0 0.0
      %5565 = vmatpush2.msra.mxu0 0.0
      %5566 = vmatprep.mubr.f32.mxu0 0.0
      %5567 = vmatmul.mubr.f32.gmra.mxu0 %v5498
      %v5568 = vpop.f32.mrf.mxu0
      %v5569 = vadd.f32 0.0, %v5568
      %v5570 = vpop.f32.mrf.mxu0
      %5571 = vmatprep.mubr.f32.mxu0 0.0
      %5572 = vmatmul.mubr.f32.gmra.mxu0 %v5500
      %v5573 = vpop.f32.mrf.mxu0
      %v5574 = vadd.f32 0.0, %v5573
      %v5575 = vpop.f32.mrf.mxu0
      %5576 = vdwg.mxu0
      %v5577 = vadd.f32 %v5468, %v5569
      %v5578 = vadd.f32 %v5469, %v5574
      %v5579 = vrot.slane %v3691, 7
      %v5580 = vrot.slane %v3764, 6
      %v5581 = vsel %vm4812, %v5580, %v5579
      %v5582 = vrot.slane %v3837, 5
      %v5583 = vsel %vm4815, %v5582, %v5581
      %v5584 = vrot.slane %v3910, 4
      %v5585 = vsel %vm4818, %v5584, %v5583
      %v5586 = vrot.slane %v3983, 3
      %v5587 = vsel %vm4821, %v5586, %v5585
      %v5588 = vrot.slane %v4056, 2
      %v5589 = vsel %vm4824, %v5588, %v5587
      %v5590 = vrot.slane %v4129, 1
      %v5591 = vsel %vm4827, %v5590, %v5589
      %v5592 = vsel %vm4830, %v4202, %v5591
      %v5593 = vrot.slane %v4275, 7
      %v5594 = vrot.slane %v4348, 6
      %v5595 = vsel %vm4812, %v5594, %v5593
      %v5596 = vrot.slane %v4421, 5
      %v5597 = vsel %vm4815, %v5596, %v5595
      %v5598 = vrot.slane %v4494, 4
      %v5599 = vsel %vm4818, %v5598, %v5597
      %v5600 = vrot.slane %v4567, 3
      %v5601 = vsel %vm4821, %v5600, %v5599
      %v5602 = vrot.slane %v4640, 2
      %v5603 = vsel %vm4824, %v5602, %v5601
      %v5604 = vrot.slane %v4713, 1
      %v5605 = vsel %vm4827, %v5604, %v5603
      %v5606 = vsel %vm4830, %v4786, %v5605
      %v5607 = vsel %vm1358, %v5592, 0
      %v5609 = vsel %vm1358, %v5606, 0
      %5611 = vmatprep.subr.mxu0 0.0
      %5612 = vmatpush1.msra.mxu0 0.0
      %5613 = vmatprep.subr.mxu0 0.0
      %5614 = vmatpush1.msra.mxu0 0.0
      %5615 = vmatprep.subr.mxu0 0.0
      %5616 = vmatpush1.msra.mxu0 0.0
      %5617 = vmatprep.subr.mxu0 0.0
      %5618 = vmatpush1.msra.mxu0 0.0
      %5619 = vmatprep.subr.mxu0 0.0
      %5620 = vmatpush1.msra.mxu0 0.0
      %5621 = vmatprep.subr.mxu0 0.0
      %5622 = vmatpush1.msra.mxu0 0.0
      %5623 = vmatprep.subr.mxu0 0.0
      %5624 = vmatpush1.msra.mxu0 0.0
      %5625 = vmatprep.subr.mxu0 0.0
      %5626 = vmatpush1.msra.mxu0 0.0
      %5627 = vmatprep.subr.mxu0 0.0
      %5628 = vmatpush1.msra.mxu0 0.0
      %5629 = vmatprep.subr.mxu0 0.0
      %5630 = vmatpush1.msra.mxu0 0.0
      %5631 = vmatprep.subr.mxu0 0.0
      %5632 = vmatpush1.msra.mxu0 0.0
      %5633 = vmatprep.subr.mxu0 0.0
      %5634 = vmatpush1.msra.mxu0 0.0
      %5635 = vmatprep.subr.mxu0 0.0
      %5636 = vmatpush1.msra.mxu0 %v1156
      %5637 = vmatprep.subr.mxu0 0.0
      %5638 = vmatpush1.msra.mxu0 %v1155
      %5639 = vmatprep.subr.mxu0 0.0
      %5640 = vmatpush1.msra.mxu0 %v1154
      %5641 = vmatprep.subr.mxu0 0.0
      %5642 = vmatpush1.msra.mxu0 %v1153
      %5643 = vmatprep.subr.mxu0 0.0
      %5644 = vmatpush2.msra.mxu0 0.0
      %5645 = vmatprep.subr.mxu0 0.0
      %5646 = vmatpush2.msra.mxu0 0.0
      %5647 = vmatprep.subr.mxu0 0.0
      %5648 = vmatpush2.msra.mxu0 0.0
      %5649 = vmatprep.subr.mxu0 0.0
      %5650 = vmatpush2.msra.mxu0 0.0
      %5651 = vmatprep.subr.mxu0 0.0
      %5652 = vmatpush2.msra.mxu0 0.0
      %5653 = vmatprep.subr.mxu0 0.0
      %5654 = vmatpush2.msra.mxu0 0.0
      %5655 = vmatprep.subr.mxu0 0.0
      %5656 = vmatpush2.msra.mxu0 0.0
      %5657 = vmatprep.subr.mxu0 0.0
      %5658 = vmatpush2.msra.mxu0 0.0
      %5659 = vmatprep.subr.mxu0 0.0
      %5660 = vmatpush2.msra.mxu0 0.0
      %5661 = vmatprep.subr.mxu0 0.0
      %5662 = vmatpush2.msra.mxu0 0.0
      %5663 = vmatprep.subr.mxu0 0.0
      %5664 = vmatpush2.msra.mxu0 0.0
      %5665 = vmatprep.subr.mxu0 0.0
      %5666 = vmatpush2.msra.mxu0 0.0
      %5667 = vmatprep.subr.mxu0 0.0
      %5668 = vmatpush2.msra.mxu0 0.0
      %5669 = vmatprep.subr.mxu0 0.0
      %5670 = vmatpush2.msra.mxu0 0.0
      %5671 = vmatprep.subr.mxu0 0.0
      %5672 = vmatpush2.msra.mxu0 0.0
      %5673 = vmatprep.subr.mxu0 0.0
      %5674 = vmatpush2.msra.mxu0 0.0
      %5675 = vmatprep.mubr.f32.mxu0 0.0
      %5676 = vmatmul.mubr.f32.gmra.mxu0 %v5607
      %v5677 = vpop.f32.mrf.mxu0
      %v5678 = vadd.f32 0.0, %v5677
      %v5679 = vpop.f32.mrf.mxu0
      %5680 = vmatprep.mubr.f32.mxu0 0.0
      %5681 = vmatmul.mubr.f32.gmra.mxu0 %v5609
      %v5682 = vpop.f32.mrf.mxu0
      %v5683 = vadd.f32 0.0, %v5682
      %v5684 = vpop.f32.mrf.mxu0
      %5685 = vdwg.mxu0
      %v5686 = vadd.f32 %v5577, %v5678
      %v5687 = vadd.f32 %v5578, %v5683
      %vm5688 = vcmp.gt.f32.partialorder %v5686, 0.0
      %vm5689 = vcmp.gt.f32.partialorder %v5687, 0.0
      %v5690 = vmin.f32 %v5686, 0.0
      %v5691 = vmin.f32 %v5687, 0.0
      %v5692 = vmul.f32 %v5690, 1.442695
      %v5693 = vpow.pop %v5692
      %v5694 = vmul.f32 %v5691, 1.442695
      %v5695 = vpow.pop %v5694
      %v5696 = vsub.f32 %v5693, 1.0
      %v5697 = vsub.f32 %v5695, 1.0
      %v5698 = vsel %vm5688, %v5686, %v5696
      %v5699 = vsel %vm5689, %v5687, %v5697
      %v5701 = vlaneseq
      %v5702 = vshrl.u32 %v5701, 7
      %v5703 = vsub.s32 0, %v5702
      %v5704 = vrot.slane %v1166, %v5703
      %vm5706 = vcmask 523264
      %v5708 = vsel %vm5706, %v5698, 0
      %v5711 = vsel %vm5706, %v5699, 0
      %5713 = vmatprep.subr.mxu0 0.0
      %5714 = vmatpush1.msra.mxu0 0.0
      %5715 = vmatprep.subr.mxu0 0.0
      %5716 = vmatpush1.msra.mxu0 0.0
      %5717 = vmatprep.subr.mxu0 0.0
      %5718 = vmatpush1.msra.mxu0 0.0
      %5719 = vmatprep.subr.mxu0 0.0
      %5720 = vmatpush1.msra.mxu0 0.0
      %5721 = vmatprep.subr.mxu0 0.0
      %5722 = vmatpush1.msra.mxu0 0.0
      %5723 = vmatprep.subr.mxu0 0.0
      %5724 = vmatpush1.msra.mxu0 0.0
      %5725 = vmatprep.subr.mxu0 0.0
      %5726 = vmatpush1.msra.mxu0 0.0
      %5727 = vmatprep.subr.mxu0 0.0
      %5728 = vmatpush1.msra.mxu0 0.0
      %5729 = vmatprep.subr.mxu0 0.0
      %5730 = vmatpush1.msra.mxu0 %v1165
      %5731 = vmatprep.subr.mxu0 0.0
      %5732 = vmatpush1.msra.mxu0 %v1164
      %5733 = vmatprep.subr.mxu0 0.0
      %5734 = vmatpush1.msra.mxu0 %v1163
      %5735 = vmatprep.subr.mxu0 0.0
      %5736 = vmatpush1.msra.mxu0 %v1162
      %5737 = vmatprep.subr.mxu0 0.0
      %5738 = vmatpush1.msra.mxu0 %v1161
      %5739 = vmatprep.subr.mxu0 0.0
      %5740 = vmatpush1.msra.mxu0 %v1160
      %5741 = vmatprep.subr.mxu0 0.0
      %5742 = vmatpush1.msra.mxu0 %v1159
      %5743 = vmatprep.subr.mxu0 0.0
      %5744 = vmatpush1.msra.mxu0 %v1158
      %5745 = vmatprep.subr.mxu0 0.0
      %5746 = vmatpush2.msra.mxu0 0.0
      %5747 = vmatprep.subr.mxu0 0.0
      %5748 = vmatpush2.msra.mxu0 0.0
      %5749 = vmatprep.subr.mxu0 0.0
      %5750 = vmatpush2.msra.mxu0 0.0
      %5751 = vmatprep.subr.mxu0 0.0
      %5752 = vmatpush2.msra.mxu0 0.0
      %5753 = vmatprep.subr.mxu0 0.0
      %5754 = vmatpush2.msra.mxu0 0.0
      %5755 = vmatprep.subr.mxu0 0.0
      %5756 = vmatpush2.msra.mxu0 0.0
      %5757 = vmatprep.subr.mxu0 0.0
      %5758 = vmatpush2.msra.mxu0 0.0
      %5759 = vmatprep.subr.mxu0 0.0
      %5760 = vmatpush2.msra.mxu0 0.0
      %5761 = vmatprep.subr.mxu0 0.0
      %5762 = vmatpush2.msra.mxu0 0.0
      %5763 = vmatprep.subr.mxu0 0.0
      %5764 = vmatpush2.msra.mxu0 0.0
      %5765 = vmatprep.subr.mxu0 0.0
      %5766 = vmatpush2.msra.mxu0 0.0
      %5767 = vmatprep.subr.mxu0 0.0
      %5768 = vmatpush2.msra.mxu0 0.0
      %5769 = vmatprep.subr.mxu0 0.0
      %5770 = vmatpush2.msra.mxu0 0.0
      %5771 = vmatprep.subr.mxu0 0.0
      %5772 = vmatpush2.msra.mxu0 0.0
      %5773 = vmatprep.subr.mxu0 0.0
      %5774 = vmatpush2.msra.mxu0 0.0
      %5775 = vmatprep.subr.mxu0 0.0
      %5776 = vmatpush2.msra.mxu0 0.0
      %5777 = vmatprep.mubr.f32.mxu0 0.0
      %5778 = vmatmul.mubr.f32.gmra.mxu0 %v5708
      %v5779 = vpop.f32.mrf.mxu0
      %v5780 = vadd.f32 %v5704, %v5779
      %v5781 = vpop.f32.mrf.mxu0
      %5782 = vmatprep.mubr.f32.mxu0 0.0
      %5783 = vmatmul.mubr.f32.gmra.mxu0 %v5711
      %v5784 = vpop.f32.mrf.mxu0
      %v5785 = vadd.f32 %v5704, %v5784
      %v5786 = vpop.f32.mrf.mxu0
      %5787 = vdwg.mxu0
      %vm5788 = vcmp.gt.f32.partialorder %v5780, 0.0
      %vm5789 = vcmp.gt.f32.partialorder %v5785, 0.0
      %v5790 = vmin.f32 %v5780, 0.0
      %v5791 = vmin.f32 %v5785, 0.0
      %v5792 = vmul.f32 %v5790, 1.442695
      %v5793 = vpow.pop %v5792
      %v5794 = vmul.f32 %v5791, 1.442695
      %v5795 = vpow.pop %v5794
      %v5796 = vsub.f32 %v5793, 1.0
      %v5797 = vsub.f32 %v5795, 1.0
      %v5798 = vsel %vm5788, %v5780, %v5796
      %v5799 = vsel %vm5789, %v5785, %v5797
      %v5801 = vlaneseq
      %v5802 = vshrl.u32 %v5801, 7
      %v5803 = vsub.s32 0, %v5802
      %v5804 = vrot.slane %v1175, %v5803
      %v5807 = vsel %vm5706, %v5798, 0
      %v5810 = vsel %vm5706, %v5799, 0
      %5812 = vmatprep.subr.mxu0 0.0
      %5813 = vmatpush1.msra.mxu0 0.0
      %5814 = vmatprep.subr.mxu0 0.0
      %5815 = vmatpush1.msra.mxu0 0.0
      %5816 = vmatprep.subr.mxu0 0.0
      %5817 = vmatpush1.msra.mxu0 0.0
      %5818 = vmatprep.subr.mxu0 0.0
      %5819 = vmatpush1.msra.mxu0 0.0
      %5820 = vmatprep.subr.mxu0 0.0
      %5821 = vmatpush1.msra.mxu0 0.0
      %5822 = vmatprep.subr.mxu0 0.0
      %5823 = vmatpush1.msra.mxu0 0.0
      %5824 = vmatprep.subr.mxu0 0.0
      %5825 = vmatpush1.msra.mxu0 0.0
      %5826 = vmatprep.subr.mxu0 0.0
      %5827 = vmatpush1.msra.mxu0 0.0
      %5828 = vmatprep.subr.mxu0 0.0
      %5829 = vmatpush1.msra.mxu0 %v1174
      %5830 = vmatprep.subr.mxu0 0.0
      %5831 = vmatpush1.msra.mxu0 %v1173
      %5832 = vmatprep.subr.mxu0 0.0
      %5833 = vmatpush1.msra.mxu0 %v1172
      %5834 = vmatprep.subr.mxu0 0.0
      %5835 = vmatpush1.msra.mxu0 %v1171
      %5836 = vmatprep.subr.mxu0 0.0
      %5837 = vmatpush1.msra.mxu0 %v1170
      %5838 = vmatprep.subr.mxu0 0.0
      %5839 = vmatpush1.msra.mxu0 %v1169
      %5840 = vmatprep.subr.mxu0 0.0
      %5841 = vmatpush1.msra.mxu0 %v1168
      %5842 = vmatprep.subr.mxu0 0.0
      %5843 = vmatpush1.msra.mxu0 %v1167
      %5844 = vmatprep.subr.mxu0 0.0
      %5845 = vmatpush2.msra.mxu0 0.0
      %5846 = vmatprep.subr.mxu0 0.0
      %5847 = vmatpush2.msra.mxu0 0.0
      %5848 = vmatprep.subr.mxu0 0.0
      %5849 = vmatpush2.msra.mxu0 0.0
      %5850 = vmatprep.subr.mxu0 0.0
      %5851 = vmatpush2.msra.mxu0 0.0
      %5852 = vmatprep.subr.mxu0 0.0
      %5853 = vmatpush2.msra.mxu0 0.0
      %5854 = vmatprep.subr.mxu0 0.0
      %5855 = vmatpush2.msra.mxu0 0.0
      %5856 = vmatprep.subr.mxu0 0.0
      %5857 = vmatpush2.msra.mxu0 0.0
      %5858 = vmatprep.subr.mxu0 0.0
      %5859 = vmatpush2.msra.mxu0 0.0
      %5860 = vmatprep.subr.mxu0 0.0
      %5861 = vmatpush2.msra.mxu0 0.0
      %5862 = vmatprep.subr.mxu0 0.0
      %5863 = vmatpush2.msra.mxu0 0.0
      %5864 = vmatprep.subr.mxu0 0.0
      %5865 = vmatpush2.msra.mxu0 0.0
      %5866 = vmatprep.subr.mxu0 0.0
      %5867 = vmatpush2.msra.mxu0 0.0
      %5868 = vmatprep.subr.mxu0 0.0
      %5869 = vmatpush2.msra.mxu0 0.0
      %5870 = vmatprep.subr.mxu0 0.0
      %5871 = vmatpush2.msra.mxu0 0.0
      %5872 = vmatprep.subr.mxu0 0.0
      %5873 = vmatpush2.msra.mxu0 0.0
      %5874 = vmatprep.subr.mxu0 0.0
      %5875 = vmatpush2.msra.mxu0 0.0
      %5876 = vmatprep.mubr.f32.mxu0 0.0
      %5877 = vmatmul.mubr.f32.gmra.mxu0 %v5807
      %v5878 = vpop.f32.mrf.mxu0
      %v5879 = vadd.f32 %v5804, %v5878
      %v5880 = vpop.f32.mrf.mxu0
      %5881 = vmatprep.mubr.f32.mxu0 0.0
      %5882 = vmatmul.mubr.f32.gmra.mxu0 %v5810
      %v5883 = vpop.f32.mrf.mxu0
      %v5884 = vadd.f32 %v5804, %v5883
      %v5885 = vpop.f32.mrf.mxu0
      %5886 = vdwg.mxu0
      %vm5887 = vcmp.gt.f32.partialorder %v5879, 0.0
      %vm5888 = vcmp.gt.f32.partialorder %v5884, 0.0
      %v5889 = vmin.f32 %v5879, 0.0
      %v5890 = vmin.f32 %v5884, 0.0
      %v5891 = vmul.f32 %v5889, 1.442695
      %v5892 = vpow.pop %v5891
      %v5893 = vmul.f32 %v5890, 1.442695
      %v5894 = vpow.pop %v5893
      %v5895 = vsub.f32 %v5892, 1.0
      %v5896 = vsub.f32 %v5894, 1.0
      %v5897 = vsel %vm5887, %v5879, %v5895
      %v5898 = vsel %vm5888, %v5884, %v5896
      %v5900 = vlaneseq
      %v5901 = vshrl.u32 %v5900, 7
      %v5902 = vsub.s32 0, %v5901
      %v5903 = vrot.slane %v1180, %v5902
      %v5906 = vsel %vm1358, %v5897, 0
      %v5909 = vsel %vm1358, %v5898, 0
      %5911 = vmatprep.subr.mxu0 0.0
      %5912 = vmatpush1.msra.mxu0 0.0
      %5913 = vmatprep.subr.mxu0 0.0
      %5914 = vmatpush1.msra.mxu0 0.0
      %5915 = vmatprep.subr.mxu0 0.0
      %5916 = vmatpush1.msra.mxu0 0.0
      %5917 = vmatprep.subr.mxu0 0.0
      %5918 = vmatpush1.msra.mxu0 0.0
      %5919 = vmatprep.subr.mxu0 0.0
      %5920 = vmatpush1.msra.mxu0 0.0
      %5921 = vmatprep.subr.mxu0 0.0
      %5922 = vmatpush1.msra.mxu0 0.0
      %5923 = vmatprep.subr.mxu0 0.0
      %5924 = vmatpush1.msra.mxu0 0.0
      %5925 = vmatprep.subr.mxu0 0.0
      %5926 = vmatpush1.msra.mxu0 0.0
      %5927 = vmatprep.subr.mxu0 0.0
      %5928 = vmatpush1.msra.mxu0 0.0
      %5929 = vmatprep.subr.mxu0 0.0
      %5930 = vmatpush1.msra.mxu0 0.0
      %5931 = vmatprep.subr.mxu0 0.0
      %5932 = vmatpush1.msra.mxu0 0.0
      %5933 = vmatprep.subr.mxu0 0.0
      %5934 = vmatpush1.msra.mxu0 0.0
      %5935 = vmatprep.subr.mxu0 0.0
      %5936 = vmatpush1.msra.mxu0 %v1179
      %5937 = vmatprep.subr.mxu0 0.0
      %5938 = vmatpush1.msra.mxu0 %v1178
      %5939 = vmatprep.subr.mxu0 0.0
      %5940 = vmatpush1.msra.mxu0 %v1177
      %5941 = vmatprep.subr.mxu0 0.0
      %5942 = vmatpush1.msra.mxu0 %v1176
      %5943 = vmatprep.subr.mxu0 0.0
      %5944 = vmatpush2.msra.mxu0 0.0
      %5945 = vmatprep.subr.mxu0 0.0
      %5946 = vmatpush2.msra.mxu0 0.0
      %5947 = vmatprep.subr.mxu0 0.0
      %5948 = vmatpush2.msra.mxu0 0.0
      %5949 = vmatprep.subr.mxu0 0.0
      %5950 = vmatpush2.msra.mxu0 0.0
      %5951 = vmatprep.subr.mxu0 0.0
      %5952 = vmatpush2.msra.mxu0 0.0
      %5953 = vmatprep.subr.mxu0 0.0
      %5954 = vmatpush2.msra.mxu0 0.0
      %5955 = vmatprep.subr.mxu0 0.0
      %5956 = vmatpush2.msra.mxu0 0.0
      %5957 = vmatprep.subr.mxu0 0.0
      %5958 = vmatpush2.msra.mxu0 0.0
      %5959 = vmatprep.subr.mxu0 0.0
      %5960 = vmatpush2.msra.mxu0 0.0
      %5961 = vmatprep.subr.mxu0 0.0
      %5962 = vmatpush2.msra.mxu0 0.0
      %5963 = vmatprep.subr.mxu0 0.0
      %5964 = vmatpush2.msra.mxu0 0.0
      %5965 = vmatprep.subr.mxu0 0.0
      %5966 = vmatpush2.msra.mxu0 0.0
      %5967 = vmatprep.subr.mxu0 0.0
      %5968 = vmatpush2.msra.mxu0 0.0
      %5969 = vmatprep.subr.mxu0 0.0
      %5970 = vmatpush2.msra.mxu0 0.0
      %5971 = vmatprep.subr.mxu0 0.0
      %5972 = vmatpush2.msra.mxu0 0.0
      %5973 = vmatprep.subr.mxu0 0.0
      %5974 = vmatpush2.msra.mxu0 0.0
      %5975 = vmatprep.mubr.f32.mxu0 0.0
      %5976 = vmatmul.mubr.f32.gmra.mxu0 %v5906
      %v5977 = vpop.f32.mrf.mxu0
      %v5978 = vadd.f32 %v5903, %v5977
      %v5979 = vpop.f32.mrf.mxu0
      %5980 = vmatprep.mubr.f32.mxu0 0.0
      %5981 = vmatmul.mubr.f32.gmra.mxu0 %v5909
      %v5982 = vpop.f32.mrf.mxu0
      %v5983 = vadd.f32 %v5903, %v5982
      %v5984 = vpop.f32.mrf.mxu0
      %5985 = vdwg.mxu0
      %vm5986 = vcmp.gt.f32.partialorder %v5978, 0.0
      %vm5987 = vcmp.gt.f32.partialorder %v5983, 0.0
      %v5988 = vmin.f32 %v5978, 0.0
      %v5989 = vmin.f32 %v5983, 0.0
      %v5990 = vmul.f32 %v5988, 1.442695
      %v5991 = vpow.pop %v5990
      %v5992 = vmul.f32 %v5989, 1.442695
      %v5993 = vpow.pop %v5992
      %v5994 = vsub.f32 %v5991, 1.0
      %v5995 = vsub.f32 %v5993, 1.0
      %v5996 = vsel %vm5986, %v5978, %v5994
      %v5997 = vsel %vm5987, %v5983, %v5995
      %v5999 = vlaneseq
      %v6000 = vshrl.u32 %v5999, 7
      %v6001 = vsub.s32 0, %v6000
      %v6002 = vrot.slane %v1185, %v6001
      %v6005 = vsel %vm1358, %v5996, 0
      %v6008 = vsel %vm1358, %v5997, 0
      %6010 = vmatprep.subr.mxu0 0.0
      %6011 = vmatpush1.msra.mxu0 0.0
      %6012 = vmatprep.subr.mxu0 0.0
      %6013 = vmatpush1.msra.mxu0 0.0
      %6014 = vmatprep.subr.mxu0 0.0
      %6015 = vmatpush1.msra.mxu0 0.0
      %6016 = vmatprep.subr.mxu0 0.0
      %6017 = vmatpush1.msra.mxu0 0.0
      %6018 = vmatprep.subr.mxu0 0.0
      %6019 = vmatpush1.msra.mxu0 0.0
      %6020 = vmatprep.subr.mxu0 0.0
      %6021 = vmatpush1.msra.mxu0 0.0
      %6022 = vmatprep.subr.mxu0 0.0
      %6023 = vmatpush1.msra.mxu0 0.0
      %6024 = vmatprep.subr.mxu0 0.0
      %6025 = vmatpush1.msra.mxu0 0.0
      %6026 = vmatprep.subr.mxu0 0.0
      %6027 = vmatpush1.msra.mxu0 0.0
      %6028 = vmatprep.subr.mxu0 0.0
      %6029 = vmatpush1.msra.mxu0 0.0
      %6030 = vmatprep.subr.mxu0 0.0
      %6031 = vmatpush1.msra.mxu0 0.0
      %6032 = vmatprep.subr.mxu0 0.0
      %6033 = vmatpush1.msra.mxu0 0.0
      %6034 = vmatprep.subr.mxu0 0.0
      %6035 = vmatpush1.msra.mxu0 %v1184
      %6036 = vmatprep.subr.mxu0 0.0
      %6037 = vmatpush1.msra.mxu0 %v1183
      %6038 = vmatprep.subr.mxu0 0.0
      %6039 = vmatpush1.msra.mxu0 %v1182
      %6040 = vmatprep.subr.mxu0 0.0
      %6041 = vmatpush1.msra.mxu0 %v1181
      %6042 = vmatprep.subr.mxu0 0.0
      %6043 = vmatpush2.msra.mxu0 0.0
      %6044 = vmatprep.subr.mxu0 0.0
      %6045 = vmatpush2.msra.mxu0 0.0
      %6046 = vmatprep.subr.mxu0 0.0
      %6047 = vmatpush2.msra.mxu0 0.0
      %6048 = vmatprep.subr.mxu0 0.0
      %6049 = vmatpush2.msra.mxu0 0.0
      %6050 = vmatprep.subr.mxu0 0.0
      %6051 = vmatpush2.msra.mxu0 0.0
      %6052 = vmatprep.subr.mxu0 0.0
      %6053 = vmatpush2.msra.mxu0 0.0
      %6054 = vmatprep.subr.mxu0 0.0
      %6055 = vmatpush2.msra.mxu0 0.0
      %6056 = vmatprep.subr.mxu0 0.0
      %6057 = vmatpush2.msra.mxu0 0.0
      %6058 = vmatprep.subr.mxu0 0.0
      %6059 = vmatpush2.msra.mxu0 0.0
      %6060 = vmatprep.subr.mxu0 0.0
      %6061 = vmatpush2.msra.mxu0 0.0
      %6062 = vmatprep.subr.mxu0 0.0
      %6063 = vmatpush2.msra.mxu0 0.0
      %6064 = vmatprep.subr.mxu0 0.0
      %6065 = vmatpush2.msra.mxu0 0.0
      %6066 = vmatprep.subr.mxu0 0.0
      %6067 = vmatpush2.msra.mxu0 0.0
      %6068 = vmatprep.subr.mxu0 0.0
      %6069 = vmatpush2.msra.mxu0 0.0
      %6070 = vmatprep.subr.mxu0 0.0
      %6071 = vmatpush2.msra.mxu0 0.0
      %6072 = vmatprep.subr.mxu0 0.0
      %6073 = vmatpush2.msra.mxu0 0.0
      %6074 = vmatprep.mubr.f32.mxu0 0.0
      %6075 = vmatmul.mubr.f32.gmra.mxu0 %v6005
      %v6076 = vpop.f32.mrf.mxu0
      %v6077 = vadd.f32 %v6002, %v6076
      %v6078 = vpop.f32.mrf.mxu0
      %6079 = vmatprep.mubr.f32.mxu0 0.0
      %6080 = vmatmul.mubr.f32.gmra.mxu0 %v6008
      %v6081 = vpop.f32.mrf.mxu0
      %v6082 = vadd.f32 %v6002, %v6081
      %v6083 = vpop.f32.mrf.mxu0
      %6084 = vdwg.mxu0
      %vm6085 = vcmp.gt.f32.partialorder %v6077, 0.0
      %vm6086 = vcmp.gt.f32.partialorder %v6082, 0.0
      %v6087 = vmin.f32 %v6077, 0.0
      %v6088 = vmin.f32 %v6082, 0.0
      %v6089 = vmul.f32 %v6087, 1.442695
      %v6090 = vpow.pop %v6089
      %v6091 = vmul.f32 %v6088, 1.442695
      %v6092 = vpow.pop %v6091
      %v6093 = vsub.f32 %v6090, 1.0
      %v6094 = vsub.f32 %v6092, 1.0
      %v6095 = vsel %vm6085, %v6077, %v6093
      %v6096 = vsel %vm6086, %v6082, %v6094
      %v6098 = vlaneseq
      %v6099 = vshrl.u32 %v6098, 7
      %v6100 = vsub.s32 0, %v6099
      %v6101 = vrot.slane %v1188, %v6100
      %vm6103 = vcmask 130048
      %v6105 = vsel %vm6103, %v6095, 0
      %v6108 = vsel %vm6103, %v6096, 0
      %6110 = vmatprep.subr.mxu0 0.0
      %6111 = vmatpush1.msra.mxu0 0.0
      %6112 = vmatprep.subr.mxu0 0.0
      %6113 = vmatpush1.msra.mxu0 0.0
      %6114 = vmatprep.subr.mxu0 0.0
      %6115 = vmatpush1.msra.mxu0 0.0
      %6116 = vmatprep.subr.mxu0 0.0
      %6117 = vmatpush1.msra.mxu0 0.0
      %6118 = vmatprep.subr.mxu0 0.0
      %6119 = vmatpush1.msra.mxu0 0.0
      %6120 = vmatprep.subr.mxu0 0.0
      %6121 = vmatpush1.msra.mxu0 0.0
      %6122 = vmatprep.subr.mxu0 0.0
      %6123 = vmatpush1.msra.mxu0 0.0
      %6124 = vmatprep.subr.mxu0 0.0
      %6125 = vmatpush1.msra.mxu0 0.0
      %6126 = vmatprep.subr.mxu0 0.0
      %6127 = vmatpush1.msra.mxu0 0.0
      %6128 = vmatprep.subr.mxu0 0.0
      %6129 = vmatpush1.msra.mxu0 0.0
      %6130 = vmatprep.subr.mxu0 0.0
      %6131 = vmatpush1.msra.mxu0 0.0
      %6132 = vmatprep.subr.mxu0 0.0
      %6133 = vmatpush1.msra.mxu0 0.0
      %6134 = vmatprep.subr.mxu0 0.0
      %6135 = vmatpush1.msra.mxu0 0.0
      %6136 = vmatprep.subr.mxu0 0.0
      %6137 = vmatpush1.msra.mxu0 0.0
      %6138 = vmatprep.subr.mxu0 0.0
      %6139 = vmatpush1.msra.mxu0 %v1187
      %6140 = vmatprep.subr.mxu0 0.0
      %6141 = vmatpush1.msra.mxu0 %v1186
      %6142 = vmatprep.subr.mxu0 0.0
      %6143 = vmatpush2.msra.mxu0 0.0
      %6144 = vmatprep.subr.mxu0 0.0
      %6145 = vmatpush2.msra.mxu0 0.0
      %6146 = vmatprep.subr.mxu0 0.0
      %6147 = vmatpush2.msra.mxu0 0.0
      %6148 = vmatprep.subr.mxu0 0.0
      %6149 = vmatpush2.msra.mxu0 0.0
      %6150 = vmatprep.subr.mxu0 0.0
      %6151 = vmatpush2.msra.mxu0 0.0
      %6152 = vmatprep.subr.mxu0 0.0
      %6153 = vmatpush2.msra.mxu0 0.0
      %6154 = vmatprep.subr.mxu0 0.0
      %6155 = vmatpush2.msra.mxu0 0.0
      %6156 = vmatprep.subr.mxu0 0.0
      %6157 = vmatpush2.msra.mxu0 0.0
      %6158 = vmatprep.subr.mxu0 0.0
      %6159 = vmatpush2.msra.mxu0 0.0
      %6160 = vmatprep.subr.mxu0 0.0
      %6161 = vmatpush2.msra.mxu0 0.0
      %6162 = vmatprep.subr.mxu0 0.0
      %6163 = vmatpush2.msra.mxu0 0.0
      %6164 = vmatprep.subr.mxu0 0.0
      %6165 = vmatpush2.msra.mxu0 0.0
      %6166 = vmatprep.subr.mxu0 0.0
      %6167 = vmatpush2.msra.mxu0 0.0
      %6168 = vmatprep.subr.mxu0 0.0
      %6169 = vmatpush2.msra.mxu0 0.0
      %6170 = vmatprep.subr.mxu0 0.0
      %6171 = vmatpush2.msra.mxu0 0.0
      %6172 = vmatprep.subr.mxu0 0.0
      %6173 = vmatpush2.msra.mxu0 0.0
      %6174 = vmatprep.mubr.f32.mxu0 0.0
      %6175 = vmatmul.mubr.f32.gmra.mxu0 %v6105
      %v6176 = vpop.f32.mrf.mxu0
      %v6177 = vadd.f32 %v6101, %v6176
      %v6178 = vpop.f32.mrf.mxu0
      %6179 = vmatprep.mubr.f32.mxu0 0.0
      %6180 = vmatmul.mubr.f32.gmra.mxu0 %v6108
      %v6181 = vpop.f32.mrf.mxu0
      %v6182 = vadd.f32 %v6101, %v6181
      %v6183 = vpop.f32.mrf.mxu0
      %6184 = vdwg.mxu0
      %v6185 = vxor.u32 %v6177, 2147483648
      %v6186 = vxor.u32 %v6182, 2147483648
      %v6187 = vmul.f32 %v6185, 1.442695
      %v6188 = vpow.pop %v6187
      %v6189 = vmul.f32 %v6186, 1.442695
      %v6190 = vpow.pop %v6189
      %v6191 = vadd.f32 %v6188, 1.0
      %v6192 = vadd.f32 %v6190, 1.0
      %v6193 = vrcp.pop %v6191
      %v6194 = vmul.f32 1.0, %v6193
      %v6195 = vrcp.pop %v6192
      %v6196 = vmul.f32 1.0, %v6195
      %v6198 = vlaneseq
      %v6199 = vshrl.u32 %v6198, 7
      %v6200 = vsub.s32 0, %v6199
      %v6201 = vrot.slane %v1122, %v6200
      %v6204 = vsel %vm1358, %v1326, 0
      %v6207 = vsel %vm1358, %v1327, 0
      %v6210 = vsel %vm1358, %v1328, 0
      %v6213 = vsel %vm1358, %v1329, 0
      %v6216 = vsel %vm1358, %v1330, 0
      %v6219 = vsel %vm1358, %v1331, 0
      %v6222 = vsel %vm1358, %v1332, 0
      %v6225 = vsel %vm1358, %v1333, 0
      %v6228 = vsel %vm1358, %v1334, 0
      %v6231 = vsel %vm1358, %v1335, 0
      %v6234 = vsel %vm1358, %v1336, 0
      %v6237 = vsel %vm1358, %v1337, 0
      %v6240 = vsel %vm1358, %v1338, 0
      %v6243 = vsel %vm1358, %v1339, 0
      %v6246 = vsel %vm1358, %v1340, 0
      %v6249 = vsel %vm1358, %v1341, 0
      %6251 = vmatprep.subr.mxu0 0.0
      %6252 = vmatpush1.msra.mxu0 0.0
      %6253 = vmatprep.subr.mxu0 0.0
      %6254 = vmatpush1.msra.mxu0 0.0
      %6255 = vmatprep.subr.mxu0 0.0
      %6256 = vmatpush1.msra.mxu0 0.0
      %6257 = vmatprep.subr.mxu0 0.0
      %6258 = vmatpush1.msra.mxu0 0.0
      %6259 = vmatprep.subr.mxu0 0.0
      %6260 = vmatpush1.msra.mxu0 0.0
      %6261 = vmatprep.subr.mxu0 0.0
      %6262 = vmatpush1.msra.mxu0 0.0
      %6263 = vmatprep.subr.mxu0 0.0
      %6264 = vmatpush1.msra.mxu0 0.0
      %6265 = vmatprep.subr.mxu0 0.0
      %6266 = vmatpush1.msra.mxu0 0.0
      %6267 = vmatprep.subr.mxu0 0.0
      %6268 = vmatpush1.msra.mxu0 0.0
      %6269 = vmatprep.subr.mxu0 0.0
      %6270 = vmatpush1.msra.mxu0 0.0
      %6271 = vmatprep.subr.mxu0 0.0
      %6272 = vmatpush1.msra.mxu0 0.0
      %6273 = vmatprep.subr.mxu0 0.0
      %6274 = vmatpush1.msra.mxu0 0.0
      %6275 = vmatprep.subr.mxu0 0.0
      %6276 = vmatpush1.msra.mxu0 %v1121
      %6277 = vmatprep.subr.mxu0 0.0
      %6278 = vmatpush1.msra.mxu0 %v1120
      %6279 = vmatprep.subr.mxu0 0.0
      %6280 = vmatpush1.msra.mxu0 %v1119
      %6281 = vmatprep.subr.mxu0 0.0
      %6282 = vmatpush1.msra.mxu0 %v1118
      %6283 = vmatprep.subr.mxu0 0.0
      %6284 = vmatpush2.msra.mxu0 0.0
      %6285 = vmatprep.subr.mxu0 0.0
      %6286 = vmatpush2.msra.mxu0 0.0
      %6287 = vmatprep.subr.mxu0 0.0
      %6288 = vmatpush2.msra.mxu0 0.0
      %6289 = vmatprep.subr.mxu0 0.0
      %6290 = vmatpush2.msra.mxu0 0.0
      %6291 = vmatprep.subr.mxu0 0.0
      %6292 = vmatpush2.msra.mxu0 0.0
      %6293 = vmatprep.subr.mxu0 0.0
      %6294 = vmatpush2.msra.mxu0 0.0
      %6295 = vmatprep.subr.mxu0 0.0
      %6296 = vmatpush2.msra.mxu0 0.0
      %6297 = vmatprep.subr.mxu0 0.0
      %6298 = vmatpush2.msra.mxu0 0.0
      %6299 = vmatprep.subr.mxu0 0.0
      %6300 = vmatpush2.msra.mxu0 0.0
      %6301 = vmatprep.subr.mxu0 0.0
      %6302 = vmatpush2.msra.mxu0 0.0
      %6303 = vmatprep.subr.mxu0 0.0
      %6304 = vmatpush2.msra.mxu0 0.0
      %6305 = vmatprep.subr.mxu0 0.0
      %6306 = vmatpush2.msra.mxu0 0.0
      %6307 = vmatprep.subr.mxu0 0.0
      %6308 = vmatpush2.msra.mxu0 0.0
      %6309 = vmatprep.subr.mxu0 0.0
      %6310 = vmatpush2.msra.mxu0 0.0
      %6311 = vmatprep.subr.mxu0 0.0
      %6312 = vmatpush2.msra.mxu0 0.0
      %6313 = vmatprep.subr.mxu0 0.0
      %6314 = vmatpush2.msra.mxu0 0.0
      %6315 = vmatprep.mubr.f32.mxu0 0.0
      %6316 = vmatmul.mubr.f32.gmra.mxu0 %v6204
      %v6317 = vpop.f32.mrf.mxu0
      %v6318 = vadd.f32 %v6201, %v6317
      %v6319 = vpop.f32.mrf.mxu0
      %6320 = vmatprep.mubr.f32.mxu0 0.0
      %6321 = vmatmul.mubr.f32.gmra.mxu0 %v6207
      %v6322 = vpop.f32.mrf.mxu0
      %v6323 = vadd.f32 %v6201, %v6322
      %v6324 = vpop.f32.mrf.mxu0
      %6325 = vmatprep.mubr.f32.mxu0 0.0
      %6326 = vmatmul.mubr.f32.gmra.mxu0 %v6210
      %v6327 = vpop.f32.mrf.mxu0
      %v6328 = vadd.f32 %v6201, %v6327
      %v6329 = vpop.f32.mrf.mxu0
      %6330 = vmatprep.mubr.f32.mxu0 0.0
      %6331 = vmatmul.mubr.f32.gmra.mxu0 %v6213
      %v6332 = vpop.f32.mrf.mxu0
      %v6333 = vadd.f32 %v6201, %v6332
      %v6334 = vpop.f32.mrf.mxu0
      %6335 = vmatprep.mubr.f32.mxu0 0.0
      %6336 = vmatmul.mubr.f32.gmra.mxu0 %v6216
      %v6337 = vpop.f32.mrf.mxu0
      %v6338 = vadd.f32 %v6201, %v6337
      %v6339 = vpop.f32.mrf.mxu0
      %6340 = vmatprep.mubr.f32.mxu0 0.0
      %6341 = vmatmul.mubr.f32.gmra.mxu0 %v6219
      %v6342 = vpop.f32.mrf.mxu0
      %v6343 = vadd.f32 %v6201, %v6342
      %v6344 = vpop.f32.mrf.mxu0
      %6345 = vmatprep.mubr.f32.mxu0 0.0
      %6346 = vmatmul.mubr.f32.gmra.mxu0 %v6222
      %v6347 = vpop.f32.mrf.mxu0
      %v6348 = vadd.f32 %v6201, %v6347
      %v6349 = vpop.f32.mrf.mxu0
      %6350 = vmatprep.mubr.f32.mxu0 0.0
      %6351 = vmatmul.mubr.f32.gmra.mxu0 %v6225
      %v6352 = vpop.f32.mrf.mxu0
      %v6353 = vadd.f32 %v6201, %v6352
      %v6354 = vpop.f32.mrf.mxu0
      %6355 = vmatprep.mubr.f32.mxu0 0.0
      %6356 = vmatmul.mubr.f32.gmra.mxu0 %v6228
      %v6357 = vpop.f32.mrf.mxu0
      %v6358 = vadd.f32 %v6201, %v6357
      %v6359 = vpop.f32.mrf.mxu0
      %6360 = vmatprep.mubr.f32.mxu0 0.0
      %6361 = vmatmul.mubr.f32.gmra.mxu0 %v6231
      %v6362 = vpop.f32.mrf.mxu0
      %v6363 = vadd.f32 %v6201, %v6362
      %v6364 = vpop.f32.mrf.mxu0
      %6365 = vmatprep.mubr.f32.mxu0 0.0
      %6366 = vmatmul.mubr.f32.gmra.mxu0 %v6234
      %v6367 = vpop.f32.mrf.mxu0
      %v6368 = vadd.f32 %v6201, %v6367
      %v6369 = vpop.f32.mrf.mxu0
      %6370 = vmatprep.mubr.f32.mxu0 0.0
      %6371 = vmatmul.mubr.f32.gmra.mxu0 %v6237
      %v6372 = vpop.f32.mrf.mxu0
      %v6373 = vadd.f32 %v6201, %v6372
      %v6374 = vpop.f32.mrf.mxu0
      %6375 = vmatprep.mubr.f32.mxu0 0.0
      %6376 = vmatmul.mubr.f32.gmra.mxu0 %v6240
      %v6377 = vpop.f32.mrf.mxu0
      %v6378 = vadd.f32 %v6201, %v6377
      %v6379 = vpop.f32.mrf.mxu0
      %6380 = vmatprep.mubr.f32.mxu0 0.0
      %6381 = vmatmul.mubr.f32.gmra.mxu0 %v6243
      %v6382 = vpop.f32.mrf.mxu0
      %v6383 = vadd.f32 %v6201, %v6382
      %v6384 = vpop.f32.mrf.mxu0
      %6385 = vmatprep.mubr.f32.mxu0 0.0
      %6386 = vmatmul.mubr.f32.gmra.mxu0 %v6246
      %v6387 = vpop.f32.mrf.mxu0
      %v6388 = vadd.f32 %v6201, %v6387
      %v6389 = vpop.f32.mrf.mxu0
      %6390 = vmatprep.mubr.f32.mxu0 0.0
      %6391 = vmatmul.mubr.f32.gmra.mxu0 %v6249
      %v6392 = vpop.f32.mrf.mxu0
      %v6393 = vadd.f32 %v6201, %v6392
      %v6394 = vpop.f32.mrf.mxu0
      %6395 = vdwg.mxu0
      %v6396 = vxor.u32 %v6318, 2147483648
      %v6397 = vxor.u32 %v6323, 2147483648
      %v6398 = vxor.u32 %v6328, 2147483648
      %v6399 = vxor.u32 %v6333, 2147483648
      %v6400 = vxor.u32 %v6338, 2147483648
      %v6401 = vxor.u32 %v6343, 2147483648
      %v6402 = vxor.u32 %v6348, 2147483648
      %v6403 = vxor.u32 %v6353, 2147483648
      %v6404 = vxor.u32 %v6358, 2147483648
      %v6405 = vxor.u32 %v6363, 2147483648
      %v6406 = vxor.u32 %v6368, 2147483648
      %v6407 = vxor.u32 %v6373, 2147483648
      %v6408 = vxor.u32 %v6378, 2147483648
      %v6409 = vxor.u32 %v6383, 2147483648
      %v6410 = vxor.u32 %v6388, 2147483648
      %v6411 = vxor.u32 %v6393, 2147483648
      %v6412 = vmul.f32 %v6396, 1.442695
      %v6413 = vpow.pop %v6412
      %v6414 = vmul.f32 %v6397, 1.442695
      %v6415 = vpow.pop %v6414
      %v6416 = vmul.f32 %v6398, 1.442695
      %v6417 = vpow.pop %v6416
      %v6418 = vmul.f32 %v6399, 1.442695
      %v6419 = vpow.pop %v6418
      %v6420 = vmul.f32 %v6400, 1.442695
      %v6421 = vpow.pop %v6420
      %v6422 = vmul.f32 %v6401, 1.442695
      %v6423 = vpow.pop %v6422
      %v6424 = vmul.f32 %v6402, 1.442695
      %v6425 = vpow.pop %v6424
      %v6426 = vmul.f32 %v6403, 1.442695
      %v6427 = vpow.pop %v6426
      %v6428 = vmul.f32 %v6404, 1.442695
      %v6429 = vpow.pop %v6428
      %v6430 = vmul.f32 %v6405, 1.442695
      %v6431 = vpow.pop %v6430
      %v6432 = vmul.f32 %v6406, 1.442695
      %v6433 = vpow.pop %v6432
      %v6434 = vmul.f32 %v6407, 1.442695
      %v6435 = vpow.pop %v6434
      %v6436 = vmul.f32 %v6408, 1.442695
      %v6437 = vpow.pop %v6436
      %v6438 = vmul.f32 %v6409, 1.442695
      %v6439 = vpow.pop %v6438
      %v6440 = vmul.f32 %v6410, 1.442695
      %v6441 = vpow.pop %v6440
      %v6442 = vmul.f32 %v6411, 1.442695
      %v6443 = vpow.pop %v6442
      %v6444 = vadd.f32 %v6413, 1.0
      %v6445 = vadd.f32 %v6415, 1.0
      %v6446 = vadd.f32 %v6417, 1.0
      %v6447 = vadd.f32 %v6419, 1.0
      %v6448 = vadd.f32 %v6421, 1.0
      %v6449 = vadd.f32 %v6423, 1.0
      %v6450 = vadd.f32 %v6425, 1.0
      %v6451 = vadd.f32 %v6427, 1.0
      %v6452 = vadd.f32 %v6429, 1.0
      %v6453 = vadd.f32 %v6431, 1.0
      %v6454 = vadd.f32 %v6433, 1.0
      %v6455 = vadd.f32 %v6435, 1.0
      %v6456 = vadd.f32 %v6437, 1.0
      %v6457 = vadd.f32 %v6439, 1.0
      %v6458 = vadd.f32 %v6441, 1.0
      %v6459 = vadd.f32 %v6443, 1.0
      %v6460 = vrcp.pop %v6444
      %v6461 = vmul.f32 1.0, %v6460
      %v6462 = vrcp.pop %v6445
      %v6463 = vmul.f32 1.0, %v6462
      %v6464 = vrcp.pop %v6446
      %v6465 = vmul.f32 1.0, %v6464
      %v6466 = vrcp.pop %v6447
      %v6467 = vmul.f32 1.0, %v6466
      %v6468 = vrcp.pop %v6448
      %v6469 = vmul.f32 1.0, %v6468
      %v6470 = vrcp.pop %v6449
      %v6471 = vmul.f32 1.0, %v6470
      %v6472 = vrcp.pop %v6450
      %v6473 = vmul.f32 1.0, %v6472
      %v6474 = vrcp.pop %v6451
      %v6475 = vmul.f32 1.0, %v6474
      %v6476 = vrcp.pop %v6452
      %v6477 = vmul.f32 1.0, %v6476
      %v6478 = vrcp.pop %v6453
      %v6479 = vmul.f32 1.0, %v6478
      %v6480 = vrcp.pop %v6454
      %v6481 = vmul.f32 1.0, %v6480
      %v6482 = vrcp.pop %v6455
      %v6483 = vmul.f32 1.0, %v6482
      %v6484 = vrcp.pop %v6456
      %v6485 = vmul.f32 1.0, %v6484
      %v6486 = vrcp.pop %v6457
      %v6487 = vmul.f32 1.0, %v6486
      %v6488 = vrcp.pop %v6458
      %v6489 = vmul.f32 1.0, %v6488
      %v6490 = vrcp.pop %v6459
      %v6491 = vmul.f32 1.0, %v6490
      %v6493 = vlaneseq
      %v6494 = vshrl.u32 %v6493, 7
      %v6495 = vsub.s32 0, %v6494
      %v6496 = vrot.slane %v1123, %v6495
      %v6498 = vadd.f32 %v6496, %v6461
      %v6499 = vadd.f32 %v6496, %v6463
      %v6500 = vadd.f32 %v6496, %v6465
      %v6501 = vadd.f32 %v6496, %v6467
      %v6502 = vadd.f32 %v6496, %v6469
      %v6503 = vadd.f32 %v6496, %v6471
      %v6504 = vadd.f32 %v6496, %v6473
      %v6505 = vadd.f32 %v6496, %v6475
      %v6506 = vadd.f32 %v6496, %v6477
      %v6507 = vadd.f32 %v6496, %v6479
      %v6508 = vadd.f32 %v6496, %v6481
      %v6509 = vadd.f32 %v6496, %v6483
      %v6510 = vadd.f32 %v6496, %v6485
      %v6511 = vadd.f32 %v6496, %v6487
      %v6512 = vadd.f32 %v6496, %v6489
      %v6513 = vadd.f32 %v6496, %v6491
      %v6514 = vmax.f32 %v6498, 0.0
      %v6515 = vmax.f32 %v6499, 0.0
      %v6516 = vmax.f32 %v6500, 0.0
      %v6517 = vmax.f32 %v6501, 0.0
      %v6518 = vmax.f32 %v6502, 0.0
      %v6519 = vmax.f32 %v6503, 0.0
      %v6520 = vmax.f32 %v6504, 0.0
      %v6521 = vmax.f32 %v6505, 0.0
      %v6522 = vmax.f32 %v6506, 0.0
      %v6523 = vmax.f32 %v6507, 0.0
      %v6524 = vmax.f32 %v6508, 0.0
      %v6525 = vmax.f32 %v6509, 0.0
      %v6526 = vmax.f32 %v6510, 0.0
      %v6527 = vmax.f32 %v6511, 0.0
      %v6528 = vmax.f32 %v6512, 0.0
      %v6529 = vmax.f32 %v6513, 0.0
      %v6531 = vlaneseq
      %v6532 = vshrl.u32 %v6531, 7
      %v6533 = vsub.s32 0, %v6532
      %v6534 = vrot.slane %v1124, %v6533
      %v6536 = vmul.f32 %v6514, %v6534
      %v6537 = vmul.f32 %v6515, %v6534
      %v6538 = vmul.f32 %v6516, %v6534
      %v6539 = vmul.f32 %v6517, %v6534
      %v6540 = vmul.f32 %v6518, %v6534
      %v6541 = vmul.f32 %v6519, %v6534
      %v6542 = vmul.f32 %v6520, %v6534
      %v6543 = vmul.f32 %v6521, %v6534
      %v6544 = vmul.f32 %v6522, %v6534
      %v6545 = vmul.f32 %v6523, %v6534
      %v6546 = vmul.f32 %v6524, %v6534
      %v6547 = vmul.f32 %v6525, %v6534
      %v6548 = vmul.f32 %v6526, %v6534
      %v6549 = vmul.f32 %v6527, %v6534
      %v6550 = vmul.f32 %v6528, %v6534
      %v6551 = vmul.f32 %v6529, %v6534
      %v6552 = vsel %vm1358, %v6536, 0.0
      %6553 = vadd.xlane.f32.xlu0 %v6552
      %v6554 = vpop.xlane.xlu0 %6553
      %v6555 = vsel %vm1358, %v6537, 0.0
      %6556 = vadd.xlane.f32.xlu0 %v6555
      %v6557 = vpop.xlane.xlu0 %6556
      %v6558 = vsel %vm1358, %v6538, 0.0
      %6559 = vadd.xlane.f32.xlu0 %v6558
      %v6560 = vpop.xlane.xlu0 %6559
      %v6561 = vsel %vm1358, %v6539, 0.0
      %6562 = vadd.xlane.f32.xlu0 %v6561
      %v6563 = vpop.xlane.xlu0 %6562
      %v6564 = vsel %vm1358, %v6540, 0.0
      %6565 = vadd.xlane.f32.xlu0 %v6564
      %v6566 = vpop.xlane.xlu0 %6565
      %v6567 = vsel %vm1358, %v6541, 0.0
      %6568 = vadd.xlane.f32.xlu0 %v6567
      %v6569 = vpop.xlane.xlu0 %6568
      %v6570 = vsel %vm1358, %v6542, 0.0
      %6571 = vadd.xlane.f32.xlu0 %v6570
      %v6572 = vpop.xlane.xlu0 %6571
      %v6573 = vsel %vm1358, %v6543, 0.0
      %6574 = vadd.xlane.f32.xlu0 %v6573
      %v6575 = vpop.xlane.xlu0 %6574
      %v6576 = vsel %vm1358, %v6544, 0.0
      %6577 = vadd.xlane.f32.xlu0 %v6576
      %v6578 = vpop.xlane.xlu0 %6577
      %v6579 = vsel %vm1358, %v6545, 0.0
      %6580 = vadd.xlane.f32.xlu0 %v6579
      %v6581 = vpop.xlane.xlu0 %6580
      %v6582 = vsel %vm1358, %v6546, 0.0
      %6583 = vadd.xlane.f32.xlu0 %v6582
      %v6584 = vpop.xlane.xlu0 %6583
      %v6585 = vsel %vm1358, %v6547, 0.0
      %6586 = vadd.xlane.f32.xlu0 %v6585
      %v6587 = vpop.xlane.xlu0 %6586
      %v6588 = vsel %vm1358, %v6548, 0.0
      %6589 = vadd.xlane.f32.xlu0 %v6588
      %v6590 = vpop.xlane.xlu0 %6589
      %v6591 = vsel %vm1358, %v6549, 0.0
      %6592 = vadd.xlane.f32.xlu0 %v6591
      %v6593 = vpop.xlane.xlu0 %6592
      %v6594 = vsel %vm1358, %v6550, 0.0
      %6595 = vadd.xlane.f32.xlu0 %v6594
      %v6596 = vpop.xlane.xlu0 %6595
      %v6597 = vsel %vm1358, %v6551, 0.0
      %6598 = vadd.xlane.f32.xlu0 %v6597
      %v6599 = vpop.xlane.xlu0 %6598
      %v6616 = vlaneseq
      %v6617 = vand.u32 %v6616, 127
      %v6618 = vlaneseq
      %v6619 = vshrl.u32 %v6618, 7
      %v6620 = vsub.s32 %v6617, %v6619
      %v6621 = vrot.slane %v6554, %v6620
      %v6622 = vlaneseq
      %v6623 = vshrl.u32 %v6622, 7
      %v6624 = vsub.s32 %v6617, %v6623
      %v6625 = vrot.slane %v6557, %v6624
      %v6626 = vlaneseq
      %v6627 = vshrl.u32 %v6626, 7
      %v6628 = vsub.s32 %v6617, %v6627
      %v6629 = vrot.slane %v6560, %v6628
      %v6630 = vlaneseq
      %v6631 = vshrl.u32 %v6630, 7
      %v6632 = vsub.s32 %v6617, %v6631
      %v6633 = vrot.slane %v6563, %v6632
      %v6634 = vlaneseq
      %v6635 = vshrl.u32 %v6634, 7
      %v6636 = vsub.s32 %v6617, %v6635
      %v6637 = vrot.slane %v6566, %v6636
      %v6638 = vlaneseq
      %v6639 = vshrl.u32 %v6638, 7
      %v6640 = vsub.s32 %v6617, %v6639
      %v6641 = vrot.slane %v6569, %v6640
      %v6642 = vlaneseq
      %v6643 = vshrl.u32 %v6642, 7
      %v6644 = vsub.s32 %v6617, %v6643
      %v6645 = vrot.slane %v6572, %v6644
      %v6646 = vlaneseq
      %v6647 = vshrl.u32 %v6646, 7
      %v6648 = vsub.s32 %v6617, %v6647
      %v6649 = vrot.slane %v6575, %v6648
      %v6650 = vlaneseq
      %v6651 = vshrl.u32 %v6650, 7
      %v6652 = vsub.s32 %v6617, %v6651
      %v6653 = vrot.slane %v6578, %v6652
      %v6654 = vlaneseq
      %v6655 = vshrl.u32 %v6654, 7
      %v6656 = vsub.s32 %v6617, %v6655
      %v6657 = vrot.slane %v6581, %v6656
      %v6658 = vlaneseq
      %v6659 = vshrl.u32 %v6658, 7
      %v6660 = vsub.s32 %v6617, %v6659
      %v6661 = vrot.slane %v6584, %v6660
      %v6662 = vlaneseq
      %v6663 = vshrl.u32 %v6662, 7
      %v6664 = vsub.s32 %v6617, %v6663
      %v6665 = vrot.slane %v6587, %v6664
      %v6666 = vlaneseq
      %v6667 = vshrl.u32 %v6666, 7
      %v6668 = vsub.s32 %v6617, %v6667
      %v6669 = vrot.slane %v6590, %v6668
      %v6670 = vlaneseq
      %v6671 = vshrl.u32 %v6670, 7
      %v6672 = vsub.s32 %v6617, %v6671
      %v6673 = vrot.slane %v6593, %v6672
      %v6674 = vlaneseq
      %v6675 = vshrl.u32 %v6674, 7
      %v6676 = vsub.s32 %v6617, %v6675
      %v6677 = vrot.slane %v6596, %v6676
      %v6678 = vlaneseq
      %v6679 = vshrl.u32 %v6678, 7
      %v6680 = vsub.s32 %v6617, %v6679
      %v6681 = vrot.slane %v6599, %v6680
      %v6682 = vsel %vm4812, %v6625, %v6621
      %v6683 = vsel %vm4815, %v6629, %v6682
      %v6684 = vsel %vm4818, %v6633, %v6683
      %v6685 = vsel %vm4821, %v6637, %v6684
      %v6686 = vsel %vm4824, %v6641, %v6685
      %v6687 = vsel %vm4827, %v6645, %v6686
      %v6688 = vsel %vm4830, %v6649, %v6687
      %v6689 = vsel %vm4812, %v6657, %v6653
      %v6690 = vsel %vm4815, %v6661, %v6689
      %v6691 = vsel %vm4818, %v6665, %v6690
      %v6692 = vsel %vm4821, %v6669, %v6691
      %v6693 = vsel %vm4824, %v6673, %v6692
      %v6694 = vsel %vm4827, %v6677, %v6693
      %v6695 = vsel %vm4830, %v6681, %v6694
      %v6698 = vsel %vm3348, %v6688, -inf
      %6699 = vmax.xlane.f32.xlu0 %v6698
      %v6700 = vpop.xlane.xlu0 %6699
      %v6701 = vsel %vm3348, %v6695, -inf
      %6702 = vmax.xlane.f32.xlu0 %v6701
      %v6703 = vpop.xlane.xlu0 %6702
      %v6706 = vlaneseq
      %v6707 = vshrl.u32 %v6706, 7
      %v6708 = vsub.s32 0, %v6707
      %v6709 = vrot.slane %v6700, %v6708
      %v6710 = vlaneseq
      %v6711 = vshrl.u32 %v6710, 7
      %v6712 = vsub.s32 1, %v6711
      %v6713 = vrot.slane %v6700, %v6712
      %v6714 = vlaneseq
      %v6715 = vshrl.u32 %v6714, 7
      %v6716 = vsub.s32 2, %v6715
      %v6717 = vrot.slane %v6700, %v6716
      %v6718 = vlaneseq
      %v6719 = vshrl.u32 %v6718, 7
      %v6720 = vsub.s32 3, %v6719
      %v6721 = vrot.slane %v6700, %v6720
      %v6722 = vlaneseq
      %v6723 = vshrl.u32 %v6722, 7
      %v6724 = vsub.s32 4, %v6723
      %v6725 = vrot.slane %v6700, %v6724
      %v6726 = vlaneseq
      %v6727 = vshrl.u32 %v6726, 7
      %v6728 = vsub.s32 5, %v6727
      %v6729 = vrot.slane %v6700, %v6728
      %v6730 = vlaneseq
      %v6731 = vshrl.u32 %v6730, 7
      %v6732 = vsub.s32 6, %v6731
      %v6733 = vrot.slane %v6700, %v6732
      %v6734 = vlaneseq
      %v6735 = vshrl.u32 %v6734, 7
      %v6736 = vsub.s32 7, %v6735
      %v6737 = vrot.slane %v6700, %v6736
      %v6738 = vlaneseq
      %v6739 = vshrl.u32 %v6738, 7
      %v6740 = vsub.s32 0, %v6739
      %v6741 = vrot.slane %v6703, %v6740
      %v6742 = vlaneseq
      %v6743 = vshrl.u32 %v6742, 7
      %v6744 = vsub.s32 1, %v6743
      %v6745 = vrot.slane %v6703, %v6744
      %v6746 = vlaneseq
      %v6747 = vshrl.u32 %v6746, 7
      %v6748 = vsub.s32 2, %v6747
      %v6749 = vrot.slane %v6703, %v6748
      %v6750 = vlaneseq
      %v6751 = vshrl.u32 %v6750, 7
      %v6752 = vsub.s32 3, %v6751
      %v6753 = vrot.slane %v6703, %v6752
      %v6754 = vlaneseq
      %v6755 = vshrl.u32 %v6754, 7
      %v6756 = vsub.s32 4, %v6755
      %v6757 = vrot.slane %v6703, %v6756
      %v6758 = vlaneseq
      %v6759 = vshrl.u32 %v6758, 7
      %v6760 = vsub.s32 5, %v6759
      %v6761 = vrot.slane %v6703, %v6760
      %v6762 = vlaneseq
      %v6763 = vshrl.u32 %v6762, 7
      %v6764 = vsub.s32 6, %v6763
      %v6765 = vrot.slane %v6703, %v6764
      %v6766 = vlaneseq
      %v6767 = vshrl.u32 %v6766, 7
      %v6768 = vsub.s32 7, %v6767
      %v6769 = vrot.slane %v6703, %v6768
      %v6786 = vsub.f32 %v6554, %v6709
      %v6787 = vsub.f32 %v6557, %v6713
      %v6788 = vsub.f32 %v6560, %v6717
      %v6789 = vsub.f32 %v6563, %v6721
      %v6790 = vsub.f32 %v6566, %v6725
      %v6791 = vsub.f32 %v6569, %v6729
      %v6792 = vsub.f32 %v6572, %v6733
      %v6793 = vsub.f32 %v6575, %v6737
      %v6794 = vsub.f32 %v6578, %v6741
      %v6795 = vsub.f32 %v6581, %v6745
      %v6796 = vsub.f32 %v6584, %v6749
      %v6797 = vsub.f32 %v6587, %v6753
      %v6798 = vsub.f32 %v6590, %v6757
      %v6799 = vsub.f32 %v6593, %v6761
      %v6800 = vsub.f32 %v6596, %v6765
      %v6801 = vsub.f32 %v6599, %v6769
      %v6802 = vmul.f32 %v6786, 1.442695
      %v6803 = vpow.pop %v6802
      %v6804 = vmul.f32 %v6787, 1.442695
      %v6805 = vpow.pop %v6804
      %v6806 = vmul.f32 %v6788, 1.442695
      %v6807 = vpow.pop %v6806
      %v6808 = vmul.f32 %v6789, 1.442695
      %v6809 = vpow.pop %v6808
      %v6810 = vmul.f32 %v6790, 1.442695
      %v6811 = vpow.pop %v6810
      %v6812 = vmul.f32 %v6791, 1.442695
      %v6813 = vpow.pop %v6812
      %v6814 = vmul.f32 %v6792, 1.442695
      %v6815 = vpow.pop %v6814
      %v6816 = vmul.f32 %v6793, 1.442695
      %v6817 = vpow.pop %v6816
      %v6818 = vmul.f32 %v6794, 1.442695
      %v6819 = vpow.pop %v6818
      %v6820 = vmul.f32 %v6795, 1.442695
      %v6821 = vpow.pop %v6820
      %v6822 = vmul.f32 %v6796, 1.442695
      %v6823 = vpow.pop %v6822
      %v6824 = vmul.f32 %v6797, 1.442695
      %v6825 = vpow.pop %v6824
      %v6826 = vmul.f32 %v6798, 1.442695
      %v6827 = vpow.pop %v6826
      %v6828 = vmul.f32 %v6799, 1.442695
      %v6829 = vpow.pop %v6828
      %v6830 = vmul.f32 %v6800, 1.442695
      %v6831 = vpow.pop %v6830
      %v6832 = vmul.f32 %v6801, 1.442695
      %v6833 = vpow.pop %v6832
      %6850 = vset.pattern.permute.xlu0 0
      %6851 = vperm.xlu0 %6850, %v6803
      %v6852 = vpop.permute.xlu0 %6851
      %6853 = vset.pattern.permute.xlu0 0
      %6854 = vperm.xlu0 %6853, %v6805
      %v6855 = vpop.permute.xlu0 %6854
      %6856 = vset.pattern.permute.xlu0 0
      %6857 = vperm.xlu0 %6856, %v6807
      %v6858 = vpop.permute.xlu0 %6857
      %6859 = vset.pattern.permute.xlu0 0
      %6860 = vperm.xlu0 %6859, %v6809
      %v6861 = vpop.permute.xlu0 %6860
      %6862 = vset.pattern.permute.xlu0 0
      %6863 = vperm.xlu0 %6862, %v6811
      %v6864 = vpop.permute.xlu0 %6863
      %6865 = vset.pattern.permute.xlu0 0
      %6866 = vperm.xlu0 %6865, %v6813
      %v6867 = vpop.permute.xlu0 %6866
      %6868 = vset.pattern.permute.xlu0 0
      %6869 = vperm.xlu0 %6868, %v6815
      %v6870 = vpop.permute.xlu0 %6869
      %6871 = vset.pattern.permute.xlu0 0
      %6872 = vperm.xlu0 %6871, %v6817
      %v6873 = vpop.permute.xlu0 %6872
      %6874 = vset.pattern.permute.xlu0 0
      %6875 = vperm.xlu0 %6874, %v6819
      %v6876 = vpop.permute.xlu0 %6875
      %6877 = vset.pattern.permute.xlu0 0
      %6878 = vperm.xlu0 %6877, %v6821
      %v6879 = vpop.permute.xlu0 %6878
      %6880 = vset.pattern.permute.xlu0 0
      %6881 = vperm.xlu0 %6880, %v6823
      %v6882 = vpop.permute.xlu0 %6881
      %6883 = vset.pattern.permute.xlu0 0
      %6884 = vperm.xlu0 %6883, %v6825
      %v6885 = vpop.permute.xlu0 %6884
      %6886 = vset.pattern.permute.xlu0 0
      %6887 = vperm.xlu0 %6886, %v6827
      %v6888 = vpop.permute.xlu0 %6887
      %6889 = vset.pattern.permute.xlu0 0
      %6890 = vperm.xlu0 %6889, %v6829
      %v6891 = vpop.permute.xlu0 %6890
      %6892 = vset.pattern.permute.xlu0 0
      %6893 = vperm.xlu0 %6892, %v6831
      %v6894 = vpop.permute.xlu0 %6893
      %6895 = vset.pattern.permute.xlu0 0
      %6896 = vperm.xlu0 %6895, %v6833
      %v6897 = vpop.permute.xlu0 %6896
      %v6898 = vlaneseq
      %v6899 = vshrl.u32 %v6898, 7
      %v6900 = vsub.s32 %v6617, %v6899
      %v6901 = vrot.slane %v6852, %v6900
      %v6902 = vlaneseq
      %v6903 = vshrl.u32 %v6902, 7
      %v6904 = vsub.s32 %v6617, %v6903
      %v6905 = vrot.slane %v6855, %v6904
      %v6906 = vlaneseq
      %v6907 = vshrl.u32 %v6906, 7
      %v6908 = vsub.s32 %v6617, %v6907
      %v6909 = vrot.slane %v6858, %v6908
      %v6910 = vlaneseq
      %v6911 = vshrl.u32 %v6910, 7
      %v6912 = vsub.s32 %v6617, %v6911
      %v6913 = vrot.slane %v6861, %v6912
      %v6914 = vlaneseq
      %v6915 = vshrl.u32 %v6914, 7
      %v6916 = vsub.s32 %v6617, %v6915
      %v6917 = vrot.slane %v6864, %v6916
      %v6918 = vlaneseq
      %v6919 = vshrl.u32 %v6918, 7
      %v6920 = vsub.s32 %v6617, %v6919
      %v6921 = vrot.slane %v6867, %v6920
      %v6922 = vlaneseq
      %v6923 = vshrl.u32 %v6922, 7
      %v6924 = vsub.s32 %v6617, %v6923
      %v6925 = vrot.slane %v6870, %v6924
      %v6926 = vlaneseq
      %v6927 = vshrl.u32 %v6926, 7
      %v6928 = vsub.s32 %v6617, %v6927
      %v6929 = vrot.slane %v6873, %v6928
      %v6930 = vlaneseq
      %v6931 = vshrl.u32 %v6930, 7
      %v6932 = vsub.s32 %v6617, %v6931
      %v6933 = vrot.slane %v6876, %v6932
      %v6934 = vlaneseq
      %v6935 = vshrl.u32 %v6934, 7
      %v6936 = vsub.s32 %v6617, %v6935
      %v6937 = vrot.slane %v6879, %v6936
      %v6938 = vlaneseq
      %v6939 = vshrl.u32 %v6938, 7
      %v6940 = vsub.s32 %v6617, %v6939
      %v6941 = vrot.slane %v6882, %v6940
      %v6942 = vlaneseq
      %v6943 = vshrl.u32 %v6942, 7
      %v6944 = vsub.s32 %v6617, %v6943
      %v6945 = vrot.slane %v6885, %v6944
      %v6946 = vlaneseq
      %v6947 = vshrl.u32 %v6946, 7
      %v6948 = vsub.s32 %v6617, %v6947
      %v6949 = vrot.slane %v6888, %v6948
      %v6950 = vlaneseq
      %v6951 = vshrl.u32 %v6950, 7
      %v6952 = vsub.s32 %v6617, %v6951
      %v6953 = vrot.slane %v6891, %v6952
      %v6954 = vlaneseq
      %v6955 = vshrl.u32 %v6954, 7
      %v6956 = vsub.s32 %v6617, %v6955
      %v6957 = vrot.slane %v6894, %v6956
      %v6958 = vlaneseq
      %v6959 = vshrl.u32 %v6958, 7
      %v6960 = vsub.s32 %v6617, %v6959
      %v6961 = vrot.slane %v6897, %v6960
      %v6962 = vsel %vm4812, %v6905, %v6901
      %v6963 = vsel %vm4815, %v6909, %v6962
      %v6964 = vsel %vm4818, %v6913, %v6963
      %v6965 = vsel %vm4821, %v6917, %v6964
      %v6966 = vsel %vm4824, %v6921, %v6965
      %v6967 = vsel %vm4827, %v6925, %v6966
      %v6968 = vsel %vm4830, %v6929, %v6967
      %v6969 = vsel %vm4812, %v6937, %v6933
      %v6970 = vsel %vm4815, %v6941, %v6969
      %v6971 = vsel %vm4818, %v6945, %v6970
      %v6972 = vsel %vm4821, %v6949, %v6971
      %v6973 = vsel %vm4824, %v6953, %v6972
      %v6974 = vsel %vm4827, %v6957, %v6973
      %v6975 = vsel %vm4830, %v6961, %v6974
      %v6978 = vsel %vm3348, %v6968, 0.0
      %6979 = vadd.xlane.f32.xlu0 %v6978
      %v6980 = vpop.xlane.xlu0 %6979
      %v6981 = vsel %vm3348, %v6975, 0.0
      %6982 = vadd.xlane.f32.xlu0 %v6981
      %v6983 = vpop.xlane.xlu0 %6982
      %v6984 = vrcp.pop %v6980
      %v6985 = vrcp.pop %v6983
      %v6986 = vmul.f32 %v6980, %v6984
      %v6987 = vmul.f32 %v6983, %v6985
      %v6988 = vsub.f32 2.0, %v6986
      %v6989 = vsub.f32 2.0, %v6987
      %v6990 = vmul.f32 %v6984, %v6988
      %v6991 = vmul.f32 %v6985, %v6989
      %v6992 = vmul.f32 %v6980, %v6990
      %v6993 = vmul.f32 %v6983, %v6991
      %v6994 = vsub.f32 2.0, %v6992
      %v6995 = vsub.f32 2.0, %v6993
      %v6996 = vmul.f32 %v6990, %v6994
      %v6997 = vmul.f32 %v6991, %v6995
      %v7000 = vlaneseq
      %v7001 = vshrl.u32 %v7000, 7
      %v7002 = vsub.s32 0, %v7001
      %v7003 = vrot.slane %v6996, %v7002
      %v7004 = vlaneseq
      %v7005 = vshrl.u32 %v7004, 7
      %v7006 = vsub.s32 1, %v7005
      %v7007 = vrot.slane %v6996, %v7006
      %v7008 = vlaneseq
      %v7009 = vshrl.u32 %v7008, 7
      %v7010 = vsub.s32 2, %v7009
      %v7011 = vrot.slane %v6996, %v7010
      %v7012 = vlaneseq
      %v7013 = vshrl.u32 %v7012, 7
      %v7014 = vsub.s32 3, %v7013
      %v7015 = vrot.slane %v6996, %v7014
      %v7016 = vlaneseq
      %v7017 = vshrl.u32 %v7016, 7
      %v7018 = vsub.s32 4, %v7017
      %v7019 = vrot.slane %v6996, %v7018
      %v7020 = vlaneseq
      %v7021 = vshrl.u32 %v7020, 7
      %v7022 = vsub.s32 5, %v7021
      %v7023 = vrot.slane %v6996, %v7022
      %v7024 = vlaneseq
      %v7025 = vshrl.u32 %v7024, 7
      %v7026 = vsub.s32 6, %v7025
      %v7027 = vrot.slane %v6996, %v7026
      %v7028 = vlaneseq
      %v7029 = vshrl.u32 %v7028, 7
      %v7030 = vsub.s32 7, %v7029
      %v7031 = vrot.slane %v6996, %v7030
      %v7032 = vlaneseq
      %v7033 = vshrl.u32 %v7032, 7
      %v7034 = vsub.s32 0, %v7033
      %v7035 = vrot.slane %v6997, %v7034
      %v7036 = vlaneseq
      %v7037 = vshrl.u32 %v7036, 7
      %v7038 = vsub.s32 1, %v7037
      %v7039 = vrot.slane %v6997, %v7038
      %v7040 = vlaneseq
      %v7041 = vshrl.u32 %v7040, 7
      %v7042 = vsub.s32 2, %v7041
      %v7043 = vrot.slane %v6997, %v7042
      %v7044 = vlaneseq
      %v7045 = vshrl.u32 %v7044, 7
      %v7046 = vsub.s32 3, %v7045
      %v7047 = vrot.slane %v6997, %v7046
      %v7048 = vlaneseq
      %v7049 = vshrl.u32 %v7048, 7
      %v7050 = vsub.s32 4, %v7049
      %v7051 = vrot.slane %v6997, %v7050
      %v7052 = vlaneseq
      %v7053 = vshrl.u32 %v7052, 7
      %v7054 = vsub.s32 5, %v7053
      %v7055 = vrot.slane %v6997, %v7054
      %v7056 = vlaneseq
      %v7057 = vshrl.u32 %v7056, 7
      %v7058 = vsub.s32 6, %v7057
      %v7059 = vrot.slane %v6997, %v7058
      %v7060 = vlaneseq
      %v7061 = vshrl.u32 %v7060, 7
      %v7062 = vsub.s32 7, %v7061
      %v7063 = vrot.slane %v6997, %v7062
      %v7080 = vmul.f32 %v6803, %v7003
      %v7081 = vmul.f32 %v6805, %v7007
      %v7082 = vmul.f32 %v6807, %v7011
      %v7083 = vmul.f32 %v6809, %v7015
      %v7084 = vmul.f32 %v6811, %v7019
      %v7085 = vmul.f32 %v6813, %v7023
      %v7086 = vmul.f32 %v6815, %v7027
      %v7087 = vmul.f32 %v6817, %v7031
      %v7088 = vmul.f32 %v6819, %v7035
      %v7089 = vmul.f32 %v6821, %v7039
      %v7090 = vmul.f32 %v6823, %v7043
      %v7091 = vmul.f32 %v6825, %v7047
      %v7092 = vmul.f32 %v6827, %v7051
      %v7093 = vmul.f32 %v6829, %v7055
      %v7094 = vmul.f32 %v6831, %v7059
      %v7095 = vmul.f32 %v6833, %v7063
      %7097 = vset.pattern.permute.xlu0 0
      %7098 = vperm.xlu0 %7097, %v7080
      %v7099 = vpop.permute.xlu0 %7098
      %7102 = vset.pattern.permute.xlu0 0
      %7103 = vperm.xlu0 %7102, %v7081
      %v7104 = vpop.permute.xlu0 %7103
      %7107 = vset.pattern.permute.xlu0 0
      %7108 = vperm.xlu0 %7107, %v7082
      %v7109 = vpop.permute.xlu0 %7108
      %7112 = vset.pattern.permute.xlu0 0
      %7113 = vperm.xlu0 %7112, %v7083
      %v7114 = vpop.permute.xlu0 %7113
      %7117 = vset.pattern.permute.xlu0 0
      %7118 = vperm.xlu0 %7117, %v7084
      %v7119 = vpop.permute.xlu0 %7118
      %7122 = vset.pattern.permute.xlu0 0
      %7123 = vperm.xlu0 %7122, %v7085
      %v7124 = vpop.permute.xlu0 %7123
      %7127 = vset.pattern.permute.xlu0 0
      %7128 = vperm.xlu0 %7127, %v7086
      %v7129 = vpop.permute.xlu0 %7128
      %7132 = vset.pattern.permute.xlu0 0
      %7133 = vperm.xlu0 %7132, %v7087
      %v7134 = vpop.permute.xlu0 %7133
      %7137 = vset.pattern.permute.xlu0 0
      %7138 = vperm.xlu0 %7137, %v7088
      %v7139 = vpop.permute.xlu0 %7138
      %7142 = vset.pattern.permute.xlu0 0
      %7143 = vperm.xlu0 %7142, %v7089
      %v7144 = vpop.permute.xlu0 %7143
      %7147 = vset.pattern.permute.xlu0 0
      %7148 = vperm.xlu0 %7147, %v7090
      %v7149 = vpop.permute.xlu0 %7148
      %7152 = vset.pattern.permute.xlu0 0
      %7153 = vperm.xlu0 %7152, %v7091
      %v7154 = vpop.permute.xlu0 %7153
      %7157 = vset.pattern.permute.xlu0 0
      %7158 = vperm.xlu0 %7157, %v7092
      %v7159 = vpop.permute.xlu0 %7158
      %7162 = vset.pattern.permute.xlu0 0
      %7163 = vperm.xlu0 %7162, %v7093
      %v7164 = vpop.permute.xlu0 %7163
      %7167 = vset.pattern.permute.xlu0 0
      %7168 = vperm.xlu0 %7167, %v7094
      %v7169 = vpop.permute.xlu0 %7168
      %7172 = vset.pattern.permute.xlu0 0
      %7173 = vperm.xlu0 %7172, %v7095
      %v7174 = vpop.permute.xlu0 %7173
      %v7176 = vmul.f32 %v7099, %v1326
      %v7177 = vmul.f32 %v7104, %v1327
      %v7178 = vmul.f32 %v7109, %v1328
      %v7179 = vmul.f32 %v7114, %v1329
      %v7180 = vmul.f32 %v7119, %v1330
      %v7181 = vmul.f32 %v7124, %v1331
      %v7182 = vmul.f32 %v7129, %v1332
      %v7183 = vmul.f32 %v7134, %v1333
      %v7184 = vmul.f32 %v7139, %v1334
      %v7185 = vmul.f32 %v7144, %v1335
      %v7186 = vmul.f32 %v7149, %v1336
      %v7187 = vmul.f32 %v7154, %v1337
      %v7188 = vmul.f32 %v7159, %v1338
      %v7189 = vmul.f32 %v7164, %v1339
      %v7190 = vmul.f32 %v7169, %v1340
      %v7191 = vmul.f32 %v7174, %v1341
      %v7192 = vsel %vm1358, %v7176, 0.0
      %v7193 = vrot.slane %v7192, 4
      %v7194 = vadd.f32 %v7192, %v7193
      %v7195 = vrot.slane %v7194, 2
      %v7196 = vadd.f32 %v7194, %v7195
      %v7197 = vrot.slane %v7196, 1
      %v7198 = vadd.f32 %v7196, %v7197
      %v7199 = vsel %vm1358, %v7177, 0.0
      %v7200 = vrot.slane %v7199, 4
      %v7201 = vadd.f32 %v7199, %v7200
      %v7202 = vrot.slane %v7201, 2
      %v7203 = vadd.f32 %v7201, %v7202
      %v7204 = vrot.slane %v7203, 1
      %v7205 = vadd.f32 %v7203, %v7204
      %v7206 = vsel %vm1358, %v7178, 0.0
      %v7207 = vrot.slane %v7206, 4
      %v7208 = vadd.f32 %v7206, %v7207
      %v7209 = vrot.slane %v7208, 2
      %v7210 = vadd.f32 %v7208, %v7209
      %v7211 = vrot.slane %v7210, 1
      %v7212 = vadd.f32 %v7210, %v7211
      %v7213 = vsel %vm1358, %v7179, 0.0
      %v7214 = vrot.slane %v7213, 4
      %v7215 = vadd.f32 %v7213, %v7214
      %v7216 = vrot.slane %v7215, 2
      %v7217 = vadd.f32 %v7215, %v7216
      %v7218 = vrot.slane %v7217, 1
      %v7219 = vadd.f32 %v7217, %v7218
      %v7220 = vsel %vm1358, %v7180, 0.0
      %v7221 = vrot.slane %v7220, 4
      %v7222 = vadd.f32 %v7220, %v7221
      %v7223 = vrot.slane %v7222, 2
      %v7224 = vadd.f32 %v7222, %v7223
      %v7225 = vrot.slane %v7224, 1
      %v7226 = vadd.f32 %v7224, %v7225
      %v7227 = vsel %vm1358, %v7181, 0.0
      %v7228 = vrot.slane %v7227, 4
      %v7229 = vadd.f32 %v7227, %v7228
      %v7230 = vrot.slane %v7229, 2
      %v7231 = vadd.f32 %v7229, %v7230
      %v7232 = vrot.slane %v7231, 1
      %v7233 = vadd.f32 %v7231, %v7232
      %v7234 = vsel %vm1358, %v7182, 0.0
      %v7235 = vrot.slane %v7234, 4
      %v7236 = vadd.f32 %v7234, %v7235
      %v7237 = vrot.slane %v7236, 2
      %v7238 = vadd.f32 %v7236, %v7237
      %v7239 = vrot.slane %v7238, 1
      %v7240 = vadd.f32 %v7238, %v7239
      %v7241 = vsel %vm1358, %v7183, 0.0
      %v7242 = vrot.slane %v7241, 4
      %v7243 = vadd.f32 %v7241, %v7242
      %v7244 = vrot.slane %v7243, 2
      %v7245 = vadd.f32 %v7243, %v7244
      %v7246 = vrot.slane %v7245, 1
      %v7247 = vadd.f32 %v7245, %v7246
      %v7248 = vsel %vm1358, %v7184, 0.0
      %v7249 = vrot.slane %v7248, 4
      %v7250 = vadd.f32 %v7248, %v7249
      %v7251 = vrot.slane %v7250, 2
      %v7252 = vadd.f32 %v7250, %v7251
      %v7253 = vrot.slane %v7252, 1
      %v7254 = vadd.f32 %v7252, %v7253
      %v7255 = vsel %vm1358, %v7185, 0.0
      %v7256 = vrot.slane %v7255, 4
      %v7257 = vadd.f32 %v7255, %v7256
      %v7258 = vrot.slane %v7257, 2
      %v7259 = vadd.f32 %v7257, %v7258
      %v7260 = vrot.slane %v7259, 1
      %v7261 = vadd.f32 %v7259, %v7260
      %v7262 = vsel %vm1358, %v7186, 0.0
      %v7263 = vrot.slane %v7262, 4
      %v7264 = vadd.f32 %v7262, %v7263
      %v7265 = vrot.slane %v7264, 2
      %v7266 = vadd.f32 %v7264, %v7265
      %v7267 = vrot.slane %v7266, 1
      %v7268 = vadd.f32 %v7266, %v7267
      %v7269 = vsel %vm1358, %v7187, 0.0
      %v7270 = vrot.slane %v7269, 4
      %v7271 = vadd.f32 %v7269, %v7270
      %v7272 = vrot.slane %v7271, 2
      %v7273 = vadd.f32 %v7271, %v7272
      %v7274 = vrot.slane %v7273, 1
      %v7275 = vadd.f32 %v7273, %v7274
      %v7276 = vsel %vm1358, %v7188, 0.0
      %v7277 = vrot.slane %v7276, 4
      %v7278 = vadd.f32 %v7276, %v7277
      %v7279 = vrot.slane %v7278, 2
      %v7280 = vadd.f32 %v7278, %v7279
      %v7281 = vrot.slane %v7280, 1
      %v7282 = vadd.f32 %v7280, %v7281
      %v7283 = vsel %vm1358, %v7189, 0.0
      %v7284 = vrot.slane %v7283, 4
      %v7285 = vadd.f32 %v7283, %v7284
      %v7286 = vrot.slane %v7285, 2
      %v7287 = vadd.f32 %v7285, %v7286
      %v7288 = vrot.slane %v7287, 1
      %v7289 = vadd.f32 %v7287, %v7288
      %v7290 = vsel %vm1358, %v7190, 0.0
      %v7291 = vrot.slane %v7290, 4
      %v7292 = vadd.f32 %v7290, %v7291
      %v7293 = vrot.slane %v7292, 2
      %v7294 = vadd.f32 %v7292, %v7293
      %v7295 = vrot.slane %v7294, 1
      %v7296 = vadd.f32 %v7294, %v7295
      %v7297 = vsel %vm1358, %v7191, 0.0
      %v7298 = vrot.slane %v7297, 4
      %v7299 = vadd.f32 %v7297, %v7298
      %v7300 = vrot.slane %v7299, 2
      %v7301 = vadd.f32 %v7299, %v7300
      %v7302 = vrot.slane %v7301, 1
      %v7303 = vadd.f32 %v7301, %v7302
      %v7305 = vlaneseq
      %v7306 = vshrl.u32 %v7305, 7
      %v7307 = vsub.s32 0, %v7306
      %v7308 = vrot.slane %v1193, %v7307
      %v7326 = vsel %vm4812, %v7205, %v7198
      %v7327 = vsel %vm4815, %v7212, %v7326
      %v7328 = vsel %vm4818, %v7219, %v7327
      %v7329 = vsel %vm4821, %v7226, %v7328
      %v7330 = vsel %vm4824, %v7233, %v7329
      %v7331 = vsel %vm4827, %v7240, %v7330
      %v7332 = vsel %vm4830, %v7247, %v7331
      %v7333 = vsel %vm4812, %v7261, %v7254
      %v7334 = vsel %vm4815, %v7268, %v7333
      %v7335 = vsel %vm4818, %v7275, %v7334
      %v7336 = vsel %vm4821, %v7282, %v7335
      %v7337 = vsel %vm4824, %v7289, %v7336
      %v7338 = vsel %vm4827, %v7296, %v7337
      %v7339 = vsel %vm4830, %v7303, %v7338
      %v7340 = vsel %vm1358, %v7332, 0
      %v7342 = vsel %vm1358, %v7339, 0
      %7344 = vmatprep.subr.mxu0 0.0
      %7345 = vmatpush1.msra.mxu0 0.0
      %7346 = vmatprep.subr.mxu0 0.0
      %7347 = vmatpush1.msra.mxu0 0.0
      %7348 = vmatprep.subr.mxu0 0.0
      %7349 = vmatpush1.msra.mxu0 0.0
      %7350 = vmatprep.subr.mxu0 0.0
      %7351 = vmatpush1.msra.mxu0 0.0
      %7352 = vmatprep.subr.mxu0 0.0
      %7353 = vmatpush1.msra.mxu0 0.0
      %7354 = vmatprep.subr.mxu0 0.0
      %7355 = vmatpush1.msra.mxu0 0.0
      %7356 = vmatprep.subr.mxu0 0.0
      %7357 = vmatpush1.msra.mxu0 0.0
      %7358 = vmatprep.subr.mxu0 0.0
      %7359 = vmatpush1.msra.mxu0 0.0
      %7360 = vmatprep.subr.mxu0 0.0
      %7361 = vmatpush1.msra.mxu0 0.0
      %7362 = vmatprep.subr.mxu0 0.0
      %7363 = vmatpush1.msra.mxu0 0.0
      %7364 = vmatprep.subr.mxu0 0.0
      %7365 = vmatpush1.msra.mxu0 0.0
      %7366 = vmatprep.subr.mxu0 0.0
      %7367 = vmatpush1.msra.mxu0 0.0
      %7368 = vmatprep.subr.mxu0 0.0
      %7369 = vmatpush1.msra.mxu0 %v1192
      %7370 = vmatprep.subr.mxu0 0.0
      %7371 = vmatpush1.msra.mxu0 %v1191
      %7372 = vmatprep.subr.mxu0 0.0
      %7373 = vmatpush1.msra.mxu0 %v1190
      %7374 = vmatprep.subr.mxu0 0.0
      %7375 = vmatpush1.msra.mxu0 %v1189
      %7376 = vmatprep.subr.mxu0 0.0
      %7377 = vmatpush2.msra.mxu0 0.0
      %7378 = vmatprep.subr.mxu0 0.0
      %7379 = vmatpush2.msra.mxu0 0.0
      %7380 = vmatprep.subr.mxu0 0.0
      %7381 = vmatpush2.msra.mxu0 0.0
      %7382 = vmatprep.subr.mxu0 0.0
      %7383 = vmatpush2.msra.mxu0 0.0
      %7384 = vmatprep.subr.mxu0 0.0
      %7385 = vmatpush2.msra.mxu0 0.0
      %7386 = vmatprep.subr.mxu0 0.0
      %7387 = vmatpush2.msra.mxu0 0.0
      %7388 = vmatprep.subr.mxu0 0.0
      %7389 = vmatpush2.msra.mxu0 0.0
      %7390 = vmatprep.subr.mxu0 0.0
      %7391 = vmatpush2.msra.mxu0 0.0
      %7392 = vmatprep.subr.mxu0 0.0
      %7393 = vmatpush2.msra.mxu0 0.0
      %7394 = vmatprep.subr.mxu0 0.0
      %7395 = vmatpush2.msra.mxu0 0.0
      %7396 = vmatprep.subr.mxu0 0.0
      %7397 = vmatpush2.msra.mxu0 0.0
      %7398 = vmatprep.subr.mxu0 0.0
      %7399 = vmatpush2.msra.mxu0 0.0
      %7400 = vmatprep.subr.mxu0 0.0
      %7401 = vmatpush2.msra.mxu0 0.0
      %7402 = vmatprep.subr.mxu0 0.0
      %7403 = vmatpush2.msra.mxu0 0.0
      %7404 = vmatprep.subr.mxu0 0.0
      %7405 = vmatpush2.msra.mxu0 0.0
      %7406 = vmatprep.subr.mxu0 0.0
      %7407 = vmatpush2.msra.mxu0 0.0
      %7408 = vmatprep.mubr.f32.mxu0 0.0
      %7409 = vmatmul.mubr.f32.gmra.mxu0 %v7340
      %v7410 = vpop.f32.mrf.mxu0
      %v7411 = vadd.f32 %v7308, %v7410
      %v7412 = vpop.f32.mrf.mxu0
      %7413 = vmatprep.mubr.f32.mxu0 0.0
      %7414 = vmatmul.mubr.f32.gmra.mxu0 %v7342
      %v7415 = vpop.f32.mrf.mxu0
      %v7416 = vadd.f32 %v7308, %v7415
      %v7417 = vpop.f32.mrf.mxu0
      %7418 = vdwg.mxu0
      %vm7419 = vcmp.gt.f32.partialorder %v7411, 0.0
      %vm7420 = vcmp.gt.f32.partialorder %v7416, 0.0
      %v7421 = vmin.f32 %v7411, 0.0
      %v7422 = vmin.f32 %v7416, 0.0
      %v7423 = vmul.f32 %v7421, 1.442695
      %v7424 = vpow.pop %v7423
      %v7425 = vmul.f32 %v7422, 1.442695
      %v7426 = vpow.pop %v7425
      %v7427 = vsub.f32 %v7424, 1.0
      %v7428 = vsub.f32 %v7426, 1.0
      %v7429 = vsel %vm7419, %v7411, %v7427
      %v7430 = vsel %vm7420, %v7416, %v7428
      %v7432 = vlaneseq
      %v7433 = vshrl.u32 %v7432, 7
      %v7434 = vsub.s32 0, %v7433
      %v7435 = vrot.slane %v1198, %v7434
      %v7438 = vsel %vm1358, %v7429, 0
      %v7441 = vsel %vm1358, %v7430, 0
      %7443 = vmatprep.subr.mxu0 0.0
      %7444 = vmatpush1.msra.mxu0 0.0
      %7445 = vmatprep.subr.mxu0 0.0
      %7446 = vmatpush1.msra.mxu0 0.0
      %7447 = vmatprep.subr.mxu0 0.0
      %7448 = vmatpush1.msra.mxu0 0.0
      %7449 = vmatprep.subr.mxu0 0.0
      %7450 = vmatpush1.msra.mxu0 0.0
      %7451 = vmatprep.subr.mxu0 0.0
      %7452 = vmatpush1.msra.mxu0 0.0
      %7453 = vmatprep.subr.mxu0 0.0
      %7454 = vmatpush1.msra.mxu0 0.0
      %7455 = vmatprep.subr.mxu0 0.0
      %7456 = vmatpush1.msra.mxu0 0.0
      %7457 = vmatprep.subr.mxu0 0.0
      %7458 = vmatpush1.msra.mxu0 0.0
      %7459 = vmatprep.subr.mxu0 0.0
      %7460 = vmatpush1.msra.mxu0 0.0
      %7461 = vmatprep.subr.mxu0 0.0
      %7462 = vmatpush1.msra.mxu0 0.0
      %7463 = vmatprep.subr.mxu0 0.0
      %7464 = vmatpush1.msra.mxu0 0.0
      %7465 = vmatprep.subr.mxu0 0.0
      %7466 = vmatpush1.msra.mxu0 0.0
      %7467 = vmatprep.subr.mxu0 0.0
      %7468 = vmatpush1.msra.mxu0 %v1197
      %7469 = vmatprep.subr.mxu0 0.0
      %7470 = vmatpush1.msra.mxu0 %v1196
      %7471 = vmatprep.subr.mxu0 0.0
      %7472 = vmatpush1.msra.mxu0 %v1195
      %7473 = vmatprep.subr.mxu0 0.0
      %7474 = vmatpush1.msra.mxu0 %v1194
      %7475 = vmatprep.subr.mxu0 0.0
      %7476 = vmatpush2.msra.mxu0 0.0
      %7477 = vmatprep.subr.mxu0 0.0
      %7478 = vmatpush2.msra.mxu0 0.0
      %7479 = vmatprep.subr.mxu0 0.0
      %7480 = vmatpush2.msra.mxu0 0.0
      %7481 = vmatprep.subr.mxu0 0.0
      %7482 = vmatpush2.msra.mxu0 0.0
      %7483 = vmatprep.subr.mxu0 0.0
      %7484 = vmatpush2.msra.mxu0 0.0
      %7485 = vmatprep.subr.mxu0 0.0
      %7486 = vmatpush2.msra.mxu0 0.0
      %7487 = vmatprep.subr.mxu0 0.0
      %7488 = vmatpush2.msra.mxu0 0.0
      %7489 = vmatprep.subr.mxu0 0.0
      %7490 = vmatpush2.msra.mxu0 0.0
      %7491 = vmatprep.subr.mxu0 0.0
      %7492 = vmatpush2.msra.mxu0 0.0
      %7493 = vmatprep.subr.mxu0 0.0
      %7494 = vmatpush2.msra.mxu0 0.0
      %7495 = vmatprep.subr.mxu0 0.0
      %7496 = vmatpush2.msra.mxu0 0.0
      %7497 = vmatprep.subr.mxu0 0.0
      %7498 = vmatpush2.msra.mxu0 0.0
      %7499 = vmatprep.subr.mxu0 0.0
      %7500 = vmatpush2.msra.mxu0 0.0
      %7501 = vmatprep.subr.mxu0 0.0
      %7502 = vmatpush2.msra.mxu0 0.0
      %7503 = vmatprep.subr.mxu0 0.0
      %7504 = vmatpush2.msra.mxu0 0.0
      %7505 = vmatprep.subr.mxu0 0.0
      %7506 = vmatpush2.msra.mxu0 0.0
      %7507 = vmatprep.mubr.f32.mxu0 0.0
      %7508 = vmatmul.mubr.f32.gmra.mxu0 %v7438
      %v7509 = vpop.f32.mrf.mxu0
      %v7510 = vadd.f32 %v7435, %v7509
      %v7511 = vpop.f32.mrf.mxu0
      %7512 = vmatprep.mubr.f32.mxu0 0.0
      %7513 = vmatmul.mubr.f32.gmra.mxu0 %v7441
      %v7514 = vpop.f32.mrf.mxu0
      %v7515 = vadd.f32 %v7435, %v7514
      %v7516 = vpop.f32.mrf.mxu0
      %7517 = vdwg.mxu0
      %vm7518 = vcmp.gt.f32.partialorder %v7510, 0.0
      %vm7519 = vcmp.gt.f32.partialorder %v7515, 0.0
      %v7520 = vmin.f32 %v7510, 0.0
      %v7521 = vmin.f32 %v7515, 0.0
      %v7522 = vmul.f32 %v7520, 1.442695
      %v7523 = vpow.pop %v7522
      %v7524 = vmul.f32 %v7521, 1.442695
      %v7525 = vpow.pop %v7524
      %v7526 = vsub.f32 %v7523, 1.0
      %v7527 = vsub.f32 %v7525, 1.0
      %v7528 = vsel %vm7518, %v7510, %v7526
      %v7529 = vsel %vm7519, %v7515, %v7527
      %v7531 = vlaneseq
      %v7532 = vshrl.u32 %v7531, 7
      %v7533 = vsub.s32 0, %v7532
      %v7534 = vrot.slane %v1203, %v7533
      %v7537 = vsel %vm1358, %v7528, 0
      %v7540 = vsel %vm1358, %v7529, 0
      %7542 = vmatprep.subr.mxu0 0.0
      %7543 = vmatpush1.msra.mxu0 0.0
      %7544 = vmatprep.subr.mxu0 0.0
      %7545 = vmatpush1.msra.mxu0 0.0
      %7546 = vmatprep.subr.mxu0 0.0
      %7547 = vmatpush1.msra.mxu0 0.0
      %7548 = vmatprep.subr.mxu0 0.0
      %7549 = vmatpush1.msra.mxu0 0.0
      %7550 = vmatprep.subr.mxu0 0.0
      %7551 = vmatpush1.msra.mxu0 0.0
      %7552 = vmatprep.subr.mxu0 0.0
      %7553 = vmatpush1.msra.mxu0 0.0
      %7554 = vmatprep.subr.mxu0 0.0
      %7555 = vmatpush1.msra.mxu0 0.0
      %7556 = vmatprep.subr.mxu0 0.0
      %7557 = vmatpush1.msra.mxu0 0.0
      %7558 = vmatprep.subr.mxu0 0.0
      %7559 = vmatpush1.msra.mxu0 0.0
      %7560 = vmatprep.subr.mxu0 0.0
      %7561 = vmatpush1.msra.mxu0 0.0
      %7562 = vmatprep.subr.mxu0 0.0
      %7563 = vmatpush1.msra.mxu0 0.0
      %7564 = vmatprep.subr.mxu0 0.0
      %7565 = vmatpush1.msra.mxu0 0.0
      %7566 = vmatprep.subr.mxu0 0.0
      %7567 = vmatpush1.msra.mxu0 %v1202
      %7568 = vmatprep.subr.mxu0 0.0
      %7569 = vmatpush1.msra.mxu0 %v1201
      %7570 = vmatprep.subr.mxu0 0.0
      %7571 = vmatpush1.msra.mxu0 %v1200
      %7572 = vmatprep.subr.mxu0 0.0
      %7573 = vmatpush1.msra.mxu0 %v1199
      %7574 = vmatprep.subr.mxu0 0.0
      %7575 = vmatpush2.msra.mxu0 0.0
      %7576 = vmatprep.subr.mxu0 0.0
      %7577 = vmatpush2.msra.mxu0 0.0
      %7578 = vmatprep.subr.mxu0 0.0
      %7579 = vmatpush2.msra.mxu0 0.0
      %7580 = vmatprep.subr.mxu0 0.0
      %7581 = vmatpush2.msra.mxu0 0.0
      %7582 = vmatprep.subr.mxu0 0.0
      %7583 = vmatpush2.msra.mxu0 0.0
      %7584 = vmatprep.subr.mxu0 0.0
      %7585 = vmatpush2.msra.mxu0 0.0
      %7586 = vmatprep.subr.mxu0 0.0
      %7587 = vmatpush2.msra.mxu0 0.0
      %7588 = vmatprep.subr.mxu0 0.0
      %7589 = vmatpush2.msra.mxu0 0.0
      %7590 = vmatprep.subr.mxu0 0.0
      %7591 = vmatpush2.msra.mxu0 0.0
      %7592 = vmatprep.subr.mxu0 0.0
      %7593 = vmatpush2.msra.mxu0 0.0
      %7594 = vmatprep.subr.mxu0 0.0
      %7595 = vmatpush2.msra.mxu0 0.0
      %7596 = vmatprep.subr.mxu0 0.0
      %7597 = vmatpush2.msra.mxu0 0.0
      %7598 = vmatprep.subr.mxu0 0.0
      %7599 = vmatpush2.msra.mxu0 0.0
      %7600 = vmatprep.subr.mxu0 0.0
      %7601 = vmatpush2.msra.mxu0 0.0
      %7602 = vmatprep.subr.mxu0 0.0
      %7603 = vmatpush2.msra.mxu0 0.0
      %7604 = vmatprep.subr.mxu0 0.0
      %7605 = vmatpush2.msra.mxu0 0.0
      %7606 = vmatprep.mubr.f32.mxu0 0.0
      %7607 = vmatmul.mubr.f32.gmra.mxu0 %v7537
      %v7608 = vpop.f32.mrf.mxu0
      %v7609 = vadd.f32 %v7534, %v7608
      %v7610 = vpop.f32.mrf.mxu0
      %7611 = vmatprep.mubr.f32.mxu0 0.0
      %7612 = vmatmul.mubr.f32.gmra.mxu0 %v7540
      %v7613 = vpop.f32.mrf.mxu0
      %v7614 = vadd.f32 %v7534, %v7613
      %v7615 = vpop.f32.mrf.mxu0
      %7616 = vdwg.mxu0
      %vm7617 = vcmp.gt.f32.partialorder %v7609, 0.0
      %vm7618 = vcmp.gt.f32.partialorder %v7614, 0.0
      %v7619 = vmin.f32 %v7609, 0.0
      %v7620 = vmin.f32 %v7614, 0.0
      %v7621 = vmul.f32 %v7619, 1.442695
      %v7622 = vpow.pop %v7621
      %v7623 = vmul.f32 %v7620, 1.442695
      %v7624 = vpow.pop %v7623
      %v7625 = vsub.f32 %v7622, 1.0
      %v7626 = vsub.f32 %v7624, 1.0
      %v7627 = vsel %vm7617, %v7609, %v7625
      %v7628 = vsel %vm7618, %v7614, %v7626
      %v7630 = vlaneseq
      %v7631 = vshrl.u32 %v7630, 7
      %v7632 = vsub.s32 0, %v7631
      %v7633 = vrot.slane %v1206, %v7632
      %v7636 = vsel %vm6103, %v7627, 0
      %v7639 = vsel %vm6103, %v7628, 0
      %7641 = vmatprep.subr.mxu0 0.0
      %7642 = vmatpush1.msra.mxu0 0.0
      %7643 = vmatprep.subr.mxu0 0.0
      %7644 = vmatpush1.msra.mxu0 0.0
      %7645 = vmatprep.subr.mxu0 0.0
      %7646 = vmatpush1.msra.mxu0 0.0
      %7647 = vmatprep.subr.mxu0 0.0
      %7648 = vmatpush1.msra.mxu0 0.0
      %7649 = vmatprep.subr.mxu0 0.0
      %7650 = vmatpush1.msra.mxu0 0.0
      %7651 = vmatprep.subr.mxu0 0.0
      %7652 = vmatpush1.msra.mxu0 0.0
      %7653 = vmatprep.subr.mxu0 0.0
      %7654 = vmatpush1.msra.mxu0 0.0
      %7655 = vmatprep.subr.mxu0 0.0
      %7656 = vmatpush1.msra.mxu0 0.0
      %7657 = vmatprep.subr.mxu0 0.0
      %7658 = vmatpush1.msra.mxu0 0.0
      %7659 = vmatprep.subr.mxu0 0.0
      %7660 = vmatpush1.msra.mxu0 0.0
      %7661 = vmatprep.subr.mxu0 0.0
      %7662 = vmatpush1.msra.mxu0 0.0
      %7663 = vmatprep.subr.mxu0 0.0
      %7664 = vmatpush1.msra.mxu0 0.0
      %7665 = vmatprep.subr.mxu0 0.0
      %7666 = vmatpush1.msra.mxu0 0.0
      %7667 = vmatprep.subr.mxu0 0.0
      %7668 = vmatpush1.msra.mxu0 0.0
      %7669 = vmatprep.subr.mxu0 0.0
      %7670 = vmatpush1.msra.mxu0 %v1205
      %7671 = vmatprep.subr.mxu0 0.0
      %7672 = vmatpush1.msra.mxu0 %v1204
      %7673 = vmatprep.subr.mxu0 0.0
      %7674 = vmatpush2.msra.mxu0 0.0
      %7675 = vmatprep.subr.mxu0 0.0
      %7676 = vmatpush2.msra.mxu0 0.0
      %7677 = vmatprep.subr.mxu0 0.0
      %7678 = vmatpush2.msra.mxu0 0.0
      %7679 = vmatprep.subr.mxu0 0.0
      %7680 = vmatpush2.msra.mxu0 0.0
      %7681 = vmatprep.subr.mxu0 0.0
      %7682 = vmatpush2.msra.mxu0 0.0
      %7683 = vmatprep.subr.mxu0 0.0
      %7684 = vmatpush2.msra.mxu0 0.0
      %7685 = vmatprep.subr.mxu0 0.0
      %7686 = vmatpush2.msra.mxu0 0.0
      %7687 = vmatprep.subr.mxu0 0.0
      %7688 = vmatpush2.msra.mxu0 0.0
      %7689 = vmatprep.subr.mxu0 0.0
      %7690 = vmatpush2.msra.mxu0 0.0
      %7691 = vmatprep.subr.mxu0 0.0
      %7692 = vmatpush2.msra.mxu0 0.0
      %7693 = vmatprep.subr.mxu0 0.0
      %7694 = vmatpush2.msra.mxu0 0.0
      %7695 = vmatprep.subr.mxu0 0.0
      %7696 = vmatpush2.msra.mxu0 0.0
      %7697 = vmatprep.subr.mxu0 0.0
      %7698 = vmatpush2.msra.mxu0 0.0
      %7699 = vmatprep.subr.mxu0 0.0
      %7700 = vmatpush2.msra.mxu0 0.0
      %7701 = vmatprep.subr.mxu0 0.0
      %7702 = vmatpush2.msra.mxu0 0.0
      %7703 = vmatprep.subr.mxu0 0.0
      %7704 = vmatpush2.msra.mxu0 0.0
      %7705 = vmatprep.mubr.f32.mxu0 0.0
      %7706 = vmatmul.mubr.f32.gmra.mxu0 %v7636
      %v7707 = vpop.f32.mrf.mxu0
      %v7708 = vadd.f32 %v7633, %v7707
      %v7709 = vpop.f32.mrf.mxu0
      %7710 = vmatprep.mubr.f32.mxu0 0.0
      %7711 = vmatmul.mubr.f32.gmra.mxu0 %v7639
      %v7712 = vpop.f32.mrf.mxu0
      %v7713 = vadd.f32 %v7633, %v7712
      %v7714 = vpop.f32.mrf.mxu0
      %7715 = vdwg.mxu0
      %vm7716 = vcmp.gt.f32.partialorder %v7708, 0.0
      %vm7717 = vcmp.gt.f32.partialorder %v7713, 0.0
      %v7718 = vmin.f32 %v7708, 0.0
      %v7719 = vmin.f32 %v7713, 0.0
      %v7720 = vmul.f32 %v7718, 1.442695
      %v7721 = vpow.pop %v7720
      %v7722 = vmul.f32 %v7719, 1.442695
      %v7723 = vpow.pop %v7722
      %v7724 = vsub.f32 %v7721, 1.0
      %v7725 = vsub.f32 %v7723, 1.0
      %v7726 = vsel %vm7716, %v7708, %v7724
      %v7727 = vsel %vm7717, %v7713, %v7725
      %v7729 = vlaneseq
      %v7730 = vshrl.u32 %v7729, 7
      %v7731 = vsub.s32 0, %v7730
      %v7732 = vrot.slane %v1209, %v7731
      %v7735 = vsel %vm6103, %v7726, 0
      %v7738 = vsel %vm6103, %v7727, 0
      %7740 = vmatprep.subr.mxu0 0.0
      %7741 = vmatpush1.msra.mxu0 0.0
      %7742 = vmatprep.subr.mxu0 0.0
      %7743 = vmatpush1.msra.mxu0 0.0
      %7744 = vmatprep.subr.mxu0 0.0
      %7745 = vmatpush1.msra.mxu0 0.0
      %7746 = vmatprep.subr.mxu0 0.0
      %7747 = vmatpush1.msra.mxu0 0.0
      %7748 = vmatprep.subr.mxu0 0.0
      %7749 = vmatpush1.msra.mxu0 0.0
      %7750 = vmatprep.subr.mxu0 0.0
      %7751 = vmatpush1.msra.mxu0 0.0
      %7752 = vmatprep.subr.mxu0 0.0
      %7753 = vmatpush1.msra.mxu0 0.0
      %7754 = vmatprep.subr.mxu0 0.0
      %7755 = vmatpush1.msra.mxu0 0.0
      %7756 = vmatprep.subr.mxu0 0.0
      %7757 = vmatpush1.msra.mxu0 0.0
      %7758 = vmatprep.subr.mxu0 0.0
      %7759 = vmatpush1.msra.mxu0 0.0
      %7760 = vmatprep.subr.mxu0 0.0
      %7761 = vmatpush1.msra.mxu0 0.0
      %7762 = vmatprep.subr.mxu0 0.0
      %7763 = vmatpush1.msra.mxu0 0.0
      %7764 = vmatprep.subr.mxu0 0.0
      %7765 = vmatpush1.msra.mxu0 0.0
      %7766 = vmatprep.subr.mxu0 0.0
      %7767 = vmatpush1.msra.mxu0 0.0
      %7768 = vmatprep.subr.mxu0 0.0
      %7769 = vmatpush1.msra.mxu0 %v1208
      %7770 = vmatprep.subr.mxu0 0.0
      %7771 = vmatpush1.msra.mxu0 %v1207
      %7772 = vmatprep.subr.mxu0 0.0
      %7773 = vmatpush2.msra.mxu0 0.0
      %7774 = vmatprep.subr.mxu0 0.0
      %7775 = vmatpush2.msra.mxu0 0.0
      %7776 = vmatprep.subr.mxu0 0.0
      %7777 = vmatpush2.msra.mxu0 0.0
      %7778 = vmatprep.subr.mxu0 0.0
      %7779 = vmatpush2.msra.mxu0 0.0
      %7780 = vmatprep.subr.mxu0 0.0
      %7781 = vmatpush2.msra.mxu0 0.0
      %7782 = vmatprep.subr.mxu0 0.0
      %7783 = vmatpush2.msra.mxu0 0.0
      %7784 = vmatprep.subr.mxu0 0.0
      %7785 = vmatpush2.msra.mxu0 0.0
      %7786 = vmatprep.subr.mxu0 0.0
      %7787 = vmatpush2.msra.mxu0 0.0
      %7788 = vmatprep.subr.mxu0 0.0
      %7789 = vmatpush2.msra.mxu0 0.0
      %7790 = vmatprep.subr.mxu0 0.0
      %7791 = vmatpush2.msra.mxu0 0.0
      %7792 = vmatprep.subr.mxu0 0.0
      %7793 = vmatpush2.msra.mxu0 0.0
      %7794 = vmatprep.subr.mxu0 0.0
      %7795 = vmatpush2.msra.mxu0 0.0
      %7796 = vmatprep.subr.mxu0 0.0
      %7797 = vmatpush2.msra.mxu0 0.0
      %7798 = vmatprep.subr.mxu0 0.0
      %7799 = vmatpush2.msra.mxu0 0.0
      %7800 = vmatprep.subr.mxu0 0.0
      %7801 = vmatpush2.msra.mxu0 0.0
      %7802 = vmatprep.subr.mxu0 0.0
      %7803 = vmatpush2.msra.mxu0 0.0
      %7804 = vmatprep.mubr.f32.mxu0 0.0
      %7805 = vmatmul.mubr.f32.gmra.mxu0 %v7735
      %v7806 = vpop.f32.mrf.mxu0
      %v7807 = vadd.f32 %v7732, %v7806
      %v7808 = vpop.f32.mrf.mxu0
      %7809 = vmatprep.mubr.f32.mxu0 0.0
      %7810 = vmatmul.mubr.f32.gmra.mxu0 %v7738
      %v7811 = vpop.f32.mrf.mxu0
      %v7812 = vadd.f32 %v7732, %v7811
      %v7813 = vpop.f32.mrf.mxu0
      %7814 = vdwg.mxu0
      %vm7815 = vcmp.gt.f32.partialorder %v7807, 0.0
      %vm7816 = vcmp.gt.f32.partialorder %v7812, 0.0
      %v7817 = vmin.f32 %v7807, 0.0
      %v7818 = vmin.f32 %v7812, 0.0
      %v7819 = vmul.f32 %v7817, 1.442695
      %v7820 = vpow.pop %v7819
      %v7821 = vmul.f32 %v7818, 1.442695
      %v7822 = vpow.pop %v7821
      %v7823 = vsub.f32 %v7820, 1.0
      %v7824 = vsub.f32 %v7822, 1.0
      %v7825 = vsel %vm7815, %v7807, %v7823
      %v7826 = vsel %vm7816, %v7812, %v7824
      %v7828 = vlaneseq
      %v7829 = vshrl.u32 %v7828, 7
      %v7830 = vsub.s32 0, %v7829
      %v7831 = vrot.slane %v1211, %v7830
      %v7834 = vsel %vm3348, %v7825, 0
      %v7837 = vsel %vm3348, %v7826, 0
      %7839 = vmatprep.subr.mxu0 0.0
      %7840 = vmatpush1.msra.mxu0 0.0
      %7841 = vmatprep.subr.mxu0 0.0
      %7842 = vmatpush1.msra.mxu0 0.0
      %7843 = vmatprep.subr.mxu0 0.0
      %7844 = vmatpush1.msra.mxu0 0.0
      %7845 = vmatprep.subr.mxu0 0.0
      %7846 = vmatpush1.msra.mxu0 0.0
      %7847 = vmatprep.subr.mxu0 0.0
      %7848 = vmatpush1.msra.mxu0 0.0
      %7849 = vmatprep.subr.mxu0 0.0
      %7850 = vmatpush1.msra.mxu0 0.0
      %7851 = vmatprep.subr.mxu0 0.0
      %7852 = vmatpush1.msra.mxu0 0.0
      %7853 = vmatprep.subr.mxu0 0.0
      %7854 = vmatpush1.msra.mxu0 0.0
      %7855 = vmatprep.subr.mxu0 0.0
      %7856 = vmatpush1.msra.mxu0 0.0
      %7857 = vmatprep.subr.mxu0 0.0
      %7858 = vmatpush1.msra.mxu0 0.0
      %7859 = vmatprep.subr.mxu0 0.0
      %7860 = vmatpush1.msra.mxu0 0.0
      %7861 = vmatprep.subr.mxu0 0.0
      %7862 = vmatpush1.msra.mxu0 0.0
      %7863 = vmatprep.subr.mxu0 0.0
      %7864 = vmatpush1.msra.mxu0 0.0
      %7865 = vmatprep.subr.mxu0 0.0
      %7866 = vmatpush1.msra.mxu0 0.0
      %7867 = vmatprep.subr.mxu0 0.0
      %7868 = vmatpush1.msra.mxu0 0.0
      %7869 = vmatprep.subr.mxu0 0.0
      %7870 = vmatpush1.msra.mxu0 %v1210
      %7871 = vmatprep.subr.mxu0 0.0
      %7872 = vmatpush2.msra.mxu0 0.0
      %7873 = vmatprep.subr.mxu0 0.0
      %7874 = vmatpush2.msra.mxu0 0.0
      %7875 = vmatprep.subr.mxu0 0.0
      %7876 = vmatpush2.msra.mxu0 0.0
      %7877 = vmatprep.subr.mxu0 0.0
      %7878 = vmatpush2.msra.mxu0 0.0
      %7879 = vmatprep.subr.mxu0 0.0
      %7880 = vmatpush2.msra.mxu0 0.0
      %7881 = vmatprep.subr.mxu0 0.0
      %7882 = vmatpush2.msra.mxu0 0.0
      %7883 = vmatprep.subr.mxu0 0.0
      %7884 = vmatpush2.msra.mxu0 0.0
      %7885 = vmatprep.subr.mxu0 0.0
      %7886 = vmatpush2.msra.mxu0 0.0
      %7887 = vmatprep.subr.mxu0 0.0
      %7888 = vmatpush2.msra.mxu0 0.0
      %7889 = vmatprep.subr.mxu0 0.0
      %7890 = vmatpush2.msra.mxu0 0.0
      %7891 = vmatprep.subr.mxu0 0.0
      %7892 = vmatpush2.msra.mxu0 0.0
      %7893 = vmatprep.subr.mxu0 0.0
      %7894 = vmatpush2.msra.mxu0 0.0
      %7895 = vmatprep.subr.mxu0 0.0
      %7896 = vmatpush2.msra.mxu0 0.0
      %7897 = vmatprep.subr.mxu0 0.0
      %7898 = vmatpush2.msra.mxu0 0.0
      %7899 = vmatprep.subr.mxu0 0.0
      %7900 = vmatpush2.msra.mxu0 0.0
      %7901 = vmatprep.subr.mxu0 0.0
      %7902 = vmatpush2.msra.mxu0 0.0
      %7903 = vmatprep.mubr.f32.mxu0 0.0
      %7904 = vmatmul.mubr.f32.gmra.mxu0 %v7834
      %v7905 = vpop.f32.mrf.mxu0
      %v7906 = vadd.f32 %v7831, %v7905
      %v7907 = vpop.f32.mrf.mxu0
      %7908 = vmatprep.mubr.f32.mxu0 0.0
      %7909 = vmatmul.mubr.f32.gmra.mxu0 %v7837
      %v7910 = vpop.f32.mrf.mxu0
      %v7911 = vadd.f32 %v7831, %v7910
      %v7912 = vpop.f32.mrf.mxu0
      %7913 = vdwg.mxu0
      %v7914 = vxor.u32 %v7906, 2147483648
      %v7915 = vxor.u32 %v7911, 2147483648
      %v7916 = vmul.f32 %v7914, 1.442695
      %v7917 = vpow.pop %v7916
      %v7918 = vmul.f32 %v7915, 1.442695
      %v7919 = vpow.pop %v7918
      %v7920 = vadd.f32 %v7917, 1.0
      %v7921 = vadd.f32 %v7919, 1.0
      %v7922 = vrcp.pop %v7920
      %v7923 = vmul.f32 1.0, %v7922
      %v7924 = vrcp.pop %v7921
      %v7925 = vmul.f32 1.0, %v7924
      %7928 = vrot.lane.b32.xlu0 %v6194, 1
      %v7929 = vpop.permute.xlu0 %7928
      %7930 = vrot.lane.b32.xlu0 %v6196, 1
      %v7931 = vpop.permute.xlu0 %7930
      %7936 = vrot.lane.b32.xlu0 %v6177, 1
      %v7937 = vpop.permute.xlu0 %7936
      %7938 = vrot.lane.b32.xlu0 %v6182, 1
      %v7939 = vpop.permute.xlu0 %7938
      %7944 = vrot.lane.b32.xlu0 %v7906, 3
      %v7945 = vpop.permute.xlu0 %7944
      %7946 = vrot.lane.b32.xlu0 %v7911, 3
      %v7947 = vpop.permute.xlu0 %7946
      %7952 = vrot.lane.b32.xlu0 %v7923, 4
      %v7953 = vpop.permute.xlu0 %7952
      %7954 = vrot.lane.b32.xlu0 %v7925, 4
      %v7955 = vpop.permute.xlu0 %7954
      %7958 = vrot.lane.b32.xlu0 %v7906, 4
      %v7959 = vpop.permute.xlu0 %7958
      %7960 = vrot.lane.b32.xlu0 %v7911, 4
      %v7961 = vpop.permute.xlu0 %7960
      %vm7964 = vcmask 7168
      %v7965 = vsel %vm7964, %v6177, %v7929
      %v7966 = vsel %vm7964, %v6182, %v7931
      %vm7967 = vcmask 15360
      %v7968 = vsel %vm7967, %v7965, %v7937
      %v7969 = vsel %vm7967, %v7966, %v7939
      %vm7970 = vcmask 23552
      %v7971 = vsel %vm7970, %v7968, %v7945
      %v7972 = vsel %vm7970, %v7969, %v7947
      %vm7973 = vcmask 31744
      %v7974 = vsel %vm7973, %v7971, %v7953
      %v7975 = vsel %vm7973, %v7972, %v7955
      %vm7976 = vcmask 39936
      %v7977 = vsel %vm7976, %v7974, %v7959
      %v7978 = vsel %vm7976, %v7975, %v7961
      %vm7979 = vcmask 48128
      %v7980 = vsel %vm7979, %v7977, 0.0
      %v7981 = vsel %vm7979, %v7978, 0.0
      %7982 = vst.msk [vmem:[%s1100] sm:$0xff] %vm3348, %v7980
      %7983 = vst.msk [vmem:[%s1100 + $0x8] sm:$0xff] %vm3348, %v7981
      %s7984 = smul.u32 2, %s84
      %p7985 = scmp.lt.s32.totalorder %s7984, 7
      %s7986 = scalar_select %p7985, %s7984, 7
      %s7987 = smul.addr %s7986, 8
      %s7988 = scalar_lea.vmem %s73, %s7987
      // Predicated region
      $region165: #{tpu_custom_call.1} parent=163 // pred_check
        %p7989 = pneg %p863
      $region166: #{tpu_custom_call.1} parent=163 // pred_check_branch
        %7991 = sbr.rel (%p7989) target = $region168
      $region167: #{tpu_custom_call.1} parent=163 // pred_region
        %s7992 = smul.u32 2, %s84
      $region168: #{tpu_custom_call.1} parent=163 // pred_fallthru
        _
    $region164: #{tpu_custom_call.1} parent=5 // pred_fallthru
      _
    %p7993 = scmp.le.s32.totalorder 2, %s79
    // Predicated region
    $region169: #{tpu_custom_call.1} parent=5 // pred_check
      %p7994 = pneg %p7993
    $region170: #{tpu_custom_call.1} parent=5 // pred_check_branch
      %7996 = sbr.rel (%p7994) target = $region172
    $region171: #{tpu_custom_call.1} parent=5 // pred_region
      %s7997 = ssub.s32 %s79, 2
      // Predicated region
      $region173: #{tpu_custom_call.1} parent=171 // pred_check
        %p7998 = pneg %p869
      $region174: #{tpu_custom_call.1} parent=171 // pred_check_branch
        %8000 = sbr.rel (%p7998) target = $region176
      $region175: #{tpu_custom_call.1} parent=171 // pred_region
        %s8001 = smul.u32 2, %s85
        %p8002 = scmp.lt.s32.totalorder %s8001, 7
        %s8003 = scalar_select %p8002, %s8001, 7
        %s8004 = smul.addr %s8003, 8
        %s8005 = scalar_lea.vmem %s73, %s8004
      $region176: #{tpu_custom_call.1} parent=171 // pred_fallthru
        _
    $region172: #{tpu_custom_call.1} parent=5 // pred_fallthru
      _
  $region6: #{tpu_custom_call.1} parent=0 // loop_footer
    %s83 = sadd.s32 1, %s79
  $region7: #{tpu_custom_call.1} parent=0 // loop_footer_branch
    %78 = sbr.rel target = $region3
  $region8: #{tpu_custom_call.1} parent=0 // loop_exit
    _

</llo_original>
